<compile_context>
chip_gen: v6e
topology: v6e:2x2x1
jax: 0.10.0
libtpu: 0.0.40
codegen_flags: <defaults>
</compile_context>

<pallas_src>
import functools
import numpy as np
import jax
import jax.numpy as jnp
from jax.experimental import pallas as pl
from jax.experimental.pallas import tpu as pltpu


# ----------------------------------------------------------------------------
# Pallas kernel: all nW windows of one image, multi-head attention
#   qkv proj -> scores + (bias+mask) -> softmax -> attn@v -> out proj
# ----------------------------------------------------------------------------
def _swin_window_attn_kernel(x_ref, wq_ref, wk_ref, wv_ref,
                             bq_ref, bk_ref, bv_ref,
                             bm_ref, wp_ref, bp_ref, out_ref,
                             *, num_heads):
    # x_ref : (Wb, N, C)        Wb windows of N tokens (Wb = nW per image)
    # wq/wk/wv_ref : (H, C, dh) per-head projection weights (scale folded in wq)
    # bq/bk/bv_ref : (H, 1, dh) per-head biases (f32)
    # bm_ref: (H, Wb, N, N)     relative-position bias + shift mask, pre-combined
    # wp_ref: (H, dh, C)        output projection, row-sliced per head
    # bp_ref: (1, C)
    # out_ref: (Wb, N, C)
    Wb, N, C = x_ref.shape
    dh = C // num_heads
    T = Wb * N

    # Merge window/token dims; leading-dim reshape only (layout preserving).
    x2 = x_ref[...].reshape(T, C)

    acc = None
    for h in range(num_heads):
        # Per-head weights are leading-dim indexed slabs -> no lane slicing of
        # activations, no relayouts.  f32 accumulation on the MXU.
        q = jnp.dot(x2, wq_ref[h], preferred_element_type=jnp.float32) + bq_ref[h]
        k = jnp.dot(x2, wk_ref[h], preferred_element_type=jnp.float32) + bk_ref[h]
        v = jnp.dot(x2, wv_ref[h], preferred_element_type=jnp.float32) + bv_ref[h]

        # Split the leading (sublane) dim back into windows; N % 8 == 0 so this
        # is layout preserving.
        q3 = q.reshape(Wb, N, dh)
        k3 = k.reshape(Wb, N, dh)
        v3 = v.reshape(Wb, N, dh)

        # Batched QK^T over the window dim (q scale already folded into wq/bq).
        s = jnp.einsum('wnd,wmd->wnm', q3, k3,
                       preferred_element_type=jnp.float32)        # (Wb, N, N)
        s = s + bm_ref[h]                     # single add: bias + mask combined

        # Softmax, all f32 (v5e-safe); reciprocal-multiply instead of divide.
        s = s - jnp.max(s, axis=-1, keepdims=True)
        p = jnp.exp(s)
        inv = pl.reciprocal(jnp.sum(p, axis=-1, keepdims=True), approx=False)
        p = p * inv

        # attn @ v in the compute dtype (bf16 on v6e/v7x), f32 accumulation.
        o3 = jnp.einsum('wnm,wmd->wnd',
                        p.astype(x2.dtype), v3.astype(x2.dtype),
                        preferred_element_type=jnp.float32)       # (Wb, N, dh)
        o2 = o3.reshape(T, dh)

        # Accumulate straight into the output projection (no lane-axis concat):
        # y += o_h @ Wproj[h*dh:(h+1)*dh, :]
        contrib = jnp.dot(o2.astype(x2.dtype), wp_ref[h],
                          preferred_element_type=jnp.float32)     # (T, C)
        acc = contrib if acc is None else acc + contrib

    y = acc + bp_ref[...]                                         # (T,C)+(1,C)
    out_ref[...] = y.reshape(Wb, N, C).astype(out_ref.dtype)


def swin_window_attention(xw, bias_mask, kp, *, num_heads, windows_per_step):
    """xw: (Bw, N, C) windows; bias_mask: (H, nW, N, N) f32 (bias + shift mask)."""
    Bw, N, C = xw.shape
    nh = num_heads
    dh = C // nh
    assert Bw % windows_per_step == 0
    steps = Bw // windows_per_step                 # == B (>= 2 feeds both v7x TCs)

    kernel = functools.partial(_swin_window_attn_kernel, num_heads=nh)
    return pl.pallas_call(
        kernel,
        out_shape=jax.ShapeDtypeStruct((Bw, N, C), jnp.float32),
        grid_spec=pltpu.PrefetchScalarGridSpec(
            num_scalar_prefetch=0,
            grid=(steps,),
            in_specs=[
                pl.BlockSpec((windows_per_step, N, C), lambda i: (i, 0, 0)),   # x
                pl.BlockSpec((nh, C, dh), lambda i: (0, 0, 0)),                # wq
                pl.BlockSpec((nh, C, dh), lambda i: (0, 0, 0)),                # wk
                pl.BlockSpec((nh, C, dh), lambda i: (0, 0, 0)),                # wv
                pl.BlockSpec((nh, 1, dh), lambda i: (0, 0, 0)),                # bq
                pl.BlockSpec((nh, 1, dh), lambda i: (0, 0, 0)),                # bk
                pl.BlockSpec((nh, 1, dh), lambda i: (0, 0, 0)),                # bv
                pl.BlockSpec((nh, windows_per_step, N, N),
                             lambda i: (0, 0, 0, 0)),                          # bias+mask
                pl.BlockSpec((nh, dh, C), lambda i: (0, 0, 0)),                # wproj
                pl.BlockSpec((1, C), lambda i: (0, 0)),                        # bproj
            ],
            out_specs=pl.BlockSpec((windows_per_step, N, C), lambda i: (i, 0, 0)),
        ),
        compiler_params=pltpu.CompilerParams(
            dimension_semantics=("parallel",)),
    )(xw, kp["wq"], kp["wk"], kp["wv"], kp["bq"], kp["bk"], kp["bv"],
      bias_mask, kp["wp"], kp["bp"])


# ----------------------------------------------------------------------------
# Static (numpy) helpers mirroring the PyTorch module's buffers / masks
# ----------------------------------------------------------------------------
def double_step_seq(step1, len1, step2, len2):
    seq1 = np.arange(0, step1 * len1, step1)
    seq2 = np.arange(0, step2 * len2, step2)
    return (seq1[:, None] + seq2[None, :]).reshape(1, -1)


def relative_position_index(window_size):
    Wh, Ww = window_size, window_size
    rel_index_coords = double_step_seq(2 * Ww - 1, Wh, 1, Ww)   # (1, Wh*Ww)
    rel_position_index = rel_index_coords + rel_index_coords.T  # (N, N)
    rel_position_index = rel_position_index[:, ::-1].copy()     # flip(1)
    return rel_position_index


def window_partition(x, window_size):
    B, H, W, C = x.shape
    ws = window_size
    x = x.reshape(B, H // ws, ws, W // ws, ws, C)
    x = jnp.transpose(x, (0, 1, 3, 2, 4, 5))
    return x.reshape(-1, ws, ws, C)


def window_reverse(windows, H, W, window_size):
    ws = window_size
    B = windows.shape[0] // ((H // ws) * (W // ws))
    x = windows.reshape(B, H // ws, W // ws, ws, ws, -1)
    x = jnp.transpose(x, (0, 1, 3, 2, 4, 5))
    return x.reshape(B, H, W, -1)


def shift_attn_mask(H_pad, W_pad, window_size, shift_size):
    """attn_mask of shape (nW, N, N) with 0 / -100, same as the torch code."""
    ws, ss = window_size, shift_size
    img_mask = np.zeros((1, H_pad, W_pad, 1), dtype=np.float32)
    h_slices = (slice(0, -ws), slice(-ws, -ss), slice(-ss, None))
    w_slices = (slice(0, -ws), slice(-ws, -ss), slice(-ss, None))
    cnt = 0
    for h in h_slices:
        for w in w_slices:
            img_mask[:, h, w, :] = cnt
            cnt += 1
    mw = img_mask.reshape(1, H_pad // ws, ws, W_pad // ws, ws, 1)
    mw = mw.transpose(0, 1, 3, 2, 4, 5).reshape(-1, ws * ws)
    attn_mask = mw[:, None, :] - mw[:, :, None]            # (nW, N, N)
    attn_mask = np.where(attn_mask != 0, -100.0, 0.0).astype(np.float32)
    return attn_mask


# ----------------------------------------------------------------------------
# One-time parameter preparation (per layer): split per head, fold q scale,
# gather the relative-position-bias table once.
# ----------------------------------------------------------------------------
def prepare_kernel_params(raw, *, embed_dims, num_heads, window_size,
                          compute_dtype=jnp.float32):
    C = embed_dims
    nh = num_heads
    dh = C // nh
    N = window_size * window_size
    scale = dh ** (-0.5)

    wqkv = raw["wqkv"]                       # (C, 3C), laid out for x @ Wqkv
    bqkv = raw["bqkv"]                       # (3C,)
    wq, wk, wv = wqkv[:, :C], wqkv[:, C:2 * C], wqkv[:, 2 * C:]
    bq, bk, bv = bqkv[:C], bqkv[C:2 * C], bqkv[2 * C:]
    wq = wq * scale                          # fold q scale (one-time transform)
    bq = bq * scale

    def head_major_w(w):                     # (C, C) -> (nh, C, dh)
        return jnp.transpose(w.reshape(C, nh, dh), (1, 0, 2))

    def head_major_b(b):                     # (C,) -> (nh, 1, dh)
        return b.reshape(nh, 1, dh)

    # relative position bias gathered ONCE (constant per layer / window_size)
    rel_idx = relative_position_index(window_size).reshape(-1)
    rel_bias = raw["rel_table"][rel_idx].reshape(N, N, nh)
    rel_bias = jnp.transpose(rel_bias, (2, 0, 1))                 # (nh, N, N)

    return {
        "wq": head_major_w(wq).astype(compute_dtype),
        "wk": head_major_w(wk).astype(compute_dtype),
        "wv": head_major_w(wv).astype(compute_dtype),
        "bq": head_major_b(bq).astype(jnp.float32),
        "bk": head_major_b(bk).astype(jnp.float32),
        "bv": head_major_b(bv).astype(jnp.float32),
        "wp": raw["wproj"].reshape(nh, dh, C).astype(compute_dtype),
        "bp": raw["bproj"].reshape(1, C).astype(jnp.float32),
        "rel_bias": rel_bias.astype(jnp.float32),
    }


# ----------------------------------------------------------------------------
# ShiftWindowMSA forward: glue in JAX, attention hot path in Pallas
# ----------------------------------------------------------------------------
def shift_window_msa_forward(query, hw_shape, kp, *, num_heads, window_size,
                             shift_size):
    B, L, C = query.shape
    H, W = hw_shape
    assert L == H * W, "input feature has wrong size"
    ws, ss = window_size, shift_size
    nh = num_heads

    x = query.reshape(B, H, W, C)
    pad_r = (ws - W % ws) % ws
    pad_b = (ws - H % ws) % ws
    if pad_r or pad_b:
        x = jnp.pad(x, ((0, 0), (0, pad_b), (0, pad_r), (0, 0)))
    H_pad, W_pad = H + pad_b, W + pad_r
    nW = (H_pad // ws) * (W_pad // ws)
    N = ws * ws

    if ss > 0:
        x = jnp.roll(x, shift=(-ss, -ss), axis=(1, 2))
        attn_mask = shift_attn_mask(H_pad, W_pad, ws, ss)        # np (nW, N, N)
        bias_mask = kp["rel_bias"][:, None, :, :] + jnp.asarray(attn_mask)[None]
    else:
        # no shift mask -> just the bias, shared across windows (no extra add)
        bias_mask = jnp.broadcast_to(kp["rel_bias"][:, None, :, :],
                                     (nh, nW, N, N))

    xw = window_partition(x, ws).reshape(B * nW, N, C).astype(kp["wq"].dtype)

    out_w = swin_window_attention(xw, bias_mask, kp,
                                  num_heads=nh, windows_per_step=nW)

    out_w = out_w.reshape(-1, ws, ws, C)
    shifted_x = window_reverse(out_w, H_pad, W_pad, ws)
    if ss > 0:
        shifted_x = jnp.roll(shifted_x, shift=(ss, ss), axis=(1, 2))
    xo = shifted_x[:, :H, :W, :]
    return xo.reshape(B, H * W, C)


# ----------------------------------------------------------------------------
# Pure-JAX reference (mirrors the PyTorch module, uses raw params)
# ----------------------------------------------------------------------------
def shift_window_msa_reference(query, hw_shape, raw, *, embed_dims, num_heads,
                               window_size, shift_size):
    B, L, C = query.shape
    H, W = hw_shape
    ws, ss = window_size, shift_size
    scale = (embed_dims // num_heads) ** (-0.5)

    x = query.reshape(B, H, W, C)
    pad_r = (ws - W % ws) % ws
    pad_b = (ws - H % ws) % ws
    x = jnp.pad(x, ((0, 0), (0, pad_b), (0, pad_r), (0, 0)))
    H_pad, W_pad = H + pad_b, W + pad_r
    nW = (H_pad // ws) * (W_pad // ws)
    N = ws * ws

    if ss > 0:
        x = jnp.roll(x, shift=(-ss, -ss), axis=(1, 2))
        attn_mask = shift_attn_mask(H_pad, W_pad, ws, ss)
    else:
        attn_mask = np.zeros((nW, N, N), dtype=np.float32)

    xw = window_partition(x, ws).reshape(-1, N, C)
    rel_idx = relative_position_index(ws).reshape(-1)
    rel_bias = raw["rel_table"][rel_idx].reshape(N, N, num_heads)
    rel_bias = jnp.transpose(rel_bias, (2, 0, 1))
    mask_full = jnp.tile(jnp.asarray(attn_mask), (B, 1, 1))

    Bw = xw.shape[0]
    dh = C // num_heads
    qkv = xw @ raw["wqkv"] + raw["bqkv"]
    qkv = qkv.reshape(Bw, N, 3, num_heads, dh).transpose(2, 0, 3, 1, 4)
    q, k, v = qkv[0] * scale, qkv[1], qkv[2]
    attn = jnp.einsum("bhnd,bhmd->bhnm", q, k)
    attn = attn + rel_bias[None] + mask_full[:, None]
    attn = jax.nn.softmax(attn, axis=-1)
    o = jnp.einsum("bhnm,bhmd->bhnd", attn, v)
    o = jnp.transpose(o, (0, 2, 1, 3)).reshape(Bw, N, C)
    out_w = o @ raw["wproj"] + raw["bproj"]

    out_w = out_w.reshape(-1, ws, ws, C)
    shifted_x = window_reverse(out_w, H_pad, W_pad, ws)
    if ss > 0:
        shifted_x = jnp.roll(shifted_x, shift=(ss, ss), axis=(1, 2))
    xo = shifted_x[:, :H, :W, :]
    return xo.reshape(B, H * W, C)


# ----------------------------------------------------------------------------
# main
# ----------------------------------------------------------------------------
if __name__ == "__main__":
    B = 2
    H = W = 16
    embed_dims = 32
    num_heads = 4
    window_size = 8
    L = H * W

    key = jax.random.PRNGKey(0)
    k_x, k_t, k_wq, k_bq, k_wp, k_bp = jax.random.split(key, 6)

    query = jax.random.normal(k_x, (B, L, embed_dims), dtype=jnp.float32)

    # module stores qkv weight as (3C, C); we use the transposed (C, 3C) layout
    # so x @ Wqkv matches nn.Linear.
    raw_params = {
        "rel_table": 0.02 * jax.random.normal(
            k_t, ((2 * window_size - 1) ** 2, num_heads), dtype=jnp.float32),
        "wqkv": 0.05 * jax.random.normal(
            k_wq, (embed_dims, 3 * embed_dims), dtype=jnp.float32),
        "bqkv": 0.01 * jax.random.normal(k_bq, (3 * embed_dims,), jnp.float32),
        "wproj": 0.05 * jax.random.normal(
            k_wp, (embed_dims, embed_dims), dtype=jnp.float32),
        "bproj": 0.01 * jax.random.normal(k_bp, (embed_dims,), jnp.float32),
    }

    # --- f32 compute path (tight check), shifted and non-shifted layers -------
    kp_f32 = prepare_kernel_params(raw_params, embed_dims=embed_dims,
                                   num_heads=num_heads, window_size=window_size,
                                   compute_dtype=jnp.float32)
    for shift_size in (4, 0):
        out = shift_window_msa_forward(
            query, (H, W), kp_f32, num_heads=num_heads,
            window_size=window_size, shift_size=shift_size)
        out = jax.block_until_ready(out)
        ref = shift_window_msa_reference(
            query, (H, W), raw_params, embed_dims=embed_dims,
            num_heads=num_heads, window_size=window_size, shift_size=shift_size)
        ref = jax.block_until_ready(ref)
        assert out.shape == (B, L, embed_dims)
        np.testing.assert_allclose(np.asarray(out), np.asarray(ref),
                                   rtol=2e-5, atol=2e-5)

    # --- bf16 compute path (v6e/v7x MXU fast path), loosened tolerance --------
    kp_bf16 = prepare_kernel_params(raw_params, embed_dims=embed_dims,
                                    num_heads=num_heads, window_size=window_size,
                                    compute_dtype=jnp.bfloat16)
    out_bf16 = shift_window_msa_forward(
        query, (H, W), kp_bf16, num_heads=num_heads,
        window_size=window_size, shift_size=4)
    out_bf16 = jax.block_until_ready(out_bf16)
    ref = shift_window_msa_reference(
        query, (H, W), raw_params, embed_dims=embed_dims,
        num_heads=num_heads, window_size=window_size, shift_size=4)
    ref = jax.block_until_ready(ref)
    np.testing.assert_allclose(np.asarray(out_bf16), np.asarray(ref),
                               rtol=2e-2, atol=2e-2)

    print("KERNEL_OK")
</pallas_src>

<mosaic_0001>
module attributes {stable_mosaic.version = 11 : i64} {
  func.func @_swin_window_attn_kernel(%arg0: i32, %arg1: memref<4x64x32xf32, #tpu.memory_space<vmem>>, %arg2: memref<4x32x8xf32, #tpu.memory_space<vmem>>, %arg3: memref<4x32x8xf32, #tpu.memory_space<vmem>>, %arg4: memref<4x32x8xf32, #tpu.memory_space<vmem>>, %arg5: memref<4x1x8xf32, #tpu.memory_space<vmem>>, %arg6: memref<4x1x8xf32, #tpu.memory_space<vmem>>, %arg7: memref<4x1x8xf32, #tpu.memory_space<vmem>>, %arg8: memref<4x4x64x64xf32, #tpu.memory_space<vmem>>, %arg9: memref<4x8x32xf32, #tpu.memory_space<vmem>>, %arg10: memref<1x32xf32, #tpu.memory_space<vmem>>, %arg11: memref<4x64x32xf32, #tpu.memory_space<vmem>>) attributes {dimension_semantics = [#tpu.dimension_semantics<parallel>], iteration_bounds = array<i64: 2>, scalar_prefetch = 0 : i64, scratch_operands = 0 : i64, tpu.core_type = #tpu.core_type<tc>, window_params = [{transform_indices = @transform_0, window_bounds = array<i64: 4, 64, 32>}, {pipeline_mode = #tpu.pipeline_mode<synchronous>, transform_indices = @transform_1, window_bounds = array<i64: 4, 32, 8>}, {pipeline_mode = #tpu.pipeline_mode<synchronous>, transform_indices = @transform_2, window_bounds = array<i64: 4, 32, 8>}, {pipeline_mode = #tpu.pipeline_mode<synchronous>, transform_indices = @transform_3, window_bounds = array<i64: 4, 32, 8>}, {pipeline_mode = #tpu.pipeline_mode<synchronous>, transform_indices = @transform_4, window_bounds = array<i64: 4, 1, 8>}, {pipeline_mode = #tpu.pipeline_mode<synchronous>, transform_indices = @transform_5, window_bounds = array<i64: 4, 1, 8>}, {pipeline_mode = #tpu.pipeline_mode<synchronous>, transform_indices = @transform_6, window_bounds = array<i64: 4, 1, 8>}, {pipeline_mode = #tpu.pipeline_mode<synchronous>, transform_indices = @transform_7, window_bounds = array<i64: 4, 4, 64, 64>}, {pipeline_mode = #tpu.pipeline_mode<synchronous>, transform_indices = @transform_8, window_bounds = array<i64: 4, 8, 32>}, {pipeline_mode = #tpu.pipeline_mode<synchronous>, transform_indices = @transform_9, window_bounds = array<i64: 1, 32>}, {transform_indices = @transform_10, window_bounds = array<i64: 4, 64, 32>}]} {
    %c0 = arith.constant 0 : index
    %c0_0 = arith.constant 0 : index
    %c0_1 = arith.constant 0 : index
    %0 = vector.load %arg1[%c0, %c0_0, %c0_1] : memref<4x64x32xf32, #tpu.memory_space<vmem>>, vector<4x64x32xf32>
    %1 = vector.shape_cast %0 : vector<4x64x32xf32> to vector<256x32xf32>
    %c0_2 = arith.constant 0 : index
    %c0_3 = arith.constant 0 : index
    %c0_4 = arith.constant 0 : index
    %2 = vector.load %arg2[%c0_2, %c0_3, %c0_4] : memref<4x32x8xf32, #tpu.memory_space<vmem>>, vector<1x32x8xf32>
    %3 = vector.shape_cast %2 : vector<1x32x8xf32> to vector<32x8xf32>
    %cst = arith.constant dense<0.000000e+00> : vector<256x8xf32>
    %4 = tpu.matmul %1, %3, %cst {dimension_numbers = #tpu.dot_dimension_numbers<[1], [0], [0], [1], [0, 0, 1, 1], [], []>} : vector<256x32xf32>, vector<32x8xf32>, vector<256x8xf32> -> vector<256x8xf32>
    %c0_5 = arith.constant 0 : index
    %c0_6 = arith.constant 0 : index
    %c0_7 = arith.constant 0 : index
    %5 = vector.load %arg5[%c0_5, %c0_6, %c0_7] : memref<4x1x8xf32, #tpu.memory_space<vmem>>, vector<1x1x8xf32>
    %6 = vector.shape_cast %5 : vector<1x1x8xf32> to vector<1x8xf32>
    %7 = vector.broadcast %6 : vector<1x8xf32> to vector<256x8xf32>
    %8 = arith.addf %4, %7 : vector<256x8xf32>
    %c0_8 = arith.constant 0 : index
    %c0_9 = arith.constant 0 : index
    %c0_10 = arith.constant 0 : index
    %9 = vector.load %arg3[%c0_8, %c0_9, %c0_10] : memref<4x32x8xf32, #tpu.memory_space<vmem>>, vector<1x32x8xf32>
    %10 = vector.shape_cast %9 : vector<1x32x8xf32> to vector<32x8xf32>
    %cst_11 = arith.constant dense<0.000000e+00> : vector<256x8xf32>
    %11 = tpu.matmul %1, %10, %cst_11 {dimension_numbers = #tpu.dot_dimension_numbers<[1], [0], [0], [1], [0, 0, 1, 1], [], []>} : vector<256x32xf32>, vector<32x8xf32>, vector<256x8xf32> -> vector<256x8xf32>
    %c0_12 = arith.constant 0 : index
    %c0_13 = arith.constant 0 : index
    %c0_14 = arith.constant 0 : index
    %12 = vector.load %arg6[%c0_12, %c0_13, %c0_14] : memref<4x1x8xf32, #tpu.memory_space<vmem>>, vector<1x1x8xf32>
    %13 = vector.shape_cast %12 : vector<1x1x8xf32> to vector<1x8xf32>
    %14 = vector.broadcast %13 : vector<1x8xf32> to vector<256x8xf32>
    %15 = arith.addf %11, %14 : vector<256x8xf32>
    %c0_15 = arith.constant 0 : index
    %c0_16 = arith.constant 0 : index
    %c0_17 = arith.constant 0 : index
    %16 = vector.load %arg4[%c0_15, %c0_16, %c0_17] : memref<4x32x8xf32, #tpu.memory_space<vmem>>, vector<1x32x8xf32>
    %17 = vector.shape_cast %16 : vector<1x32x8xf32> to vector<32x8xf32>
    %cst_18 = arith.constant dense<0.000000e+00> : vector<256x8xf32>
    %18 = tpu.matmul %1, %17, %cst_18 {dimension_numbers = #tpu.dot_dimension_numbers<[1], [0], [0], [1], [0, 0, 1, 1], [], []>} : vector<256x32xf32>, vector<32x8xf32>, vector<256x8xf32> -> vector<256x8xf32>
    %c0_19 = arith.constant 0 : index
    %c0_20 = arith.constant 0 : index
    %c0_21 = arith.constant 0 : index
    %19 = vector.load %arg7[%c0_19, %c0_20, %c0_21] : memref<4x1x8xf32, #tpu.memory_space<vmem>>, vector<1x1x8xf32>
    %20 = vector.shape_cast %19 : vector<1x1x8xf32> to vector<1x8xf32>
    %21 = vector.broadcast %20 : vector<1x8xf32> to vector<256x8xf32>
    %22 = arith.addf %18, %21 : vector<256x8xf32>
    %23 = vector.shape_cast %8 : vector<256x8xf32> to vector<4x64x8xf32>
    %24 = vector.shape_cast %15 : vector<256x8xf32> to vector<4x64x8xf32>
    %25 = vector.shape_cast %22 : vector<256x8xf32> to vector<4x64x8xf32>
    "tpu.trace_start"() <{level = 10 : i32, message = "wnd,wmd->wnm"}> : () -> ()
    %cst_22 = arith.constant dense<0.000000e+00> : vector<4x64x64xf32>
    %26 = tpu.matmul %23, %24, %cst_22 {dimension_numbers = #tpu.dot_dimension_numbers<[2], [2], [1], [1], [0, 0, 0, 1, 1, 1], [0], [0]>} : vector<4x64x8xf32>, vector<4x64x8xf32>, vector<4x64x64xf32> -> vector<4x64x64xf32>
    "tpu.trace_stop"() : () -> ()
    %c0_23 = arith.constant 0 : index
    %c0_24 = arith.constant 0 : index
    %c0_25 = arith.constant 0 : index
    %c0_26 = arith.constant 0 : index
    %27 = vector.load %arg8[%c0_23, %c0_24, %c0_25, %c0_26] : memref<4x4x64x64xf32, #tpu.memory_space<vmem>>, vector<1x4x64x64xf32>
    %28 = vector.shape_cast %27 : vector<1x4x64x64xf32> to vector<4x64x64xf32>
    %29 = arith.addf %26, %28 : vector<4x64x64xf32>
    %cst_27 = arith.constant dense<0xFF800000> : vector<4x64xf32>
    %30 = vector.multi_reduction <maximumf>, %29, %cst_27 [2] : vector<4x64x64xf32> to vector<4x64xf32>
    %31 = vector.shape_cast %30 : vector<4x64xf32> to vector<4x64x1xf32>
    %32 = vector.broadcast %31 : vector<4x64x1xf32> to vector<4x64x64xf32>
    %33 = arith.subf %29, %32 : vector<4x64x64xf32>
    %34 = math.exp %33 : vector<4x64x64xf32>
    %cst_28 = arith.constant dense<0.000000e+00> : vector<4x64xf32>
    %35 = vector.multi_reduction <add>, %34, %cst_28 [2] : vector<4x64x64xf32> to vector<4x64xf32>
    %36 = vector.shape_cast %35 : vector<4x64xf32> to vector<4x64x1xf32>
    %37 = tpu.reciprocal %36 : vector<4x64x1xf32> -> vector<4x64x1xf32>
    %38 = vector.broadcast %37 : vector<4x64x1xf32> to vector<4x64x64xf32>
    %39 = arith.mulf %34, %38 : vector<4x64x64xf32>
    "tpu.trace_start"() <{level = 10 : i32, message = "wnm,wmd->wnd"}> : () -> ()
    %cst_29 = arith.constant dense<0.000000e+00> : vector<4x64x8xf32>
    %40 = tpu.matmul %39, %25, %cst_29 {dimension_numbers = #tpu.dot_dimension_numbers<[2], [1], [1], [2], [0, 0, 0, 1, 1, 2], [0], [0]>} : vector<4x64x64xf32>, vector<4x64x8xf32>, vector<4x64x8xf32> -> vector<4x64x8xf32>
    "tpu.trace_stop"() : () -> ()
    %41 = vector.shape_cast %40 : vector<4x64x8xf32> to vector<256x8xf32>
    %c0_30 = arith.constant 0 : index
    %c0_31 = arith.constant 0 : index
    %c0_32 = arith.constant 0 : index
    %42 = vector.load %arg9[%c0_30, %c0_31, %c0_32] : memref<4x8x32xf32, #tpu.memory_space<vmem>>, vector<1x8x32xf32>
    %43 = vector.shape_cast %42 : vector<1x8x32xf32> to vector<8x32xf32>
    %cst_33 = arith.constant dense<0.000000e+00> : vector<256x32xf32>
    %44 = tpu.matmul %41, %43, %cst_33 {dimension_numbers = #tpu.dot_dimension_numbers<[1], [0], [0], [1], [0, 0, 1, 1], [], []>} : vector<256x8xf32>, vector<8x32xf32>, vector<256x32xf32> -> vector<256x32xf32>
    %c1 = arith.constant 1 : index
    %c0_34 = arith.constant 0 : index
    %c0_35 = arith.constant 0 : index
    %45 = vector.load %arg2[%c1, %c0_34, %c0_35] : memref<4x32x8xf32, #tpu.memory_space<vmem>>, vector<1x32x8xf32>
    %46 = vector.shape_cast %45 : vector<1x32x8xf32> to vector<32x8xf32>
    %cst_36 = arith.constant dense<0.000000e+00> : vector<256x8xf32>
    %47 = tpu.matmul %1, %46, %cst_36 {dimension_numbers = #tpu.dot_dimension_numbers<[1], [0], [0], [1], [0, 0, 1, 1], [], []>} : vector<256x32xf32>, vector<32x8xf32>, vector<256x8xf32> -> vector<256x8xf32>
    %c1_37 = arith.constant 1 : index
    %c0_38 = arith.constant 0 : index
    %c0_39 = arith.constant 0 : index
    %48 = vector.load %arg5[%c1_37, %c0_38, %c0_39] : memref<4x1x8xf32, #tpu.memory_space<vmem>>, vector<1x1x8xf32>
    %49 = vector.shape_cast %48 : vector<1x1x8xf32> to vector<1x8xf32>
    %50 = vector.broadcast %49 : vector<1x8xf32> to vector<256x8xf32>
    %51 = arith.addf %47, %50 : vector<256x8xf32>
    %c1_40 = arith.constant 1 : index
    %c0_41 = arith.constant 0 : index
    %c0_42 = arith.constant 0 : index
    %52 = vector.load %arg3[%c1_40, %c0_41, %c0_42] : memref<4x32x8xf32, #tpu.memory_space<vmem>>, vector<1x32x8xf32>
    %53 = vector.shape_cast %52 : vector<1x32x8xf32> to vector<32x8xf32>
    %cst_43 = arith.constant dense<0.000000e+00> : vector<256x8xf32>
    %54 = tpu.matmul %1, %53, %cst_43 {dimension_numbers = #tpu.dot_dimension_numbers<[1], [0], [0], [1], [0, 0, 1, 1], [], []>} : vector<256x32xf32>, vector<32x8xf32>, vector<256x8xf32> -> vector<256x8xf32>
    %c1_44 = arith.constant 1 : index
    %c0_45 = arith.constant 0 : index
    %c0_46 = arith.constant 0 : index
    %55 = vector.load %arg6[%c1_44, %c0_45, %c0_46] : memref<4x1x8xf32, #tpu.memory_space<vmem>>, vector<1x1x8xf32>
    %56 = vector.shape_cast %55 : vector<1x1x8xf32> to vector<1x8xf32>
    %57 = vector.broadcast %56 : vector<1x8xf32> to vector<256x8xf32>
    %58 = arith.addf %54, %57 : vector<256x8xf32>
    %c1_47 = arith.constant 1 : index
    %c0_48 = arith.constant 0 : index
    %c0_49 = arith.constant 0 : index
    %59 = vector.load %arg4[%c1_47, %c0_48, %c0_49] : memref<4x32x8xf32, #tpu.memory_space<vmem>>, vector<1x32x8xf32>
    %60 = vector.shape_cast %59 : vector<1x32x8xf32> to vector<32x8xf32>
    %cst_50 = arith.constant dense<0.000000e+00> : vector<256x8xf32>
    %61 = tpu.matmul %1, %60, %cst_50 {dimension_numbers = #tpu.dot_dimension_numbers<[1], [0], [0], [1], [0, 0, 1, 1], [], []>} : vector<256x32xf32>, vector<32x8xf32>, vector<256x8xf32> -> vector<256x8xf32>
    %c1_51 = arith.constant 1 : index
    %c0_52 = arith.constant 0 : index
    %c0_53 = arith.constant 0 : index
    %62 = vector.load %arg7[%c1_51, %c0_52, %c0_53] : memref<4x1x8xf32, #tpu.memory_space<vmem>>, vector<1x1x8xf32>
    %63 = vector.shape_cast %62 : vector<1x1x8xf32> to vector<1x8xf32>
    %64 = vector.broadcast %63 : vector<1x8xf32> to vector<256x8xf32>
    %65 = arith.addf %61, %64 : vector<256x8xf32>
    %66 = vector.shape_cast %51 : vector<256x8xf32> to vector<4x64x8xf32>
    %67 = vector.shape_cast %58 : vector<256x8xf32> to vector<4x64x8xf32>
    %68 = vector.shape_cast %65 : vector<256x8xf32> to vector<4x64x8xf32>
    "tpu.trace_start"() <{level = 10 : i32, message = "wnd,wmd->wnm"}> : () -> ()
    %cst_54 = arith.constant dense<0.000000e+00> : vector<4x64x64xf32>
    %69 = tpu.matmul %66, %67, %cst_54 {dimension_numbers = #tpu.dot_dimension_numbers<[2], [2], [1], [1], [0, 0, 0, 1, 1, 1], [0], [0]>} : vector<4x64x8xf32>, vector<4x64x8xf32>, vector<4x64x64xf32> -> vector<4x64x64xf32>
    "tpu.trace_stop"() : () -> ()
    %c1_55 = arith.constant 1 : index
    %c0_56 = arith.constant 0 : index
    %c0_57 = arith.constant 0 : index
    %c0_58 = arith.constant 0 : index
    %70 = vector.load %arg8[%c1_55, %c0_56, %c0_57, %c0_58] : memref<4x4x64x64xf32, #tpu.memory_space<vmem>>, vector<1x4x64x64xf32>
    %71 = vector.shape_cast %70 : vector<1x4x64x64xf32> to vector<4x64x64xf32>
    %72 = arith.addf %69, %71 : vector<4x64x64xf32>
    %cst_59 = arith.constant dense<0xFF800000> : vector<4x64xf32>
    %73 = vector.multi_reduction <maximumf>, %72, %cst_59 [2] : vector<4x64x64xf32> to vector<4x64xf32>
    %74 = vector.shape_cast %73 : vector<4x64xf32> to vector<4x64x1xf32>
    %75 = vector.broadcast %74 : vector<4x64x1xf32> to vector<4x64x64xf32>
    %76 = arith.subf %72, %75 : vector<4x64x64xf32>
    %77 = math.exp %76 : vector<4x64x64xf32>
    %cst_60 = arith.constant dense<0.000000e+00> : vector<4x64xf32>
    %78 = vector.multi_reduction <add>, %77, %cst_60 [2] : vector<4x64x64xf32> to vector<4x64xf32>
    %79 = vector.shape_cast %78 : vector<4x64xf32> to vector<4x64x1xf32>
    %80 = tpu.reciprocal %79 : vector<4x64x1xf32> -> vector<4x64x1xf32>
    %81 = vector.broadcast %80 : vector<4x64x1xf32> to vector<4x64x64xf32>
    %82 = arith.mulf %77, %81 : vector<4x64x64xf32>
    "tpu.trace_start"() <{level = 10 : i32, message = "wnm,wmd->wnd"}> : () -> ()
    %cst_61 = arith.constant dense<0.000000e+00> : vector<4x64x8xf32>
    %83 = tpu.matmul %82, %68, %cst_61 {dimension_numbers = #tpu.dot_dimension_numbers<[2], [1], [1], [2], [0, 0, 0, 1, 1, 2], [0], [0]>} : vector<4x64x64xf32>, vector<4x64x8xf32>, vector<4x64x8xf32> -> vector<4x64x8xf32>
    "tpu.trace_stop"() : () -> ()
    %84 = vector.shape_cast %83 : vector<4x64x8xf32> to vector<256x8xf32>
    %c1_62 = arith.constant 1 : index
    %c0_63 = arith.constant 0 : index
    %c0_64 = arith.constant 0 : index
    %85 = vector.load %arg9[%c1_62, %c0_63, %c0_64] : memref<4x8x32xf32, #tpu.memory_space<vmem>>, vector<1x8x32xf32>
    %86 = vector.shape_cast %85 : vector<1x8x32xf32> to vector<8x32xf32>
    %cst_65 = arith.constant dense<0.000000e+00> : vector<256x32xf32>
    %87 = tpu.matmul %84, %86, %cst_65 {dimension_numbers = #tpu.dot_dimension_numbers<[1], [0], [0], [1], [0, 0, 1, 1], [], []>} : vector<256x8xf32>, vector<8x32xf32>, vector<256x32xf32> -> vector<256x32xf32>
    %88 = arith.addf %44, %87 : vector<256x32xf32>
    %c2 = arith.constant 2 : index
    %c0_66 = arith.constant 0 : index
    %c0_67 = arith.constant 0 : index
    %89 = vector.load %arg2[%c2, %c0_66, %c0_67] : memref<4x32x8xf32, #tpu.memory_space<vmem>>, vector<1x32x8xf32>
    %90 = vector.shape_cast %89 : vector<1x32x8xf32> to vector<32x8xf32>
    %cst_68 = arith.constant dense<0.000000e+00> : vector<256x8xf32>
    %91 = tpu.matmul %1, %90, %cst_68 {dimension_numbers = #tpu.dot_dimension_numbers<[1], [0], [0], [1], [0, 0, 1, 1], [], []>} : vector<256x32xf32>, vector<32x8xf32>, vector<256x8xf32> -> vector<256x8xf32>
    %c2_69 = arith.constant 2 : index
    %c0_70 = arith.constant 0 : index
    %c0_71 = arith.constant 0 : index
    %92 = vector.load %arg5[%c2_69, %c0_70, %c0_71] : memref<4x1x8xf32, #tpu.memory_space<vmem>>, vector<1x1x8xf32>
    %93 = vector.shape_cast %92 : vector<1x1x8xf32> to vector<1x8xf32>
    %94 = vector.broadcast %93 : vector<1x8xf32> to vector<256x8xf32>
    %95 = arith.addf %91, %94 : vector<256x8xf32>
    %c2_72 = arith.constant 2 : index
    %c0_73 = arith.constant 0 : index
    %c0_74 = arith.constant 0 : index
    %96 = vector.load %arg3[%c2_72, %c0_73, %c0_74] : memref<4x32x8xf32, #tpu.memory_space<vmem>>, vector<1x32x8xf32>
    %97 = vector.shape_cast %96 : vector<1x32x8xf32> to vector<32x8xf32>
    %cst_75 = arith.constant dense<0.000000e+00> : vector<256x8xf32>
    %98 = tpu.matmul %1, %97, %cst_75 {dimension_numbers = #tpu.dot_dimension_numbers<[1], [0], [0], [1], [0, 0, 1, 1], [], []>} : vector<256x32xf32>, vector<32x8xf32>, vector<256x8xf32> -> vector<256x8xf32>
    %c2_76 = arith.constant 2 : index
    %c0_77 = arith.constant 0 : index
    %c0_78 = arith.constant 0 : index
    %99 = vector.load %arg6[%c2_76, %c0_77, %c0_78] : memref<4x1x8xf32, #tpu.memory_space<vmem>>, vector<1x1x8xf32>
    %100 = vector.shape_cast %99 : vector<1x1x8xf32> to vector<1x8xf32>
    %101 = vector.broadcast %100 : vector<1x8xf32> to vector<256x8xf32>
    %102 = arith.addf %98, %101 : vector<256x8xf32>
    %c2_79 = arith.constant 2 : index
    %c0_80 = arith.constant 0 : index
    %c0_81 = arith.constant 0 : index
    %103 = vector.load %arg4[%c2_79, %c0_80, %c0_81] : memref<4x32x8xf32, #tpu.memory_space<vmem>>, vector<1x32x8xf32>
    %104 = vector.shape_cast %103 : vector<1x32x8xf32> to vector<32x8xf32>
    %cst_82 = arith.constant dense<0.000000e+00> : vector<256x8xf32>
    %105 = tpu.matmul %1, %104, %cst_82 {dimension_numbers = #tpu.dot_dimension_numbers<[1], [0], [0], [1], [0, 0, 1, 1], [], []>} : vector<256x32xf32>, vector<32x8xf32>, vector<256x8xf32> -> vector<256x8xf32>
    %c2_83 = arith.constant 2 : index
    %c0_84 = arith.constant 0 : index
    %c0_85 = arith.constant 0 : index
    %106 = vector.load %arg7[%c2_83, %c0_84, %c0_85] : memref<4x1x8xf32, #tpu.memory_space<vmem>>, vector<1x1x8xf32>
    %107 = vector.shape_cast %106 : vector<1x1x8xf32> to vector<1x8xf32>
    %108 = vector.broadcast %107 : vector<1x8xf32> to vector<256x8xf32>
    %109 = arith.addf %105, %108 : vector<256x8xf32>
    %110 = vector.shape_cast %95 : vector<256x8xf32> to vector<4x64x8xf32>
    %111 = vector.shape_cast %102 : vector<256x8xf32> to vector<4x64x8xf32>
    %112 = vector.shape_cast %109 : vector<256x8xf32> to vector<4x64x8xf32>
    "tpu.trace_start"() <{level = 10 : i32, message = "wnd,wmd->wnm"}> : () -> ()
    %cst_86 = arith.constant dense<0.000000e+00> : vector<4x64x64xf32>
    %113 = tpu.matmul %110, %111, %cst_86 {dimension_numbers = #tpu.dot_dimension_numbers<[2], [2], [1], [1], [0, 0, 0, 1, 1, 1], [0], [0]>} : vector<4x64x8xf32>, vector<4x64x8xf32>, vector<4x64x64xf32> -> vector<4x64x64xf32>
    "tpu.trace_stop"() : () -> ()
    %c2_87 = arith.constant 2 : index
    %c0_88 = arith.constant 0 : index
    %c0_89 = arith.constant 0 : index
    %c0_90 = arith.constant 0 : index
    %114 = vector.load %arg8[%c2_87, %c0_88, %c0_89, %c0_90] : memref<4x4x64x64xf32, #tpu.memory_space<vmem>>, vector<1x4x64x64xf32>
    %115 = vector.shape_cast %114 : vector<1x4x64x64xf32> to vector<4x64x64xf32>
    %116 = arith.addf %113, %115 : vector<4x64x64xf32>
    %cst_91 = arith.constant dense<0xFF800000> : vector<4x64xf32>
    %117 = vector.multi_reduction <maximumf>, %116, %cst_91 [2] : vector<4x64x64xf32> to vector<4x64xf32>
    %118 = vector.shape_cast %117 : vector<4x64xf32> to vector<4x64x1xf32>
    %119 = vector.broadcast %118 : vector<4x64x1xf32> to vector<4x64x64xf32>
    %120 = arith.subf %116, %119 : vector<4x64x64xf32>
    %121 = math.exp %120 : vector<4x64x64xf32>
    %cst_92 = arith.constant dense<0.000000e+00> : vector<4x64xf32>
    %122 = vector.multi_reduction <add>, %121, %cst_92 [2] : vector<4x64x64xf32> to vector<4x64xf32>
    %123 = vector.shape_cast %122 : vector<4x64xf32> to vector<4x64x1xf32>
    %124 = tpu.reciprocal %123 : vector<4x64x1xf32> -> vector<4x64x1xf32>
    %125 = vector.broadcast %124 : vector<4x64x1xf32> to vector<4x64x64xf32>
    %126 = arith.mulf %121, %125 : vector<4x64x64xf32>
    "tpu.trace_start"() <{level = 10 : i32, message = "wnm,wmd->wnd"}> : () -> ()
    %cst_93 = arith.constant dense<0.000000e+00> : vector<4x64x8xf32>
    %127 = tpu.matmul %126, %112, %cst_93 {dimension_numbers = #tpu.dot_dimension_numbers<[2], [1], [1], [2], [0, 0, 0, 1, 1, 2], [0], [0]>} : vector<4x64x64xf32>, vector<4x64x8xf32>, vector<4x64x8xf32> -> vector<4x64x8xf32>
    "tpu.trace_stop"() : () -> ()
    %128 = vector.shape_cast %127 : vector<4x64x8xf32> to vector<256x8xf32>
    %c2_94 = arith.constant 2 : index
    %c0_95 = arith.constant 0 : index
    %c0_96 = arith.constant 0 : index
    %129 = vector.load %arg9[%c2_94, %c0_95, %c0_96] : memref<4x8x32xf32, #tpu.memory_space<vmem>>, vector<1x8x32xf32>
    %130 = vector.shape_cast %129 : vector<1x8x32xf32> to vector<8x32xf32>
    %cst_97 = arith.constant dense<0.000000e+00> : vector<256x32xf32>
    %131 = tpu.matmul %128, %130, %cst_97 {dimension_numbers = #tpu.dot_dimension_numbers<[1], [0], [0], [1], [0, 0, 1, 1], [], []>} : vector<256x8xf32>, vector<8x32xf32>, vector<256x32xf32> -> vector<256x32xf32>
    %132 = arith.addf %88, %131 : vector<256x32xf32>
    %c3 = arith.constant 3 : index
    %c0_98 = arith.constant 0 : index
    %c0_99 = arith.constant 0 : index
    %133 = vector.load %arg2[%c3, %c0_98, %c0_99] : memref<4x32x8xf32, #tpu.memory_space<vmem>>, vector<1x32x8xf32>
    %134 = vector.shape_cast %133 : vector<1x32x8xf32> to vector<32x8xf32>
    %cst_100 = arith.constant dense<0.000000e+00> : vector<256x8xf32>
    %135 = tpu.matmul %1, %134, %cst_100 {dimension_numbers = #tpu.dot_dimension_numbers<[1], [0], [0], [1], [0, 0, 1, 1], [], []>} : vector<256x32xf32>, vector<32x8xf32>, vector<256x8xf32> -> vector<256x8xf32>
    %c3_101 = arith.constant 3 : index
    %c0_102 = arith.constant 0 : index
    %c0_103 = arith.constant 0 : index
    %136 = vector.load %arg5[%c3_101, %c0_102, %c0_103] : memref<4x1x8xf32, #tpu.memory_space<vmem>>, vector<1x1x8xf32>
    %137 = vector.shape_cast %136 : vector<1x1x8xf32> to vector<1x8xf32>
    %138 = vector.broadcast %137 : vector<1x8xf32> to vector<256x8xf32>
    %139 = arith.addf %135, %138 : vector<256x8xf32>
    %c3_104 = arith.constant 3 : index
    %c0_105 = arith.constant 0 : index
    %c0_106 = arith.constant 0 : index
    %140 = vector.load %arg3[%c3_104, %c0_105, %c0_106] : memref<4x32x8xf32, #tpu.memory_space<vmem>>, vector<1x32x8xf32>
    %141 = vector.shape_cast %140 : vector<1x32x8xf32> to vector<32x8xf32>
    %cst_107 = arith.constant dense<0.000000e+00> : vector<256x8xf32>
    %142 = tpu.matmul %1, %141, %cst_107 {dimension_numbers = #tpu.dot_dimension_numbers<[1], [0], [0], [1], [0, 0, 1, 1], [], []>} : vector<256x32xf32>, vector<32x8xf32>, vector<256x8xf32> -> vector<256x8xf32>
    %c3_108 = arith.constant 3 : index
    %c0_109 = arith.constant 0 : index
    %c0_110 = arith.constant 0 : index
    %143 = vector.load %arg6[%c3_108, %c0_109, %c0_110] : memref<4x1x8xf32, #tpu.memory_space<vmem>>, vector<1x1x8xf32>
    %144 = vector.shape_cast %143 : vector<1x1x8xf32> to vector<1x8xf32>
    %145 = vector.broadcast %144 : vector<1x8xf32> to vector<256x8xf32>
    %146 = arith.addf %142, %145 : vector<256x8xf32>
    %c3_111 = arith.constant 3 : index
    %c0_112 = arith.constant 0 : index
    %c0_113 = arith.constant 0 : index
    %147 = vector.load %arg4[%c3_111, %c0_112, %c0_113] : memref<4x32x8xf32, #tpu.memory_space<vmem>>, vector<1x32x8xf32>
    %148 = vector.shape_cast %147 : vector<1x32x8xf32> to vector<32x8xf32>
    %cst_114 = arith.constant dense<0.000000e+00> : vector<256x8xf32>
    %149 = tpu.matmul %1, %148, %cst_114 {dimension_numbers = #tpu.dot_dimension_numbers<[1], [0], [0], [1], [0, 0, 1, 1], [], []>} : vector<256x32xf32>, vector<32x8xf32>, vector<256x8xf32> -> vector<256x8xf32>
    %c3_115 = arith.constant 3 : index
    %c0_116 = arith.constant 0 : index
    %c0_117 = arith.constant 0 : index
    %150 = vector.load %arg7[%c3_115, %c0_116, %c0_117] : memref<4x1x8xf32, #tpu.memory_space<vmem>>, vector<1x1x8xf32>
    %151 = vector.shape_cast %150 : vector<1x1x8xf32> to vector<1x8xf32>
    %152 = vector.broadcast %151 : vector<1x8xf32> to vector<256x8xf32>
    %153 = arith.addf %149, %152 : vector<256x8xf32>
    %154 = vector.shape_cast %139 : vector<256x8xf32> to vector<4x64x8xf32>
    %155 = vector.shape_cast %146 : vector<256x8xf32> to vector<4x64x8xf32>
    %156 = vector.shape_cast %153 : vector<256x8xf32> to vector<4x64x8xf32>
    "tpu.trace_start"() <{level = 10 : i32, message = "wnd,wmd->wnm"}> : () -> ()
    %cst_118 = arith.constant dense<0.000000e+00> : vector<4x64x64xf32>
    %157 = tpu.matmul %154, %155, %cst_118 {dimension_numbers = #tpu.dot_dimension_numbers<[2], [2], [1], [1], [0, 0, 0, 1, 1, 1], [0], [0]>} : vector<4x64x8xf32>, vector<4x64x8xf32>, vector<4x64x64xf32> -> vector<4x64x64xf32>
    "tpu.trace_stop"() : () -> ()
    %c3_119 = arith.constant 3 : index
    %c0_120 = arith.constant 0 : index
    %c0_121 = arith.constant 0 : index
    %c0_122 = arith.constant 0 : index
    %158 = vector.load %arg8[%c3_119, %c0_120, %c0_121, %c0_122] : memref<4x4x64x64xf32, #tpu.memory_space<vmem>>, vector<1x4x64x64xf32>
    %159 = vector.shape_cast %158 : vector<1x4x64x64xf32> to vector<4x64x64xf32>
    %160 = arith.addf %157, %159 : vector<4x64x64xf32>
    %cst_123 = arith.constant dense<0xFF800000> : vector<4x64xf32>
    %161 = vector.multi_reduction <maximumf>, %160, %cst_123 [2] : vector<4x64x64xf32> to vector<4x64xf32>
    %162 = vector.shape_cast %161 : vector<4x64xf32> to vector<4x64x1xf32>
    %163 = vector.broadcast %162 : vector<4x64x1xf32> to vector<4x64x64xf32>
    %164 = arith.subf %160, %163 : vector<4x64x64xf32>
    %165 = math.exp %164 : vector<4x64x64xf32>
    %cst_124 = arith.constant dense<0.000000e+00> : vector<4x64xf32>
    %166 = vector.multi_reduction <add>, %165, %cst_124 [2] : vector<4x64x64xf32> to vector<4x64xf32>
    %167 = vector.shape_cast %166 : vector<4x64xf32> to vector<4x64x1xf32>
    %168 = tpu.reciprocal %167 : vector<4x64x1xf32> -> vector<4x64x1xf32>
    %169 = vector.broadcast %168 : vector<4x64x1xf32> to vector<4x64x64xf32>
    %170 = arith.mulf %165, %169 : vector<4x64x64xf32>
    "tpu.trace_start"() <{level = 10 : i32, message = "wnm,wmd->wnd"}> : () -> ()
    %cst_125 = arith.constant dense<0.000000e+00> : vector<4x64x8xf32>
    %171 = tpu.matmul %170, %156, %cst_125 {dimension_numbers = #tpu.dot_dimension_numbers<[2], [1], [1], [2], [0, 0, 0, 1, 1, 2], [0], [0]>} : vector<4x64x64xf32>, vector<4x64x8xf32>, vector<4x64x8xf32> -> vector<4x64x8xf32>
    "tpu.trace_stop"() : () -> ()
    %172 = vector.shape_cast %171 : vector<4x64x8xf32> to vector<256x8xf32>
    %c3_126 = arith.constant 3 : index
    %c0_127 = arith.constant 0 : index
    %c0_128 = arith.constant 0 : index
    %173 = vector.load %arg9[%c3_126, %c0_127, %c0_128] : memref<4x8x32xf32, #tpu.memory_space<vmem>>, vector<1x8x32xf32>
    %174 = vector.shape_cast %173 : vector<1x8x32xf32> to vector<8x32xf32>
    %cst_129 = arith.constant dense<0.000000e+00> : vector<256x32xf32>
    %175 = tpu.matmul %172, %174, %cst_129 {dimension_numbers = #tpu.dot_dimension_numbers<[1], [0], [0], [1], [0, 0, 1, 1], [], []>} : vector<256x8xf32>, vector<8x32xf32>, vector<256x32xf32> -> vector<256x32xf32>
    %176 = arith.addf %132, %175 : vector<256x32xf32>
    %c0_130 = arith.constant 0 : index
    %c0_131 = arith.constant 0 : index
    %177 = vector.load %arg10[%c0_130, %c0_131] : memref<1x32xf32, #tpu.memory_space<vmem>>, vector<1x32xf32>
    %178 = vector.broadcast %177 : vector<1x32xf32> to vector<256x32xf32>
    %179 = arith.addf %176, %178 : vector<256x32xf32>
    %180 = vector.shape_cast %179 : vector<256x32xf32> to vector<4x64x32xf32>
    %c0_132 = arith.constant 0 : index
    %c0_133 = arith.constant 0 : index
    %c0_134 = arith.constant 0 : index
    %181 = vector.load %arg11[%c0_132, %c0_133, %c0_134] : memref<4x64x32xf32, #tpu.memory_space<vmem>>, vector<4x64x32xf32>
    tpu.vector_store %arg11[%c0_132, %c0_133, %c0_134], %180 {strides = array<i32>} : memref<4x64x32xf32, #tpu.memory_space<vmem>>, vector<4x64x32xf32>,
    return
  }
  func.func @transform_0(%arg0: i32) -> (i32, i32, i32) {
    %c0_i32 = arith.constant 0 : i32
    %c0_i32_0 = arith.constant 0 : i32
    %c0_i32_1 = arith.constant 0 : i32
    return %arg0, %c0_i32, %c0_i32_0 : i32, i32, i32
  }
  func.func @transform_1(%arg0: i32) -> (i32, i32, i32) {
    %c0_i32 = arith.constant 0 : i32
    %c0_i32_0 = arith.constant 0 : i32
    %c0_i32_1 = arith.constant 0 : i32
    %c0_i32_2 = arith.constant 0 : i32
    return %c0_i32, %c0_i32_0, %c0_i32_1 : i32, i32, i32
  }
  func.func @transform_2(%arg0: i32) -> (i32, i32, i32) {
    %c0_i32 = arith.constant 0 : i32
    %c0_i32_0 = arith.constant 0 : i32
    %c0_i32_1 = arith.constant 0 : i32
    %c0_i32_2 = arith.constant 0 : i32
    return %c0_i32, %c0_i32_0, %c0_i32_1 : i32, i32, i32
  }
  func.func @transform_3(%arg0: i32) -> (i32, i32, i32) {
    %c0_i32 = arith.constant 0 : i32
    %c0_i32_0 = arith.constant 0 : i32
    %c0_i32_1 = arith.constant 0 : i32
    %c0_i32_2 = arith.constant 0 : i32
    return %c0_i32, %c0_i32_0, %c0_i32_1 : i32, i32, i32
  }
  func.func @transform_4(%arg0: i32) -> (i32, i32, i32) {
    %c0_i32 = arith.constant 0 : i32
    %c0_i32_0 = arith.constant 0 : i32
    %c0_i32_1 = arith.constant 0 : i32
    %c0_i32_2 = arith.constant 0 : i32
    return %c0_i32, %c0_i32_0, %c0_i32_1 : i32, i32, i32
  }
  func.func @transform_5(%arg0: i32) -> (i32, i32, i32) {
    %c0_i32 = arith.constant 0 : i32
    %c0_i32_0 = arith.constant 0 : i32
    %c0_i32_1 = arith.constant 0 : i32
    %c0_i32_2 = arith.constant 0 : i32
    return %c0_i32, %c0_i32_0, %c0_i32_1 : i32, i32, i32
  }
  func.func @transform_6(%arg0: i32) -> (i32, i32, i32) {
    %c0_i32 = arith.constant 0 : i32
    %c0_i32_0 = arith.constant 0 : i32
    %c0_i32_1 = arith.constant 0 : i32
    %c0_i32_2 = arith.constant 0 : i32
    return %c0_i32, %c0_i32_0, %c0_i32_1 : i32, i32, i32
  }
  func.func @transform_7(%arg0: i32) -> (i32, i32, i32, i32) {
    %c0_i32 = arith.constant 0 : i32
    %c0_i32_0 = arith.constant 0 : i32
    %c0_i32_1 = arith.constant 0 : i32
    %c0_i32_2 = arith.constant 0 : i32
    %c0_i32_3 = arith.constant 0 : i32
    return %c0_i32, %c0_i32_0, %c0_i32_1, %c0_i32_2 : i32, i32, i32, i32
  }
  func.func @transform_8(%arg0: i32) -> (i32, i32, i32) {
    %c0_i32 = arith.constant 0 : i32
    %c0_i32_0 = arith.constant 0 : i32
    %c0_i32_1 = arith.constant 0 : i32
    %c0_i32_2 = arith.constant 0 : i32
    return %c0_i32, %c0_i32_0, %c0_i32_1 : i32, i32, i32
  }
  func.func @transform_9(%arg0: i32) -> (i32, i32) {
    %c0_i32 = arith.constant 0 : i32
    %c0_i32_0 = arith.constant 0 : i32
    %c0_i32_1 = arith.constant 0 : i32
    return %c0_i32, %c0_i32_0 : i32, i32
  }
  func.func @transform_10(%arg0: i32) -> (i32, i32, i32) {
    %c0_i32 = arith.constant 0 : i32
    %c0_i32_0 = arith.constant 0 : i32
    %c0_i32_1 = arith.constant 0 : i32
    return %arg0, %c0_i32, %c0_i32_0 : i32, i32, i32
  }
}

</mosaic_0001>

<llo_original>
// kernel: tpu_custom_call.1
$region0: #{tpu_custom_call.1}
  #allocation0 [shape = 'u32[]', space=smem, size = 0x4, offset = 0x4, fixed_abs, tag = 'smem constant byte address 0x4 - core index']
  #allocation1 [shape = 'u32[144,128]{1,0:T(1,128)}', space=vmem, size = 0x12000, scoped, tag = 'internal scratch']
  %s0 = inlined_call_operand.vmem [shape: f32[8,64,32], index: 0, kind: input, shape index: {}]
  %s1 = inlined_call_operand.vmem [shape: f32[4,32,8], index: 1, kind: input, shape index: {}]
  %s2 = inlined_call_operand.vmem [shape: f32[4,32,8], index: 2, kind: input, shape index: {}]
  %s3 = inlined_call_operand.vmem [shape: f32[4,32,8], index: 3, kind: input, shape index: {}]
  %s4 = inlined_call_operand.vmem [shape: f32[4,1,8], index: 4, kind: input, shape index: {}]
  %s5 = inlined_call_operand.vmem [shape: f32[4,1,8], index: 5, kind: input, shape index: {}]
  %s6 = inlined_call_operand.vmem [shape: f32[4,1,8], index: 6, kind: input, shape index: {}]
  %s7 = inlined_call_operand.vmem [shape: f32[4,4,64,64], index: 7, kind: input, shape index: {}]
  %s8 = inlined_call_operand.vmem [shape: f32[4,8,32], index: 8, kind: input, shape index: {}]
  %s9 = inlined_call_operand.vmem [shape: f32[1,32], index: 9, kind: input, shape index: {}]
  %s10 = inlined_call_operand.vmem [shape: f32[8,64,32], index: 10, kind: output, shape index: {}]
  %s11 = sld [smem:[#allocation0]]
  $region73: #{tpu_custom_call.1} parent=0
    _
  %s13 = ssub.s32 1, %s11
  %s14 = scalar_select 0, %s13, %s11
  loop: start=0, step=1, limit=4
  $region2: #{tpu_custom_call.1} parent=0 // loop_pre_header
    _
  $region3: #{tpu_custom_call.1} parent=0 // loop_header
    %s16 = sphi 0, %s20
    %p17 = scmp.ge.s32.totalorder %s16, 4
    %s26 = sphi 0, %s28
    %s29 = sphi 0, %s26
    %s30 = sphi 0, %s29
    %s46 = sphi 0, %s30
    %s50 = sphi 0, %s50
    %s52 = sphi 0, %s50
    %s53 = sphi 0, %s52
    %s67 = sphi 0, %s53
    %s71 = sphi 0, %s71
    %s73 = sphi 0, %s71
    %s74 = sphi 0, %s73
    %s88 = sphi 0, %s74
    %s92 = sphi 0, %s92
    %s94 = sphi 0, %s92
    %s95 = sphi 0, %s94
    %s109 = sphi 0, %s95
    %s113 = sphi 0, %s113
    %s115 = sphi 0, %s113
    %s116 = sphi 0, %s115
    %s130 = sphi 0, %s116
    %s134 = sphi 0, %s134
    %s136 = sphi 0, %s134
    %s137 = sphi 0, %s136
    %s151 = sphi 0, %s137
    %s155 = sphi 0, %s155
    %s157 = sphi 0, %s155
    %s158 = sphi 0, %s157
    %s172 = sphi 0, %s158
    %s176 = sphi 0, %s176
    %s178 = sphi 0, %s176
    %s179 = sphi 0, %s178
    %s193 = sphi 0, %s179
    %s197 = sphi 0, %s197
    %s199 = sphi 0, %s197
    %s200 = sphi 0, %s199
    %s214 = sphi 0, %s200
    %s218 = sphi 0, %s218
    %s220 = sphi 0, %s218
    %s221 = sphi 0, %s220
    %s235 = sphi 0, %s221
    %s241 = sphi 0, %s243
    %s244 = sphi 0, %s241
    %s245 = sphi 0, %s244
    %s261 = sphi 0, %s245
  $region4: #{tpu_custom_call.1} parent=0 // loop_header_branch
    %19 = sbr.rel (%p17) target = $region8
  $region5: #{tpu_custom_call.1} parent=0 // loop_body
    %s21 = ssub.s32 %s16, 1
    %s22 = ssub.s32 %s16, 2
    %s23 = sadd.s32 %s16, 1
    %s24 = ssub.s32 %s16, %s23
    %p25 = scmp.eq.s32.totalorder %s24, 0
    %s27 = sadd.s32 %s26, 1
    %s28 = scalar_select %p25, %s26, %s27
    %p31 = pneg %p25
    %p32 = scmp.eq.s32.totalorder %s16, 1
    %p33 = por %p31, %p32
    %p34 = scmp.ne.s32.totalorder %s26, %s29
    %p35 = scmp.eq.s32.totalorder %s16, 0
    %p36 = por %p34, %p35
    %p37 = scmp.ne.s32.totalorder %s26, %s29
    %p38 = scmp.eq.s32.totalorder %s21, 1
    %p39 = por %p37, %p38
    %p40 = scmp.ne.s32.totalorder %s29, %s30
    %p41 = scmp.eq.s32.totalorder %s21, 0
    %p42 = por %p40, %p41
    %p43 = scmp.ne.s32.totalorder %s29, %s30
    %p44 = scmp.eq.s32.totalorder %s22, 1
    %p45 = por %p43, %p44
    %p47 = scmp.ne.s32.totalorder %s30, %s46
    %p48 = scmp.eq.s32.totalorder %s22, 0
    %p49 = por %p47, %p48
    %s51 = sadd.s32 %s50, 1
    %p54 = scmp.eq.s32.totalorder %s16, 1
    %p55 = scmp.ne.s32.totalorder %s50, %s52
    %p56 = scmp.eq.s32.totalorder %s16, 0
    %p57 = por %p55, %p56
    %p58 = scmp.ne.s32.totalorder %s50, %s52
    %p59 = scmp.eq.s32.totalorder %s21, 1
    %p60 = por %p58, %p59
    %p61 = scmp.ne.s32.totalorder %s52, %s53
    %p62 = scmp.eq.s32.totalorder %s21, 0
    %p63 = por %p61, %p62
    %p64 = scmp.ne.s32.totalorder %s52, %s53
    %p65 = scmp.eq.s32.totalorder %s22, 1
    %p66 = por %p64, %p65
    %p68 = scmp.ne.s32.totalorder %s53, %s67
    %p69 = scmp.eq.s32.totalorder %s22, 0
    %p70 = por %p68, %p69
    %s72 = sadd.s32 %s71, 1
    %p75 = scmp.eq.s32.totalorder %s16, 1
    %p76 = scmp.ne.s32.totalorder %s71, %s73
    %p77 = scmp.eq.s32.totalorder %s16, 0
    %p78 = por %p76, %p77
    %p79 = scmp.ne.s32.totalorder %s71, %s73
    %p80 = scmp.eq.s32.totalorder %s21, 1
    %p81 = por %p79, %p80
    %p82 = scmp.ne.s32.totalorder %s73, %s74
    %p83 = scmp.eq.s32.totalorder %s21, 0
    %p84 = por %p82, %p83
    %p85 = scmp.ne.s32.totalorder %s73, %s74
    %p86 = scmp.eq.s32.totalorder %s22, 1
    %p87 = por %p85, %p86
    %p89 = scmp.ne.s32.totalorder %s74, %s88
    %p90 = scmp.eq.s32.totalorder %s22, 0
    %p91 = por %p89, %p90
    %s93 = sadd.s32 %s92, 1
    %p96 = scmp.eq.s32.totalorder %s16, 1
    %p97 = scmp.ne.s32.totalorder %s92, %s94
    %p98 = scmp.eq.s32.totalorder %s16, 0
    %p99 = por %p97, %p98
    %p100 = scmp.ne.s32.totalorder %s92, %s94
    %p101 = scmp.eq.s32.totalorder %s21, 1
    %p102 = por %p100, %p101
    %p103 = scmp.ne.s32.totalorder %s94, %s95
    %p104 = scmp.eq.s32.totalorder %s21, 0
    %p105 = por %p103, %p104
    %p106 = scmp.ne.s32.totalorder %s94, %s95
    %p107 = scmp.eq.s32.totalorder %s22, 1
    %p108 = por %p106, %p107
    %p110 = scmp.ne.s32.totalorder %s95, %s109
    %p111 = scmp.eq.s32.totalorder %s22, 0
    %p112 = por %p110, %p111
    %s114 = sadd.s32 %s113, 1
    %p117 = scmp.eq.s32.totalorder %s16, 1
    %p118 = scmp.ne.s32.totalorder %s113, %s115
    %p119 = scmp.eq.s32.totalorder %s16, 0
    %p120 = por %p118, %p119
    %p121 = scmp.ne.s32.totalorder %s113, %s115
    %p122 = scmp.eq.s32.totalorder %s21, 1
    %p123 = por %p121, %p122
    %p124 = scmp.ne.s32.totalorder %s115, %s116
    %p125 = scmp.eq.s32.totalorder %s21, 0
    %p126 = por %p124, %p125
    %p127 = scmp.ne.s32.totalorder %s115, %s116
    %p128 = scmp.eq.s32.totalorder %s22, 1
    %p129 = por %p127, %p128
    %p131 = scmp.ne.s32.totalorder %s116, %s130
    %p132 = scmp.eq.s32.totalorder %s22, 0
    %p133 = por %p131, %p132
    %s135 = sadd.s32 %s134, 1
    %p138 = scmp.eq.s32.totalorder %s16, 1
    %p139 = scmp.ne.s32.totalorder %s134, %s136
    %p140 = scmp.eq.s32.totalorder %s16, 0
    %p141 = por %p139, %p140
    %p142 = scmp.ne.s32.totalorder %s134, %s136
    %p143 = scmp.eq.s32.totalorder %s21, 1
    %p144 = por %p142, %p143
    %p145 = scmp.ne.s32.totalorder %s136, %s137
    %p146 = scmp.eq.s32.totalorder %s21, 0
    %p147 = por %p145, %p146
    %p148 = scmp.ne.s32.totalorder %s136, %s137
    %p149 = scmp.eq.s32.totalorder %s22, 1
    %p150 = por %p148, %p149
    %p152 = scmp.ne.s32.totalorder %s137, %s151
    %p153 = scmp.eq.s32.totalorder %s22, 0
    %p154 = por %p152, %p153
    %s156 = sadd.s32 %s155, 1
    %p159 = scmp.eq.s32.totalorder %s16, 1
    %p160 = scmp.ne.s32.totalorder %s155, %s157
    %p161 = scmp.eq.s32.totalorder %s16, 0
    %p162 = por %p160, %p161
    %p163 = scmp.ne.s32.totalorder %s155, %s157
    %p164 = scmp.eq.s32.totalorder %s21, 1
    %p165 = por %p163, %p164
    %p166 = scmp.ne.s32.totalorder %s157, %s158
    %p167 = scmp.eq.s32.totalorder %s21, 0
    %p168 = por %p166, %p167
    %p169 = scmp.ne.s32.totalorder %s157, %s158
    %p170 = scmp.eq.s32.totalorder %s22, 1
    %p171 = por %p169, %p170
    %p173 = scmp.ne.s32.totalorder %s158, %s172
    %p174 = scmp.eq.s32.totalorder %s22, 0
    %p175 = por %p173, %p174
    %s177 = sadd.s32 %s176, 1
    %p180 = scmp.eq.s32.totalorder %s16, 1
    %p181 = scmp.ne.s32.totalorder %s176, %s178
    %p182 = scmp.eq.s32.totalorder %s16, 0
    %p183 = por %p181, %p182
    %p184 = scmp.ne.s32.totalorder %s176, %s178
    %p185 = scmp.eq.s32.totalorder %s21, 1
    %p186 = por %p184, %p185
    %p187 = scmp.ne.s32.totalorder %s178, %s179
    %p188 = scmp.eq.s32.totalorder %s21, 0
    %p189 = por %p187, %p188
    %p190 = scmp.ne.s32.totalorder %s178, %s179
    %p191 = scmp.eq.s32.totalorder %s22, 1
    %p192 = por %p190, %p191
    %p194 = scmp.ne.s32.totalorder %s179, %s193
    %p195 = scmp.eq.s32.totalorder %s22, 0
    %p196 = por %p194, %p195
    %s198 = sadd.s32 %s197, 1
    %p201 = scmp.eq.s32.totalorder %s16, 1
    %p202 = scmp.ne.s32.totalorder %s197, %s199
    %p203 = scmp.eq.s32.totalorder %s16, 0
    %p204 = por %p202, %p203
    %p205 = scmp.ne.s32.totalorder %s197, %s199
    %p206 = scmp.eq.s32.totalorder %s21, 1
    %p207 = por %p205, %p206
    %p208 = scmp.ne.s32.totalorder %s199, %s200
    %p209 = scmp.eq.s32.totalorder %s21, 0
    %p210 = por %p208, %p209
    %p211 = scmp.ne.s32.totalorder %s199, %s200
    %p212 = scmp.eq.s32.totalorder %s22, 1
    %p213 = por %p211, %p212
    %p215 = scmp.ne.s32.totalorder %s200, %s214
    %p216 = scmp.eq.s32.totalorder %s22, 0
    %p217 = por %p215, %p216
    %s219 = sadd.s32 %s218, 1
    %p222 = scmp.eq.s32.totalorder %s16, 1
    %p223 = scmp.ne.s32.totalorder %s218, %s220
    %p224 = scmp.eq.s32.totalorder %s16, 0
    %p225 = por %p223, %p224
    %p226 = scmp.ne.s32.totalorder %s218, %s220
    %p227 = scmp.eq.s32.totalorder %s21, 1
    %p228 = por %p226, %p227
    %p229 = scmp.ne.s32.totalorder %s220, %s221
    %p230 = scmp.eq.s32.totalorder %s21, 0
    %p231 = por %p229, %p230
    %p232 = scmp.ne.s32.totalorder %s220, %s221
    %p233 = scmp.eq.s32.totalorder %s22, 1
    %p234 = por %p232, %p233
    %p236 = scmp.ne.s32.totalorder %s221, %s235
    %p237 = scmp.eq.s32.totalorder %s22, 0
    %p238 = por %p236, %p237
    %s239 = ssub.s32 %s16, %s23
    %p240 = scmp.eq.s32.totalorder %s239, 0
    %s242 = sadd.s32 %s241, 1
    %s243 = scalar_select %p240, %s241, %s242
    %p246 = pneg %p240
    %p247 = scmp.eq.s32.totalorder %s16, 1
    %p248 = por %p246, %p247
    %p249 = scmp.ne.s32.totalorder %s241, %s244
    %p250 = scmp.eq.s32.totalorder %s16, 0
    %p251 = por %p249, %p250
    %p252 = scmp.ne.s32.totalorder %s241, %s244
    %p253 = scmp.eq.s32.totalorder %s21, 1
    %p254 = por %p252, %p253
    %p255 = scmp.ne.s32.totalorder %s244, %s245
    %p256 = scmp.eq.s32.totalorder %s21, 0
    %p257 = por %p255, %p256
    %p258 = scmp.ne.s32.totalorder %s244, %s245
    %p259 = scmp.eq.s32.totalorder %s22, 1
    %p260 = por %p258, %p259
    %p262 = scmp.ne.s32.totalorder %s245, %s261
    %p263 = scmp.eq.s32.totalorder %s22, 0
    %p264 = por %p262, %p263
    %p265 = scmp.le.s32.totalorder 1, %s16
    %p266 = scmp.lt.s32.totalorder %s16, 3
    %p267 = pnand %p265, %p266
    %p268 = pneg %p267
    // Predicated region
    $region9: #{tpu_custom_call.1} parent=5 // pred_check
      _
    $region10: #{tpu_custom_call.1} parent=5 // pred_check_branch
      %270 = sbr.rel (%p267) target = $region12
    $region11: #{tpu_custom_call.1} parent=5 // pred_region
      %s271 = ssub.s32 %s16, 1
      // Predicated region
      $region13: #{tpu_custom_call.1} parent=11 // pred_check
        %p272 = pneg %p63
      $region14: #{tpu_custom_call.1} parent=11 // pred_check_branch
        %274 = sbr.rel (%p272) target = $region16
      $region15: #{tpu_custom_call.1} parent=11 // pred_region
        _
      $region16: #{tpu_custom_call.1} parent=11 // pred_fallthru
        _
      // Predicated region
      $region17: #{tpu_custom_call.1} parent=11 // pred_check
        %p275 = pneg %p84
      $region18: #{tpu_custom_call.1} parent=11 // pred_check_branch
        %277 = sbr.rel (%p275) target = $region20
      $region19: #{tpu_custom_call.1} parent=11 // pred_region
        _
      $region20: #{tpu_custom_call.1} parent=11 // pred_fallthru
        _
      // Predicated region
      $region21: #{tpu_custom_call.1} parent=11 // pred_check
        %p278 = pneg %p105
      $region22: #{tpu_custom_call.1} parent=11 // pred_check_branch
        %280 = sbr.rel (%p278) target = $region24
      $region23: #{tpu_custom_call.1} parent=11 // pred_region
        _
      $region24: #{tpu_custom_call.1} parent=11 // pred_fallthru
        _
      // Predicated region
      $region25: #{tpu_custom_call.1} parent=11 // pred_check
        %p281 = pneg %p126
      $region26: #{tpu_custom_call.1} parent=11 // pred_check_branch
        %283 = sbr.rel (%p281) target = $region28
      $region27: #{tpu_custom_call.1} parent=11 // pred_region
        _
      $region28: #{tpu_custom_call.1} parent=11 // pred_fallthru
        _
      // Predicated region
      $region29: #{tpu_custom_call.1} parent=11 // pred_check
        %p284 = pneg %p147
      $region30: #{tpu_custom_call.1} parent=11 // pred_check_branch
        %286 = sbr.rel (%p284) target = $region32
      $region31: #{tpu_custom_call.1} parent=11 // pred_region
        _
      $region32: #{tpu_custom_call.1} parent=11 // pred_fallthru
        _
      // Predicated region
      $region33: #{tpu_custom_call.1} parent=11 // pred_check
        %p287 = pneg %p168
      $region34: #{tpu_custom_call.1} parent=11 // pred_check_branch
        %289 = sbr.rel (%p287) target = $region36
      $region35: #{tpu_custom_call.1} parent=11 // pred_region
        _
      $region36: #{tpu_custom_call.1} parent=11 // pred_fallthru
        _
      // Predicated region
      $region37: #{tpu_custom_call.1} parent=11 // pred_check
        %p290 = pneg %p189
      $region38: #{tpu_custom_call.1} parent=11 // pred_check_branch
        %292 = sbr.rel (%p290) target = $region40
      $region39: #{tpu_custom_call.1} parent=11 // pred_region
        _
      $region40: #{tpu_custom_call.1} parent=11 // pred_fallthru
        _
      // Predicated region
      $region41: #{tpu_custom_call.1} parent=11 // pred_check
        %p293 = pneg %p210
      $region42: #{tpu_custom_call.1} parent=11 // pred_check_branch
        %295 = sbr.rel (%p293) target = $region44
      $region43: #{tpu_custom_call.1} parent=11 // pred_region
        _
      $region44: #{tpu_custom_call.1} parent=11 // pred_fallthru
        _
      // Predicated region
      $region45: #{tpu_custom_call.1} parent=11 // pred_check
        %p296 = pneg %p231
      $region46: #{tpu_custom_call.1} parent=11 // pred_check_branch
        %298 = sbr.rel (%p296) target = $region48
      $region47: #{tpu_custom_call.1} parent=11 // pred_region
        _
      $region48: #{tpu_custom_call.1} parent=11 // pred_fallthru
        _
    $region12: #{tpu_custom_call.1} parent=5 // pred_fallthru
      _
    %p299 = scmp.lt.s32.totalorder %s16, 2
    // Predicated region
    $region49: #{tpu_custom_call.1} parent=5 // pred_check
      %p300 = pneg %p299
    $region50: #{tpu_custom_call.1} parent=5 // pred_check_branch
      %302 = sbr.rel (%p300) target = $region52
    $region51: #{tpu_custom_call.1} parent=5 // pred_region
      // Predicated region
      $region53: #{tpu_custom_call.1} parent=51 // pred_check
        %p303 = pneg %p36
      $region54: #{tpu_custom_call.1} parent=51 // pred_check_branch
        %305 = sbr.rel (%p303) target = $region56
      $region55: #{tpu_custom_call.1} parent=51 // pred_region
        %s306 = smul.u32 4, %s16
        %p307 = scmp.lt.s32.totalorder %s306, 7
        %s308 = scalar_select %p307, %s306, 7
        %s309 = smul.addr %s308, 8
        %s310 = smul.addr %s309, 8
        %s311 = scalar_lea.vmem %s0, %s310
        %s312 = smul.u32 4, %s16
      $region56: #{tpu_custom_call.1} parent=51 // pred_fallthru
        _
    $region52: #{tpu_custom_call.1} parent=5 // pred_fallthru
      _
    %p313 = scmp.le.s32.totalorder 1, %s16
    %p314 = scmp.lt.s32.totalorder %s16, 3
    %p315 = pnand %p313, %p314
    %p316 = pneg %p315
    // Predicated region
    $region57: #{tpu_custom_call.1} parent=5 // pred_check
      _
    $region58: #{tpu_custom_call.1} parent=5 // pred_check_branch
      %318 = sbr.rel (%p315) target = $region60
    $region59: #{tpu_custom_call.1} parent=5 // pred_region
      %s319 = ssub.s32 %s16, 1
      %s320 = smul.u32 4, %s21
      %p321 = scmp.lt.s32.totalorder %s320, 7
      %s322 = scalar_select %p321, %s320, 7
      %s323 = smul.addr %s322, 8
      %s324 = smul.addr %s323, 8
      %s325 = scalar_lea.vmem %s0, %s324
      %p326 = pneg %p42
      %p327 = pneg %p39
      %p328 = pneg %p63
      %p329 = pneg %p60
      %p330 = pneg %p84
      %p331 = pneg %p81
      %p332 = pneg %p105
      %p333 = pneg %p102
      %p334 = pneg %p126
      %p335 = pneg %p123
      %p336 = pneg %p147
      %p337 = pneg %p144
      %p338 = pneg %p168
      %p339 = pneg %p165
      %p340 = pneg %p189
      %p341 = pneg %p186
      %p342 = pneg %p210
      %p343 = pneg %p207
      %p344 = pneg %p231
      %p345 = pneg %p228
      %p346 = pneg %p257
      %p347 = pneg %p254
      %s348 = smul.u32 4, %s21
      %p349 = scmp.lt.s32.totalorder %s348, 7
      %s350 = scalar_select %p349, %s348, 7
      %s351 = smul.addr %s350, 8
      %s352 = smul.addr %s351, 8
      %s353 = scalar_lea.vmem %s10, %s352
      %s354 = smul.u32 4, %s21
      %p355 = scmp.lt.s32.totalorder %s354, 7
      %s356 = scalar_select %p355, %s354, 7
      %s357 = smul.addr %s356, 8
      %s358 = smul.addr %s357, 8
      %s359 = scalar_lea.vmem %s0, %s358
      %s360 = smul.u32 4, %s21
      %s361 = smul.u32 4, %s21
      %p362 = scmp.lt.s32.totalorder %s361, 7
      %s363 = scalar_select %p362, %s361, 7
      %s364 = smul.addr %s363, 8
      %s365 = smul.addr %s364, 8
      %s366 = scalar_lea.vmem %s10, %s365
      %s367 = smul.u32 4, %s21
      %v368 = vld [vmem:[%s359] sm:$0xff]
      %v369 = vld [vmem:[%s359 + $0x8] sm:$0xff]
      %v370 = vld [vmem:[%s359 + $0x10] sm:$0xff]
      %v371 = vld [vmem:[%s359 + $0x18] sm:$0xff]
      %v372 = vld [vmem:[%s359 + $0x20] sm:$0xff]
      %v373 = vld [vmem:[%s359 + $0x28] sm:$0xff]
      %v374 = vld [vmem:[%s359 + $0x30] sm:$0xff]
      %v375 = vld [vmem:[%s359 + $0x38] sm:$0xff]
      %v376 = vld [vmem:[%s359 + $0x40] sm:$0xff]
      %v377 = vld [vmem:[%s359 + $0x48] sm:$0xff]
      %v378 = vld [vmem:[%s359 + $0x50] sm:$0xff]
      %v379 = vld [vmem:[%s359 + $0x58] sm:$0xff]
      %v380 = vld [vmem:[%s359 + $0x60] sm:$0xff]
      %v381 = vld [vmem:[%s359 + $0x68] sm:$0xff]
      %v382 = vld [vmem:[%s359 + $0x70] sm:$0xff]
      %v383 = vld [vmem:[%s359 + $0x78] sm:$0xff]
      %v384 = vld [vmem:[%s359 + $0x80] sm:$0xff]
      %v385 = vld [vmem:[%s359 + $0x88] sm:$0xff]
      %v386 = vld [vmem:[%s359 + $0x90] sm:$0xff]
      %v387 = vld [vmem:[%s359 + $0x98] sm:$0xff]
      %v388 = vld [vmem:[%s359 + $0xa0] sm:$0xff]
      %v389 = vld [vmem:[%s359 + $0xa8] sm:$0xff]
      %v390 = vld [vmem:[%s359 + $0xb0] sm:$0xff]
      %v391 = vld [vmem:[%s359 + $0xb8] sm:$0xff]
      %v392 = vld [vmem:[%s359 + $0xc0] sm:$0xff]
      %v393 = vld [vmem:[%s359 + $0xc8] sm:$0xff]
      %v394 = vld [vmem:[%s359 + $0xd0] sm:$0xff]
      %v395 = vld [vmem:[%s359 + $0xd8] sm:$0xff]
      %v396 = vld [vmem:[%s359 + $0xe0] sm:$0xff]
      %v397 = vld [vmem:[%s359 + $0xe8] sm:$0xff]
      %v398 = vld [vmem:[%s359 + $0xf0] sm:$0xff]
      %v399 = vld [vmem:[%s359 + $0xf8] sm:$0xff]
      %v400 = vld [vmem:[%s1] sm:$0xff]
      %v401 = vld [vmem:[%s1 + $0x8] sm:$0xff]
      %v402 = vld [vmem:[%s1 + $0x10] sm:$0xff]
      %v403 = vld [vmem:[%s1 + $0x18] sm:$0xff]
      %v404 = vld [vmem:[%s4] sm:$0x1]
      %v406 = vlaneseq
      %v407 = vshrl.u32 %v406, 7
      %v408 = vsub.s32 0, %v407
      %v409 = vrot.slane %v404, %v408
      %vm411 = vcmask 261120
      %v413 = vsel %vm411, %v368, 0
      %v416 = vsel %vm411, %v369, 0
      %v419 = vsel %vm411, %v370, 0
      %v422 = vsel %vm411, %v371, 0
      %v425 = vsel %vm411, %v372, 0
      %v428 = vsel %vm411, %v373, 0
      %v431 = vsel %vm411, %v374, 0
      %v434 = vsel %vm411, %v375, 0
      %v437 = vsel %vm411, %v376, 0
      %v440 = vsel %vm411, %v377, 0
      %v443 = vsel %vm411, %v378, 0
      %v446 = vsel %vm411, %v379, 0
      %v449 = vsel %vm411, %v380, 0
      %v452 = vsel %vm411, %v381, 0
      %v455 = vsel %vm411, %v382, 0
      %v458 = vsel %vm411, %v383, 0
      %v461 = vsel %vm411, %v384, 0
      %v464 = vsel %vm411, %v385, 0
      %v467 = vsel %vm411, %v386, 0
      %v470 = vsel %vm411, %v387, 0
      %v473 = vsel %vm411, %v388, 0
      %v476 = vsel %vm411, %v389, 0
      %v479 = vsel %vm411, %v390, 0
      %v482 = vsel %vm411, %v391, 0
      %v485 = vsel %vm411, %v392, 0
      %v488 = vsel %vm411, %v393, 0
      %v491 = vsel %vm411, %v394, 0
      %v494 = vsel %vm411, %v395, 0
      %v497 = vsel %vm411, %v396, 0
      %v500 = vsel %vm411, %v397, 0
      %v503 = vsel %vm411, %v398, 0
      %v506 = vsel %vm411, %v399, 0
      %508 = vmatprep.subr.mxu0 0.0
      %509 = vmatpush1.msra.mxu0 0.0
      %510 = vmatprep.subr.mxu0 0.0
      %511 = vmatpush1.msra.mxu0 0.0
      %512 = vmatprep.subr.mxu0 0.0
      %513 = vmatpush1.msra.mxu0 0.0
      %514 = vmatprep.subr.mxu0 0.0
      %515 = vmatpush1.msra.mxu0 0.0
      %516 = vmatprep.subr.mxu0 0.0
      %517 = vmatpush1.msra.mxu0 0.0
      %518 = vmatprep.subr.mxu0 0.0
      %519 = vmatpush1.msra.mxu0 0.0
      %520 = vmatprep.subr.mxu0 0.0
      %521 = vmatpush1.msra.mxu0 0.0
      %522 = vmatprep.subr.mxu0 0.0
      %523 = vmatpush1.msra.mxu0 0.0
      %524 = vmatprep.subr.mxu0 0.0
      %525 = vmatpush1.msra.mxu0 0.0
      %526 = vmatprep.subr.mxu0 0.0
      %527 = vmatpush1.msra.mxu0 0.0
      %528 = vmatprep.subr.mxu0 0.0
      %529 = vmatpush1.msra.mxu0 0.0
      %530 = vmatprep.subr.mxu0 0.0
      %531 = vmatpush1.msra.mxu0 0.0
      %532 = vmatprep.subr.mxu0 0.0
      %533 = vmatpush1.msra.mxu0 %v403
      %534 = vmatprep.subr.mxu0 0.0
      %535 = vmatpush1.msra.mxu0 %v402
      %536 = vmatprep.subr.mxu0 0.0
      %537 = vmatpush1.msra.mxu0 %v401
      %538 = vmatprep.subr.mxu0 0.0
      %539 = vmatpush1.msra.mxu0 %v400
      %540 = vmatprep.subr.mxu0 0.0
      %541 = vmatpush2.msra.mxu0 0.0
      %542 = vmatprep.subr.mxu0 0.0
      %543 = vmatpush2.msra.mxu0 0.0
      %544 = vmatprep.subr.mxu0 0.0
      %545 = vmatpush2.msra.mxu0 0.0
      %546 = vmatprep.subr.mxu0 0.0
      %547 = vmatpush2.msra.mxu0 0.0
      %548 = vmatprep.subr.mxu0 0.0
      %549 = vmatpush2.msra.mxu0 0.0
      %550 = vmatprep.subr.mxu0 0.0
      %551 = vmatpush2.msra.mxu0 0.0
      %552 = vmatprep.subr.mxu0 0.0
      %553 = vmatpush2.msra.mxu0 0.0
      %554 = vmatprep.subr.mxu0 0.0
      %555 = vmatpush2.msra.mxu0 0.0
      %556 = vmatprep.subr.mxu0 0.0
      %557 = vmatpush2.msra.mxu0 0.0
      %558 = vmatprep.subr.mxu0 0.0
      %559 = vmatpush2.msra.mxu0 0.0
      %560 = vmatprep.subr.mxu0 0.0
      %561 = vmatpush2.msra.mxu0 0.0
      %562 = vmatprep.subr.mxu0 0.0
      %563 = vmatpush2.msra.mxu0 0.0
      %564 = vmatprep.subr.mxu0 0.0
      %565 = vmatpush2.msra.mxu0 0.0
      %566 = vmatprep.subr.mxu0 0.0
      %567 = vmatpush2.msra.mxu0 0.0
      %568 = vmatprep.subr.mxu0 0.0
      %569 = vmatpush2.msra.mxu0 0.0
      %570 = vmatprep.subr.mxu0 0.0
      %571 = vmatpush2.msra.mxu0 0.0
      %572 = vmatprep.mubr.f32.mxu0 0.0
      %573 = vmatmul.mubr.f32.gmra.mxu0 %v413
      %v574 = vpop.f32.mrf.mxu0
      %v575 = vadd.f32 %v409, %v574
      %v576 = vpop.f32.mrf.mxu0
      %577 = vmatprep.mubr.f32.mxu0 0.0
      %578 = vmatmul.mubr.f32.gmra.mxu0 %v416
      %v579 = vpop.f32.mrf.mxu0
      %v580 = vadd.f32 %v409, %v579
      %v581 = vpop.f32.mrf.mxu0
      %582 = vmatprep.mubr.f32.mxu0 0.0
      %583 = vmatmul.mubr.f32.gmra.mxu0 %v419
      %v584 = vpop.f32.mrf.mxu0
      %v585 = vadd.f32 %v409, %v584
      %v586 = vpop.f32.mrf.mxu0
      %587 = vmatprep.mubr.f32.mxu0 0.0
      %588 = vmatmul.mubr.f32.gmra.mxu0 %v422
      %v589 = vpop.f32.mrf.mxu0
      %v590 = vadd.f32 %v409, %v589
      %v591 = vpop.f32.mrf.mxu0
      %592 = vmatprep.mubr.f32.mxu0 0.0
      %593 = vmatmul.mubr.f32.gmra.mxu0 %v425
      %v594 = vpop.f32.mrf.mxu0
      %v595 = vadd.f32 %v409, %v594
      %v596 = vpop.f32.mrf.mxu0
      %597 = vmatprep.mubr.f32.mxu0 0.0
      %598 = vmatmul.mubr.f32.gmra.mxu0 %v428
      %v599 = vpop.f32.mrf.mxu0
      %v600 = vadd.f32 %v409, %v599
      %v601 = vpop.f32.mrf.mxu0
      %602 = vmatprep.mubr.f32.mxu0 0.0
      %603 = vmatmul.mubr.f32.gmra.mxu0 %v431
      %v604 = vpop.f32.mrf.mxu0
      %v605 = vadd.f32 %v409, %v604
      %v606 = vpop.f32.mrf.mxu0
      %607 = vmatprep.mubr.f32.mxu0 0.0
      %608 = vmatmul.mubr.f32.gmra.mxu0 %v434
      %v609 = vpop.f32.mrf.mxu0
      %v610 = vadd.f32 %v409, %v609
      %v611 = vpop.f32.mrf.mxu0
      %612 = vmatprep.mubr.f32.mxu0 0.0
      %613 = vmatmul.mubr.f32.gmra.mxu0 %v437
      %v614 = vpop.f32.mrf.mxu0
      %v615 = vadd.f32 %v409, %v614
      %v616 = vpop.f32.mrf.mxu0
      %617 = vmatprep.mubr.f32.mxu0 0.0
      %618 = vmatmul.mubr.f32.gmra.mxu0 %v440
      %v619 = vpop.f32.mrf.mxu0
      %v620 = vadd.f32 %v409, %v619
      %v621 = vpop.f32.mrf.mxu0
      %622 = vmatprep.mubr.f32.mxu0 0.0
      %623 = vmatmul.mubr.f32.gmra.mxu0 %v443
      %v624 = vpop.f32.mrf.mxu0
      %v625 = vadd.f32 %v409, %v624
      %v626 = vpop.f32.mrf.mxu0
      %627 = vmatprep.mubr.f32.mxu0 0.0
      %628 = vmatmul.mubr.f32.gmra.mxu0 %v446
      %v629 = vpop.f32.mrf.mxu0
      %v630 = vadd.f32 %v409, %v629
      %v631 = vpop.f32.mrf.mxu0
      %632 = vmatprep.mubr.f32.mxu0 0.0
      %633 = vmatmul.mubr.f32.gmra.mxu0 %v449
      %v634 = vpop.f32.mrf.mxu0
      %v635 = vadd.f32 %v409, %v634
      %v636 = vpop.f32.mrf.mxu0
      %637 = vmatprep.mubr.f32.mxu0 0.0
      %638 = vmatmul.mubr.f32.gmra.mxu0 %v452
      %v639 = vpop.f32.mrf.mxu0
      %v640 = vadd.f32 %v409, %v639
      %v641 = vpop.f32.mrf.mxu0
      %642 = vmatprep.mubr.f32.mxu0 0.0
      %643 = vmatmul.mubr.f32.gmra.mxu0 %v455
      %v644 = vpop.f32.mrf.mxu0
      %v645 = vadd.f32 %v409, %v644
      %v646 = vpop.f32.mrf.mxu0
      %647 = vmatprep.mubr.f32.mxu0 0.0
      %648 = vmatmul.mubr.f32.gmra.mxu0 %v458
      %v649 = vpop.f32.mrf.mxu0
      %v650 = vadd.f32 %v409, %v649
      %v651 = vpop.f32.mrf.mxu0
      %652 = vmatprep.mubr.f32.mxu0 0.0
      %653 = vmatmul.mubr.f32.gmra.mxu0 %v461
      %v654 = vpop.f32.mrf.mxu0
      %v655 = vadd.f32 %v409, %v654
      %v656 = vpop.f32.mrf.mxu0
      %657 = vmatprep.mubr.f32.mxu0 0.0
      %658 = vmatmul.mubr.f32.gmra.mxu0 %v464
      %v659 = vpop.f32.mrf.mxu0
      %v660 = vadd.f32 %v409, %v659
      %v661 = vpop.f32.mrf.mxu0
      %662 = vmatprep.mubr.f32.mxu0 0.0
      %663 = vmatmul.mubr.f32.gmra.mxu0 %v467
      %v664 = vpop.f32.mrf.mxu0
      %v665 = vadd.f32 %v409, %v664
      %v666 = vpop.f32.mrf.mxu0
      %667 = vmatprep.mubr.f32.mxu0 0.0
      %668 = vmatmul.mubr.f32.gmra.mxu0 %v470
      %v669 = vpop.f32.mrf.mxu0
      %v670 = vadd.f32 %v409, %v669
      %v671 = vpop.f32.mrf.mxu0
      %672 = vmatprep.mubr.f32.mxu0 0.0
      %673 = vmatmul.mubr.f32.gmra.mxu0 %v473
      %v674 = vpop.f32.mrf.mxu0
      %v675 = vadd.f32 %v409, %v674
      %v676 = vpop.f32.mrf.mxu0
      %677 = vmatprep.mubr.f32.mxu0 0.0
      %678 = vmatmul.mubr.f32.gmra.mxu0 %v476
      %v679 = vpop.f32.mrf.mxu0
      %v680 = vadd.f32 %v409, %v679
      %v681 = vpop.f32.mrf.mxu0
      %682 = vmatprep.mubr.f32.mxu0 0.0
      %683 = vmatmul.mubr.f32.gmra.mxu0 %v479
      %v684 = vpop.f32.mrf.mxu0
      %v685 = vadd.f32 %v409, %v684
      %v686 = vpop.f32.mrf.mxu0
      %687 = vmatprep.mubr.f32.mxu0 0.0
      %688 = vmatmul.mubr.f32.gmra.mxu0 %v482
      %v689 = vpop.f32.mrf.mxu0
      %v690 = vadd.f32 %v409, %v689
      %v691 = vpop.f32.mrf.mxu0
      %692 = vmatprep.mubr.f32.mxu0 0.0
      %693 = vmatmul.mubr.f32.gmra.mxu0 %v485
      %v694 = vpop.f32.mrf.mxu0
      %v695 = vadd.f32 %v409, %v694
      %v696 = vpop.f32.mrf.mxu0
      %697 = vmatprep.mubr.f32.mxu0 0.0
      %698 = vmatmul.mubr.f32.gmra.mxu0 %v488
      %v699 = vpop.f32.mrf.mxu0
      %v700 = vadd.f32 %v409, %v699
      %v701 = vpop.f32.mrf.mxu0
      %702 = vmatprep.mubr.f32.mxu0 0.0
      %703 = vmatmul.mubr.f32.gmra.mxu0 %v491
      %v704 = vpop.f32.mrf.mxu0
      %v705 = vadd.f32 %v409, %v704
      %v706 = vpop.f32.mrf.mxu0
      %707 = vmatprep.mubr.f32.mxu0 0.0
      %708 = vmatmul.mubr.f32.gmra.mxu0 %v494
      %v709 = vpop.f32.mrf.mxu0
      %v710 = vadd.f32 %v409, %v709
      %v711 = vpop.f32.mrf.mxu0
      %712 = vmatprep.mubr.f32.mxu0 0.0
      %713 = vmatmul.mubr.f32.gmra.mxu0 %v497
      %v714 = vpop.f32.mrf.mxu0
      %v715 = vadd.f32 %v409, %v714
      %v716 = vpop.f32.mrf.mxu0
      %717 = vmatprep.mubr.f32.mxu0 0.0
      %718 = vmatmul.mubr.f32.gmra.mxu0 %v500
      %v719 = vpop.f32.mrf.mxu0
      %v720 = vadd.f32 %v409, %v719
      %v721 = vpop.f32.mrf.mxu0
      %722 = vmatprep.mubr.f32.mxu0 0.0
      %723 = vmatmul.mubr.f32.gmra.mxu0 %v503
      %v724 = vpop.f32.mrf.mxu0
      %v725 = vadd.f32 %v409, %v724
      %v726 = vpop.f32.mrf.mxu0
      %727 = vmatprep.mubr.f32.mxu0 0.0
      %728 = vmatmul.mubr.f32.gmra.mxu0 %v506
      %v729 = vpop.f32.mrf.mxu0
      %v730 = vadd.f32 %v409, %v729
      %v731 = vpop.f32.mrf.mxu0
      %732 = vdwg.mxu0
      %v733 = vld [vmem:[%s2] sm:$0xff]
      %v734 = vld [vmem:[%s2 + $0x8] sm:$0xff]
      %v735 = vld [vmem:[%s2 + $0x10] sm:$0xff]
      %v736 = vld [vmem:[%s2 + $0x18] sm:$0xff]
      %v737 = vld [vmem:[%s5] sm:$0x1]
      %v739 = vlaneseq
      %v740 = vshrl.u32 %v739, 7
      %v741 = vsub.s32 0, %v740
      %v742 = vrot.slane %v737, %v741
      %744 = vmatprep.subr.mxu0 0.0
      %745 = vmatpush1.msra.mxu0 0.0
      %746 = vmatprep.subr.mxu0 0.0
      %747 = vmatpush1.msra.mxu0 0.0
      %748 = vmatprep.subr.mxu0 0.0
      %749 = vmatpush1.msra.mxu0 0.0
      %750 = vmatprep.subr.mxu0 0.0
      %751 = vmatpush1.msra.mxu0 0.0
      %752 = vmatprep.subr.mxu0 0.0
      %753 = vmatpush1.msra.mxu0 0.0
      %754 = vmatprep.subr.mxu0 0.0
      %755 = vmatpush1.msra.mxu0 0.0
      %756 = vmatprep.subr.mxu0 0.0
      %757 = vmatpush1.msra.mxu0 0.0
      %758 = vmatprep.subr.mxu0 0.0
      %759 = vmatpush1.msra.mxu0 0.0
      %760 = vmatprep.subr.mxu0 0.0
      %761 = vmatpush1.msra.mxu0 0.0
      %762 = vmatprep.subr.mxu0 0.0
      %763 = vmatpush1.msra.mxu0 0.0
      %764 = vmatprep.subr.mxu0 0.0
      %765 = vmatpush1.msra.mxu0 0.0
      %766 = vmatprep.subr.mxu0 0.0
      %767 = vmatpush1.msra.mxu0 0.0
      %768 = vmatprep.subr.mxu0 0.0
      %769 = vmatpush1.msra.mxu0 %v736
      %770 = vmatprep.subr.mxu0 0.0
      %771 = vmatpush1.msra.mxu0 %v735
      %772 = vmatprep.subr.mxu0 0.0
      %773 = vmatpush1.msra.mxu0 %v734
      %774 = vmatprep.subr.mxu0 0.0
      %775 = vmatpush1.msra.mxu0 %v733
      %776 = vmatprep.subr.mxu0 0.0
      %777 = vmatpush2.msra.mxu0 0.0
      %778 = vmatprep.subr.mxu0 0.0
      %779 = vmatpush2.msra.mxu0 0.0
      %780 = vmatprep.subr.mxu0 0.0
      %781 = vmatpush2.msra.mxu0 0.0
      %782 = vmatprep.subr.mxu0 0.0
      %783 = vmatpush2.msra.mxu0 0.0
      %784 = vmatprep.subr.mxu0 0.0
      %785 = vmatpush2.msra.mxu0 0.0
      %786 = vmatprep.subr.mxu0 0.0
      %787 = vmatpush2.msra.mxu0 0.0
      %788 = vmatprep.subr.mxu0 0.0
      %789 = vmatpush2.msra.mxu0 0.0
      %790 = vmatprep.subr.mxu0 0.0
      %791 = vmatpush2.msra.mxu0 0.0
      %792 = vmatprep.subr.mxu0 0.0
      %793 = vmatpush2.msra.mxu0 0.0
      %794 = vmatprep.subr.mxu0 0.0
      %795 = vmatpush2.msra.mxu0 0.0
      %796 = vmatprep.subr.mxu0 0.0
      %797 = vmatpush2.msra.mxu0 0.0
      %798 = vmatprep.subr.mxu0 0.0
      %799 = vmatpush2.msra.mxu0 0.0
      %800 = vmatprep.subr.mxu0 0.0
      %801 = vmatpush2.msra.mxu0 0.0
      %802 = vmatprep.subr.mxu0 0.0
      %803 = vmatpush2.msra.mxu0 0.0
      %804 = vmatprep.subr.mxu0 0.0
      %805 = vmatpush2.msra.mxu0 0.0
      %806 = vmatprep.subr.mxu0 0.0
      %807 = vmatpush2.msra.mxu0 0.0
      %808 = vmatprep.mubr.f32.mxu0 0.0
      %809 = vmatmul.mubr.f32.gmra.mxu0 %v413
      %v810 = vpop.f32.mrf.mxu0
      %v811 = vadd.f32 %v742, %v810
      %v812 = vpop.f32.mrf.mxu0
      %813 = vmatprep.mubr.f32.mxu0 0.0
      %814 = vmatmul.mubr.f32.gmra.mxu0 %v416
      %v815 = vpop.f32.mrf.mxu0
      %v816 = vadd.f32 %v742, %v815
      %v817 = vpop.f32.mrf.mxu0
      %818 = vmatprep.mubr.f32.mxu0 0.0
      %819 = vmatmul.mubr.f32.gmra.mxu0 %v419
      %v820 = vpop.f32.mrf.mxu0
      %v821 = vadd.f32 %v742, %v820
      %v822 = vpop.f32.mrf.mxu0
      %823 = vmatprep.mubr.f32.mxu0 0.0
      %824 = vmatmul.mubr.f32.gmra.mxu0 %v422
      %v825 = vpop.f32.mrf.mxu0
      %v826 = vadd.f32 %v742, %v825
      %v827 = vpop.f32.mrf.mxu0
      %828 = vmatprep.mubr.f32.mxu0 0.0
      %829 = vmatmul.mubr.f32.gmra.mxu0 %v425
      %v830 = vpop.f32.mrf.mxu0
      %v831 = vadd.f32 %v742, %v830
      %v832 = vpop.f32.mrf.mxu0
      %833 = vmatprep.mubr.f32.mxu0 0.0
      %834 = vmatmul.mubr.f32.gmra.mxu0 %v428
      %v835 = vpop.f32.mrf.mxu0
      %v836 = vadd.f32 %v742, %v835
      %v837 = vpop.f32.mrf.mxu0
      %838 = vmatprep.mubr.f32.mxu0 0.0
      %839 = vmatmul.mubr.f32.gmra.mxu0 %v431
      %v840 = vpop.f32.mrf.mxu0
      %v841 = vadd.f32 %v742, %v840
      %v842 = vpop.f32.mrf.mxu0
      %843 = vmatprep.mubr.f32.mxu0 0.0
      %844 = vmatmul.mubr.f32.gmra.mxu0 %v434
      %v845 = vpop.f32.mrf.mxu0
      %v846 = vadd.f32 %v742, %v845
      %v847 = vpop.f32.mrf.mxu0
      %848 = vmatprep.mubr.f32.mxu0 0.0
      %849 = vmatmul.mubr.f32.gmra.mxu0 %v437
      %v850 = vpop.f32.mrf.mxu0
      %v851 = vadd.f32 %v742, %v850
      %v852 = vpop.f32.mrf.mxu0
      %853 = vmatprep.mubr.f32.mxu0 0.0
      %854 = vmatmul.mubr.f32.gmra.mxu0 %v440
      %v855 = vpop.f32.mrf.mxu0
      %v856 = vadd.f32 %v742, %v855
      %v857 = vpop.f32.mrf.mxu0
      %858 = vmatprep.mubr.f32.mxu0 0.0
      %859 = vmatmul.mubr.f32.gmra.mxu0 %v443
      %v860 = vpop.f32.mrf.mxu0
      %v861 = vadd.f32 %v742, %v860
      %v862 = vpop.f32.mrf.mxu0
      %863 = vmatprep.mubr.f32.mxu0 0.0
      %864 = vmatmul.mubr.f32.gmra.mxu0 %v446
      %v865 = vpop.f32.mrf.mxu0
      %v866 = vadd.f32 %v742, %v865
      %v867 = vpop.f32.mrf.mxu0
      %868 = vmatprep.mubr.f32.mxu0 0.0
      %869 = vmatmul.mubr.f32.gmra.mxu0 %v449
      %v870 = vpop.f32.mrf.mxu0
      %v871 = vadd.f32 %v742, %v870
      %v872 = vpop.f32.mrf.mxu0
      %873 = vmatprep.mubr.f32.mxu0 0.0
      %874 = vmatmul.mubr.f32.gmra.mxu0 %v452
      %v875 = vpop.f32.mrf.mxu0
      %v876 = vadd.f32 %v742, %v875
      %v877 = vpop.f32.mrf.mxu0
      %878 = vmatprep.mubr.f32.mxu0 0.0
      %879 = vmatmul.mubr.f32.gmra.mxu0 %v455
      %v880 = vpop.f32.mrf.mxu0
      %v881 = vadd.f32 %v742, %v880
      %v882 = vpop.f32.mrf.mxu0
      %883 = vmatprep.mubr.f32.mxu0 0.0
      %884 = vmatmul.mubr.f32.gmra.mxu0 %v458
      %v885 = vpop.f32.mrf.mxu0
      %v886 = vadd.f32 %v742, %v885
      %v887 = vpop.f32.mrf.mxu0
      %888 = vmatprep.mubr.f32.mxu0 0.0
      %889 = vmatmul.mubr.f32.gmra.mxu0 %v461
      %v890 = vpop.f32.mrf.mxu0
      %v891 = vadd.f32 %v742, %v890
      %v892 = vpop.f32.mrf.mxu0
      %893 = vmatprep.mubr.f32.mxu0 0.0
      %894 = vmatmul.mubr.f32.gmra.mxu0 %v464
      %v895 = vpop.f32.mrf.mxu0
      %v896 = vadd.f32 %v742, %v895
      %v897 = vpop.f32.mrf.mxu0
      %898 = vmatprep.mubr.f32.mxu0 0.0
      %899 = vmatmul.mubr.f32.gmra.mxu0 %v467
      %v900 = vpop.f32.mrf.mxu0
      %v901 = vadd.f32 %v742, %v900
      %v902 = vpop.f32.mrf.mxu0
      %903 = vmatprep.mubr.f32.mxu0 0.0
      %904 = vmatmul.mubr.f32.gmra.mxu0 %v470
      %v905 = vpop.f32.mrf.mxu0
      %v906 = vadd.f32 %v742, %v905
      %v907 = vpop.f32.mrf.mxu0
      %908 = vmatprep.mubr.f32.mxu0 0.0
      %909 = vmatmul.mubr.f32.gmra.mxu0 %v473
      %v910 = vpop.f32.mrf.mxu0
      %v911 = vadd.f32 %v742, %v910
      %v912 = vpop.f32.mrf.mxu0
      %913 = vmatprep.mubr.f32.mxu0 0.0
      %914 = vmatmul.mubr.f32.gmra.mxu0 %v476
      %v915 = vpop.f32.mrf.mxu0
      %v916 = vadd.f32 %v742, %v915
      %v917 = vpop.f32.mrf.mxu0
      %918 = vmatprep.mubr.f32.mxu0 0.0
      %919 = vmatmul.mubr.f32.gmra.mxu0 %v479
      %v920 = vpop.f32.mrf.mxu0
      %v921 = vadd.f32 %v742, %v920
      %v922 = vpop.f32.mrf.mxu0
      %923 = vmatprep.mubr.f32.mxu0 0.0
      %924 = vmatmul.mubr.f32.gmra.mxu0 %v482
      %v925 = vpop.f32.mrf.mxu0
      %v926 = vadd.f32 %v742, %v925
      %v927 = vpop.f32.mrf.mxu0
      %928 = vmatprep.mubr.f32.mxu0 0.0
      %929 = vmatmul.mubr.f32.gmra.mxu0 %v485
      %v930 = vpop.f32.mrf.mxu0
      %v931 = vadd.f32 %v742, %v930
      %v932 = vpop.f32.mrf.mxu0
      %933 = vmatprep.mubr.f32.mxu0 0.0
      %934 = vmatmul.mubr.f32.gmra.mxu0 %v488
      %v935 = vpop.f32.mrf.mxu0
      %v936 = vadd.f32 %v742, %v935
      %v937 = vpop.f32.mrf.mxu0
      %938 = vmatprep.mubr.f32.mxu0 0.0
      %939 = vmatmul.mubr.f32.gmra.mxu0 %v491
      %v940 = vpop.f32.mrf.mxu0
      %v941 = vadd.f32 %v742, %v940
      %v942 = vpop.f32.mrf.mxu0
      %943 = vmatprep.mubr.f32.mxu0 0.0
      %944 = vmatmul.mubr.f32.gmra.mxu0 %v494
      %v945 = vpop.f32.mrf.mxu0
      %v946 = vadd.f32 %v742, %v945
      %v947 = vpop.f32.mrf.mxu0
      %948 = vmatprep.mubr.f32.mxu0 0.0
      %949 = vmatmul.mubr.f32.gmra.mxu0 %v497
      %v950 = vpop.f32.mrf.mxu0
      %v951 = vadd.f32 %v742, %v950
      %v952 = vpop.f32.mrf.mxu0
      %953 = vmatprep.mubr.f32.mxu0 0.0
      %954 = vmatmul.mubr.f32.gmra.mxu0 %v500
      %v955 = vpop.f32.mrf.mxu0
      %v956 = vadd.f32 %v742, %v955
      %v957 = vpop.f32.mrf.mxu0
      %958 = vmatprep.mubr.f32.mxu0 0.0
      %959 = vmatmul.mubr.f32.gmra.mxu0 %v503
      %v960 = vpop.f32.mrf.mxu0
      %v961 = vadd.f32 %v742, %v960
      %v962 = vpop.f32.mrf.mxu0
      %963 = vmatprep.mubr.f32.mxu0 0.0
      %964 = vmatmul.mubr.f32.gmra.mxu0 %v506
      %v965 = vpop.f32.mrf.mxu0
      %v966 = vadd.f32 %v742, %v965
      %v967 = vpop.f32.mrf.mxu0
      %968 = vdwg.mxu0
      %v969 = vld [vmem:[%s3] sm:$0xff]
      %v970 = vld [vmem:[%s3 + $0x8] sm:$0xff]
      %v971 = vld [vmem:[%s3 + $0x10] sm:$0xff]
      %v972 = vld [vmem:[%s3 + $0x18] sm:$0xff]
      %v973 = vld [vmem:[%s6] sm:$0x1]
      %v975 = vlaneseq
      %v976 = vshrl.u32 %v975, 7
      %v977 = vsub.s32 0, %v976
      %v978 = vrot.slane %v973, %v977
      %980 = vmatprep.subr.mxu0 0.0
      %981 = vmatpush1.msra.mxu0 0.0
      %982 = vmatprep.subr.mxu0 0.0
      %983 = vmatpush1.msra.mxu0 0.0
      %984 = vmatprep.subr.mxu0 0.0
      %985 = vmatpush1.msra.mxu0 0.0
      %986 = vmatprep.subr.mxu0 0.0
      %987 = vmatpush1.msra.mxu0 0.0
      %988 = vmatprep.subr.mxu0 0.0
      %989 = vmatpush1.msra.mxu0 0.0
      %990 = vmatprep.subr.mxu0 0.0
      %991 = vmatpush1.msra.mxu0 0.0
      %992 = vmatprep.subr.mxu0 0.0
      %993 = vmatpush1.msra.mxu0 0.0
      %994 = vmatprep.subr.mxu0 0.0
      %995 = vmatpush1.msra.mxu0 0.0
      %996 = vmatprep.subr.mxu0 0.0
      %997 = vmatpush1.msra.mxu0 0.0
      %998 = vmatprep.subr.mxu0 0.0
      %999 = vmatpush1.msra.mxu0 0.0
      %1000 = vmatprep.subr.mxu0 0.0
      %1001 = vmatpush1.msra.mxu0 0.0
      %1002 = vmatprep.subr.mxu0 0.0
      %1003 = vmatpush1.msra.mxu0 0.0
      %1004 = vmatprep.subr.mxu0 0.0
      %1005 = vmatpush1.msra.mxu0 %v972
      %1006 = vmatprep.subr.mxu0 0.0
      %1007 = vmatpush1.msra.mxu0 %v971
      %1008 = vmatprep.subr.mxu0 0.0
      %1009 = vmatpush1.msra.mxu0 %v970
      %1010 = vmatprep.subr.mxu0 0.0
      %1011 = vmatpush1.msra.mxu0 %v969
      %1012 = vmatprep.subr.mxu0 0.0
      %1013 = vmatpush2.msra.mxu0 0.0
      %1014 = vmatprep.subr.mxu0 0.0
      %1015 = vmatpush2.msra.mxu0 0.0
      %1016 = vmatprep.subr.mxu0 0.0
      %1017 = vmatpush2.msra.mxu0 0.0
      %1018 = vmatprep.subr.mxu0 0.0
      %1019 = vmatpush2.msra.mxu0 0.0
      %1020 = vmatprep.subr.mxu0 0.0
      %1021 = vmatpush2.msra.mxu0 0.0
      %1022 = vmatprep.subr.mxu0 0.0
      %1023 = vmatpush2.msra.mxu0 0.0
      %1024 = vmatprep.subr.mxu0 0.0
      %1025 = vmatpush2.msra.mxu0 0.0
      %1026 = vmatprep.subr.mxu0 0.0
      %1027 = vmatpush2.msra.mxu0 0.0
      %1028 = vmatprep.subr.mxu0 0.0
      %1029 = vmatpush2.msra.mxu0 0.0
      %1030 = vmatprep.subr.mxu0 0.0
      %1031 = vmatpush2.msra.mxu0 0.0
      %1032 = vmatprep.subr.mxu0 0.0
      %1033 = vmatpush2.msra.mxu0 0.0
      %1034 = vmatprep.subr.mxu0 0.0
      %1035 = vmatpush2.msra.mxu0 0.0
      %1036 = vmatprep.subr.mxu0 0.0
      %1037 = vmatpush2.msra.mxu0 0.0
      %1038 = vmatprep.subr.mxu0 0.0
      %1039 = vmatpush2.msra.mxu0 0.0
      %1040 = vmatprep.subr.mxu0 0.0
      %1041 = vmatpush2.msra.mxu0 0.0
      %1042 = vmatprep.subr.mxu0 0.0
      %1043 = vmatpush2.msra.mxu0 0.0
      %1044 = vmatprep.mubr.f32.mxu0 0.0
      %1045 = vmatmul.mubr.f32.gmra.mxu0 %v413
      %v1046 = vpop.f32.mrf.mxu0
      %v1047 = vadd.f32 %v978, %v1046
      %v1048 = vpop.f32.mrf.mxu0
      %1049 = vmatprep.mubr.f32.mxu0 0.0
      %1050 = vmatmul.mubr.f32.gmra.mxu0 %v416
      %v1051 = vpop.f32.mrf.mxu0
      %v1052 = vadd.f32 %v978, %v1051
      %v1053 = vpop.f32.mrf.mxu0
      %1054 = vmatprep.mubr.f32.mxu0 0.0
      %1055 = vmatmul.mubr.f32.gmra.mxu0 %v419
      %v1056 = vpop.f32.mrf.mxu0
      %v1057 = vadd.f32 %v978, %v1056
      %v1058 = vpop.f32.mrf.mxu0
      %1059 = vmatprep.mubr.f32.mxu0 0.0
      %1060 = vmatmul.mubr.f32.gmra.mxu0 %v422
      %v1061 = vpop.f32.mrf.mxu0
      %v1062 = vadd.f32 %v978, %v1061
      %v1063 = vpop.f32.mrf.mxu0
      %1064 = vmatprep.mubr.f32.mxu0 0.0
      %1065 = vmatmul.mubr.f32.gmra.mxu0 %v425
      %v1066 = vpop.f32.mrf.mxu0
      %v1067 = vadd.f32 %v978, %v1066
      %v1068 = vpop.f32.mrf.mxu0
      %1069 = vmatprep.mubr.f32.mxu0 0.0
      %1070 = vmatmul.mubr.f32.gmra.mxu0 %v428
      %v1071 = vpop.f32.mrf.mxu0
      %v1072 = vadd.f32 %v978, %v1071
      %v1073 = vpop.f32.mrf.mxu0
      %1074 = vmatprep.mubr.f32.mxu0 0.0
      %1075 = vmatmul.mubr.f32.gmra.mxu0 %v431
      %v1076 = vpop.f32.mrf.mxu0
      %v1077 = vadd.f32 %v978, %v1076
      %v1078 = vpop.f32.mrf.mxu0
      %1079 = vmatprep.mubr.f32.mxu0 0.0
      %1080 = vmatmul.mubr.f32.gmra.mxu0 %v434
      %v1081 = vpop.f32.mrf.mxu0
      %v1082 = vadd.f32 %v978, %v1081
      %v1083 = vpop.f32.mrf.mxu0
      %1084 = vmatprep.mubr.f32.mxu0 0.0
      %1085 = vmatmul.mubr.f32.gmra.mxu0 %v437
      %v1086 = vpop.f32.mrf.mxu0
      %v1087 = vadd.f32 %v978, %v1086
      %v1088 = vpop.f32.mrf.mxu0
      %1089 = vmatprep.mubr.f32.mxu0 0.0
      %1090 = vmatmul.mubr.f32.gmra.mxu0 %v440
      %v1091 = vpop.f32.mrf.mxu0
      %v1092 = vadd.f32 %v978, %v1091
      %v1093 = vpop.f32.mrf.mxu0
      %1094 = vmatprep.mubr.f32.mxu0 0.0
      %1095 = vmatmul.mubr.f32.gmra.mxu0 %v443
      %v1096 = vpop.f32.mrf.mxu0
      %v1097 = vadd.f32 %v978, %v1096
      %v1098 = vpop.f32.mrf.mxu0
      %1099 = vmatprep.mubr.f32.mxu0 0.0
      %1100 = vmatmul.mubr.f32.gmra.mxu0 %v446
      %v1101 = vpop.f32.mrf.mxu0
      %v1102 = vadd.f32 %v978, %v1101
      %v1103 = vpop.f32.mrf.mxu0
      %1104 = vmatprep.mubr.f32.mxu0 0.0
      %1105 = vmatmul.mubr.f32.gmra.mxu0 %v449
      %v1106 = vpop.f32.mrf.mxu0
      %v1107 = vadd.f32 %v978, %v1106
      %v1108 = vpop.f32.mrf.mxu0
      %1109 = vmatprep.mubr.f32.mxu0 0.0
      %1110 = vmatmul.mubr.f32.gmra.mxu0 %v452
      %v1111 = vpop.f32.mrf.mxu0
      %v1112 = vadd.f32 %v978, %v1111
      %v1113 = vpop.f32.mrf.mxu0
      %1114 = vmatprep.mubr.f32.mxu0 0.0
      %1115 = vmatmul.mubr.f32.gmra.mxu0 %v455
      %v1116 = vpop.f32.mrf.mxu0
      %v1117 = vadd.f32 %v978, %v1116
      %v1118 = vpop.f32.mrf.mxu0
      %1119 = vmatprep.mubr.f32.mxu0 0.0
      %1120 = vmatmul.mubr.f32.gmra.mxu0 %v458
      %v1121 = vpop.f32.mrf.mxu0
      %v1122 = vadd.f32 %v978, %v1121
      %v1123 = vpop.f32.mrf.mxu0
      %1124 = vmatprep.mubr.f32.mxu0 0.0
      %1125 = vmatmul.mubr.f32.gmra.mxu0 %v461
      %v1126 = vpop.f32.mrf.mxu0
      %v1127 = vadd.f32 %v978, %v1126
      %v1128 = vpop.f32.mrf.mxu0
      %1129 = vmatprep.mubr.f32.mxu0 0.0
      %1130 = vmatmul.mubr.f32.gmra.mxu0 %v464
      %v1131 = vpop.f32.mrf.mxu0
      %v1132 = vadd.f32 %v978, %v1131
      %v1133 = vpop.f32.mrf.mxu0
      %1134 = vmatprep.mubr.f32.mxu0 0.0
      %1135 = vmatmul.mubr.f32.gmra.mxu0 %v467
      %v1136 = vpop.f32.mrf.mxu0
      %v1137 = vadd.f32 %v978, %v1136
      %v1138 = vpop.f32.mrf.mxu0
      %1139 = vmatprep.mubr.f32.mxu0 0.0
      %1140 = vmatmul.mubr.f32.gmra.mxu0 %v470
      %v1141 = vpop.f32.mrf.mxu0
      %v1142 = vadd.f32 %v978, %v1141
      %v1143 = vpop.f32.mrf.mxu0
      %1144 = vmatprep.mubr.f32.mxu0 0.0
      %1145 = vmatmul.mubr.f32.gmra.mxu0 %v473
      %v1146 = vpop.f32.mrf.mxu0
      %v1147 = vadd.f32 %v978, %v1146
      %v1148 = vpop.f32.mrf.mxu0
      %1149 = vmatprep.mubr.f32.mxu0 0.0
      %1150 = vmatmul.mubr.f32.gmra.mxu0 %v476
      %v1151 = vpop.f32.mrf.mxu0
      %v1152 = vadd.f32 %v978, %v1151
      %v1153 = vpop.f32.mrf.mxu0
      %1154 = vmatprep.mubr.f32.mxu0 0.0
      %1155 = vmatmul.mubr.f32.gmra.mxu0 %v479
      %v1156 = vpop.f32.mrf.mxu0
      %v1157 = vadd.f32 %v978, %v1156
      %v1158 = vpop.f32.mrf.mxu0
      %1159 = vmatprep.mubr.f32.mxu0 0.0
      %1160 = vmatmul.mubr.f32.gmra.mxu0 %v482
      %v1161 = vpop.f32.mrf.mxu0
      %v1162 = vadd.f32 %v978, %v1161
      %v1163 = vpop.f32.mrf.mxu0
      %1164 = vmatprep.mubr.f32.mxu0 0.0
      %1165 = vmatmul.mubr.f32.gmra.mxu0 %v485
      %v1166 = vpop.f32.mrf.mxu0
      %v1167 = vadd.f32 %v978, %v1166
      %v1168 = vpop.f32.mrf.mxu0
      %1169 = vmatprep.mubr.f32.mxu0 0.0
      %1170 = vmatmul.mubr.f32.gmra.mxu0 %v488
      %v1171 = vpop.f32.mrf.mxu0
      %v1172 = vadd.f32 %v978, %v1171
      %v1173 = vpop.f32.mrf.mxu0
      %1174 = vmatprep.mubr.f32.mxu0 0.0
      %1175 = vmatmul.mubr.f32.gmra.mxu0 %v491
      %v1176 = vpop.f32.mrf.mxu0
      %v1177 = vadd.f32 %v978, %v1176
      %v1178 = vpop.f32.mrf.mxu0
      %1179 = vmatprep.mubr.f32.mxu0 0.0
      %1180 = vmatmul.mubr.f32.gmra.mxu0 %v494
      %v1181 = vpop.f32.mrf.mxu0
      %v1182 = vadd.f32 %v978, %v1181
      %v1183 = vpop.f32.mrf.mxu0
      %1184 = vmatprep.mubr.f32.mxu0 0.0
      %1185 = vmatmul.mubr.f32.gmra.mxu0 %v497
      %v1186 = vpop.f32.mrf.mxu0
      %v1187 = vadd.f32 %v978, %v1186
      %v1188 = vpop.f32.mrf.mxu0
      %1189 = vmatprep.mubr.f32.mxu0 0.0
      %1190 = vmatmul.mubr.f32.gmra.mxu0 %v500
      %v1191 = vpop.f32.mrf.mxu0
      %v1192 = vadd.f32 %v978, %v1191
      %v1193 = vpop.f32.mrf.mxu0
      %1194 = vmatprep.mubr.f32.mxu0 0.0
      %1195 = vmatmul.mubr.f32.gmra.mxu0 %v503
      %v1196 = vpop.f32.mrf.mxu0
      %v1197 = vadd.f32 %v978, %v1196
      %v1198 = vpop.f32.mrf.mxu0
      %1199 = vmatprep.mubr.f32.mxu0 0.0
      %1200 = vmatmul.mubr.f32.gmra.mxu0 %v506
      %v1201 = vpop.f32.mrf.mxu0
      %v1202 = vadd.f32 %v978, %v1201
      %v1203 = vpop.f32.mrf.mxu0
      %1204 = vdwg.mxu0
      %v1205 = vld [vmem:[%s7] sm:$0xff]
      %v1206 = vld [vmem:[%s7 + $0x8] sm:$0xff]
      %v1207 = vld [vmem:[%s7 + $0x10] sm:$0xff]
      %v1208 = vld [vmem:[%s7 + $0x18] sm:$0xff]
      %v1209 = vld [vmem:[%s7 + $0x20] sm:$0xff]
      %v1210 = vld [vmem:[%s7 + $0x28] sm:$0xff]
      %v1211 = vld [vmem:[%s7 + $0x30] sm:$0xff]
      %v1212 = vld [vmem:[%s7 + $0x38] sm:$0xff]
      %v1213 = vld [vmem:[%s7 + $0x40] sm:$0xff]
      %v1214 = vld [vmem:[%s7 + $0x48] sm:$0xff]
      %v1215 = vld [vmem:[%s7 + $0x50] sm:$0xff]
      %v1216 = vld [vmem:[%s7 + $0x58] sm:$0xff]
      %v1217 = vld [vmem:[%s7 + $0x60] sm:$0xff]
      %v1218 = vld [vmem:[%s7 + $0x68] sm:$0xff]
      %v1219 = vld [vmem:[%s7 + $0x70] sm:$0xff]
      %v1220 = vld [vmem:[%s7 + $0x78] sm:$0xff]
      %v1221 = vld [vmem:[%s7 + $0x80] sm:$0xff]
      %v1222 = vld [vmem:[%s7 + $0x88] sm:$0xff]
      %v1223 = vld [vmem:[%s7 + $0x90] sm:$0xff]
      %v1224 = vld [vmem:[%s7 + $0x98] sm:$0xff]
      %v1225 = vld [vmem:[%s7 + $0xa0] sm:$0xff]
      %v1226 = vld [vmem:[%s7 + $0xa8] sm:$0xff]
      %v1227 = vld [vmem:[%s7 + $0xb0] sm:$0xff]
      %v1228 = vld [vmem:[%s7 + $0xb8] sm:$0xff]
      %v1229 = vld [vmem:[%s7 + $0xc0] sm:$0xff]
      %v1230 = vld [vmem:[%s7 + $0xc8] sm:$0xff]
      %v1231 = vld [vmem:[%s7 + $0xd0] sm:$0xff]
      %v1232 = vld [vmem:[%s7 + $0xd8] sm:$0xff]
      %v1233 = vld [vmem:[%s7 + $0xe0] sm:$0xff]
      %v1234 = vld [vmem:[%s7 + $0xe8] sm:$0xff]
      %v1235 = vld [vmem:[%s7 + $0xf0] sm:$0xff]
      %v1236 = vld [vmem:[%s7 + $0xf8] sm:$0xff]
      %vm1237 = vcmask 64512
      %v1239 = vsel %vm1237, %v575, 0
      %v1242 = vsel %vm1237, %v580, 0
      %v1245 = vsel %vm1237, %v585, 0
      %v1248 = vsel %vm1237, %v590, 0
      %v1251 = vsel %vm1237, %v595, 0
      %v1254 = vsel %vm1237, %v600, 0
      %v1257 = vsel %vm1237, %v605, 0
      %v1260 = vsel %vm1237, %v610, 0
      %v1263 = vsel %vm1237, %v811, 0
      %v1266 = vsel %vm1237, %v816, 0
      %v1269 = vsel %vm1237, %v821, 0
      %v1272 = vsel %vm1237, %v826, 0
      %v1275 = vsel %vm1237, %v831, 0
      %v1278 = vsel %vm1237, %v836, 0
      %v1281 = vsel %vm1237, %v841, 0
      %v1284 = vsel %vm1237, %v846, 0
      %1286 = vmatprep.subr.mxu0 0.0
      %1287 = vmatpush1.xpose.msra.mxu0 0.0
      %1288 = vmatprep.subr.mxu0 0.0
      %1289 = vmatpush1.xpose.msra.mxu0 0.0
      %1290 = vmatprep.subr.mxu0 0.0
      %1291 = vmatpush1.xpose.msra.mxu0 0.0
      %1292 = vmatprep.subr.mxu0 0.0
      %1293 = vmatpush1.xpose.msra.mxu0 0.0
      %1294 = vmatprep.subr.mxu0 0.0
      %1295 = vmatpush1.xpose.msra.mxu0 0.0
      %1296 = vmatprep.subr.mxu0 0.0
      %1297 = vmatpush1.xpose.msra.mxu0 0.0
      %1298 = vmatprep.subr.mxu0 0.0
      %1299 = vmatpush1.xpose.msra.mxu0 0.0
      %1300 = vmatprep.subr.mxu0 0.0
      %1301 = vmatpush1.xpose.msra.mxu0 0.0
      %1302 = vmatprep.subr.mxu0 0.0
      %1303 = vmatpush1.xpose.msra.mxu0 %v1284
      %1304 = vmatprep.subr.mxu0 0.0
      %1305 = vmatpush1.xpose.msra.mxu0 %v1281
      %1306 = vmatprep.subr.mxu0 0.0
      %1307 = vmatpush1.xpose.msra.mxu0 %v1278
      %1308 = vmatprep.subr.mxu0 0.0
      %1309 = vmatpush1.xpose.msra.mxu0 %v1275
      %1310 = vmatprep.subr.mxu0 0.0
      %1311 = vmatpush1.xpose.msra.mxu0 %v1272
      %1312 = vmatprep.subr.mxu0 0.0
      %1313 = vmatpush1.xpose.msra.mxu0 %v1269
      %1314 = vmatprep.subr.mxu0 0.0
      %1315 = vmatpush1.xpose.msra.mxu0 %v1266
      %1316 = vmatprep.subr.mxu0 0.0
      %1317 = vmatpush1.xpose.msra.mxu0 %v1263
      %1318 = vmatprep.subr.mxu0 0.0
      %1319 = vmatpush2.xpose.msra.mxu0 0.0
      %1320 = vmatprep.subr.mxu0 0.0
      %1321 = vmatpush2.xpose.msra.mxu0 0.0
      %1322 = vmatprep.subr.mxu0 0.0
      %1323 = vmatpush2.xpose.msra.mxu0 0.0
      %1324 = vmatprep.subr.mxu0 0.0
      %1325 = vmatpush2.xpose.msra.mxu0 0.0
      %1326 = vmatprep.subr.mxu0 0.0
      %1327 = vmatpush2.xpose.msra.mxu0 0.0
      %1328 = vmatprep.subr.mxu0 0.0
      %1329 = vmatpush2.xpose.msra.mxu0 0.0
      %1330 = vmatprep.subr.mxu0 0.0
      %1331 = vmatpush2.xpose.msra.mxu0 0.0
      %1332 = vmatprep.subr.mxu0 0.0
      %1333 = vmatpush2.xpose.msra.mxu0 0.0
      %1334 = vmatprep.subr.mxu0 0.0
      %1335 = vmatpush2.xpose.msra.mxu0 0.0
      %1336 = vmatprep.subr.mxu0 0.0
      %1337 = vmatpush2.xpose.msra.mxu0 0.0
      %1338 = vmatprep.subr.mxu0 0.0
      %1339 = vmatpush2.xpose.msra.mxu0 0.0
      %1340 = vmatprep.subr.mxu0 0.0
      %1341 = vmatpush2.xpose.msra.mxu0 0.0
      %1342 = vmatprep.subr.mxu0 0.0
      %1343 = vmatpush2.xpose.msra.mxu0 0.0
      %1344 = vmatprep.subr.mxu0 0.0
      %1345 = vmatpush2.xpose.msra.mxu0 0.0
      %1346 = vmatprep.subr.mxu0 0.0
      %1347 = vmatpush2.xpose.msra.mxu0 0.0
      %1348 = vmatprep.subr.mxu0 0.0
      %1349 = vmatpush2.xpose.msra.mxu0 0.0
      %1350 = vmatprep.mubr.f32.mxu0 0.0
      %1351 = vmatmul.mubr.f32.gmra.mxu0 %v1239
      %v1352 = vpop.f32.mrf.mxu0
      %v1353 = vadd.f32 %v1205, %v1352
      %v1354 = vpop.f32.mrf.mxu0
      %1355 = vmatprep.mubr.f32.mxu0 0.0
      %1356 = vmatmul.mubr.f32.gmra.mxu0 %v1242
      %v1357 = vpop.f32.mrf.mxu0
      %v1358 = vadd.f32 %v1206, %v1357
      %v1359 = vpop.f32.mrf.mxu0
      %1360 = vmatprep.mubr.f32.mxu0 0.0
      %1361 = vmatmul.mubr.f32.gmra.mxu0 %v1245
      %v1362 = vpop.f32.mrf.mxu0
      %v1363 = vadd.f32 %v1207, %v1362
      %v1364 = vpop.f32.mrf.mxu0
      %1365 = vmatprep.mubr.f32.mxu0 0.0
      %1366 = vmatmul.mubr.f32.gmra.mxu0 %v1248
      %v1367 = vpop.f32.mrf.mxu0
      %v1368 = vadd.f32 %v1208, %v1367
      %v1369 = vpop.f32.mrf.mxu0
      %1370 = vmatprep.mubr.f32.mxu0 0.0
      %1371 = vmatmul.mubr.f32.gmra.mxu0 %v1251
      %v1372 = vpop.f32.mrf.mxu0
      %v1373 = vadd.f32 %v1209, %v1372
      %v1374 = vpop.f32.mrf.mxu0
      %1375 = vmatprep.mubr.f32.mxu0 0.0
      %1376 = vmatmul.mubr.f32.gmra.mxu0 %v1254
      %v1377 = vpop.f32.mrf.mxu0
      %v1378 = vadd.f32 %v1210, %v1377
      %v1379 = vpop.f32.mrf.mxu0
      %1380 = vmatprep.mubr.f32.mxu0 0.0
      %1381 = vmatmul.mubr.f32.gmra.mxu0 %v1257
      %v1382 = vpop.f32.mrf.mxu0
      %v1383 = vadd.f32 %v1211, %v1382
      %v1384 = vpop.f32.mrf.mxu0
      %1385 = vmatprep.mubr.f32.mxu0 0.0
      %1386 = vmatmul.mubr.f32.gmra.mxu0 %v1260
      %v1387 = vpop.f32.mrf.mxu0
      %v1388 = vadd.f32 %v1212, %v1387
      %v1389 = vpop.f32.mrf.mxu0
      %1390 = vdwg.mxu0
      %v1392 = vsel %vm1237, %v615, 0
      %v1395 = vsel %vm1237, %v620, 0
      %v1398 = vsel %vm1237, %v625, 0
      %v1401 = vsel %vm1237, %v630, 0
      %v1404 = vsel %vm1237, %v635, 0
      %v1407 = vsel %vm1237, %v640, 0
      %v1410 = vsel %vm1237, %v645, 0
      %v1413 = vsel %vm1237, %v650, 0
      %v1416 = vsel %vm1237, %v851, 0
      %v1419 = vsel %vm1237, %v856, 0
      %v1422 = vsel %vm1237, %v861, 0
      %v1425 = vsel %vm1237, %v866, 0
      %v1428 = vsel %vm1237, %v871, 0
      %v1431 = vsel %vm1237, %v876, 0
      %v1434 = vsel %vm1237, %v881, 0
      %v1437 = vsel %vm1237, %v886, 0
      %1439 = vmatprep.subr.mxu0 0.0
      %1440 = vmatpush1.xpose.msra.mxu0 0.0
      %1441 = vmatprep.subr.mxu0 0.0
      %1442 = vmatpush1.xpose.msra.mxu0 0.0
      %1443 = vmatprep.subr.mxu0 0.0
      %1444 = vmatpush1.xpose.msra.mxu0 0.0
      %1445 = vmatprep.subr.mxu0 0.0
      %1446 = vmatpush1.xpose.msra.mxu0 0.0
      %1447 = vmatprep.subr.mxu0 0.0
      %1448 = vmatpush1.xpose.msra.mxu0 0.0
      %1449 = vmatprep.subr.mxu0 0.0
      %1450 = vmatpush1.xpose.msra.mxu0 0.0
      %1451 = vmatprep.subr.mxu0 0.0
      %1452 = vmatpush1.xpose.msra.mxu0 0.0
      %1453 = vmatprep.subr.mxu0 0.0
      %1454 = vmatpush1.xpose.msra.mxu0 0.0
      %1455 = vmatprep.subr.mxu0 0.0
      %1456 = vmatpush1.xpose.msra.mxu0 %v1437
      %1457 = vmatprep.subr.mxu0 0.0
      %1458 = vmatpush1.xpose.msra.mxu0 %v1434
      %1459 = vmatprep.subr.mxu0 0.0
      %1460 = vmatpush1.xpose.msra.mxu0 %v1431
      %1461 = vmatprep.subr.mxu0 0.0
      %1462 = vmatpush1.xpose.msra.mxu0 %v1428
      %1463 = vmatprep.subr.mxu0 0.0
      %1464 = vmatpush1.xpose.msra.mxu0 %v1425
      %1465 = vmatprep.subr.mxu0 0.0
      %1466 = vmatpush1.xpose.msra.mxu0 %v1422
      %1467 = vmatprep.subr.mxu0 0.0
      %1468 = vmatpush1.xpose.msra.mxu0 %v1419
      %1469 = vmatprep.subr.mxu0 0.0
      %1470 = vmatpush1.xpose.msra.mxu0 %v1416
      %1471 = vmatprep.subr.mxu0 0.0
      %1472 = vmatpush2.xpose.msra.mxu0 0.0
      %1473 = vmatprep.subr.mxu0 0.0
      %1474 = vmatpush2.xpose.msra.mxu0 0.0
      %1475 = vmatprep.subr.mxu0 0.0
      %1476 = vmatpush2.xpose.msra.mxu0 0.0
      %1477 = vmatprep.subr.mxu0 0.0
      %1478 = vmatpush2.xpose.msra.mxu0 0.0
      %1479 = vmatprep.subr.mxu0 0.0
      %1480 = vmatpush2.xpose.msra.mxu0 0.0
      %1481 = vmatprep.subr.mxu0 0.0
      %1482 = vmatpush2.xpose.msra.mxu0 0.0
      %1483 = vmatprep.subr.mxu0 0.0
      %1484 = vmatpush2.xpose.msra.mxu0 0.0
      %1485 = vmatprep.subr.mxu0 0.0
      %1486 = vmatpush2.xpose.msra.mxu0 0.0
      %1487 = vmatprep.subr.mxu0 0.0
      %1488 = vmatpush2.xpose.msra.mxu0 0.0
      %1489 = vmatprep.subr.mxu0 0.0
      %1490 = vmatpush2.xpose.msra.mxu0 0.0
      %1491 = vmatprep.subr.mxu0 0.0
      %1492 = vmatpush2.xpose.msra.mxu0 0.0
      %1493 = vmatprep.subr.mxu0 0.0
      %1494 = vmatpush2.xpose.msra.mxu0 0.0
      %1495 = vmatprep.subr.mxu0 0.0
      %1496 = vmatpush2.xpose.msra.mxu0 0.0
      %1497 = vmatprep.subr.mxu0 0.0
      %1498 = vmatpush2.xpose.msra.mxu0 0.0
      %1499 = vmatprep.subr.mxu0 0.0
      %1500 = vmatpush2.xpose.msra.mxu0 0.0
      %1501 = vmatprep.subr.mxu0 0.0
      %1502 = vmatpush2.xpose.msra.mxu0 0.0
      %1503 = vmatprep.mubr.f32.mxu0 0.0
      %1504 = vmatmul.mubr.f32.gmra.mxu0 %v1392
      %v1505 = vpop.f32.mrf.mxu0
      %v1506 = vadd.f32 %v1213, %v1505
      %v1507 = vpop.f32.mrf.mxu0
      %1508 = vmatprep.mubr.f32.mxu0 0.0
      %1509 = vmatmul.mubr.f32.gmra.mxu0 %v1395
      %v1510 = vpop.f32.mrf.mxu0
      %v1511 = vadd.f32 %v1214, %v1510
      %v1512 = vpop.f32.mrf.mxu0
      %1513 = vmatprep.mubr.f32.mxu0 0.0
      %1514 = vmatmul.mubr.f32.gmra.mxu0 %v1398
      %v1515 = vpop.f32.mrf.mxu0
      %v1516 = vadd.f32 %v1215, %v1515
      %v1517 = vpop.f32.mrf.mxu0
      %1518 = vmatprep.mubr.f32.mxu0 0.0
      %1519 = vmatmul.mubr.f32.gmra.mxu0 %v1401
      %v1520 = vpop.f32.mrf.mxu0
      %v1521 = vadd.f32 %v1216, %v1520
      %v1522 = vpop.f32.mrf.mxu0
      %1523 = vmatprep.mubr.f32.mxu0 0.0
      %1524 = vmatmul.mubr.f32.gmra.mxu0 %v1404
      %v1525 = vpop.f32.mrf.mxu0
      %v1526 = vadd.f32 %v1217, %v1525
      %v1527 = vpop.f32.mrf.mxu0
      %1528 = vmatprep.mubr.f32.mxu0 0.0
      %1529 = vmatmul.mubr.f32.gmra.mxu0 %v1407
      %v1530 = vpop.f32.mrf.mxu0
      %v1531 = vadd.f32 %v1218, %v1530
      %v1532 = vpop.f32.mrf.mxu0
      %1533 = vmatprep.mubr.f32.mxu0 0.0
      %1534 = vmatmul.mubr.f32.gmra.mxu0 %v1410
      %v1535 = vpop.f32.mrf.mxu0
      %v1536 = vadd.f32 %v1219, %v1535
      %v1537 = vpop.f32.mrf.mxu0
      %1538 = vmatprep.mubr.f32.mxu0 0.0
      %1539 = vmatmul.mubr.f32.gmra.mxu0 %v1413
      %v1540 = vpop.f32.mrf.mxu0
      %v1541 = vadd.f32 %v1220, %v1540
      %v1542 = vpop.f32.mrf.mxu0
      %1543 = vdwg.mxu0
      %v1545 = vsel %vm1237, %v655, 0
      %v1548 = vsel %vm1237, %v660, 0
      %v1551 = vsel %vm1237, %v665, 0
      %v1554 = vsel %vm1237, %v670, 0
      %v1557 = vsel %vm1237, %v675, 0
      %v1560 = vsel %vm1237, %v680, 0
      %v1563 = vsel %vm1237, %v685, 0
      %v1566 = vsel %vm1237, %v690, 0
      %v1569 = vsel %vm1237, %v891, 0
      %v1572 = vsel %vm1237, %v896, 0
      %v1575 = vsel %vm1237, %v901, 0
      %v1578 = vsel %vm1237, %v906, 0
      %v1581 = vsel %vm1237, %v911, 0
      %v1584 = vsel %vm1237, %v916, 0
      %v1587 = vsel %vm1237, %v921, 0
      %v1590 = vsel %vm1237, %v926, 0
      %1592 = vmatprep.subr.mxu0 0.0
      %1593 = vmatpush1.xpose.msra.mxu0 0.0
      %1594 = vmatprep.subr.mxu0 0.0
      %1595 = vmatpush1.xpose.msra.mxu0 0.0
      %1596 = vmatprep.subr.mxu0 0.0
      %1597 = vmatpush1.xpose.msra.mxu0 0.0
      %1598 = vmatprep.subr.mxu0 0.0
      %1599 = vmatpush1.xpose.msra.mxu0 0.0
      %1600 = vmatprep.subr.mxu0 0.0
      %1601 = vmatpush1.xpose.msra.mxu0 0.0
      %1602 = vmatprep.subr.mxu0 0.0
      %1603 = vmatpush1.xpose.msra.mxu0 0.0
      %1604 = vmatprep.subr.mxu0 0.0
      %1605 = vmatpush1.xpose.msra.mxu0 0.0
      %1606 = vmatprep.subr.mxu0 0.0
      %1607 = vmatpush1.xpose.msra.mxu0 0.0
      %1608 = vmatprep.subr.mxu0 0.0
      %1609 = vmatpush1.xpose.msra.mxu0 %v1590
      %1610 = vmatprep.subr.mxu0 0.0
      %1611 = vmatpush1.xpose.msra.mxu0 %v1587
      %1612 = vmatprep.subr.mxu0 0.0
      %1613 = vmatpush1.xpose.msra.mxu0 %v1584
      %1614 = vmatprep.subr.mxu0 0.0
      %1615 = vmatpush1.xpose.msra.mxu0 %v1581
      %1616 = vmatprep.subr.mxu0 0.0
      %1617 = vmatpush1.xpose.msra.mxu0 %v1578
      %1618 = vmatprep.subr.mxu0 0.0
      %1619 = vmatpush1.xpose.msra.mxu0 %v1575
      %1620 = vmatprep.subr.mxu0 0.0
      %1621 = vmatpush1.xpose.msra.mxu0 %v1572
      %1622 = vmatprep.subr.mxu0 0.0
      %1623 = vmatpush1.xpose.msra.mxu0 %v1569
      %1624 = vmatprep.subr.mxu0 0.0
      %1625 = vmatpush2.xpose.msra.mxu0 0.0
      %1626 = vmatprep.subr.mxu0 0.0
      %1627 = vmatpush2.xpose.msra.mxu0 0.0
      %1628 = vmatprep.subr.mxu0 0.0
      %1629 = vmatpush2.xpose.msra.mxu0 0.0
      %1630 = vmatprep.subr.mxu0 0.0
      %1631 = vmatpush2.xpose.msra.mxu0 0.0
      %1632 = vmatprep.subr.mxu0 0.0
      %1633 = vmatpush2.xpose.msra.mxu0 0.0
      %1634 = vmatprep.subr.mxu0 0.0
      %1635 = vmatpush2.xpose.msra.mxu0 0.0
      %1636 = vmatprep.subr.mxu0 0.0
      %1637 = vmatpush2.xpose.msra.mxu0 0.0
      %1638 = vmatprep.subr.mxu0 0.0
      %1639 = vmatpush2.xpose.msra.mxu0 0.0
      %1640 = vmatprep.subr.mxu0 0.0
      %1641 = vmatpush2.xpose.msra.mxu0 0.0
      %1642 = vmatprep.subr.mxu0 0.0
      %1643 = vmatpush2.xpose.msra.mxu0 0.0
      %1644 = vmatprep.subr.mxu0 0.0
      %1645 = vmatpush2.xpose.msra.mxu0 0.0
      %1646 = vmatprep.subr.mxu0 0.0
      %1647 = vmatpush2.xpose.msra.mxu0 0.0
      %1648 = vmatprep.subr.mxu0 0.0
      %1649 = vmatpush2.xpose.msra.mxu0 0.0
      %1650 = vmatprep.subr.mxu0 0.0
      %1651 = vmatpush2.xpose.msra.mxu0 0.0
      %1652 = vmatprep.subr.mxu0 0.0
      %1653 = vmatpush2.xpose.msra.mxu0 0.0
      %1654 = vmatprep.subr.mxu0 0.0
      %1655 = vmatpush2.xpose.msra.mxu0 0.0
      %1656 = vmatprep.mubr.f32.mxu0 0.0
      %1657 = vmatmul.mubr.f32.gmra.mxu0 %v1545
      %v1658 = vpop.f32.mrf.mxu0
      %v1659 = vadd.f32 %v1221, %v1658
      %v1660 = vpop.f32.mrf.mxu0
      %1661 = vmatprep.mubr.f32.mxu0 0.0
      %1662 = vmatmul.mubr.f32.gmra.mxu0 %v1548
      %v1663 = vpop.f32.mrf.mxu0
      %v1664 = vadd.f32 %v1222, %v1663
      %v1665 = vpop.f32.mrf.mxu0
      %1666 = vmatprep.mubr.f32.mxu0 0.0
      %1667 = vmatmul.mubr.f32.gmra.mxu0 %v1551
      %v1668 = vpop.f32.mrf.mxu0
      %v1669 = vadd.f32 %v1223, %v1668
      %v1670 = vpop.f32.mrf.mxu0
      %1671 = vmatprep.mubr.f32.mxu0 0.0
      %1672 = vmatmul.mubr.f32.gmra.mxu0 %v1554
      %v1673 = vpop.f32.mrf.mxu0
      %v1674 = vadd.f32 %v1224, %v1673
      %v1675 = vpop.f32.mrf.mxu0
      %1676 = vmatprep.mubr.f32.mxu0 0.0
      %1677 = vmatmul.mubr.f32.gmra.mxu0 %v1557
      %v1678 = vpop.f32.mrf.mxu0
      %v1679 = vadd.f32 %v1225, %v1678
      %v1680 = vpop.f32.mrf.mxu0
      %1681 = vmatprep.mubr.f32.mxu0 0.0
      %1682 = vmatmul.mubr.f32.gmra.mxu0 %v1560
      %v1683 = vpop.f32.mrf.mxu0
      %v1684 = vadd.f32 %v1226, %v1683
      %v1685 = vpop.f32.mrf.mxu0
      %1686 = vmatprep.mubr.f32.mxu0 0.0
      %1687 = vmatmul.mubr.f32.gmra.mxu0 %v1563
      %v1688 = vpop.f32.mrf.mxu0
      %v1689 = vadd.f32 %v1227, %v1688
      %v1690 = vpop.f32.mrf.mxu0
      %1691 = vmatprep.mubr.f32.mxu0 0.0
      %1692 = vmatmul.mubr.f32.gmra.mxu0 %v1566
      %v1693 = vpop.f32.mrf.mxu0
      %v1694 = vadd.f32 %v1228, %v1693
      %v1695 = vpop.f32.mrf.mxu0
      %1696 = vdwg.mxu0
      %v1698 = vsel %vm1237, %v695, 0
      %v1701 = vsel %vm1237, %v700, 0
      %v1704 = vsel %vm1237, %v705, 0
      %v1707 = vsel %vm1237, %v710, 0
      %v1710 = vsel %vm1237, %v715, 0
      %v1713 = vsel %vm1237, %v720, 0
      %v1716 = vsel %vm1237, %v725, 0
      %v1719 = vsel %vm1237, %v730, 0
      %v1722 = vsel %vm1237, %v931, 0
      %v1725 = vsel %vm1237, %v936, 0
      %v1728 = vsel %vm1237, %v941, 0
      %v1731 = vsel %vm1237, %v946, 0
      %v1734 = vsel %vm1237, %v951, 0
      %v1737 = vsel %vm1237, %v956, 0
      %v1740 = vsel %vm1237, %v961, 0
      %v1743 = vsel %vm1237, %v966, 0
      %1745 = vmatprep.subr.mxu0 0.0
      %1746 = vmatpush1.xpose.msra.mxu0 0.0
      %1747 = vmatprep.subr.mxu0 0.0
      %1748 = vmatpush1.xpose.msra.mxu0 0.0
      %1749 = vmatprep.subr.mxu0 0.0
      %1750 = vmatpush1.xpose.msra.mxu0 0.0
      %1751 = vmatprep.subr.mxu0 0.0
      %1752 = vmatpush1.xpose.msra.mxu0 0.0
      %1753 = vmatprep.subr.mxu0 0.0
      %1754 = vmatpush1.xpose.msra.mxu0 0.0
      %1755 = vmatprep.subr.mxu0 0.0
      %1756 = vmatpush1.xpose.msra.mxu0 0.0
      %1757 = vmatprep.subr.mxu0 0.0
      %1758 = vmatpush1.xpose.msra.mxu0 0.0
      %1759 = vmatprep.subr.mxu0 0.0
      %1760 = vmatpush1.xpose.msra.mxu0 0.0
      %1761 = vmatprep.subr.mxu0 0.0
      %1762 = vmatpush1.xpose.msra.mxu0 %v1743
      %1763 = vmatprep.subr.mxu0 0.0
      %1764 = vmatpush1.xpose.msra.mxu0 %v1740
      %1765 = vmatprep.subr.mxu0 0.0
      %1766 = vmatpush1.xpose.msra.mxu0 %v1737
      %1767 = vmatprep.subr.mxu0 0.0
      %1768 = vmatpush1.xpose.msra.mxu0 %v1734
      %1769 = vmatprep.subr.mxu0 0.0
      %1770 = vmatpush1.xpose.msra.mxu0 %v1731
      %1771 = vmatprep.subr.mxu0 0.0
      %1772 = vmatpush1.xpose.msra.mxu0 %v1728
      %1773 = vmatprep.subr.mxu0 0.0
      %1774 = vmatpush1.xpose.msra.mxu0 %v1725
      %1775 = vmatprep.subr.mxu0 0.0
      %1776 = vmatpush1.xpose.msra.mxu0 %v1722
      %1777 = vmatprep.subr.mxu0 0.0
      %1778 = vmatpush2.xpose.msra.mxu0 0.0
      %1779 = vmatprep.subr.mxu0 0.0
      %1780 = vmatpush2.xpose.msra.mxu0 0.0
      %1781 = vmatprep.subr.mxu0 0.0
      %1782 = vmatpush2.xpose.msra.mxu0 0.0
      %1783 = vmatprep.subr.mxu0 0.0
      %1784 = vmatpush2.xpose.msra.mxu0 0.0
      %1785 = vmatprep.subr.mxu0 0.0
      %1786 = vmatpush2.xpose.msra.mxu0 0.0
      %1787 = vmatprep.subr.mxu0 0.0
      %1788 = vmatpush2.xpose.msra.mxu0 0.0
      %1789 = vmatprep.subr.mxu0 0.0
      %1790 = vmatpush2.xpose.msra.mxu0 0.0
      %1791 = vmatprep.subr.mxu0 0.0
      %1792 = vmatpush2.xpose.msra.mxu0 0.0
      %1793 = vmatprep.subr.mxu0 0.0
      %1794 = vmatpush2.xpose.msra.mxu0 0.0
      %1795 = vmatprep.subr.mxu0 0.0
      %1796 = vmatpush2.xpose.msra.mxu0 0.0
      %1797 = vmatprep.subr.mxu0 0.0
      %1798 = vmatpush2.xpose.msra.mxu0 0.0
      %1799 = vmatprep.subr.mxu0 0.0
      %1800 = vmatpush2.xpose.msra.mxu0 0.0
      %1801 = vmatprep.subr.mxu0 0.0
      %1802 = vmatpush2.xpose.msra.mxu0 0.0
      %1803 = vmatprep.subr.mxu0 0.0
      %1804 = vmatpush2.xpose.msra.mxu0 0.0
      %1805 = vmatprep.subr.mxu0 0.0
      %1806 = vmatpush2.xpose.msra.mxu0 0.0
      %1807 = vmatprep.subr.mxu0 0.0
      %1808 = vmatpush2.xpose.msra.mxu0 0.0
      %1809 = vmatprep.mubr.f32.mxu0 0.0
      %1810 = vmatmul.mubr.f32.gmra.mxu0 %v1698
      %v1811 = vpop.f32.mrf.mxu0
      %v1812 = vadd.f32 %v1229, %v1811
      %v1813 = vpop.f32.mrf.mxu0
      %1814 = vmatprep.mubr.f32.mxu0 0.0
      %1815 = vmatmul.mubr.f32.gmra.mxu0 %v1701
      %v1816 = vpop.f32.mrf.mxu0
      %v1817 = vadd.f32 %v1230, %v1816
      %v1818 = vpop.f32.mrf.mxu0
      %1819 = vmatprep.mubr.f32.mxu0 0.0
      %1820 = vmatmul.mubr.f32.gmra.mxu0 %v1704
      %v1821 = vpop.f32.mrf.mxu0
      %v1822 = vadd.f32 %v1231, %v1821
      %v1823 = vpop.f32.mrf.mxu0
      %1824 = vmatprep.mubr.f32.mxu0 0.0
      %1825 = vmatmul.mubr.f32.gmra.mxu0 %v1707
      %v1826 = vpop.f32.mrf.mxu0
      %v1827 = vadd.f32 %v1232, %v1826
      %v1828 = vpop.f32.mrf.mxu0
      %1829 = vmatprep.mubr.f32.mxu0 0.0
      %1830 = vmatmul.mubr.f32.gmra.mxu0 %v1710
      %v1831 = vpop.f32.mrf.mxu0
      %v1832 = vadd.f32 %v1233, %v1831
      %v1833 = vpop.f32.mrf.mxu0
      %1834 = vmatprep.mubr.f32.mxu0 0.0
      %1835 = vmatmul.mubr.f32.gmra.mxu0 %v1713
      %v1836 = vpop.f32.mrf.mxu0
      %v1837 = vadd.f32 %v1234, %v1836
      %v1838 = vpop.f32.mrf.mxu0
      %1839 = vmatprep.mubr.f32.mxu0 0.0
      %1840 = vmatmul.mubr.f32.gmra.mxu0 %v1716
      %v1841 = vpop.f32.mrf.mxu0
      %v1842 = vadd.f32 %v1235, %v1841
      %v1843 = vpop.f32.mrf.mxu0
      %1844 = vmatprep.mubr.f32.mxu0 0.0
      %1845 = vmatmul.mubr.f32.gmra.mxu0 %v1719
      %v1846 = vpop.f32.mrf.mxu0
      %v1847 = vadd.f32 %v1236, %v1846
      %v1848 = vpop.f32.mrf.mxu0
      %1849 = vdwg.mxu0
      %vm1850 = vcmask 523264
      %v1851 = vsel %vm1850, %v1353, -inf
      %1852 = vmax.xlane.f32.xlu0 %v1851
      %v1853 = vpop.xlane.xlu0 %1852
      %v1854 = vsel %vm1850, %v1358, -inf
      %1855 = vmax.xlane.f32.xlu0 %v1854
      %v1856 = vpop.xlane.xlu0 %1855
      %v1857 = vsel %vm1850, %v1363, -inf
      %1858 = vmax.xlane.f32.xlu0 %v1857
      %v1859 = vpop.xlane.xlu0 %1858
      %v1860 = vsel %vm1850, %v1368, -inf
      %1861 = vmax.xlane.f32.xlu0 %v1860
      %v1862 = vpop.xlane.xlu0 %1861
      %v1863 = vsel %vm1850, %v1373, -inf
      %1864 = vmax.xlane.f32.xlu0 %v1863
      %v1865 = vpop.xlane.xlu0 %1864
      %v1866 = vsel %vm1850, %v1378, -inf
      %1867 = vmax.xlane.f32.xlu0 %v1866
      %v1868 = vpop.xlane.xlu0 %1867
      %v1869 = vsel %vm1850, %v1383, -inf
      %1870 = vmax.xlane.f32.xlu0 %v1869
      %v1871 = vpop.xlane.xlu0 %1870
      %v1872 = vsel %vm1850, %v1388, -inf
      %1873 = vmax.xlane.f32.xlu0 %v1872
      %v1874 = vpop.xlane.xlu0 %1873
      %v1875 = vsel %vm1850, %v1506, -inf
      %1876 = vmax.xlane.f32.xlu0 %v1875
      %v1877 = vpop.xlane.xlu0 %1876
      %v1878 = vsel %vm1850, %v1511, -inf
      %1879 = vmax.xlane.f32.xlu0 %v1878
      %v1880 = vpop.xlane.xlu0 %1879
      %v1881 = vsel %vm1850, %v1516, -inf
      %1882 = vmax.xlane.f32.xlu0 %v1881
      %v1883 = vpop.xlane.xlu0 %1882
      %v1884 = vsel %vm1850, %v1521, -inf
      %1885 = vmax.xlane.f32.xlu0 %v1884
      %v1886 = vpop.xlane.xlu0 %1885
      %v1887 = vsel %vm1850, %v1526, -inf
      %1888 = vmax.xlane.f32.xlu0 %v1887
      %v1889 = vpop.xlane.xlu0 %1888
      %v1890 = vsel %vm1850, %v1531, -inf
      %1891 = vmax.xlane.f32.xlu0 %v1890
      %v1892 = vpop.xlane.xlu0 %1891
      %v1893 = vsel %vm1850, %v1536, -inf
      %1894 = vmax.xlane.f32.xlu0 %v1893
      %v1895 = vpop.xlane.xlu0 %1894
      %v1896 = vsel %vm1850, %v1541, -inf
      %1897 = vmax.xlane.f32.xlu0 %v1896
      %v1898 = vpop.xlane.xlu0 %1897
      %v1899 = vsel %vm1850, %v1659, -inf
      %1900 = vmax.xlane.f32.xlu0 %v1899
      %v1901 = vpop.xlane.xlu0 %1900
      %v1902 = vsel %vm1850, %v1664, -inf
      %1903 = vmax.xlane.f32.xlu0 %v1902
      %v1904 = vpop.xlane.xlu0 %1903
      %v1905 = vsel %vm1850, %v1669, -inf
      %1906 = vmax.xlane.f32.xlu0 %v1905
      %v1907 = vpop.xlane.xlu0 %1906
      %v1908 = vsel %vm1850, %v1674, -inf
      %1909 = vmax.xlane.f32.xlu0 %v1908
      %v1910 = vpop.xlane.xlu0 %1909
      %v1911 = vsel %vm1850, %v1679, -inf
      %1912 = vmax.xlane.f32.xlu0 %v1911
      %v1913 = vpop.xlane.xlu0 %1912
      %v1914 = vsel %vm1850, %v1684, -inf
      %1915 = vmax.xlane.f32.xlu0 %v1914
      %v1916 = vpop.xlane.xlu0 %1915
      %v1917 = vsel %vm1850, %v1689, -inf
      %1918 = vmax.xlane.f32.xlu0 %v1917
      %v1919 = vpop.xlane.xlu0 %1918
      %v1920 = vsel %vm1850, %v1694, -inf
      %1921 = vmax.xlane.f32.xlu0 %v1920
      %v1922 = vpop.xlane.xlu0 %1921
      %v1923 = vsel %vm1850, %v1812, -inf
      %1924 = vmax.xlane.f32.xlu0 %v1923
      %v1925 = vpop.xlane.xlu0 %1924
      %v1926 = vsel %vm1850, %v1817, -inf
      %1927 = vmax.xlane.f32.xlu0 %v1926
      %v1928 = vpop.xlane.xlu0 %1927
      %v1929 = vsel %vm1850, %v1822, -inf
      %1930 = vmax.xlane.f32.xlu0 %v1929
      %v1931 = vpop.xlane.xlu0 %1930
      %v1932 = vsel %vm1850, %v1827, -inf
      %1933 = vmax.xlane.f32.xlu0 %v1932
      %v1934 = vpop.xlane.xlu0 %1933
      %v1935 = vsel %vm1850, %v1832, -inf
      %1936 = vmax.xlane.f32.xlu0 %v1935
      %v1937 = vpop.xlane.xlu0 %1936
      %v1938 = vsel %vm1850, %v1837, -inf
      %1939 = vmax.xlane.f32.xlu0 %v1938
      %v1940 = vpop.xlane.xlu0 %1939
      %v1941 = vsel %vm1850, %v1842, -inf
      %1942 = vmax.xlane.f32.xlu0 %v1941
      %v1943 = vpop.xlane.xlu0 %1942
      %v1944 = vsel %vm1850, %v1847, -inf
      %1945 = vmax.xlane.f32.xlu0 %v1944
      %v1946 = vpop.xlane.xlu0 %1945
      %v1947 = vsub.f32 %v1353, %v1853
      %v1948 = vsub.f32 %v1358, %v1856
      %v1949 = vsub.f32 %v1363, %v1859
      %v1950 = vsub.f32 %v1368, %v1862
      %v1951 = vsub.f32 %v1373, %v1865
      %v1952 = vsub.f32 %v1378, %v1868
      %v1953 = vsub.f32 %v1383, %v1871
      %v1954 = vsub.f32 %v1388, %v1874
      %v1955 = vsub.f32 %v1506, %v1877
      %v1956 = vsub.f32 %v1511, %v1880
      %v1957 = vsub.f32 %v1516, %v1883
      %v1958 = vsub.f32 %v1521, %v1886
      %v1959 = vsub.f32 %v1526, %v1889
      %v1960 = vsub.f32 %v1531, %v1892
      %v1961 = vsub.f32 %v1536, %v1895
      %v1962 = vsub.f32 %v1541, %v1898
      %v1963 = vsub.f32 %v1659, %v1901
      %v1964 = vsub.f32 %v1664, %v1904
      %v1965 = vsub.f32 %v1669, %v1907
      %v1966 = vsub.f32 %v1674, %v1910
      %v1967 = vsub.f32 %v1679, %v1913
      %v1968 = vsub.f32 %v1684, %v1916
      %v1969 = vsub.f32 %v1689, %v1919
      %v1970 = vsub.f32 %v1694, %v1922
      %v1971 = vsub.f32 %v1812, %v1925
      %v1972 = vsub.f32 %v1817, %v1928
      %v1973 = vsub.f32 %v1822, %v1931
      %v1974 = vsub.f32 %v1827, %v1934
      %v1975 = vsub.f32 %v1832, %v1937
      %v1976 = vsub.f32 %v1837, %v1940
      %v1977 = vsub.f32 %v1842, %v1943
      %v1978 = vsub.f32 %v1847, %v1946
      %v1979 = vmul.f32 %v1947, 1.442695
      %v1980 = vpow.pop %v1979
      %v1981 = vmul.f32 %v1948, 1.442695
      %v1982 = vpow.pop %v1981
      %v1983 = vmul.f32 %v1949, 1.442695
      %v1984 = vpow.pop %v1983
      %v1985 = vmul.f32 %v1950, 1.442695
      %v1986 = vpow.pop %v1985
      %v1987 = vmul.f32 %v1951, 1.442695
      %v1988 = vpow.pop %v1987
      %v1989 = vmul.f32 %v1952, 1.442695
      %v1990 = vpow.pop %v1989
      %v1991 = vmul.f32 %v1953, 1.442695
      %v1992 = vpow.pop %v1991
      %v1993 = vmul.f32 %v1954, 1.442695
      %v1994 = vpow.pop %v1993
      %v1995 = vmul.f32 %v1955, 1.442695
      %v1996 = vpow.pop %v1995
      %v1997 = vmul.f32 %v1956, 1.442695
      %v1998 = vpow.pop %v1997
      %v1999 = vmul.f32 %v1957, 1.442695
      %v2000 = vpow.pop %v1999
      %v2001 = vmul.f32 %v1958, 1.442695
      %v2002 = vpow.pop %v2001
      %v2003 = vmul.f32 %v1959, 1.442695
      %v2004 = vpow.pop %v2003
      %v2005 = vmul.f32 %v1960, 1.442695
      %v2006 = vpow.pop %v2005
      %v2007 = vmul.f32 %v1961, 1.442695
      %v2008 = vpow.pop %v2007
      %v2009 = vmul.f32 %v1962, 1.442695
      %v2010 = vpow.pop %v2009
      %v2011 = vmul.f32 %v1963, 1.442695
      %v2012 = vpow.pop %v2011
      %v2013 = vmul.f32 %v1964, 1.442695
      %v2014 = vpow.pop %v2013
      %v2015 = vmul.f32 %v1965, 1.442695
      %v2016 = vpow.pop %v2015
      %v2017 = vmul.f32 %v1966, 1.442695
      %v2018 = vpow.pop %v2017
      %v2019 = vmul.f32 %v1967, 1.442695
      %v2020 = vpow.pop %v2019
      %v2021 = vmul.f32 %v1968, 1.442695
      %v2022 = vpow.pop %v2021
      %v2023 = vmul.f32 %v1969, 1.442695
      %v2024 = vpow.pop %v2023
      %v2025 = vmul.f32 %v1970, 1.442695
      %v2026 = vpow.pop %v2025
      %v2027 = vmul.f32 %v1971, 1.442695
      %v2028 = vpow.pop %v2027
      %v2029 = vmul.f32 %v1972, 1.442695
      %v2030 = vpow.pop %v2029
      %v2031 = vmul.f32 %v1973, 1.442695
      %v2032 = vpow.pop %v2031
      %v2033 = vmul.f32 %v1974, 1.442695
      %v2034 = vpow.pop %v2033
      %v2035 = vmul.f32 %v1975, 1.442695
      %v2036 = vpow.pop %v2035
      %v2037 = vmul.f32 %v1976, 1.442695
      %v2038 = vpow.pop %v2037
      %v2039 = vmul.f32 %v1977, 1.442695
      %v2040 = vpow.pop %v2039
      %v2041 = vmul.f32 %v1978, 1.442695
      %v2042 = vpow.pop %v2041
      %v2043 = vsel %vm1850, %v1980, 0.0
      %2044 = vadd.xlane.f32.xlu0 %v2043
      %v2045 = vpop.xlane.xlu0 %2044
      %v2046 = vsel %vm1850, %v1982, 0.0
      %2047 = vadd.xlane.f32.xlu0 %v2046
      %v2048 = vpop.xlane.xlu0 %2047
      %v2049 = vsel %vm1850, %v1984, 0.0
      %2050 = vadd.xlane.f32.xlu0 %v2049
      %v2051 = vpop.xlane.xlu0 %2050
      %v2052 = vsel %vm1850, %v1986, 0.0
      %2053 = vadd.xlane.f32.xlu0 %v2052
      %v2054 = vpop.xlane.xlu0 %2053
      %v2055 = vsel %vm1850, %v1988, 0.0
      %2056 = vadd.xlane.f32.xlu0 %v2055
      %v2057 = vpop.xlane.xlu0 %2056
      %v2058 = vsel %vm1850, %v1990, 0.0
      %2059 = vadd.xlane.f32.xlu0 %v2058
      %v2060 = vpop.xlane.xlu0 %2059
      %v2061 = vsel %vm1850, %v1992, 0.0
      %2062 = vadd.xlane.f32.xlu0 %v2061
      %v2063 = vpop.xlane.xlu0 %2062
      %v2064 = vsel %vm1850, %v1994, 0.0
      %2065 = vadd.xlane.f32.xlu0 %v2064
      %v2066 = vpop.xlane.xlu0 %2065
      %v2067 = vsel %vm1850, %v1996, 0.0
      %2068 = vadd.xlane.f32.xlu0 %v2067
      %v2069 = vpop.xlane.xlu0 %2068
      %v2070 = vsel %vm1850, %v1998, 0.0
      %2071 = vadd.xlane.f32.xlu0 %v2070
      %v2072 = vpop.xlane.xlu0 %2071
      %v2073 = vsel %vm1850, %v2000, 0.0
      %2074 = vadd.xlane.f32.xlu0 %v2073
      %v2075 = vpop.xlane.xlu0 %2074
      %v2076 = vsel %vm1850, %v2002, 0.0
      %2077 = vadd.xlane.f32.xlu0 %v2076
      %v2078 = vpop.xlane.xlu0 %2077
      %v2079 = vsel %vm1850, %v2004, 0.0
      %2080 = vadd.xlane.f32.xlu0 %v2079
      %v2081 = vpop.xlane.xlu0 %2080
      %v2082 = vsel %vm1850, %v2006, 0.0
      %2083 = vadd.xlane.f32.xlu0 %v2082
      %v2084 = vpop.xlane.xlu0 %2083
      %v2085 = vsel %vm1850, %v2008, 0.0
      %2086 = vadd.xlane.f32.xlu0 %v2085
      %v2087 = vpop.xlane.xlu0 %2086
      %v2088 = vsel %vm1850, %v2010, 0.0
      %2089 = vadd.xlane.f32.xlu0 %v2088
      %v2090 = vpop.xlane.xlu0 %2089
      %v2091 = vsel %vm1850, %v2012, 0.0
      %2092 = vadd.xlane.f32.xlu0 %v2091
      %v2093 = vpop.xlane.xlu0 %2092
      %v2094 = vsel %vm1850, %v2014, 0.0
      %2095 = vadd.xlane.f32.xlu0 %v2094
      %v2096 = vpop.xlane.xlu0 %2095
      %v2097 = vsel %vm1850, %v2016, 0.0
      %2098 = vadd.xlane.f32.xlu0 %v2097
      %v2099 = vpop.xlane.xlu0 %2098
      %v2100 = vsel %vm1850, %v2018, 0.0
      %2101 = vadd.xlane.f32.xlu0 %v2100
      %v2102 = vpop.xlane.xlu0 %2101
      %v2103 = vsel %vm1850, %v2020, 0.0
      %2104 = vadd.xlane.f32.xlu0 %v2103
      %v2105 = vpop.xlane.xlu0 %2104
      %v2106 = vsel %vm1850, %v2022, 0.0
      %2107 = vadd.xlane.f32.xlu0 %v2106
      %v2108 = vpop.xlane.xlu0 %2107
      %v2109 = vsel %vm1850, %v2024, 0.0
      %2110 = vadd.xlane.f32.xlu0 %v2109
      %v2111 = vpop.xlane.xlu0 %2110
      %v2112 = vsel %vm1850, %v2026, 0.0
      %2113 = vadd.xlane.f32.xlu0 %v2112
      %v2114 = vpop.xlane.xlu0 %2113
      %v2115 = vsel %vm1850, %v2028, 0.0
      %2116 = vadd.xlane.f32.xlu0 %v2115
      %v2117 = vpop.xlane.xlu0 %2116
      %v2118 = vsel %vm1850, %v2030, 0.0
      %2119 = vadd.xlane.f32.xlu0 %v2118
      %v2120 = vpop.xlane.xlu0 %2119
      %v2121 = vsel %vm1850, %v2032, 0.0
      %2122 = vadd.xlane.f32.xlu0 %v2121
      %v2123 = vpop.xlane.xlu0 %2122
      %v2124 = vsel %vm1850, %v2034, 0.0
      %2125 = vadd.xlane.f32.xlu0 %v2124
      %v2126 = vpop.xlane.xlu0 %2125
      %v2127 = vsel %vm1850, %v2036, 0.0
      %2128 = vadd.xlane.f32.xlu0 %v2127
      %v2129 = vpop.xlane.xlu0 %2128
      %v2130 = vsel %vm1850, %v2038, 0.0
      %2131 = vadd.xlane.f32.xlu0 %v2130
      %v2132 = vpop.xlane.xlu0 %2131
      %v2133 = vsel %vm1850, %v2040, 0.0
      %2134 = vadd.xlane.f32.xlu0 %v2133
      %v2135 = vpop.xlane.xlu0 %2134
      %v2136 = vsel %vm1850, %v2042, 0.0
      %2137 = vadd.xlane.f32.xlu0 %v2136
      %v2138 = vpop.xlane.xlu0 %2137
      %v2139 = vrcp.pop %v2045
      %v2140 = vrcp.pop %v2048
      %v2141 = vrcp.pop %v2051
      %v2142 = vrcp.pop %v2054
      %v2143 = vrcp.pop %v2057
      %v2144 = vrcp.pop %v2060
      %v2145 = vrcp.pop %v2063
      %v2146 = vrcp.pop %v2066
      %v2147 = vrcp.pop %v2069
      %v2148 = vrcp.pop %v2072
      %v2149 = vrcp.pop %v2075
      %v2150 = vrcp.pop %v2078
      %v2151 = vrcp.pop %v2081
      %v2152 = vrcp.pop %v2084
      %v2153 = vrcp.pop %v2087
      %v2154 = vrcp.pop %v2090
      %v2155 = vrcp.pop %v2093
      %v2156 = vrcp.pop %v2096
      %v2157 = vrcp.pop %v2099
      %v2158 = vrcp.pop %v2102
      %v2159 = vrcp.pop %v2105
      %v2160 = vrcp.pop %v2108
      %v2161 = vrcp.pop %v2111
      %v2162 = vrcp.pop %v2114
      %v2163 = vrcp.pop %v2117
      %v2164 = vrcp.pop %v2120
      %v2165 = vrcp.pop %v2123
      %v2166 = vrcp.pop %v2126
      %v2167 = vrcp.pop %v2129
      %v2168 = vrcp.pop %v2132
      %v2169 = vrcp.pop %v2135
      %v2170 = vrcp.pop %v2138
      %v2171 = vmul.f32 %v1980, %v2139
      %v2172 = vmul.f32 %v1982, %v2140
      %v2173 = vmul.f32 %v1984, %v2141
      %v2174 = vmul.f32 %v1986, %v2142
      %v2175 = vmul.f32 %v1988, %v2143
      %v2176 = vmul.f32 %v1990, %v2144
      %v2177 = vmul.f32 %v1992, %v2145
      %v2178 = vmul.f32 %v1994, %v2146
      %v2179 = vmul.f32 %v1996, %v2147
      %v2180 = vmul.f32 %v1998, %v2148
      %v2181 = vmul.f32 %v2000, %v2149
      %v2182 = vmul.f32 %v2002, %v2150
      %v2183 = vmul.f32 %v2004, %v2151
      %v2184 = vmul.f32 %v2006, %v2152
      %v2185 = vmul.f32 %v2008, %v2153
      %v2186 = vmul.f32 %v2010, %v2154
      %v2187 = vmul.f32 %v2012, %v2155
      %v2188 = vmul.f32 %v2014, %v2156
      %v2189 = vmul.f32 %v2016, %v2157
      %v2190 = vmul.f32 %v2018, %v2158
      %v2191 = vmul.f32 %v2020, %v2159
      %v2192 = vmul.f32 %v2022, %v2160
      %v2193 = vmul.f32 %v2024, %v2161
      %v2194 = vmul.f32 %v2026, %v2162
      %v2195 = vmul.f32 %v2028, %v2163
      %v2196 = vmul.f32 %v2030, %v2164
      %v2197 = vmul.f32 %v2032, %v2165
      %v2198 = vmul.f32 %v2034, %v2166
      %v2199 = vmul.f32 %v2036, %v2167
      %v2200 = vmul.f32 %v2038, %v2168
      %v2201 = vmul.f32 %v2040, %v2169
      %v2202 = vmul.f32 %v2042, %v2170
      %v2204 = vsel %vm1850, %v2171, 0
      %v2207 = vsel %vm1850, %v2172, 0
      %v2210 = vsel %vm1850, %v2173, 0
      %v2213 = vsel %vm1850, %v2174, 0
      %v2216 = vsel %vm1850, %v2175, 0
      %v2219 = vsel %vm1850, %v2176, 0
      %v2222 = vsel %vm1850, %v2177, 0
      %v2225 = vsel %vm1850, %v2178, 0
      %2227 = vmatprep.subr.mxu0 0.0
      %2228 = vmatpush1.msra.mxu0 0.0
      %2229 = vmatprep.subr.mxu0 0.0
      %2230 = vmatpush1.msra.mxu0 0.0
      %2231 = vmatprep.subr.mxu0 0.0
      %2232 = vmatpush1.msra.mxu0 0.0
      %2233 = vmatprep.subr.mxu0 0.0
      %2234 = vmatpush1.msra.mxu0 0.0
      %2235 = vmatprep.subr.mxu0 0.0
      %2236 = vmatpush1.msra.mxu0 0.0
      %2237 = vmatprep.subr.mxu0 0.0
      %2238 = vmatpush1.msra.mxu0 0.0
      %2239 = vmatprep.subr.mxu0 0.0
      %2240 = vmatpush1.msra.mxu0 0.0
      %2241 = vmatprep.subr.mxu0 0.0
      %2242 = vmatpush1.msra.mxu0 0.0
      %2243 = vmatprep.subr.mxu0 0.0
      %2244 = vmatpush1.msra.mxu0 %v1082
      %2245 = vmatprep.subr.mxu0 0.0
      %2246 = vmatpush1.msra.mxu0 %v1077
      %2247 = vmatprep.subr.mxu0 0.0
      %2248 = vmatpush1.msra.mxu0 %v1072
      %2249 = vmatprep.subr.mxu0 0.0
      %2250 = vmatpush1.msra.mxu0 %v1067
      %2251 = vmatprep.subr.mxu0 0.0
      %2252 = vmatpush1.msra.mxu0 %v1062
      %2253 = vmatprep.subr.mxu0 0.0
      %2254 = vmatpush1.msra.mxu0 %v1057
      %2255 = vmatprep.subr.mxu0 0.0
      %2256 = vmatpush1.msra.mxu0 %v1052
      %2257 = vmatprep.subr.mxu0 0.0
      %2258 = vmatpush1.msra.mxu0 %v1047
      %2259 = vmatprep.subr.mxu0 0.0
      %2260 = vmatpush2.msra.mxu0 0.0
      %2261 = vmatprep.subr.mxu0 0.0
      %2262 = vmatpush2.msra.mxu0 0.0
      %2263 = vmatprep.subr.mxu0 0.0
      %2264 = vmatpush2.msra.mxu0 0.0
      %2265 = vmatprep.subr.mxu0 0.0
      %2266 = vmatpush2.msra.mxu0 0.0
      %2267 = vmatprep.subr.mxu0 0.0
      %2268 = vmatpush2.msra.mxu0 0.0
      %2269 = vmatprep.subr.mxu0 0.0
      %2270 = vmatpush2.msra.mxu0 0.0
      %2271 = vmatprep.subr.mxu0 0.0
      %2272 = vmatpush2.msra.mxu0 0.0
      %2273 = vmatprep.subr.mxu0 0.0
      %2274 = vmatpush2.msra.mxu0 0.0
      %2275 = vmatprep.subr.mxu0 0.0
      %2276 = vmatpush2.msra.mxu0 0.0
      %2277 = vmatprep.subr.mxu0 0.0
      %2278 = vmatpush2.msra.mxu0 0.0
      %2279 = vmatprep.subr.mxu0 0.0
      %2280 = vmatpush2.msra.mxu0 0.0
      %2281 = vmatprep.subr.mxu0 0.0
      %2282 = vmatpush2.msra.mxu0 0.0
      %2283 = vmatprep.subr.mxu0 0.0
      %2284 = vmatpush2.msra.mxu0 0.0
      %2285 = vmatprep.subr.mxu0 0.0
      %2286 = vmatpush2.msra.mxu0 0.0
      %2287 = vmatprep.subr.mxu0 0.0
      %2288 = vmatpush2.msra.mxu0 0.0
      %2289 = vmatprep.subr.mxu0 0.0
      %2290 = vmatpush2.msra.mxu0 0.0
      %2291 = vmatprep.mubr.f32.mxu0 0.0
      %2292 = vmatmul.mubr.f32.gmra.mxu0 %v2204
      %v2293 = vpop.f32.mrf.mxu0
      %v2294 = vadd.f32 0.0, %v2293
      %v2295 = vpop.f32.mrf.mxu0
      %2296 = vmatprep.mubr.f32.mxu0 0.0
      %2297 = vmatmul.mubr.f32.gmra.mxu0 %v2207
      %v2298 = vpop.f32.mrf.mxu0
      %v2299 = vadd.f32 0.0, %v2298
      %v2300 = vpop.f32.mrf.mxu0
      %2301 = vmatprep.mubr.f32.mxu0 0.0
      %2302 = vmatmul.mubr.f32.gmra.mxu0 %v2210
      %v2303 = vpop.f32.mrf.mxu0
      %v2304 = vadd.f32 0.0, %v2303
      %v2305 = vpop.f32.mrf.mxu0
      %2306 = vmatprep.mubr.f32.mxu0 0.0
      %2307 = vmatmul.mubr.f32.gmra.mxu0 %v2213
      %v2308 = vpop.f32.mrf.mxu0
      %v2309 = vadd.f32 0.0, %v2308
      %v2310 = vpop.f32.mrf.mxu0
      %2311 = vmatprep.mubr.f32.mxu0 0.0
      %2312 = vmatmul.mubr.f32.gmra.mxu0 %v2216
      %v2313 = vpop.f32.mrf.mxu0
      %v2314 = vadd.f32 0.0, %v2313
      %v2315 = vpop.f32.mrf.mxu0
      %2316 = vmatprep.mubr.f32.mxu0 0.0
      %2317 = vmatmul.mubr.f32.gmra.mxu0 %v2219
      %v2318 = vpop.f32.mrf.mxu0
      %v2319 = vadd.f32 0.0, %v2318
      %v2320 = vpop.f32.mrf.mxu0
      %2321 = vmatprep.mubr.f32.mxu0 0.0
      %2322 = vmatmul.mubr.f32.gmra.mxu0 %v2222
      %v2323 = vpop.f32.mrf.mxu0
      %v2324 = vadd.f32 0.0, %v2323
      %v2325 = vpop.f32.mrf.mxu0
      %2326 = vmatprep.mubr.f32.mxu0 0.0
      %2327 = vmatmul.mubr.f32.gmra.mxu0 %v2225
      %v2328 = vpop.f32.mrf.mxu0
      %v2329 = vadd.f32 0.0, %v2328
      %v2330 = vpop.f32.mrf.mxu0
      %2331 = vdwg.mxu0
      %v2333 = vsel %vm1850, %v2179, 0
      %v2336 = vsel %vm1850, %v2180, 0
      %v2339 = vsel %vm1850, %v2181, 0
      %v2342 = vsel %vm1850, %v2182, 0
      %v2345 = vsel %vm1850, %v2183, 0
      %v2348 = vsel %vm1850, %v2184, 0
      %v2351 = vsel %vm1850, %v2185, 0
      %v2354 = vsel %vm1850, %v2186, 0
      %2356 = vmatprep.subr.mxu0 0.0
      %2357 = vmatpush1.msra.mxu0 0.0
      %2358 = vmatprep.subr.mxu0 0.0
      %2359 = vmatpush1.msra.mxu0 0.0
      %2360 = vmatprep.subr.mxu0 0.0
      %2361 = vmatpush1.msra.mxu0 0.0
      %2362 = vmatprep.subr.mxu0 0.0
      %2363 = vmatpush1.msra.mxu0 0.0
      %2364 = vmatprep.subr.mxu0 0.0
      %2365 = vmatpush1.msra.mxu0 0.0
      %2366 = vmatprep.subr.mxu0 0.0
      %2367 = vmatpush1.msra.mxu0 0.0
      %2368 = vmatprep.subr.mxu0 0.0
      %2369 = vmatpush1.msra.mxu0 0.0
      %2370 = vmatprep.subr.mxu0 0.0
      %2371 = vmatpush1.msra.mxu0 0.0
      %2372 = vmatprep.subr.mxu0 0.0
      %2373 = vmatpush1.msra.mxu0 %v1122
      %2374 = vmatprep.subr.mxu0 0.0
      %2375 = vmatpush1.msra.mxu0 %v1117
      %2376 = vmatprep.subr.mxu0 0.0
      %2377 = vmatpush1.msra.mxu0 %v1112
      %2378 = vmatprep.subr.mxu0 0.0
      %2379 = vmatpush1.msra.mxu0 %v1107
      %2380 = vmatprep.subr.mxu0 0.0
      %2381 = vmatpush1.msra.mxu0 %v1102
      %2382 = vmatprep.subr.mxu0 0.0
      %2383 = vmatpush1.msra.mxu0 %v1097
      %2384 = vmatprep.subr.mxu0 0.0
      %2385 = vmatpush1.msra.mxu0 %v1092
      %2386 = vmatprep.subr.mxu0 0.0
      %2387 = vmatpush1.msra.mxu0 %v1087
      %2388 = vmatprep.subr.mxu0 0.0
      %2389 = vmatpush2.msra.mxu0 0.0
      %2390 = vmatprep.subr.mxu0 0.0
      %2391 = vmatpush2.msra.mxu0 0.0
      %2392 = vmatprep.subr.mxu0 0.0
      %2393 = vmatpush2.msra.mxu0 0.0
      %2394 = vmatprep.subr.mxu0 0.0
      %2395 = vmatpush2.msra.mxu0 0.0
      %2396 = vmatprep.subr.mxu0 0.0
      %2397 = vmatpush2.msra.mxu0 0.0
      %2398 = vmatprep.subr.mxu0 0.0
      %2399 = vmatpush2.msra.mxu0 0.0
      %2400 = vmatprep.subr.mxu0 0.0
      %2401 = vmatpush2.msra.mxu0 0.0
      %2402 = vmatprep.subr.mxu0 0.0
      %2403 = vmatpush2.msra.mxu0 0.0
      %2404 = vmatprep.subr.mxu0 0.0
      %2405 = vmatpush2.msra.mxu0 0.0
      %2406 = vmatprep.subr.mxu0 0.0
      %2407 = vmatpush2.msra.mxu0 0.0
      %2408 = vmatprep.subr.mxu0 0.0
      %2409 = vmatpush2.msra.mxu0 0.0
      %2410 = vmatprep.subr.mxu0 0.0
      %2411 = vmatpush2.msra.mxu0 0.0
      %2412 = vmatprep.subr.mxu0 0.0
      %2413 = vmatpush2.msra.mxu0 0.0
      %2414 = vmatprep.subr.mxu0 0.0
      %2415 = vmatpush2.msra.mxu0 0.0
      %2416 = vmatprep.subr.mxu0 0.0
      %2417 = vmatpush2.msra.mxu0 0.0
      %2418 = vmatprep.subr.mxu0 0.0
      %2419 = vmatpush2.msra.mxu0 0.0
      %2420 = vmatprep.mubr.f32.mxu0 0.0
      %2421 = vmatmul.mubr.f32.gmra.mxu0 %v2333
      %v2422 = vpop.f32.mrf.mxu0
      %v2423 = vadd.f32 0.0, %v2422
      %v2424 = vpop.f32.mrf.mxu0
      %2425 = vmatprep.mubr.f32.mxu0 0.0
      %2426 = vmatmul.mubr.f32.gmra.mxu0 %v2336
      %v2427 = vpop.f32.mrf.mxu0
      %v2428 = vadd.f32 0.0, %v2427
      %v2429 = vpop.f32.mrf.mxu0
      %2430 = vmatprep.mubr.f32.mxu0 0.0
      %2431 = vmatmul.mubr.f32.gmra.mxu0 %v2339
      %v2432 = vpop.f32.mrf.mxu0
      %v2433 = vadd.f32 0.0, %v2432
      %v2434 = vpop.f32.mrf.mxu0
      %2435 = vmatprep.mubr.f32.mxu0 0.0
      %2436 = vmatmul.mubr.f32.gmra.mxu0 %v2342
      %v2437 = vpop.f32.mrf.mxu0
      %v2438 = vadd.f32 0.0, %v2437
      %v2439 = vpop.f32.mrf.mxu0
      %2440 = vmatprep.mubr.f32.mxu0 0.0
      %2441 = vmatmul.mubr.f32.gmra.mxu0 %v2345
      %v2442 = vpop.f32.mrf.mxu0
      %v2443 = vadd.f32 0.0, %v2442
      %v2444 = vpop.f32.mrf.mxu0
      %2445 = vmatprep.mubr.f32.mxu0 0.0
      %2446 = vmatmul.mubr.f32.gmra.mxu0 %v2348
      %v2447 = vpop.f32.mrf.mxu0
      %v2448 = vadd.f32 0.0, %v2447
      %v2449 = vpop.f32.mrf.mxu0
      %2450 = vmatprep.mubr.f32.mxu0 0.0
      %2451 = vmatmul.mubr.f32.gmra.mxu0 %v2351
      %v2452 = vpop.f32.mrf.mxu0
      %v2453 = vadd.f32 0.0, %v2452
      %v2454 = vpop.f32.mrf.mxu0
      %2455 = vmatprep.mubr.f32.mxu0 0.0
      %2456 = vmatmul.mubr.f32.gmra.mxu0 %v2354
      %v2457 = vpop.f32.mrf.mxu0
      %v2458 = vadd.f32 0.0, %v2457
      %v2459 = vpop.f32.mrf.mxu0
      %2460 = vdwg.mxu0
      %v2462 = vsel %vm1850, %v2187, 0
      %v2465 = vsel %vm1850, %v2188, 0
      %v2468 = vsel %vm1850, %v2189, 0
      %v2471 = vsel %vm1850, %v2190, 0
      %v2474 = vsel %vm1850, %v2191, 0
      %v2477 = vsel %vm1850, %v2192, 0
      %v2480 = vsel %vm1850, %v2193, 0
      %v2483 = vsel %vm1850, %v2194, 0
      %2485 = vmatprep.subr.mxu0 0.0
      %2486 = vmatpush1.msra.mxu0 0.0
      %2487 = vmatprep.subr.mxu0 0.0
      %2488 = vmatpush1.msra.mxu0 0.0
      %2489 = vmatprep.subr.mxu0 0.0
      %2490 = vmatpush1.msra.mxu0 0.0
      %2491 = vmatprep.subr.mxu0 0.0
      %2492 = vmatpush1.msra.mxu0 0.0
      %2493 = vmatprep.subr.mxu0 0.0
      %2494 = vmatpush1.msra.mxu0 0.0
      %2495 = vmatprep.subr.mxu0 0.0
      %2496 = vmatpush1.msra.mxu0 0.0
      %2497 = vmatprep.subr.mxu0 0.0
      %2498 = vmatpush1.msra.mxu0 0.0
      %2499 = vmatprep.subr.mxu0 0.0
      %2500 = vmatpush1.msra.mxu0 0.0
      %2501 = vmatprep.subr.mxu0 0.0
      %2502 = vmatpush1.msra.mxu0 %v1162
      %2503 = vmatprep.subr.mxu0 0.0
      %2504 = vmatpush1.msra.mxu0 %v1157
      %2505 = vmatprep.subr.mxu0 0.0
      %2506 = vmatpush1.msra.mxu0 %v1152
      %2507 = vmatprep.subr.mxu0 0.0
      %2508 = vmatpush1.msra.mxu0 %v1147
      %2509 = vmatprep.subr.mxu0 0.0
      %2510 = vmatpush1.msra.mxu0 %v1142
      %2511 = vmatprep.subr.mxu0 0.0
      %2512 = vmatpush1.msra.mxu0 %v1137
      %2513 = vmatprep.subr.mxu0 0.0
      %2514 = vmatpush1.msra.mxu0 %v1132
      %2515 = vmatprep.subr.mxu0 0.0
      %2516 = vmatpush1.msra.mxu0 %v1127
      %2517 = vmatprep.subr.mxu0 0.0
      %2518 = vmatpush2.msra.mxu0 0.0
      %2519 = vmatprep.subr.mxu0 0.0
      %2520 = vmatpush2.msra.mxu0 0.0
      %2521 = vmatprep.subr.mxu0 0.0
      %2522 = vmatpush2.msra.mxu0 0.0
      %2523 = vmatprep.subr.mxu0 0.0
      %2524 = vmatpush2.msra.mxu0 0.0
      %2525 = vmatprep.subr.mxu0 0.0
      %2526 = vmatpush2.msra.mxu0 0.0
      %2527 = vmatprep.subr.mxu0 0.0
      %2528 = vmatpush2.msra.mxu0 0.0
      %2529 = vmatprep.subr.mxu0 0.0
      %2530 = vmatpush2.msra.mxu0 0.0
      %2531 = vmatprep.subr.mxu0 0.0
      %2532 = vmatpush2.msra.mxu0 0.0
      %2533 = vmatprep.subr.mxu0 0.0
      %2534 = vmatpush2.msra.mxu0 0.0
      %2535 = vmatprep.subr.mxu0 0.0
      %2536 = vmatpush2.msra.mxu0 0.0
      %2537 = vmatprep.subr.mxu0 0.0
      %2538 = vmatpush2.msra.mxu0 0.0
      %2539 = vmatprep.subr.mxu0 0.0
      %2540 = vmatpush2.msra.mxu0 0.0
      %2541 = vmatprep.subr.mxu0 0.0
      %2542 = vmatpush2.msra.mxu0 0.0
      %2543 = vmatprep.subr.mxu0 0.0
      %2544 = vmatpush2.msra.mxu0 0.0
      %2545 = vmatprep.subr.mxu0 0.0
      %2546 = vmatpush2.msra.mxu0 0.0
      %2547 = vmatprep.subr.mxu0 0.0
      %2548 = vmatpush2.msra.mxu0 0.0
      %2549 = vmatprep.mubr.f32.mxu0 0.0
      %2550 = vmatmul.mubr.f32.gmra.mxu0 %v2462
      %v2551 = vpop.f32.mrf.mxu0
      %v2552 = vadd.f32 0.0, %v2551
      %v2553 = vpop.f32.mrf.mxu0
      %2554 = vmatprep.mubr.f32.mxu0 0.0
      %2555 = vmatmul.mubr.f32.gmra.mxu0 %v2465
      %v2556 = vpop.f32.mrf.mxu0
      %v2557 = vadd.f32 0.0, %v2556
      %v2558 = vpop.f32.mrf.mxu0
      %2559 = vmatprep.mubr.f32.mxu0 0.0
      %2560 = vmatmul.mubr.f32.gmra.mxu0 %v2468
      %v2561 = vpop.f32.mrf.mxu0
      %v2562 = vadd.f32 0.0, %v2561
      %v2563 = vpop.f32.mrf.mxu0
      %2564 = vmatprep.mubr.f32.mxu0 0.0
      %2565 = vmatmul.mubr.f32.gmra.mxu0 %v2471
      %v2566 = vpop.f32.mrf.mxu0
      %v2567 = vadd.f32 0.0, %v2566
      %v2568 = vpop.f32.mrf.mxu0
      %2569 = vmatprep.mubr.f32.mxu0 0.0
      %2570 = vmatmul.mubr.f32.gmra.mxu0 %v2474
      %v2571 = vpop.f32.mrf.mxu0
      %v2572 = vadd.f32 0.0, %v2571
      %v2573 = vpop.f32.mrf.mxu0
      %2574 = vmatprep.mubr.f32.mxu0 0.0
      %2575 = vmatmul.mubr.f32.gmra.mxu0 %v2477
      %v2576 = vpop.f32.mrf.mxu0
      %v2577 = vadd.f32 0.0, %v2576
      %v2578 = vpop.f32.mrf.mxu0
      %2579 = vmatprep.mubr.f32.mxu0 0.0
      %2580 = vmatmul.mubr.f32.gmra.mxu0 %v2480
      %v2581 = vpop.f32.mrf.mxu0
      %v2582 = vadd.f32 0.0, %v2581
      %v2583 = vpop.f32.mrf.mxu0
      %2584 = vmatprep.mubr.f32.mxu0 0.0
      %2585 = vmatmul.mubr.f32.gmra.mxu0 %v2483
      %v2586 = vpop.f32.mrf.mxu0
      %v2587 = vadd.f32 0.0, %v2586
      %v2588 = vpop.f32.mrf.mxu0
      %2589 = vdwg.mxu0
      %v2591 = vsel %vm1850, %v2195, 0
      %v2594 = vsel %vm1850, %v2196, 0
      %v2597 = vsel %vm1850, %v2197, 0
      %v2600 = vsel %vm1850, %v2198, 0
      %v2603 = vsel %vm1850, %v2199, 0
      %v2606 = vsel %vm1850, %v2200, 0
      %v2609 = vsel %vm1850, %v2201, 0
      %v2612 = vsel %vm1850, %v2202, 0
      %2614 = vmatprep.subr.mxu0 0.0
      %2615 = vmatpush1.msra.mxu0 0.0
      %2616 = vmatprep.subr.mxu0 0.0
      %2617 = vmatpush1.msra.mxu0 0.0
      %2618 = vmatprep.subr.mxu0 0.0
      %2619 = vmatpush1.msra.mxu0 0.0
      %2620 = vmatprep.subr.mxu0 0.0
      %2621 = vmatpush1.msra.mxu0 0.0
      %2622 = vmatprep.subr.mxu0 0.0
      %2623 = vmatpush1.msra.mxu0 0.0
      %2624 = vmatprep.subr.mxu0 0.0
      %2625 = vmatpush1.msra.mxu0 0.0
      %2626 = vmatprep.subr.mxu0 0.0
      %2627 = vmatpush1.msra.mxu0 0.0
      %2628 = vmatprep.subr.mxu0 0.0
      %2629 = vmatpush1.msra.mxu0 0.0
      %2630 = vmatprep.subr.mxu0 0.0
      %2631 = vmatpush1.msra.mxu0 %v1202
      %2632 = vmatprep.subr.mxu0 0.0
      %2633 = vmatpush1.msra.mxu0 %v1197
      %2634 = vmatprep.subr.mxu0 0.0
      %2635 = vmatpush1.msra.mxu0 %v1192
      %2636 = vmatprep.subr.mxu0 0.0
      %2637 = vmatpush1.msra.mxu0 %v1187
      %2638 = vmatprep.subr.mxu0 0.0
      %2639 = vmatpush1.msra.mxu0 %v1182
      %2640 = vmatprep.subr.mxu0 0.0
      %2641 = vmatpush1.msra.mxu0 %v1177
      %2642 = vmatprep.subr.mxu0 0.0
      %2643 = vmatpush1.msra.mxu0 %v1172
      %2644 = vmatprep.subr.mxu0 0.0
      %2645 = vmatpush1.msra.mxu0 %v1167
      %2646 = vmatprep.subr.mxu0 0.0
      %2647 = vmatpush2.msra.mxu0 0.0
      %2648 = vmatprep.subr.mxu0 0.0
      %2649 = vmatpush2.msra.mxu0 0.0
      %2650 = vmatprep.subr.mxu0 0.0
      %2651 = vmatpush2.msra.mxu0 0.0
      %2652 = vmatprep.subr.mxu0 0.0
      %2653 = vmatpush2.msra.mxu0 0.0
      %2654 = vmatprep.subr.mxu0 0.0
      %2655 = vmatpush2.msra.mxu0 0.0
      %2656 = vmatprep.subr.mxu0 0.0
      %2657 = vmatpush2.msra.mxu0 0.0
      %2658 = vmatprep.subr.mxu0 0.0
      %2659 = vmatpush2.msra.mxu0 0.0
      %2660 = vmatprep.subr.mxu0 0.0
      %2661 = vmatpush2.msra.mxu0 0.0
      %2662 = vmatprep.subr.mxu0 0.0
      %2663 = vmatpush2.msra.mxu0 0.0
      %2664 = vmatprep.subr.mxu0 0.0
      %2665 = vmatpush2.msra.mxu0 0.0
      %2666 = vmatprep.subr.mxu0 0.0
      %2667 = vmatpush2.msra.mxu0 0.0
      %2668 = vmatprep.subr.mxu0 0.0
      %2669 = vmatpush2.msra.mxu0 0.0
      %2670 = vmatprep.subr.mxu0 0.0
      %2671 = vmatpush2.msra.mxu0 0.0
      %2672 = vmatprep.subr.mxu0 0.0
      %2673 = vmatpush2.msra.mxu0 0.0
      %2674 = vmatprep.subr.mxu0 0.0
      %2675 = vmatpush2.msra.mxu0 0.0
      %2676 = vmatprep.subr.mxu0 0.0
      %2677 = vmatpush2.msra.mxu0 0.0
      %2678 = vmatprep.mubr.f32.mxu0 0.0
      %2679 = vmatmul.mubr.f32.gmra.mxu0 %v2591
      %v2680 = vpop.f32.mrf.mxu0
      %v2681 = vadd.f32 0.0, %v2680
      %v2682 = vpop.f32.mrf.mxu0
      %2683 = vmatprep.mubr.f32.mxu0 0.0
      %2684 = vmatmul.mubr.f32.gmra.mxu0 %v2594
      %v2685 = vpop.f32.mrf.mxu0
      %v2686 = vadd.f32 0.0, %v2685
      %v2687 = vpop.f32.mrf.mxu0
      %2688 = vmatprep.mubr.f32.mxu0 0.0
      %2689 = vmatmul.mubr.f32.gmra.mxu0 %v2597
      %v2690 = vpop.f32.mrf.mxu0
      %v2691 = vadd.f32 0.0, %v2690
      %v2692 = vpop.f32.mrf.mxu0
      %2693 = vmatprep.mubr.f32.mxu0 0.0
      %2694 = vmatmul.mubr.f32.gmra.mxu0 %v2600
      %v2695 = vpop.f32.mrf.mxu0
      %v2696 = vadd.f32 0.0, %v2695
      %v2697 = vpop.f32.mrf.mxu0
      %2698 = vmatprep.mubr.f32.mxu0 0.0
      %2699 = vmatmul.mubr.f32.gmra.mxu0 %v2603
      %v2700 = vpop.f32.mrf.mxu0
      %v2701 = vadd.f32 0.0, %v2700
      %v2702 = vpop.f32.mrf.mxu0
      %2703 = vmatprep.mubr.f32.mxu0 0.0
      %2704 = vmatmul.mubr.f32.gmra.mxu0 %v2606
      %v2705 = vpop.f32.mrf.mxu0
      %v2706 = vadd.f32 0.0, %v2705
      %v2707 = vpop.f32.mrf.mxu0
      %2708 = vmatprep.mubr.f32.mxu0 0.0
      %2709 = vmatmul.mubr.f32.gmra.mxu0 %v2609
      %v2710 = vpop.f32.mrf.mxu0
      %v2711 = vadd.f32 0.0, %v2710
      %v2712 = vpop.f32.mrf.mxu0
      %2713 = vmatprep.mubr.f32.mxu0 0.0
      %2714 = vmatmul.mubr.f32.gmra.mxu0 %v2612
      %v2715 = vpop.f32.mrf.mxu0
      %v2716 = vadd.f32 0.0, %v2715
      %v2717 = vpop.f32.mrf.mxu0
      %2718 = vdwg.mxu0
      %v2719 = vld [vmem:[%s8] sm:$0xff]
      %s2720 = scalar_lea.vmem %s1, 32
      %v2721 = vld [vmem:[%s2720] sm:$0xff]
      %v2722 = vld [vmem:[%s2720 + $0x8] sm:$0xff]
      %v2723 = vld [vmem:[%s2720 + $0x10] sm:$0xff]
      %v2724 = vld [vmem:[%s2720 + $0x18] sm:$0xff]
      %s2725 = scalar_lea.vmem %s4, 1
      %v2726 = vld [vmem:[%s2725] sm:$0x1]
      %v2728 = vlaneseq
      %v2729 = vshrl.u32 %v2728, 7
      %v2730 = vsub.s32 0, %v2729
      %v2731 = vrot.slane %v2726, %v2730
      %2733 = vmatprep.subr.mxu0 0.0
      %2734 = vmatpush1.msra.mxu0 0.0
      %2735 = vmatprep.subr.mxu0 0.0
      %2736 = vmatpush1.msra.mxu0 0.0
      %2737 = vmatprep.subr.mxu0 0.0
      %2738 = vmatpush1.msra.mxu0 0.0
      %2739 = vmatprep.subr.mxu0 0.0
      %2740 = vmatpush1.msra.mxu0 0.0
      %2741 = vmatprep.subr.mxu0 0.0
      %2742 = vmatpush1.msra.mxu0 0.0
      %2743 = vmatprep.subr.mxu0 0.0
      %2744 = vmatpush1.msra.mxu0 0.0
      %2745 = vmatprep.subr.mxu0 0.0
      %2746 = vmatpush1.msra.mxu0 0.0
      %2747 = vmatprep.subr.mxu0 0.0
      %2748 = vmatpush1.msra.mxu0 0.0
      %2749 = vmatprep.subr.mxu0 0.0
      %2750 = vmatpush1.msra.mxu0 0.0
      %2751 = vmatprep.subr.mxu0 0.0
      %2752 = vmatpush1.msra.mxu0 0.0
      %2753 = vmatprep.subr.mxu0 0.0
      %2754 = vmatpush1.msra.mxu0 0.0
      %2755 = vmatprep.subr.mxu0 0.0
      %2756 = vmatpush1.msra.mxu0 0.0
      %2757 = vmatprep.subr.mxu0 0.0
      %2758 = vmatpush1.msra.mxu0 %v2724
      %2759 = vmatprep.subr.mxu0 0.0
      %2760 = vmatpush1.msra.mxu0 %v2723
      %2761 = vmatprep.subr.mxu0 0.0
      %2762 = vmatpush1.msra.mxu0 %v2722
      %2763 = vmatprep.subr.mxu0 0.0
      %2764 = vmatpush1.msra.mxu0 %v2721
      %2765 = vmatprep.subr.mxu0 0.0
      %2766 = vmatpush2.msra.mxu0 0.0
      %2767 = vmatprep.subr.mxu0 0.0
      %2768 = vmatpush2.msra.mxu0 0.0
      %2769 = vmatprep.subr.mxu0 0.0
      %2770 = vmatpush2.msra.mxu0 0.0
      %2771 = vmatprep.subr.mxu0 0.0
      %2772 = vmatpush2.msra.mxu0 0.0
      %2773 = vmatprep.subr.mxu0 0.0
      %2774 = vmatpush2.msra.mxu0 0.0
      %2775 = vmatprep.subr.mxu0 0.0
      %2776 = vmatpush2.msra.mxu0 0.0
      %2777 = vmatprep.subr.mxu0 0.0
      %2778 = vmatpush2.msra.mxu0 0.0
      %2779 = vmatprep.subr.mxu0 0.0
      %2780 = vmatpush2.msra.mxu0 0.0
      %2781 = vmatprep.subr.mxu0 0.0
      %2782 = vmatpush2.msra.mxu0 0.0
      %2783 = vmatprep.subr.mxu0 0.0
      %2784 = vmatpush2.msra.mxu0 0.0
      %2785 = vmatprep.subr.mxu0 0.0
      %2786 = vmatpush2.msra.mxu0 0.0
      %2787 = vmatprep.subr.mxu0 0.0
      %2788 = vmatpush2.msra.mxu0 0.0
      %2789 = vmatprep.subr.mxu0 0.0
      %2790 = vmatpush2.msra.mxu0 0.0
      %2791 = vmatprep.subr.mxu0 0.0
      %2792 = vmatpush2.msra.mxu0 0.0
      %2793 = vmatprep.subr.mxu0 0.0
      %2794 = vmatpush2.msra.mxu0 0.0
      %2795 = vmatprep.subr.mxu0 0.0
      %2796 = vmatpush2.msra.mxu0 0.0
      %2797 = vmatprep.mubr.f32.mxu0 0.0
      %2798 = vmatmul.mubr.f32.gmra.mxu0 %v413
      %v2799 = vpop.f32.mrf.mxu0
      %v2800 = vadd.f32 %v2731, %v2799
      %v2801 = vpop.f32.mrf.mxu0
      %2802 = vmatprep.mubr.f32.mxu0 0.0
      %2803 = vmatmul.mubr.f32.gmra.mxu0 %v416
      %v2804 = vpop.f32.mrf.mxu0
      %v2805 = vadd.f32 %v2731, %v2804
      %v2806 = vpop.f32.mrf.mxu0
      %2807 = vmatprep.mubr.f32.mxu0 0.0
      %2808 = vmatmul.mubr.f32.gmra.mxu0 %v419
      %v2809 = vpop.f32.mrf.mxu0
      %v2810 = vadd.f32 %v2731, %v2809
      %v2811 = vpop.f32.mrf.mxu0
      %2812 = vmatprep.mubr.f32.mxu0 0.0
      %2813 = vmatmul.mubr.f32.gmra.mxu0 %v422
      %v2814 = vpop.f32.mrf.mxu0
      %v2815 = vadd.f32 %v2731, %v2814
      %v2816 = vpop.f32.mrf.mxu0
      %2817 = vmatprep.mubr.f32.mxu0 0.0
      %2818 = vmatmul.mubr.f32.gmra.mxu0 %v425
      %v2819 = vpop.f32.mrf.mxu0
      %v2820 = vadd.f32 %v2731, %v2819
      %v2821 = vpop.f32.mrf.mxu0
      %2822 = vmatprep.mubr.f32.mxu0 0.0
      %2823 = vmatmul.mubr.f32.gmra.mxu0 %v428
      %v2824 = vpop.f32.mrf.mxu0
      %v2825 = vadd.f32 %v2731, %v2824
      %v2826 = vpop.f32.mrf.mxu0
      %2827 = vmatprep.mubr.f32.mxu0 0.0
      %2828 = vmatmul.mubr.f32.gmra.mxu0 %v431
      %v2829 = vpop.f32.mrf.mxu0
      %v2830 = vadd.f32 %v2731, %v2829
      %v2831 = vpop.f32.mrf.mxu0
      %2832 = vmatprep.mubr.f32.mxu0 0.0
      %2833 = vmatmul.mubr.f32.gmra.mxu0 %v434
      %v2834 = vpop.f32.mrf.mxu0
      %v2835 = vadd.f32 %v2731, %v2834
      %v2836 = vpop.f32.mrf.mxu0
      %2837 = vmatprep.mubr.f32.mxu0 0.0
      %2838 = vmatmul.mubr.f32.gmra.mxu0 %v437
      %v2839 = vpop.f32.mrf.mxu0
      %v2840 = vadd.f32 %v2731, %v2839
      %v2841 = vpop.f32.mrf.mxu0
      %2842 = vmatprep.mubr.f32.mxu0 0.0
      %2843 = vmatmul.mubr.f32.gmra.mxu0 %v440
      %v2844 = vpop.f32.mrf.mxu0
      %v2845 = vadd.f32 %v2731, %v2844
      %v2846 = vpop.f32.mrf.mxu0
      %2847 = vmatprep.mubr.f32.mxu0 0.0
      %2848 = vmatmul.mubr.f32.gmra.mxu0 %v443
      %v2849 = vpop.f32.mrf.mxu0
      %v2850 = vadd.f32 %v2731, %v2849
      %v2851 = vpop.f32.mrf.mxu0
      %2852 = vmatprep.mubr.f32.mxu0 0.0
      %2853 = vmatmul.mubr.f32.gmra.mxu0 %v446
      %v2854 = vpop.f32.mrf.mxu0
      %v2855 = vadd.f32 %v2731, %v2854
      %v2856 = vpop.f32.mrf.mxu0
      %2857 = vmatprep.mubr.f32.mxu0 0.0
      %2858 = vmatmul.mubr.f32.gmra.mxu0 %v449
      %v2859 = vpop.f32.mrf.mxu0
      %v2860 = vadd.f32 %v2731, %v2859
      %v2861 = vpop.f32.mrf.mxu0
      %2862 = vmatprep.mubr.f32.mxu0 0.0
      %2863 = vmatmul.mubr.f32.gmra.mxu0 %v452
      %v2864 = vpop.f32.mrf.mxu0
      %v2865 = vadd.f32 %v2731, %v2864
      %v2866 = vpop.f32.mrf.mxu0
      %2867 = vmatprep.mubr.f32.mxu0 0.0
      %2868 = vmatmul.mubr.f32.gmra.mxu0 %v455
      %v2869 = vpop.f32.mrf.mxu0
      %v2870 = vadd.f32 %v2731, %v2869
      %v2871 = vpop.f32.mrf.mxu0
      %2872 = vmatprep.mubr.f32.mxu0 0.0
      %2873 = vmatmul.mubr.f32.gmra.mxu0 %v458
      %v2874 = vpop.f32.mrf.mxu0
      %v2875 = vadd.f32 %v2731, %v2874
      %v2876 = vpop.f32.mrf.mxu0
      %2877 = vmatprep.mubr.f32.mxu0 0.0
      %2878 = vmatmul.mubr.f32.gmra.mxu0 %v461
      %v2879 = vpop.f32.mrf.mxu0
      %v2880 = vadd.f32 %v2731, %v2879
      %v2881 = vpop.f32.mrf.mxu0
      %2882 = vmatprep.mubr.f32.mxu0 0.0
      %2883 = vmatmul.mubr.f32.gmra.mxu0 %v464
      %v2884 = vpop.f32.mrf.mxu0
      %v2885 = vadd.f32 %v2731, %v2884
      %v2886 = vpop.f32.mrf.mxu0
      %2887 = vmatprep.mubr.f32.mxu0 0.0
      %2888 = vmatmul.mubr.f32.gmra.mxu0 %v467
      %v2889 = vpop.f32.mrf.mxu0
      %v2890 = vadd.f32 %v2731, %v2889
      %v2891 = vpop.f32.mrf.mxu0
      %2892 = vmatprep.mubr.f32.mxu0 0.0
      %2893 = vmatmul.mubr.f32.gmra.mxu0 %v470
      %v2894 = vpop.f32.mrf.mxu0
      %v2895 = vadd.f32 %v2731, %v2894
      %v2896 = vpop.f32.mrf.mxu0
      %2897 = vmatprep.mubr.f32.mxu0 0.0
      %2898 = vmatmul.mubr.f32.gmra.mxu0 %v473
      %v2899 = vpop.f32.mrf.mxu0
      %v2900 = vadd.f32 %v2731, %v2899
      %v2901 = vpop.f32.mrf.mxu0
      %2902 = vmatprep.mubr.f32.mxu0 0.0
      %2903 = vmatmul.mubr.f32.gmra.mxu0 %v476
      %v2904 = vpop.f32.mrf.mxu0
      %v2905 = vadd.f32 %v2731, %v2904
      %v2906 = vpop.f32.mrf.mxu0
      %2907 = vmatprep.mubr.f32.mxu0 0.0
      %2908 = vmatmul.mubr.f32.gmra.mxu0 %v479
      %v2909 = vpop.f32.mrf.mxu0
      %v2910 = vadd.f32 %v2731, %v2909
      %v2911 = vpop.f32.mrf.mxu0
      %2912 = vmatprep.mubr.f32.mxu0 0.0
      %2913 = vmatmul.mubr.f32.gmra.mxu0 %v482
      %v2914 = vpop.f32.mrf.mxu0
      %v2915 = vadd.f32 %v2731, %v2914
      %v2916 = vpop.f32.mrf.mxu0
      %2917 = vmatprep.mubr.f32.mxu0 0.0
      %2918 = vmatmul.mubr.f32.gmra.mxu0 %v485
      %v2919 = vpop.f32.mrf.mxu0
      %v2920 = vadd.f32 %v2731, %v2919
      %v2921 = vpop.f32.mrf.mxu0
      %2922 = vmatprep.mubr.f32.mxu0 0.0
      %2923 = vmatmul.mubr.f32.gmra.mxu0 %v488
      %v2924 = vpop.f32.mrf.mxu0
      %v2925 = vadd.f32 %v2731, %v2924
      %v2926 = vpop.f32.mrf.mxu0
      %2927 = vmatprep.mubr.f32.mxu0 0.0
      %2928 = vmatmul.mubr.f32.gmra.mxu0 %v491
      %v2929 = vpop.f32.mrf.mxu0
      %v2930 = vadd.f32 %v2731, %v2929
      %v2931 = vpop.f32.mrf.mxu0
      %2932 = vmatprep.mubr.f32.mxu0 0.0
      %2933 = vmatmul.mubr.f32.gmra.mxu0 %v494
      %v2934 = vpop.f32.mrf.mxu0
      %v2935 = vadd.f32 %v2731, %v2934
      %v2936 = vpop.f32.mrf.mxu0
      %2937 = vmatprep.mubr.f32.mxu0 0.0
      %2938 = vmatmul.mubr.f32.gmra.mxu0 %v497
      %v2939 = vpop.f32.mrf.mxu0
      %v2940 = vadd.f32 %v2731, %v2939
      %v2941 = vpop.f32.mrf.mxu0
      %2942 = vmatprep.mubr.f32.mxu0 0.0
      %2943 = vmatmul.mubr.f32.gmra.mxu0 %v500
      %v2944 = vpop.f32.mrf.mxu0
      %v2945 = vadd.f32 %v2731, %v2944
      %v2946 = vpop.f32.mrf.mxu0
      %2947 = vmatprep.mubr.f32.mxu0 0.0
      %2948 = vmatmul.mubr.f32.gmra.mxu0 %v503
      %v2949 = vpop.f32.mrf.mxu0
      %v2950 = vadd.f32 %v2731, %v2949
      %v2951 = vpop.f32.mrf.mxu0
      %2952 = vmatprep.mubr.f32.mxu0 0.0
      %2953 = vmatmul.mubr.f32.gmra.mxu0 %v506
      %v2954 = vpop.f32.mrf.mxu0
      %v2955 = vadd.f32 %v2731, %v2954
      %v2956 = vpop.f32.mrf.mxu0
      %2957 = vdwg.mxu0
      %s2958 = scalar_lea.vmem %s2, 32
      %v2959 = vld [vmem:[%s2958] sm:$0xff]
      %v2960 = vld [vmem:[%s2958 + $0x8] sm:$0xff]
      %v2961 = vld [vmem:[%s2958 + $0x10] sm:$0xff]
      %v2962 = vld [vmem:[%s2958 + $0x18] sm:$0xff]
      %s2963 = scalar_lea.vmem %s5, 1
      %v2964 = vld [vmem:[%s2963] sm:$0x1]
      %v2966 = vlaneseq
      %v2967 = vshrl.u32 %v2966, 7
      %v2968 = vsub.s32 0, %v2967
      %v2969 = vrot.slane %v2964, %v2968
      %2971 = vmatprep.subr.mxu0 0.0
      %2972 = vmatpush1.msra.mxu0 0.0
      %2973 = vmatprep.subr.mxu0 0.0
      %2974 = vmatpush1.msra.mxu0 0.0
      %2975 = vmatprep.subr.mxu0 0.0
      %2976 = vmatpush1.msra.mxu0 0.0
      %2977 = vmatprep.subr.mxu0 0.0
      %2978 = vmatpush1.msra.mxu0 0.0
      %2979 = vmatprep.subr.mxu0 0.0
      %2980 = vmatpush1.msra.mxu0 0.0
      %2981 = vmatprep.subr.mxu0 0.0
      %2982 = vmatpush1.msra.mxu0 0.0
      %2983 = vmatprep.subr.mxu0 0.0
      %2984 = vmatpush1.msra.mxu0 0.0
      %2985 = vmatprep.subr.mxu0 0.0
      %2986 = vmatpush1.msra.mxu0 0.0
      %2987 = vmatprep.subr.mxu0 0.0
      %2988 = vmatpush1.msra.mxu0 0.0
      %2989 = vmatprep.subr.mxu0 0.0
      %2990 = vmatpush1.msra.mxu0 0.0
      %2991 = vmatprep.subr.mxu0 0.0
      %2992 = vmatpush1.msra.mxu0 0.0
      %2993 = vmatprep.subr.mxu0 0.0
      %2994 = vmatpush1.msra.mxu0 0.0
      %2995 = vmatprep.subr.mxu0 0.0
      %2996 = vmatpush1.msra.mxu0 %v2962
      %2997 = vmatprep.subr.mxu0 0.0
      %2998 = vmatpush1.msra.mxu0 %v2961
      %2999 = vmatprep.subr.mxu0 0.0
      %3000 = vmatpush1.msra.mxu0 %v2960
      %3001 = vmatprep.subr.mxu0 0.0
      %3002 = vmatpush1.msra.mxu0 %v2959
      %3003 = vmatprep.subr.mxu0 0.0
      %3004 = vmatpush2.msra.mxu0 0.0
      %3005 = vmatprep.subr.mxu0 0.0
      %3006 = vmatpush2.msra.mxu0 0.0
      %3007 = vmatprep.subr.mxu0 0.0
      %3008 = vmatpush2.msra.mxu0 0.0
      %3009 = vmatprep.subr.mxu0 0.0
      %3010 = vmatpush2.msra.mxu0 0.0
      %3011 = vmatprep.subr.mxu0 0.0
      %3012 = vmatpush2.msra.mxu0 0.0
      %3013 = vmatprep.subr.mxu0 0.0
      %3014 = vmatpush2.msra.mxu0 0.0
      %3015 = vmatprep.subr.mxu0 0.0
      %3016 = vmatpush2.msra.mxu0 0.0
      %3017 = vmatprep.subr.mxu0 0.0
      %3018 = vmatpush2.msra.mxu0 0.0
      %3019 = vmatprep.subr.mxu0 0.0
      %3020 = vmatpush2.msra.mxu0 0.0
      %3021 = vmatprep.subr.mxu0 0.0
      %3022 = vmatpush2.msra.mxu0 0.0
      %3023 = vmatprep.subr.mxu0 0.0
      %3024 = vmatpush2.msra.mxu0 0.0
      %3025 = vmatprep.subr.mxu0 0.0
      %3026 = vmatpush2.msra.mxu0 0.0
      %3027 = vmatprep.subr.mxu0 0.0
      %3028 = vmatpush2.msra.mxu0 0.0
      %3029 = vmatprep.subr.mxu0 0.0
      %3030 = vmatpush2.msra.mxu0 0.0
      %3031 = vmatprep.subr.mxu0 0.0
      %3032 = vmatpush2.msra.mxu0 0.0
      %3033 = vmatprep.subr.mxu0 0.0
      %3034 = vmatpush2.msra.mxu0 0.0
      %3035 = vmatprep.mubr.f32.mxu0 0.0
      %3036 = vmatmul.mubr.f32.gmra.mxu0 %v413
      %v3037 = vpop.f32.mrf.mxu0
      %v3038 = vadd.f32 %v2969, %v3037
      %v3039 = vpop.f32.mrf.mxu0
      %3040 = vmatprep.mubr.f32.mxu0 0.0
      %3041 = vmatmul.mubr.f32.gmra.mxu0 %v416
      %v3042 = vpop.f32.mrf.mxu0
      %v3043 = vadd.f32 %v2969, %v3042
      %v3044 = vpop.f32.mrf.mxu0
      %3045 = vmatprep.mubr.f32.mxu0 0.0
      %3046 = vmatmul.mubr.f32.gmra.mxu0 %v419
      %v3047 = vpop.f32.mrf.mxu0
      %v3048 = vadd.f32 %v2969, %v3047
      %v3049 = vpop.f32.mrf.mxu0
      %3050 = vmatprep.mubr.f32.mxu0 0.0
      %3051 = vmatmul.mubr.f32.gmra.mxu0 %v422
      %v3052 = vpop.f32.mrf.mxu0
      %v3053 = vadd.f32 %v2969, %v3052
      %v3054 = vpop.f32.mrf.mxu0
      %3055 = vmatprep.mubr.f32.mxu0 0.0
      %3056 = vmatmul.mubr.f32.gmra.mxu0 %v425
      %v3057 = vpop.f32.mrf.mxu0
      %v3058 = vadd.f32 %v2969, %v3057
      %v3059 = vpop.f32.mrf.mxu0
      %3060 = vmatprep.mubr.f32.mxu0 0.0
      %3061 = vmatmul.mubr.f32.gmra.mxu0 %v428
      %v3062 = vpop.f32.mrf.mxu0
      %v3063 = vadd.f32 %v2969, %v3062
      %v3064 = vpop.f32.mrf.mxu0
      %3065 = vmatprep.mubr.f32.mxu0 0.0
      %3066 = vmatmul.mubr.f32.gmra.mxu0 %v431
      %v3067 = vpop.f32.mrf.mxu0
      %v3068 = vadd.f32 %v2969, %v3067
      %v3069 = vpop.f32.mrf.mxu0
      %3070 = vmatprep.mubr.f32.mxu0 0.0
      %3071 = vmatmul.mubr.f32.gmra.mxu0 %v434
      %v3072 = vpop.f32.mrf.mxu0
      %v3073 = vadd.f32 %v2969, %v3072
      %v3074 = vpop.f32.mrf.mxu0
      %3075 = vmatprep.mubr.f32.mxu0 0.0
      %3076 = vmatmul.mubr.f32.gmra.mxu0 %v437
      %v3077 = vpop.f32.mrf.mxu0
      %v3078 = vadd.f32 %v2969, %v3077
      %v3079 = vpop.f32.mrf.mxu0
      %3080 = vmatprep.mubr.f32.mxu0 0.0
      %3081 = vmatmul.mubr.f32.gmra.mxu0 %v440
      %v3082 = vpop.f32.mrf.mxu0
      %v3083 = vadd.f32 %v2969, %v3082
      %v3084 = vpop.f32.mrf.mxu0
      %3085 = vmatprep.mubr.f32.mxu0 0.0
      %3086 = vmatmul.mubr.f32.gmra.mxu0 %v443
      %v3087 = vpop.f32.mrf.mxu0
      %v3088 = vadd.f32 %v2969, %v3087
      %v3089 = vpop.f32.mrf.mxu0
      %3090 = vmatprep.mubr.f32.mxu0 0.0
      %3091 = vmatmul.mubr.f32.gmra.mxu0 %v446
      %v3092 = vpop.f32.mrf.mxu0
      %v3093 = vadd.f32 %v2969, %v3092
      %v3094 = vpop.f32.mrf.mxu0
      %3095 = vmatprep.mubr.f32.mxu0 0.0
      %3096 = vmatmul.mubr.f32.gmra.mxu0 %v449
      %v3097 = vpop.f32.mrf.mxu0
      %v3098 = vadd.f32 %v2969, %v3097
      %v3099 = vpop.f32.mrf.mxu0
      %3100 = vmatprep.mubr.f32.mxu0 0.0
      %3101 = vmatmul.mubr.f32.gmra.mxu0 %v452
      %v3102 = vpop.f32.mrf.mxu0
      %v3103 = vadd.f32 %v2969, %v3102
      %v3104 = vpop.f32.mrf.mxu0
      %3105 = vmatprep.mubr.f32.mxu0 0.0
      %3106 = vmatmul.mubr.f32.gmra.mxu0 %v455
      %v3107 = vpop.f32.mrf.mxu0
      %v3108 = vadd.f32 %v2969, %v3107
      %v3109 = vpop.f32.mrf.mxu0
      %3110 = vmatprep.mubr.f32.mxu0 0.0
      %3111 = vmatmul.mubr.f32.gmra.mxu0 %v458
      %v3112 = vpop.f32.mrf.mxu0
      %v3113 = vadd.f32 %v2969, %v3112
      %v3114 = vpop.f32.mrf.mxu0
      %3115 = vmatprep.mubr.f32.mxu0 0.0
      %3116 = vmatmul.mubr.f32.gmra.mxu0 %v461
      %v3117 = vpop.f32.mrf.mxu0
      %v3118 = vadd.f32 %v2969, %v3117
      %v3119 = vpop.f32.mrf.mxu0
      %3120 = vmatprep.mubr.f32.mxu0 0.0
      %3121 = vmatmul.mubr.f32.gmra.mxu0 %v464
      %v3122 = vpop.f32.mrf.mxu0
      %v3123 = vadd.f32 %v2969, %v3122
      %v3124 = vpop.f32.mrf.mxu0
      %3125 = vmatprep.mubr.f32.mxu0 0.0
      %3126 = vmatmul.mubr.f32.gmra.mxu0 %v467
      %v3127 = vpop.f32.mrf.mxu0
      %v3128 = vadd.f32 %v2969, %v3127
      %v3129 = vpop.f32.mrf.mxu0
      %3130 = vmatprep.mubr.f32.mxu0 0.0
      %3131 = vmatmul.mubr.f32.gmra.mxu0 %v470
      %v3132 = vpop.f32.mrf.mxu0
      %v3133 = vadd.f32 %v2969, %v3132
      %v3134 = vpop.f32.mrf.mxu0
      %3135 = vmatprep.mubr.f32.mxu0 0.0
      %3136 = vmatmul.mubr.f32.gmra.mxu0 %v473
      %v3137 = vpop.f32.mrf.mxu0
      %v3138 = vadd.f32 %v2969, %v3137
      %v3139 = vpop.f32.mrf.mxu0
      %3140 = vmatprep.mubr.f32.mxu0 0.0
      %3141 = vmatmul.mubr.f32.gmra.mxu0 %v476
      %v3142 = vpop.f32.mrf.mxu0
      %v3143 = vadd.f32 %v2969, %v3142
      %v3144 = vpop.f32.mrf.mxu0
      %3145 = vmatprep.mubr.f32.mxu0 0.0
      %3146 = vmatmul.mubr.f32.gmra.mxu0 %v479
      %v3147 = vpop.f32.mrf.mxu0
      %v3148 = vadd.f32 %v2969, %v3147
      %v3149 = vpop.f32.mrf.mxu0
      %3150 = vmatprep.mubr.f32.mxu0 0.0
      %3151 = vmatmul.mubr.f32.gmra.mxu0 %v482
      %v3152 = vpop.f32.mrf.mxu0
      %v3153 = vadd.f32 %v2969, %v3152
      %v3154 = vpop.f32.mrf.mxu0
      %3155 = vmatprep.mubr.f32.mxu0 0.0
      %3156 = vmatmul.mubr.f32.gmra.mxu0 %v485
      %v3157 = vpop.f32.mrf.mxu0
      %v3158 = vadd.f32 %v2969, %v3157
      %v3159 = vpop.f32.mrf.mxu0
      %3160 = vmatprep.mubr.f32.mxu0 0.0
      %3161 = vmatmul.mubr.f32.gmra.mxu0 %v488
      %v3162 = vpop.f32.mrf.mxu0
      %v3163 = vadd.f32 %v2969, %v3162
      %v3164 = vpop.f32.mrf.mxu0
      %3165 = vmatprep.mubr.f32.mxu0 0.0
      %3166 = vmatmul.mubr.f32.gmra.mxu0 %v491
      %v3167 = vpop.f32.mrf.mxu0
      %v3168 = vadd.f32 %v2969, %v3167
      %v3169 = vpop.f32.mrf.mxu0
      %3170 = vmatprep.mubr.f32.mxu0 0.0
      %3171 = vmatmul.mubr.f32.gmra.mxu0 %v494
      %v3172 = vpop.f32.mrf.mxu0
      %v3173 = vadd.f32 %v2969, %v3172
      %v3174 = vpop.f32.mrf.mxu0
      %3175 = vmatprep.mubr.f32.mxu0 0.0
      %3176 = vmatmul.mubr.f32.gmra.mxu0 %v497
      %v3177 = vpop.f32.mrf.mxu0
      %v3178 = vadd.f32 %v2969, %v3177
      %v3179 = vpop.f32.mrf.mxu0
      %3180 = vmatprep.mubr.f32.mxu0 0.0
      %3181 = vmatmul.mubr.f32.gmra.mxu0 %v500
      %v3182 = vpop.f32.mrf.mxu0
      %v3183 = vadd.f32 %v2969, %v3182
      %v3184 = vpop.f32.mrf.mxu0
      %3185 = vmatprep.mubr.f32.mxu0 0.0
      %3186 = vmatmul.mubr.f32.gmra.mxu0 %v503
      %v3187 = vpop.f32.mrf.mxu0
      %v3188 = vadd.f32 %v2969, %v3187
      %v3189 = vpop.f32.mrf.mxu0
      %3190 = vmatprep.mubr.f32.mxu0 0.0
      %3191 = vmatmul.mubr.f32.gmra.mxu0 %v506
      %v3192 = vpop.f32.mrf.mxu0
      %v3193 = vadd.f32 %v2969, %v3192
      %v3194 = vpop.f32.mrf.mxu0
      %3195 = vdwg.mxu0
      %s3196 = scalar_lea.vmem %s3, 32
      %v3197 = vld [vmem:[%s3196] sm:$0xff]
      %v3198 = vld [vmem:[%s3196 + $0x8] sm:$0xff]
      %v3199 = vld [vmem:[%s3196 + $0x10] sm:$0xff]
      %v3200 = vld [vmem:[%s3196 + $0x18] sm:$0xff]
      %s3201 = scalar_lea.vmem %s6, 1
      %v3202 = vld [vmem:[%s3201] sm:$0x1]
      %v3204 = vlaneseq
      %v3205 = vshrl.u32 %v3204, 7
      %v3206 = vsub.s32 0, %v3205
      %v3207 = vrot.slane %v3202, %v3206
      %3209 = vmatprep.subr.mxu0 0.0
      %3210 = vmatpush1.msra.mxu0 0.0
      %3211 = vmatprep.subr.mxu0 0.0
      %3212 = vmatpush1.msra.mxu0 0.0
      %3213 = vmatprep.subr.mxu0 0.0
      %3214 = vmatpush1.msra.mxu0 0.0
      %3215 = vmatprep.subr.mxu0 0.0
      %3216 = vmatpush1.msra.mxu0 0.0
      %3217 = vmatprep.subr.mxu0 0.0
      %3218 = vmatpush1.msra.mxu0 0.0
      %3219 = vmatprep.subr.mxu0 0.0
      %3220 = vmatpush1.msra.mxu0 0.0
      %3221 = vmatprep.subr.mxu0 0.0
      %3222 = vmatpush1.msra.mxu0 0.0
      %3223 = vmatprep.subr.mxu0 0.0
      %3224 = vmatpush1.msra.mxu0 0.0
      %3225 = vmatprep.subr.mxu0 0.0
      %3226 = vmatpush1.msra.mxu0 0.0
      %3227 = vmatprep.subr.mxu0 0.0
      %3228 = vmatpush1.msra.mxu0 0.0
      %3229 = vmatprep.subr.mxu0 0.0
      %3230 = vmatpush1.msra.mxu0 0.0
      %3231 = vmatprep.subr.mxu0 0.0
      %3232 = vmatpush1.msra.mxu0 0.0
      %3233 = vmatprep.subr.mxu0 0.0
      %3234 = vmatpush1.msra.mxu0 %v3200
      %3235 = vmatprep.subr.mxu0 0.0
      %3236 = vmatpush1.msra.mxu0 %v3199
      %3237 = vmatprep.subr.mxu0 0.0
      %3238 = vmatpush1.msra.mxu0 %v3198
      %3239 = vmatprep.subr.mxu0 0.0
      %3240 = vmatpush1.msra.mxu0 %v3197
      %3241 = vmatprep.subr.mxu0 0.0
      %3242 = vmatpush2.msra.mxu0 0.0
      %3243 = vmatprep.subr.mxu0 0.0
      %3244 = vmatpush2.msra.mxu0 0.0
      %3245 = vmatprep.subr.mxu0 0.0
      %3246 = vmatpush2.msra.mxu0 0.0
      %3247 = vmatprep.subr.mxu0 0.0
      %3248 = vmatpush2.msra.mxu0 0.0
      %3249 = vmatprep.subr.mxu0 0.0
      %3250 = vmatpush2.msra.mxu0 0.0
      %3251 = vmatprep.subr.mxu0 0.0
      %3252 = vmatpush2.msra.mxu0 0.0
      %3253 = vmatprep.subr.mxu0 0.0
      %3254 = vmatpush2.msra.mxu0 0.0
      %3255 = vmatprep.subr.mxu0 0.0
      %3256 = vmatpush2.msra.mxu0 0.0
      %3257 = vmatprep.subr.mxu0 0.0
      %3258 = vmatpush2.msra.mxu0 0.0
      %3259 = vmatprep.subr.mxu0 0.0
      %3260 = vmatpush2.msra.mxu0 0.0
      %3261 = vmatprep.subr.mxu0 0.0
      %3262 = vmatpush2.msra.mxu0 0.0
      %3263 = vmatprep.subr.mxu0 0.0
      %3264 = vmatpush2.msra.mxu0 0.0
      %3265 = vmatprep.subr.mxu0 0.0
      %3266 = vmatpush2.msra.mxu0 0.0
      %3267 = vmatprep.subr.mxu0 0.0
      %3268 = vmatpush2.msra.mxu0 0.0
      %3269 = vmatprep.subr.mxu0 0.0
      %3270 = vmatpush2.msra.mxu0 0.0
      %3271 = vmatprep.subr.mxu0 0.0
      %3272 = vmatpush2.msra.mxu0 0.0
      %3273 = vmatprep.mubr.f32.mxu0 0.0
      %3274 = vmatmul.mubr.f32.gmra.mxu0 %v413
      %v3275 = vpop.f32.mrf.mxu0
      %v3276 = vadd.f32 %v3207, %v3275
      %v3277 = vpop.f32.mrf.mxu0
      %3278 = vmatprep.mubr.f32.mxu0 0.0
      %3279 = vmatmul.mubr.f32.gmra.mxu0 %v416
      %v3280 = vpop.f32.mrf.mxu0
      %v3281 = vadd.f32 %v3207, %v3280
      %v3282 = vpop.f32.mrf.mxu0
      %3283 = vmatprep.mubr.f32.mxu0 0.0
      %3284 = vmatmul.mubr.f32.gmra.mxu0 %v419
      %v3285 = vpop.f32.mrf.mxu0
      %v3286 = vadd.f32 %v3207, %v3285
      %v3287 = vpop.f32.mrf.mxu0
      %3288 = vmatprep.mubr.f32.mxu0 0.0
      %3289 = vmatmul.mubr.f32.gmra.mxu0 %v422
      %v3290 = vpop.f32.mrf.mxu0
      %v3291 = vadd.f32 %v3207, %v3290
      %v3292 = vpop.f32.mrf.mxu0
      %3293 = vmatprep.mubr.f32.mxu0 0.0
      %3294 = vmatmul.mubr.f32.gmra.mxu0 %v425
      %v3295 = vpop.f32.mrf.mxu0
      %v3296 = vadd.f32 %v3207, %v3295
      %v3297 = vpop.f32.mrf.mxu0
      %3298 = vmatprep.mubr.f32.mxu0 0.0
      %3299 = vmatmul.mubr.f32.gmra.mxu0 %v428
      %v3300 = vpop.f32.mrf.mxu0
      %v3301 = vadd.f32 %v3207, %v3300
      %v3302 = vpop.f32.mrf.mxu0
      %3303 = vmatprep.mubr.f32.mxu0 0.0
      %3304 = vmatmul.mubr.f32.gmra.mxu0 %v431
      %v3305 = vpop.f32.mrf.mxu0
      %v3306 = vadd.f32 %v3207, %v3305
      %v3307 = vpop.f32.mrf.mxu0
      %3308 = vmatprep.mubr.f32.mxu0 0.0
      %3309 = vmatmul.mubr.f32.gmra.mxu0 %v434
      %v3310 = vpop.f32.mrf.mxu0
      %v3311 = vadd.f32 %v3207, %v3310
      %v3312 = vpop.f32.mrf.mxu0
      %3313 = vmatprep.mubr.f32.mxu0 0.0
      %3314 = vmatmul.mubr.f32.gmra.mxu0 %v437
      %v3315 = vpop.f32.mrf.mxu0
      %v3316 = vadd.f32 %v3207, %v3315
      %v3317 = vpop.f32.mrf.mxu0
      %3318 = vmatprep.mubr.f32.mxu0 0.0
      %3319 = vmatmul.mubr.f32.gmra.mxu0 %v440
      %v3320 = vpop.f32.mrf.mxu0
      %v3321 = vadd.f32 %v3207, %v3320
      %v3322 = vpop.f32.mrf.mxu0
      %3323 = vmatprep.mubr.f32.mxu0 0.0
      %3324 = vmatmul.mubr.f32.gmra.mxu0 %v443
      %v3325 = vpop.f32.mrf.mxu0
      %v3326 = vadd.f32 %v3207, %v3325
      %v3327 = vpop.f32.mrf.mxu0
      %3328 = vmatprep.mubr.f32.mxu0 0.0
      %3329 = vmatmul.mubr.f32.gmra.mxu0 %v446
      %v3330 = vpop.f32.mrf.mxu0
      %v3331 = vadd.f32 %v3207, %v3330
      %v3332 = vpop.f32.mrf.mxu0
      %3333 = vmatprep.mubr.f32.mxu0 0.0
      %3334 = vmatmul.mubr.f32.gmra.mxu0 %v449
      %v3335 = vpop.f32.mrf.mxu0
      %v3336 = vadd.f32 %v3207, %v3335
      %v3337 = vpop.f32.mrf.mxu0
      %3338 = vmatprep.mubr.f32.mxu0 0.0
      %3339 = vmatmul.mubr.f32.gmra.mxu0 %v452
      %v3340 = vpop.f32.mrf.mxu0
      %v3341 = vadd.f32 %v3207, %v3340
      %v3342 = vpop.f32.mrf.mxu0
      %3343 = vmatprep.mubr.f32.mxu0 0.0
      %3344 = vmatmul.mubr.f32.gmra.mxu0 %v455
      %v3345 = vpop.f32.mrf.mxu0
      %v3346 = vadd.f32 %v3207, %v3345
      %v3347 = vpop.f32.mrf.mxu0
      %3348 = vmatprep.mubr.f32.mxu0 0.0
      %3349 = vmatmul.mubr.f32.gmra.mxu0 %v458
      %v3350 = vpop.f32.mrf.mxu0
      %v3351 = vadd.f32 %v3207, %v3350
      %v3352 = vpop.f32.mrf.mxu0
      %3353 = vmatprep.mubr.f32.mxu0 0.0
      %3354 = vmatmul.mubr.f32.gmra.mxu0 %v461
      %v3355 = vpop.f32.mrf.mxu0
      %v3356 = vadd.f32 %v3207, %v3355
      %v3357 = vpop.f32.mrf.mxu0
      %3358 = vmatprep.mubr.f32.mxu0 0.0
      %3359 = vmatmul.mubr.f32.gmra.mxu0 %v464
      %v3360 = vpop.f32.mrf.mxu0
      %v3361 = vadd.f32 %v3207, %v3360
      %v3362 = vpop.f32.mrf.mxu0
      %3363 = vmatprep.mubr.f32.mxu0 0.0
      %3364 = vmatmul.mubr.f32.gmra.mxu0 %v467
      %v3365 = vpop.f32.mrf.mxu0
      %v3366 = vadd.f32 %v3207, %v3365
      %v3367 = vpop.f32.mrf.mxu0
      %3368 = vmatprep.mubr.f32.mxu0 0.0
      %3369 = vmatmul.mubr.f32.gmra.mxu0 %v470
      %v3370 = vpop.f32.mrf.mxu0
      %v3371 = vadd.f32 %v3207, %v3370
      %v3372 = vpop.f32.mrf.mxu0
      %3373 = vmatprep.mubr.f32.mxu0 0.0
      %3374 = vmatmul.mubr.f32.gmra.mxu0 %v473
      %v3375 = vpop.f32.mrf.mxu0
      %v3376 = vadd.f32 %v3207, %v3375
      %v3377 = vpop.f32.mrf.mxu0
      %3378 = vmatprep.mubr.f32.mxu0 0.0
      %3379 = vmatmul.mubr.f32.gmra.mxu0 %v476
      %v3380 = vpop.f32.mrf.mxu0
      %v3381 = vadd.f32 %v3207, %v3380
      %v3382 = vpop.f32.mrf.mxu0
      %3383 = vmatprep.mubr.f32.mxu0 0.0
      %3384 = vmatmul.mubr.f32.gmra.mxu0 %v479
      %v3385 = vpop.f32.mrf.mxu0
      %v3386 = vadd.f32 %v3207, %v3385
      %v3387 = vpop.f32.mrf.mxu0
      %3388 = vmatprep.mubr.f32.mxu0 0.0
      %3389 = vmatmul.mubr.f32.gmra.mxu0 %v482
      %v3390 = vpop.f32.mrf.mxu0
      %v3391 = vadd.f32 %v3207, %v3390
      %v3392 = vpop.f32.mrf.mxu0
      %3393 = vmatprep.mubr.f32.mxu0 0.0
      %3394 = vmatmul.mubr.f32.gmra.mxu0 %v485
      %v3395 = vpop.f32.mrf.mxu0
      %v3396 = vadd.f32 %v3207, %v3395
      %v3397 = vpop.f32.mrf.mxu0
      %3398 = vmatprep.mubr.f32.mxu0 0.0
      %3399 = vmatmul.mubr.f32.gmra.mxu0 %v488
      %v3400 = vpop.f32.mrf.mxu0
      %v3401 = vadd.f32 %v3207, %v3400
      %v3402 = vpop.f32.mrf.mxu0
      %3403 = vmatprep.mubr.f32.mxu0 0.0
      %3404 = vmatmul.mubr.f32.gmra.mxu0 %v491
      %v3405 = vpop.f32.mrf.mxu0
      %v3406 = vadd.f32 %v3207, %v3405
      %v3407 = vpop.f32.mrf.mxu0
      %3408 = vmatprep.mubr.f32.mxu0 0.0
      %3409 = vmatmul.mubr.f32.gmra.mxu0 %v494
      %v3410 = vpop.f32.mrf.mxu0
      %v3411 = vadd.f32 %v3207, %v3410
      %v3412 = vpop.f32.mrf.mxu0
      %3413 = vmatprep.mubr.f32.mxu0 0.0
      %3414 = vmatmul.mubr.f32.gmra.mxu0 %v497
      %v3415 = vpop.f32.mrf.mxu0
      %v3416 = vadd.f32 %v3207, %v3415
      %v3417 = vpop.f32.mrf.mxu0
      %3418 = vmatprep.mubr.f32.mxu0 0.0
      %3419 = vmatmul.mubr.f32.gmra.mxu0 %v500
      %v3420 = vpop.f32.mrf.mxu0
      %v3421 = vadd.f32 %v3207, %v3420
      %v3422 = vpop.f32.mrf.mxu0
      %3423 = vmatprep.mubr.f32.mxu0 0.0
      %3424 = vmatmul.mubr.f32.gmra.mxu0 %v503
      %v3425 = vpop.f32.mrf.mxu0
      %v3426 = vadd.f32 %v3207, %v3425
      %v3427 = vpop.f32.mrf.mxu0
      %3428 = vmatprep.mubr.f32.mxu0 0.0
      %3429 = vmatmul.mubr.f32.gmra.mxu0 %v506
      %v3430 = vpop.f32.mrf.mxu0
      %v3431 = vadd.f32 %v3207, %v3430
      %v3432 = vpop.f32.mrf.mxu0
      %3433 = vdwg.mxu0
      %s3434 = scalar_lea.vmem %s7, 256
      %v3435 = vld [vmem:[%s3434] sm:$0xff]
      %v3436 = vld [vmem:[%s3434 + $0x8] sm:$0xff]
      %v3437 = vld [vmem:[%s3434 + $0x10] sm:$0xff]
      %v3438 = vld [vmem:[%s3434 + $0x18] sm:$0xff]
      %v3439 = vld [vmem:[%s3434 + $0x20] sm:$0xff]
      %v3440 = vld [vmem:[%s3434 + $0x28] sm:$0xff]
      %v3441 = vld [vmem:[%s3434 + $0x30] sm:$0xff]
      %v3442 = vld [vmem:[%s3434 + $0x38] sm:$0xff]
      %v3443 = vld [vmem:[%s3434 + $0x40] sm:$0xff]
      %v3444 = vld [vmem:[%s3434 + $0x48] sm:$0xff]
      %v3445 = vld [vmem:[%s3434 + $0x50] sm:$0xff]
      %v3446 = vld [vmem:[%s3434 + $0x58] sm:$0xff]
      %v3447 = vld [vmem:[%s3434 + $0x60] sm:$0xff]
      %v3448 = vld [vmem:[%s3434 + $0x68] sm:$0xff]
      %v3449 = vld [vmem:[%s3434 + $0x70] sm:$0xff]
      %v3450 = vld [vmem:[%s3434 + $0x78] sm:$0xff]
      %v3451 = vld [vmem:[%s3434 + $0x80] sm:$0xff]
      %v3452 = vld [vmem:[%s3434 + $0x88] sm:$0xff]
      %v3453 = vld [vmem:[%s3434 + $0x90] sm:$0xff]
      %v3454 = vld [vmem:[%s3434 + $0x98] sm:$0xff]
      %v3455 = vld [vmem:[%s3434 + $0xa0] sm:$0xff]
      %v3456 = vld [vmem:[%s3434 + $0xa8] sm:$0xff]
      %v3457 = vld [vmem:[%s3434 + $0xb0] sm:$0xff]
      %v3458 = vld [vmem:[%s3434 + $0xb8] sm:$0xff]
      %v3459 = vld [vmem:[%s3434 + $0xc0] sm:$0xff]
      %v3460 = vld [vmem:[%s3434 + $0xc8] sm:$0xff]
      %v3461 = vld [vmem:[%s3434 + $0xd0] sm:$0xff]
      %v3462 = vld [vmem:[%s3434 + $0xd8] sm:$0xff]
      %v3463 = vld [vmem:[%s3434 + $0xe0] sm:$0xff]
      %v3464 = vld [vmem:[%s3434 + $0xe8] sm:$0xff]
      %v3465 = vld [vmem:[%s3434 + $0xf0] sm:$0xff]
      %v3466 = vld [vmem:[%s3434 + $0xf8] sm:$0xff]
      %v3468 = vsel %vm1237, %v2800, 0
      %v3471 = vsel %vm1237, %v2805, 0
      %v3474 = vsel %vm1237, %v2810, 0
      %v3477 = vsel %vm1237, %v2815, 0
      %v3480 = vsel %vm1237, %v2820, 0
      %v3483 = vsel %vm1237, %v2825, 0
      %v3486 = vsel %vm1237, %v2830, 0
      %v3489 = vsel %vm1237, %v2835, 0
      %v3492 = vsel %vm1237, %v3038, 0
      %v3495 = vsel %vm1237, %v3043, 0
      %v3498 = vsel %vm1237, %v3048, 0
      %v3501 = vsel %vm1237, %v3053, 0
      %v3504 = vsel %vm1237, %v3058, 0
      %v3507 = vsel %vm1237, %v3063, 0
      %v3510 = vsel %vm1237, %v3068, 0
      %v3513 = vsel %vm1237, %v3073, 0
      %3515 = vmatprep.subr.mxu0 0.0
      %3516 = vmatpush1.xpose.msra.mxu0 0.0
      %3517 = vmatprep.subr.mxu0 0.0
      %3518 = vmatpush1.xpose.msra.mxu0 0.0
      %3519 = vmatprep.subr.mxu0 0.0
      %3520 = vmatpush1.xpose.msra.mxu0 0.0
      %3521 = vmatprep.subr.mxu0 0.0
      %3522 = vmatpush1.xpose.msra.mxu0 0.0
      %3523 = vmatprep.subr.mxu0 0.0
      %3524 = vmatpush1.xpose.msra.mxu0 0.0
      %3525 = vmatprep.subr.mxu0 0.0
      %3526 = vmatpush1.xpose.msra.mxu0 0.0
      %3527 = vmatprep.subr.mxu0 0.0
      %3528 = vmatpush1.xpose.msra.mxu0 0.0
      %3529 = vmatprep.subr.mxu0 0.0
      %3530 = vmatpush1.xpose.msra.mxu0 0.0
      %3531 = vmatprep.subr.mxu0 0.0
      %3532 = vmatpush1.xpose.msra.mxu0 %v3513
      %3533 = vmatprep.subr.mxu0 0.0
      %3534 = vmatpush1.xpose.msra.mxu0 %v3510
      %3535 = vmatprep.subr.mxu0 0.0
      %3536 = vmatpush1.xpose.msra.mxu0 %v3507
      %3537 = vmatprep.subr.mxu0 0.0
      %3538 = vmatpush1.xpose.msra.mxu0 %v3504
      %3539 = vmatprep.subr.mxu0 0.0
      %3540 = vmatpush1.xpose.msra.mxu0 %v3501
      %3541 = vmatprep.subr.mxu0 0.0
      %3542 = vmatpush1.xpose.msra.mxu0 %v3498
      %3543 = vmatprep.subr.mxu0 0.0
      %3544 = vmatpush1.xpose.msra.mxu0 %v3495
      %3545 = vmatprep.subr.mxu0 0.0
      %3546 = vmatpush1.xpose.msra.mxu0 %v3492
      %3547 = vmatprep.subr.mxu0 0.0
      %3548 = vmatpush2.xpose.msra.mxu0 0.0
      %3549 = vmatprep.subr.mxu0 0.0
      %3550 = vmatpush2.xpose.msra.mxu0 0.0
      %3551 = vmatprep.subr.mxu0 0.0
      %3552 = vmatpush2.xpose.msra.mxu0 0.0
      %3553 = vmatprep.subr.mxu0 0.0
      %3554 = vmatpush2.xpose.msra.mxu0 0.0
      %3555 = vmatprep.subr.mxu0 0.0
      %3556 = vmatpush2.xpose.msra.mxu0 0.0
      %3557 = vmatprep.subr.mxu0 0.0
      %3558 = vmatpush2.xpose.msra.mxu0 0.0
      %3559 = vmatprep.subr.mxu0 0.0
      %3560 = vmatpush2.xpose.msra.mxu0 0.0
      %3561 = vmatprep.subr.mxu0 0.0
      %3562 = vmatpush2.xpose.msra.mxu0 0.0
      %3563 = vmatprep.subr.mxu0 0.0
      %3564 = vmatpush2.xpose.msra.mxu0 0.0
      %3565 = vmatprep.subr.mxu0 0.0
      %3566 = vmatpush2.xpose.msra.mxu0 0.0
      %3567 = vmatprep.subr.mxu0 0.0
      %3568 = vmatpush2.xpose.msra.mxu0 0.0
      %3569 = vmatprep.subr.mxu0 0.0
      %3570 = vmatpush2.xpose.msra.mxu0 0.0
      %3571 = vmatprep.subr.mxu0 0.0
      %3572 = vmatpush2.xpose.msra.mxu0 0.0
      %3573 = vmatprep.subr.mxu0 0.0
      %3574 = vmatpush2.xpose.msra.mxu0 0.0
      %3575 = vmatprep.subr.mxu0 0.0
      %3576 = vmatpush2.xpose.msra.mxu0 0.0
      %3577 = vmatprep.subr.mxu0 0.0
      %3578 = vmatpush2.xpose.msra.mxu0 0.0
      %3579 = vmatprep.mubr.f32.mxu0 0.0
      %3580 = vmatmul.mubr.f32.gmra.mxu0 %v3468
      %v3581 = vpop.f32.mrf.mxu0
      %v3582 = vadd.f32 %v3435, %v3581
      %v3583 = vpop.f32.mrf.mxu0
      %3584 = vmatprep.mubr.f32.mxu0 0.0
      %3585 = vmatmul.mubr.f32.gmra.mxu0 %v3471
      %v3586 = vpop.f32.mrf.mxu0
      %v3587 = vadd.f32 %v3436, %v3586
      %v3588 = vpop.f32.mrf.mxu0
      %3589 = vmatprep.mubr.f32.mxu0 0.0
      %3590 = vmatmul.mubr.f32.gmra.mxu0 %v3474
      %v3591 = vpop.f32.mrf.mxu0
      %v3592 = vadd.f32 %v3437, %v3591
      %v3593 = vpop.f32.mrf.mxu0
      %3594 = vmatprep.mubr.f32.mxu0 0.0
      %3595 = vmatmul.mubr.f32.gmra.mxu0 %v3477
      %v3596 = vpop.f32.mrf.mxu0
      %v3597 = vadd.f32 %v3438, %v3596
      %v3598 = vpop.f32.mrf.mxu0
      %3599 = vmatprep.mubr.f32.mxu0 0.0
      %3600 = vmatmul.mubr.f32.gmra.mxu0 %v3480
      %v3601 = vpop.f32.mrf.mxu0
      %v3602 = vadd.f32 %v3439, %v3601
      %v3603 = vpop.f32.mrf.mxu0
      %3604 = vmatprep.mubr.f32.mxu0 0.0
      %3605 = vmatmul.mubr.f32.gmra.mxu0 %v3483
      %v3606 = vpop.f32.mrf.mxu0
      %v3607 = vadd.f32 %v3440, %v3606
      %v3608 = vpop.f32.mrf.mxu0
      %3609 = vmatprep.mubr.f32.mxu0 0.0
      %3610 = vmatmul.mubr.f32.gmra.mxu0 %v3486
      %v3611 = vpop.f32.mrf.mxu0
      %v3612 = vadd.f32 %v3441, %v3611
      %v3613 = vpop.f32.mrf.mxu0
      %3614 = vmatprep.mubr.f32.mxu0 0.0
      %3615 = vmatmul.mubr.f32.gmra.mxu0 %v3489
      %v3616 = vpop.f32.mrf.mxu0
      %v3617 = vadd.f32 %v3442, %v3616
      %v3618 = vpop.f32.mrf.mxu0
      %3619 = vdwg.mxu0
      %v3621 = vsel %vm1237, %v2840, 0
      %v3624 = vsel %vm1237, %v2845, 0
      %v3627 = vsel %vm1237, %v2850, 0
      %v3630 = vsel %vm1237, %v2855, 0
      %v3633 = vsel %vm1237, %v2860, 0
      %v3636 = vsel %vm1237, %v2865, 0
      %v3639 = vsel %vm1237, %v2870, 0
      %v3642 = vsel %vm1237, %v2875, 0
      %v3645 = vsel %vm1237, %v3078, 0
      %v3648 = vsel %vm1237, %v3083, 0
      %v3651 = vsel %vm1237, %v3088, 0
      %v3654 = vsel %vm1237, %v3093, 0
      %v3657 = vsel %vm1237, %v3098, 0
      %v3660 = vsel %vm1237, %v3103, 0
      %v3663 = vsel %vm1237, %v3108, 0
      %v3666 = vsel %vm1237, %v3113, 0
      %3668 = vmatprep.subr.mxu0 0.0
      %3669 = vmatpush1.xpose.msra.mxu0 0.0
      %3670 = vmatprep.subr.mxu0 0.0
      %3671 = vmatpush1.xpose.msra.mxu0 0.0
      %3672 = vmatprep.subr.mxu0 0.0
      %3673 = vmatpush1.xpose.msra.mxu0 0.0
      %3674 = vmatprep.subr.mxu0 0.0
      %3675 = vmatpush1.xpose.msra.mxu0 0.0
      %3676 = vmatprep.subr.mxu0 0.0
      %3677 = vmatpush1.xpose.msra.mxu0 0.0
      %3678 = vmatprep.subr.mxu0 0.0
      %3679 = vmatpush1.xpose.msra.mxu0 0.0
      %3680 = vmatprep.subr.mxu0 0.0
      %3681 = vmatpush1.xpose.msra.mxu0 0.0
      %3682 = vmatprep.subr.mxu0 0.0
      %3683 = vmatpush1.xpose.msra.mxu0 0.0
      %3684 = vmatprep.subr.mxu0 0.0
      %3685 = vmatpush1.xpose.msra.mxu0 %v3666
      %3686 = vmatprep.subr.mxu0 0.0
      %3687 = vmatpush1.xpose.msra.mxu0 %v3663
      %3688 = vmatprep.subr.mxu0 0.0
      %3689 = vmatpush1.xpose.msra.mxu0 %v3660
      %3690 = vmatprep.subr.mxu0 0.0
      %3691 = vmatpush1.xpose.msra.mxu0 %v3657
      %3692 = vmatprep.subr.mxu0 0.0
      %3693 = vmatpush1.xpose.msra.mxu0 %v3654
      %3694 = vmatprep.subr.mxu0 0.0
      %3695 = vmatpush1.xpose.msra.mxu0 %v3651
      %3696 = vmatprep.subr.mxu0 0.0
      %3697 = vmatpush1.xpose.msra.mxu0 %v3648
      %3698 = vmatprep.subr.mxu0 0.0
      %3699 = vmatpush1.xpose.msra.mxu0 %v3645
      %3700 = vmatprep.subr.mxu0 0.0
      %3701 = vmatpush2.xpose.msra.mxu0 0.0
      %3702 = vmatprep.subr.mxu0 0.0
      %3703 = vmatpush2.xpose.msra.mxu0 0.0
      %3704 = vmatprep.subr.mxu0 0.0
      %3705 = vmatpush2.xpose.msra.mxu0 0.0
      %3706 = vmatprep.subr.mxu0 0.0
      %3707 = vmatpush2.xpose.msra.mxu0 0.0
      %3708 = vmatprep.subr.mxu0 0.0
      %3709 = vmatpush2.xpose.msra.mxu0 0.0
      %3710 = vmatprep.subr.mxu0 0.0
      %3711 = vmatpush2.xpose.msra.mxu0 0.0
      %3712 = vmatprep.subr.mxu0 0.0
      %3713 = vmatpush2.xpose.msra.mxu0 0.0
      %3714 = vmatprep.subr.mxu0 0.0
      %3715 = vmatpush2.xpose.msra.mxu0 0.0
      %3716 = vmatprep.subr.mxu0 0.0
      %3717 = vmatpush2.xpose.msra.mxu0 0.0
      %3718 = vmatprep.subr.mxu0 0.0
      %3719 = vmatpush2.xpose.msra.mxu0 0.0
      %3720 = vmatprep.subr.mxu0 0.0
      %3721 = vmatpush2.xpose.msra.mxu0 0.0
      %3722 = vmatprep.subr.mxu0 0.0
      %3723 = vmatpush2.xpose.msra.mxu0 0.0
      %3724 = vmatprep.subr.mxu0 0.0
      %3725 = vmatpush2.xpose.msra.mxu0 0.0
      %3726 = vmatprep.subr.mxu0 0.0
      %3727 = vmatpush2.xpose.msra.mxu0 0.0
      %3728 = vmatprep.subr.mxu0 0.0
      %3729 = vmatpush2.xpose.msra.mxu0 0.0
      %3730 = vmatprep.subr.mxu0 0.0
      %3731 = vmatpush2.xpose.msra.mxu0 0.0
      %3732 = vmatprep.mubr.f32.mxu0 0.0
      %3733 = vmatmul.mubr.f32.gmra.mxu0 %v3621
      %v3734 = vpop.f32.mrf.mxu0
      %v3735 = vadd.f32 %v3443, %v3734
      %v3736 = vpop.f32.mrf.mxu0
      %3737 = vmatprep.mubr.f32.mxu0 0.0
      %3738 = vmatmul.mubr.f32.gmra.mxu0 %v3624
      %v3739 = vpop.f32.mrf.mxu0
      %v3740 = vadd.f32 %v3444, %v3739
      %v3741 = vpop.f32.mrf.mxu0
      %3742 = vmatprep.mubr.f32.mxu0 0.0
      %3743 = vmatmul.mubr.f32.gmra.mxu0 %v3627
      %v3744 = vpop.f32.mrf.mxu0
      %v3745 = vadd.f32 %v3445, %v3744
      %v3746 = vpop.f32.mrf.mxu0
      %3747 = vmatprep.mubr.f32.mxu0 0.0
      %3748 = vmatmul.mubr.f32.gmra.mxu0 %v3630
      %v3749 = vpop.f32.mrf.mxu0
      %v3750 = vadd.f32 %v3446, %v3749
      %v3751 = vpop.f32.mrf.mxu0
      %3752 = vmatprep.mubr.f32.mxu0 0.0
      %3753 = vmatmul.mubr.f32.gmra.mxu0 %v3633
      %v3754 = vpop.f32.mrf.mxu0
      %v3755 = vadd.f32 %v3447, %v3754
      %v3756 = vpop.f32.mrf.mxu0
      %3757 = vmatprep.mubr.f32.mxu0 0.0
      %3758 = vmatmul.mubr.f32.gmra.mxu0 %v3636
      %v3759 = vpop.f32.mrf.mxu0
      %v3760 = vadd.f32 %v3448, %v3759
      %v3761 = vpop.f32.mrf.mxu0
      %3762 = vmatprep.mubr.f32.mxu0 0.0
      %3763 = vmatmul.mubr.f32.gmra.mxu0 %v3639
      %v3764 = vpop.f32.mrf.mxu0
      %v3765 = vadd.f32 %v3449, %v3764
      %v3766 = vpop.f32.mrf.mxu0
      %3767 = vmatprep.mubr.f32.mxu0 0.0
      %3768 = vmatmul.mubr.f32.gmra.mxu0 %v3642
      %v3769 = vpop.f32.mrf.mxu0
      %v3770 = vadd.f32 %v3450, %v3769
      %v3771 = vpop.f32.mrf.mxu0
      %3772 = vdwg.mxu0
      %v3774 = vsel %vm1237, %v2880, 0
      %v3777 = vsel %vm1237, %v2885, 0
      %v3780 = vsel %vm1237, %v2890, 0
      %v3783 = vsel %vm1237, %v2895, 0
      %v3786 = vsel %vm1237, %v2900, 0
      %v3789 = vsel %vm1237, %v2905, 0
      %v3792 = vsel %vm1237, %v2910, 0
      %v3795 = vsel %vm1237, %v2915, 0
      %v3798 = vsel %vm1237, %v3118, 0
      %v3801 = vsel %vm1237, %v3123, 0
      %v3804 = vsel %vm1237, %v3128, 0
      %v3807 = vsel %vm1237, %v3133, 0
      %v3810 = vsel %vm1237, %v3138, 0
      %v3813 = vsel %vm1237, %v3143, 0
      %v3816 = vsel %vm1237, %v3148, 0
      %v3819 = vsel %vm1237, %v3153, 0
      %3821 = vmatprep.subr.mxu0 0.0
      %3822 = vmatpush1.xpose.msra.mxu0 0.0
      %3823 = vmatprep.subr.mxu0 0.0
      %3824 = vmatpush1.xpose.msra.mxu0 0.0
      %3825 = vmatprep.subr.mxu0 0.0
      %3826 = vmatpush1.xpose.msra.mxu0 0.0
      %3827 = vmatprep.subr.mxu0 0.0
      %3828 = vmatpush1.xpose.msra.mxu0 0.0
      %3829 = vmatprep.subr.mxu0 0.0
      %3830 = vmatpush1.xpose.msra.mxu0 0.0
      %3831 = vmatprep.subr.mxu0 0.0
      %3832 = vmatpush1.xpose.msra.mxu0 0.0
      %3833 = vmatprep.subr.mxu0 0.0
      %3834 = vmatpush1.xpose.msra.mxu0 0.0
      %3835 = vmatprep.subr.mxu0 0.0
      %3836 = vmatpush1.xpose.msra.mxu0 0.0
      %3837 = vmatprep.subr.mxu0 0.0
      %3838 = vmatpush1.xpose.msra.mxu0 %v3819
      %3839 = vmatprep.subr.mxu0 0.0
      %3840 = vmatpush1.xpose.msra.mxu0 %v3816
      %3841 = vmatprep.subr.mxu0 0.0
      %3842 = vmatpush1.xpose.msra.mxu0 %v3813
      %3843 = vmatprep.subr.mxu0 0.0
      %3844 = vmatpush1.xpose.msra.mxu0 %v3810
      %3845 = vmatprep.subr.mxu0 0.0
      %3846 = vmatpush1.xpose.msra.mxu0 %v3807
      %3847 = vmatprep.subr.mxu0 0.0
      %3848 = vmatpush1.xpose.msra.mxu0 %v3804
      %3849 = vmatprep.subr.mxu0 0.0
      %3850 = vmatpush1.xpose.msra.mxu0 %v3801
      %3851 = vmatprep.subr.mxu0 0.0
      %3852 = vmatpush1.xpose.msra.mxu0 %v3798
      %3853 = vmatprep.subr.mxu0 0.0
      %3854 = vmatpush2.xpose.msra.mxu0 0.0
      %3855 = vmatprep.subr.mxu0 0.0
      %3856 = vmatpush2.xpose.msra.mxu0 0.0
      %3857 = vmatprep.subr.mxu0 0.0
      %3858 = vmatpush2.xpose.msra.mxu0 0.0
      %3859 = vmatprep.subr.mxu0 0.0
      %3860 = vmatpush2.xpose.msra.mxu0 0.0
      %3861 = vmatprep.subr.mxu0 0.0
      %3862 = vmatpush2.xpose.msra.mxu0 0.0
      %3863 = vmatprep.subr.mxu0 0.0
      %3864 = vmatpush2.xpose.msra.mxu0 0.0
      %3865 = vmatprep.subr.mxu0 0.0
      %3866 = vmatpush2.xpose.msra.mxu0 0.0
      %3867 = vmatprep.subr.mxu0 0.0
      %3868 = vmatpush2.xpose.msra.mxu0 0.0
      %3869 = vmatprep.subr.mxu0 0.0
      %3870 = vmatpush2.xpose.msra.mxu0 0.0
      %3871 = vmatprep.subr.mxu0 0.0
      %3872 = vmatpush2.xpose.msra.mxu0 0.0
      %3873 = vmatprep.subr.mxu0 0.0
      %3874 = vmatpush2.xpose.msra.mxu0 0.0
      %3875 = vmatprep.subr.mxu0 0.0
      %3876 = vmatpush2.xpose.msra.mxu0 0.0
      %3877 = vmatprep.subr.mxu0 0.0
      %3878 = vmatpush2.xpose.msra.mxu0 0.0
      %3879 = vmatprep.subr.mxu0 0.0
      %3880 = vmatpush2.xpose.msra.mxu0 0.0
      %3881 = vmatprep.subr.mxu0 0.0
      %3882 = vmatpush2.xpose.msra.mxu0 0.0
      %3883 = vmatprep.subr.mxu0 0.0
      %3884 = vmatpush2.xpose.msra.mxu0 0.0
      %3885 = vmatprep.mubr.f32.mxu0 0.0
      %3886 = vmatmul.mubr.f32.gmra.mxu0 %v3774
      %v3887 = vpop.f32.mrf.mxu0
      %v3888 = vadd.f32 %v3451, %v3887
      %v3889 = vpop.f32.mrf.mxu0
      %3890 = vmatprep.mubr.f32.mxu0 0.0
      %3891 = vmatmul.mubr.f32.gmra.mxu0 %v3777
      %v3892 = vpop.f32.mrf.mxu0
      %v3893 = vadd.f32 %v3452, %v3892
      %v3894 = vpop.f32.mrf.mxu0
      %3895 = vmatprep.mubr.f32.mxu0 0.0
      %3896 = vmatmul.mubr.f32.gmra.mxu0 %v3780
      %v3897 = vpop.f32.mrf.mxu0
      %v3898 = vadd.f32 %v3453, %v3897
      %v3899 = vpop.f32.mrf.mxu0
      %3900 = vmatprep.mubr.f32.mxu0 0.0
      %3901 = vmatmul.mubr.f32.gmra.mxu0 %v3783
      %v3902 = vpop.f32.mrf.mxu0
      %v3903 = vadd.f32 %v3454, %v3902
      %v3904 = vpop.f32.mrf.mxu0
      %3905 = vmatprep.mubr.f32.mxu0 0.0
      %3906 = vmatmul.mubr.f32.gmra.mxu0 %v3786
      %v3907 = vpop.f32.mrf.mxu0
      %v3908 = vadd.f32 %v3455, %v3907
      %v3909 = vpop.f32.mrf.mxu0
      %3910 = vmatprep.mubr.f32.mxu0 0.0
      %3911 = vmatmul.mubr.f32.gmra.mxu0 %v3789
      %v3912 = vpop.f32.mrf.mxu0
      %v3913 = vadd.f32 %v3456, %v3912
      %v3914 = vpop.f32.mrf.mxu0
      %3915 = vmatprep.mubr.f32.mxu0 0.0
      %3916 = vmatmul.mubr.f32.gmra.mxu0 %v3792
      %v3917 = vpop.f32.mrf.mxu0
      %v3918 = vadd.f32 %v3457, %v3917
      %v3919 = vpop.f32.mrf.mxu0
      %3920 = vmatprep.mubr.f32.mxu0 0.0
      %3921 = vmatmul.mubr.f32.gmra.mxu0 %v3795
      %v3922 = vpop.f32.mrf.mxu0
      %v3923 = vadd.f32 %v3458, %v3922
      %v3924 = vpop.f32.mrf.mxu0
      %3925 = vdwg.mxu0
      %v3927 = vsel %vm1237, %v2920, 0
      %v3930 = vsel %vm1237, %v2925, 0
      %v3933 = vsel %vm1237, %v2930, 0
      %v3936 = vsel %vm1237, %v2935, 0
      %v3939 = vsel %vm1237, %v2940, 0
      %v3942 = vsel %vm1237, %v2945, 0
      %v3945 = vsel %vm1237, %v2950, 0
      %v3948 = vsel %vm1237, %v2955, 0
      %v3951 = vsel %vm1237, %v3158, 0
      %v3954 = vsel %vm1237, %v3163, 0
      %v3957 = vsel %vm1237, %v3168, 0
      %v3960 = vsel %vm1237, %v3173, 0
      %v3963 = vsel %vm1237, %v3178, 0
      %v3966 = vsel %vm1237, %v3183, 0
      %v3969 = vsel %vm1237, %v3188, 0
      %v3972 = vsel %vm1237, %v3193, 0
      %3974 = vmatprep.subr.mxu0 0.0
      %3975 = vmatpush1.xpose.msra.mxu0 0.0
      %3976 = vmatprep.subr.mxu0 0.0
      %3977 = vmatpush1.xpose.msra.mxu0 0.0
      %3978 = vmatprep.subr.mxu0 0.0
      %3979 = vmatpush1.xpose.msra.mxu0 0.0
      %3980 = vmatprep.subr.mxu0 0.0
      %3981 = vmatpush1.xpose.msra.mxu0 0.0
      %3982 = vmatprep.subr.mxu0 0.0
      %3983 = vmatpush1.xpose.msra.mxu0 0.0
      %3984 = vmatprep.subr.mxu0 0.0
      %3985 = vmatpush1.xpose.msra.mxu0 0.0
      %3986 = vmatprep.subr.mxu0 0.0
      %3987 = vmatpush1.xpose.msra.mxu0 0.0
      %3988 = vmatprep.subr.mxu0 0.0
      %3989 = vmatpush1.xpose.msra.mxu0 0.0
      %3990 = vmatprep.subr.mxu0 0.0
      %3991 = vmatpush1.xpose.msra.mxu0 %v3972
      %3992 = vmatprep.subr.mxu0 0.0
      %3993 = vmatpush1.xpose.msra.mxu0 %v3969
      %3994 = vmatprep.subr.mxu0 0.0
      %3995 = vmatpush1.xpose.msra.mxu0 %v3966
      %3996 = vmatprep.subr.mxu0 0.0
      %3997 = vmatpush1.xpose.msra.mxu0 %v3963
      %3998 = vmatprep.subr.mxu0 0.0
      %3999 = vmatpush1.xpose.msra.mxu0 %v3960
      %4000 = vmatprep.subr.mxu0 0.0
      %4001 = vmatpush1.xpose.msra.mxu0 %v3957
      %4002 = vmatprep.subr.mxu0 0.0
      %4003 = vmatpush1.xpose.msra.mxu0 %v3954
      %4004 = vmatprep.subr.mxu0 0.0
      %4005 = vmatpush1.xpose.msra.mxu0 %v3951
      %4006 = vmatprep.subr.mxu0 0.0
      %4007 = vmatpush2.xpose.msra.mxu0 0.0
      %4008 = vmatprep.subr.mxu0 0.0
      %4009 = vmatpush2.xpose.msra.mxu0 0.0
      %4010 = vmatprep.subr.mxu0 0.0
      %4011 = vmatpush2.xpose.msra.mxu0 0.0
      %4012 = vmatprep.subr.mxu0 0.0
      %4013 = vmatpush2.xpose.msra.mxu0 0.0
      %4014 = vmatprep.subr.mxu0 0.0
      %4015 = vmatpush2.xpose.msra.mxu0 0.0
      %4016 = vmatprep.subr.mxu0 0.0
      %4017 = vmatpush2.xpose.msra.mxu0 0.0
      %4018 = vmatprep.subr.mxu0 0.0
      %4019 = vmatpush2.xpose.msra.mxu0 0.0
      %4020 = vmatprep.subr.mxu0 0.0
      %4021 = vmatpush2.xpose.msra.mxu0 0.0
      %4022 = vmatprep.subr.mxu0 0.0
      %4023 = vmatpush2.xpose.msra.mxu0 0.0
      %4024 = vmatprep.subr.mxu0 0.0
      %4025 = vmatpush2.xpose.msra.mxu0 0.0
      %4026 = vmatprep.subr.mxu0 0.0
      %4027 = vmatpush2.xpose.msra.mxu0 0.0
      %4028 = vmatprep.subr.mxu0 0.0
      %4029 = vmatpush2.xpose.msra.mxu0 0.0
      %4030 = vmatprep.subr.mxu0 0.0
      %4031 = vmatpush2.xpose.msra.mxu0 0.0
      %4032 = vmatprep.subr.mxu0 0.0
      %4033 = vmatpush2.xpose.msra.mxu0 0.0
      %4034 = vmatprep.subr.mxu0 0.0
      %4035 = vmatpush2.xpose.msra.mxu0 0.0
      %4036 = vmatprep.subr.mxu0 0.0
      %4037 = vmatpush2.xpose.msra.mxu0 0.0
      %4038 = vmatprep.mubr.f32.mxu0 0.0
      %4039 = vmatmul.mubr.f32.gmra.mxu0 %v3927
      %v4040 = vpop.f32.mrf.mxu0
      %v4041 = vadd.f32 %v3459, %v4040
      %v4042 = vpop.f32.mrf.mxu0
      %4043 = vmatprep.mubr.f32.mxu0 0.0
      %4044 = vmatmul.mubr.f32.gmra.mxu0 %v3930
      %v4045 = vpop.f32.mrf.mxu0
      %v4046 = vadd.f32 %v3460, %v4045
      %v4047 = vpop.f32.mrf.mxu0
      %4048 = vmatprep.mubr.f32.mxu0 0.0
      %4049 = vmatmul.mubr.f32.gmra.mxu0 %v3933
      %v4050 = vpop.f32.mrf.mxu0
      %v4051 = vadd.f32 %v3461, %v4050
      %v4052 = vpop.f32.mrf.mxu0
      %4053 = vmatprep.mubr.f32.mxu0 0.0
      %4054 = vmatmul.mubr.f32.gmra.mxu0 %v3936
      %v4055 = vpop.f32.mrf.mxu0
      %v4056 = vadd.f32 %v3462, %v4055
      %v4057 = vpop.f32.mrf.mxu0
      %4058 = vmatprep.mubr.f32.mxu0 0.0
      %4059 = vmatmul.mubr.f32.gmra.mxu0 %v3939
      %v4060 = vpop.f32.mrf.mxu0
      %v4061 = vadd.f32 %v3463, %v4060
      %v4062 = vpop.f32.mrf.mxu0
      %4063 = vmatprep.mubr.f32.mxu0 0.0
      %4064 = vmatmul.mubr.f32.gmra.mxu0 %v3942
      %v4065 = vpop.f32.mrf.mxu0
      %v4066 = vadd.f32 %v3464, %v4065
      %v4067 = vpop.f32.mrf.mxu0
      %4068 = vmatprep.mubr.f32.mxu0 0.0
      %4069 = vmatmul.mubr.f32.gmra.mxu0 %v3945
      %v4070 = vpop.f32.mrf.mxu0
      %v4071 = vadd.f32 %v3465, %v4070
      %v4072 = vpop.f32.mrf.mxu0
      %4073 = vmatprep.mubr.f32.mxu0 0.0
      %4074 = vmatmul.mubr.f32.gmra.mxu0 %v3948
      %v4075 = vpop.f32.mrf.mxu0
      %v4076 = vadd.f32 %v3466, %v4075
      %v4077 = vpop.f32.mrf.mxu0
      %4078 = vdwg.mxu0
      %v4079 = vsel %vm1850, %v3582, -inf
      %4080 = vmax.xlane.f32.xlu0 %v4079
      %v4081 = vpop.xlane.xlu0 %4080
      %v4082 = vsel %vm1850, %v3587, -inf
      %4083 = vmax.xlane.f32.xlu0 %v4082
      %v4084 = vpop.xlane.xlu0 %4083
      %v4085 = vsel %vm1850, %v3592, -inf
      %4086 = vmax.xlane.f32.xlu0 %v4085
      %v4087 = vpop.xlane.xlu0 %4086
      %v4088 = vsel %vm1850, %v3597, -inf
      %4089 = vmax.xlane.f32.xlu0 %v4088
      %v4090 = vpop.xlane.xlu0 %4089
      %v4091 = vsel %vm1850, %v3602, -inf
      %4092 = vmax.xlane.f32.xlu0 %v4091
      %v4093 = vpop.xlane.xlu0 %4092
      %v4094 = vsel %vm1850, %v3607, -inf
      %4095 = vmax.xlane.f32.xlu0 %v4094
      %v4096 = vpop.xlane.xlu0 %4095
      %v4097 = vsel %vm1850, %v3612, -inf
      %4098 = vmax.xlane.f32.xlu0 %v4097
      %v4099 = vpop.xlane.xlu0 %4098
      %v4100 = vsel %vm1850, %v3617, -inf
      %4101 = vmax.xlane.f32.xlu0 %v4100
      %v4102 = vpop.xlane.xlu0 %4101
      %v4103 = vsel %vm1850, %v3735, -inf
      %4104 = vmax.xlane.f32.xlu0 %v4103
      %v4105 = vpop.xlane.xlu0 %4104
      %v4106 = vsel %vm1850, %v3740, -inf
      %4107 = vmax.xlane.f32.xlu0 %v4106
      %v4108 = vpop.xlane.xlu0 %4107
      %v4109 = vsel %vm1850, %v3745, -inf
      %4110 = vmax.xlane.f32.xlu0 %v4109
      %v4111 = vpop.xlane.xlu0 %4110
      %v4112 = vsel %vm1850, %v3750, -inf
      %4113 = vmax.xlane.f32.xlu0 %v4112
      %v4114 = vpop.xlane.xlu0 %4113
      %v4115 = vsel %vm1850, %v3755, -inf
      %4116 = vmax.xlane.f32.xlu0 %v4115
      %v4117 = vpop.xlane.xlu0 %4116
      %v4118 = vsel %vm1850, %v3760, -inf
      %4119 = vmax.xlane.f32.xlu0 %v4118
      %v4120 = vpop.xlane.xlu0 %4119
      %v4121 = vsel %vm1850, %v3765, -inf
      %4122 = vmax.xlane.f32.xlu0 %v4121
      %v4123 = vpop.xlane.xlu0 %4122
      %v4124 = vsel %vm1850, %v3770, -inf
      %4125 = vmax.xlane.f32.xlu0 %v4124
      %v4126 = vpop.xlane.xlu0 %4125
      %v4127 = vsel %vm1850, %v3888, -inf
      %4128 = vmax.xlane.f32.xlu0 %v4127
      %v4129 = vpop.xlane.xlu0 %4128
      %v4130 = vsel %vm1850, %v3893, -inf
      %4131 = vmax.xlane.f32.xlu0 %v4130
      %v4132 = vpop.xlane.xlu0 %4131
      %v4133 = vsel %vm1850, %v3898, -inf
      %4134 = vmax.xlane.f32.xlu0 %v4133
      %v4135 = vpop.xlane.xlu0 %4134
      %v4136 = vsel %vm1850, %v3903, -inf
      %4137 = vmax.xlane.f32.xlu0 %v4136
      %v4138 = vpop.xlane.xlu0 %4137
      %v4139 = vsel %vm1850, %v3908, -inf
      %4140 = vmax.xlane.f32.xlu0 %v4139
      %v4141 = vpop.xlane.xlu0 %4140
      %v4142 = vsel %vm1850, %v3913, -inf
      %4143 = vmax.xlane.f32.xlu0 %v4142
      %v4144 = vpop.xlane.xlu0 %4143
      %v4145 = vsel %vm1850, %v3918, -inf
      %4146 = vmax.xlane.f32.xlu0 %v4145
      %v4147 = vpop.xlane.xlu0 %4146
      %v4148 = vsel %vm1850, %v3923, -inf
      %4149 = vmax.xlane.f32.xlu0 %v4148
      %v4150 = vpop.xlane.xlu0 %4149
      %v4151 = vsel %vm1850, %v4041, -inf
      %4152 = vmax.xlane.f32.xlu0 %v4151
      %v4153 = vpop.xlane.xlu0 %4152
      %v4154 = vsel %vm1850, %v4046, -inf
      %4155 = vmax.xlane.f32.xlu0 %v4154
      %v4156 = vpop.xlane.xlu0 %4155
      %v4157 = vsel %vm1850, %v4051, -inf
      %4158 = vmax.xlane.f32.xlu0 %v4157
      %v4159 = vpop.xlane.xlu0 %4158
      %v4160 = vsel %vm1850, %v4056, -inf
      %4161 = vmax.xlane.f32.xlu0 %v4160
      %v4162 = vpop.xlane.xlu0 %4161
      %v4163 = vsel %vm1850, %v4061, -inf
      %4164 = vmax.xlane.f32.xlu0 %v4163
      %v4165 = vpop.xlane.xlu0 %4164
      %v4166 = vsel %vm1850, %v4066, -inf
      %4167 = vmax.xlane.f32.xlu0 %v4166
      %v4168 = vpop.xlane.xlu0 %4167
      %v4169 = vsel %vm1850, %v4071, -inf
      %4170 = vmax.xlane.f32.xlu0 %v4169
      %v4171 = vpop.xlane.xlu0 %4170
      %v4172 = vsel %vm1850, %v4076, -inf
      %4173 = vmax.xlane.f32.xlu0 %v4172
      %v4174 = vpop.xlane.xlu0 %4173
      %v4175 = vsub.f32 %v3582, %v4081
      %v4176 = vsub.f32 %v3587, %v4084
      %v4177 = vsub.f32 %v3592, %v4087
      %v4178 = vsub.f32 %v3597, %v4090
      %v4179 = vsub.f32 %v3602, %v4093
      %v4180 = vsub.f32 %v3607, %v4096
      %v4181 = vsub.f32 %v3612, %v4099
      %v4182 = vsub.f32 %v3617, %v4102
      %v4183 = vsub.f32 %v3735, %v4105
      %v4184 = vsub.f32 %v3740, %v4108
      %v4185 = vsub.f32 %v3745, %v4111
      %v4186 = vsub.f32 %v3750, %v4114
      %v4187 = vsub.f32 %v3755, %v4117
      %v4188 = vsub.f32 %v3760, %v4120
      %v4189 = vsub.f32 %v3765, %v4123
      %v4190 = vsub.f32 %v3770, %v4126
      %v4191 = vsub.f32 %v3888, %v4129
      %v4192 = vsub.f32 %v3893, %v4132
      %v4193 = vsub.f32 %v3898, %v4135
      %v4194 = vsub.f32 %v3903, %v4138
      %v4195 = vsub.f32 %v3908, %v4141
      %v4196 = vsub.f32 %v3913, %v4144
      %v4197 = vsub.f32 %v3918, %v4147
      %v4198 = vsub.f32 %v3923, %v4150
      %v4199 = vsub.f32 %v4041, %v4153
      %v4200 = vsub.f32 %v4046, %v4156
      %v4201 = vsub.f32 %v4051, %v4159
      %v4202 = vsub.f32 %v4056, %v4162
      %v4203 = vsub.f32 %v4061, %v4165
      %v4204 = vsub.f32 %v4066, %v4168
      %v4205 = vsub.f32 %v4071, %v4171
      %v4206 = vsub.f32 %v4076, %v4174
      %v4207 = vmul.f32 %v4175, 1.442695
      %v4208 = vpow.pop %v4207
      %v4209 = vmul.f32 %v4176, 1.442695
      %v4210 = vpow.pop %v4209
      %v4211 = vmul.f32 %v4177, 1.442695
      %v4212 = vpow.pop %v4211
      %v4213 = vmul.f32 %v4178, 1.442695
      %v4214 = vpow.pop %v4213
      %v4215 = vmul.f32 %v4179, 1.442695
      %v4216 = vpow.pop %v4215
      %v4217 = vmul.f32 %v4180, 1.442695
      %v4218 = vpow.pop %v4217
      %v4219 = vmul.f32 %v4181, 1.442695
      %v4220 = vpow.pop %v4219
      %v4221 = vmul.f32 %v4182, 1.442695
      %v4222 = vpow.pop %v4221
      %v4223 = vmul.f32 %v4183, 1.442695
      %v4224 = vpow.pop %v4223
      %v4225 = vmul.f32 %v4184, 1.442695
      %v4226 = vpow.pop %v4225
      %v4227 = vmul.f32 %v4185, 1.442695
      %v4228 = vpow.pop %v4227
      %v4229 = vmul.f32 %v4186, 1.442695
      %v4230 = vpow.pop %v4229
      %v4231 = vmul.f32 %v4187, 1.442695
      %v4232 = vpow.pop %v4231
      %v4233 = vmul.f32 %v4188, 1.442695
      %v4234 = vpow.pop %v4233
      %v4235 = vmul.f32 %v4189, 1.442695
      %v4236 = vpow.pop %v4235
      %v4237 = vmul.f32 %v4190, 1.442695
      %v4238 = vpow.pop %v4237
      %v4239 = vmul.f32 %v4191, 1.442695
      %v4240 = vpow.pop %v4239
      %v4241 = vmul.f32 %v4192, 1.442695
      %v4242 = vpow.pop %v4241
      %v4243 = vmul.f32 %v4193, 1.442695
      %v4244 = vpow.pop %v4243
      %v4245 = vmul.f32 %v4194, 1.442695
      %v4246 = vpow.pop %v4245
      %v4247 = vmul.f32 %v4195, 1.442695
      %v4248 = vpow.pop %v4247
      %v4249 = vmul.f32 %v4196, 1.442695
      %v4250 = vpow.pop %v4249
      %v4251 = vmul.f32 %v4197, 1.442695
      %v4252 = vpow.pop %v4251
      %v4253 = vmul.f32 %v4198, 1.442695
      %v4254 = vpow.pop %v4253
      %v4255 = vmul.f32 %v4199, 1.442695
      %v4256 = vpow.pop %v4255
      %v4257 = vmul.f32 %v4200, 1.442695
      %v4258 = vpow.pop %v4257
      %v4259 = vmul.f32 %v4201, 1.442695
      %v4260 = vpow.pop %v4259
      %v4261 = vmul.f32 %v4202, 1.442695
      %v4262 = vpow.pop %v4261
      %v4263 = vmul.f32 %v4203, 1.442695
      %v4264 = vpow.pop %v4263
      %v4265 = vmul.f32 %v4204, 1.442695
      %v4266 = vpow.pop %v4265
      %v4267 = vmul.f32 %v4205, 1.442695
      %v4268 = vpow.pop %v4267
      %v4269 = vmul.f32 %v4206, 1.442695
      %v4270 = vpow.pop %v4269
      %v4271 = vsel %vm1850, %v4208, 0.0
      %4272 = vadd.xlane.f32.xlu0 %v4271
      %v4273 = vpop.xlane.xlu0 %4272
      %v4274 = vsel %vm1850, %v4210, 0.0
      %4275 = vadd.xlane.f32.xlu0 %v4274
      %v4276 = vpop.xlane.xlu0 %4275
      %v4277 = vsel %vm1850, %v4212, 0.0
      %4278 = vadd.xlane.f32.xlu0 %v4277
      %v4279 = vpop.xlane.xlu0 %4278
      %v4280 = vsel %vm1850, %v4214, 0.0
      %4281 = vadd.xlane.f32.xlu0 %v4280
      %v4282 = vpop.xlane.xlu0 %4281
      %v4283 = vsel %vm1850, %v4216, 0.0
      %4284 = vadd.xlane.f32.xlu0 %v4283
      %v4285 = vpop.xlane.xlu0 %4284
      %v4286 = vsel %vm1850, %v4218, 0.0
      %4287 = vadd.xlane.f32.xlu0 %v4286
      %v4288 = vpop.xlane.xlu0 %4287
      %v4289 = vsel %vm1850, %v4220, 0.0
      %4290 = vadd.xlane.f32.xlu0 %v4289
      %v4291 = vpop.xlane.xlu0 %4290
      %v4292 = vsel %vm1850, %v4222, 0.0
      %4293 = vadd.xlane.f32.xlu0 %v4292
      %v4294 = vpop.xlane.xlu0 %4293
      %v4295 = vsel %vm1850, %v4224, 0.0
      %4296 = vadd.xlane.f32.xlu0 %v4295
      %v4297 = vpop.xlane.xlu0 %4296
      %v4298 = vsel %vm1850, %v4226, 0.0
      %4299 = vadd.xlane.f32.xlu0 %v4298
      %v4300 = vpop.xlane.xlu0 %4299
      %v4301 = vsel %vm1850, %v4228, 0.0
      %4302 = vadd.xlane.f32.xlu0 %v4301
      %v4303 = vpop.xlane.xlu0 %4302
      %v4304 = vsel %vm1850, %v4230, 0.0
      %4305 = vadd.xlane.f32.xlu0 %v4304
      %v4306 = vpop.xlane.xlu0 %4305
      %v4307 = vsel %vm1850, %v4232, 0.0
      %4308 = vadd.xlane.f32.xlu0 %v4307
      %v4309 = vpop.xlane.xlu0 %4308
      %v4310 = vsel %vm1850, %v4234, 0.0
      %4311 = vadd.xlane.f32.xlu0 %v4310
      %v4312 = vpop.xlane.xlu0 %4311
      %v4313 = vsel %vm1850, %v4236, 0.0
      %4314 = vadd.xlane.f32.xlu0 %v4313
      %v4315 = vpop.xlane.xlu0 %4314
      %v4316 = vsel %vm1850, %v4238, 0.0
      %4317 = vadd.xlane.f32.xlu0 %v4316
      %v4318 = vpop.xlane.xlu0 %4317
      %v4319 = vsel %vm1850, %v4240, 0.0
      %4320 = vadd.xlane.f32.xlu0 %v4319
      %v4321 = vpop.xlane.xlu0 %4320
      %v4322 = vsel %vm1850, %v4242, 0.0
      %4323 = vadd.xlane.f32.xlu0 %v4322
      %v4324 = vpop.xlane.xlu0 %4323
      %v4325 = vsel %vm1850, %v4244, 0.0
      %4326 = vadd.xlane.f32.xlu0 %v4325
      %v4327 = vpop.xlane.xlu0 %4326
      %v4328 = vsel %vm1850, %v4246, 0.0
      %4329 = vadd.xlane.f32.xlu0 %v4328
      %v4330 = vpop.xlane.xlu0 %4329
      %v4331 = vsel %vm1850, %v4248, 0.0
      %4332 = vadd.xlane.f32.xlu0 %v4331
      %v4333 = vpop.xlane.xlu0 %4332
      %v4334 = vsel %vm1850, %v4250, 0.0
      %4335 = vadd.xlane.f32.xlu0 %v4334
      %v4336 = vpop.xlane.xlu0 %4335
      %v4337 = vsel %vm1850, %v4252, 0.0
      %4338 = vadd.xlane.f32.xlu0 %v4337
      %v4339 = vpop.xlane.xlu0 %4338
      %v4340 = vsel %vm1850, %v4254, 0.0
      %4341 = vadd.xlane.f32.xlu0 %v4340
      %v4342 = vpop.xlane.xlu0 %4341
      %v4343 = vsel %vm1850, %v4256, 0.0
      %4344 = vadd.xlane.f32.xlu0 %v4343
      %v4345 = vpop.xlane.xlu0 %4344
      %v4346 = vsel %vm1850, %v4258, 0.0
      %4347 = vadd.xlane.f32.xlu0 %v4346
      %v4348 = vpop.xlane.xlu0 %4347
      %v4349 = vsel %vm1850, %v4260, 0.0
      %4350 = vadd.xlane.f32.xlu0 %v4349
      %v4351 = vpop.xlane.xlu0 %4350
      %v4352 = vsel %vm1850, %v4262, 0.0
      %4353 = vadd.xlane.f32.xlu0 %v4352
      %v4354 = vpop.xlane.xlu0 %4353
      %v4355 = vsel %vm1850, %v4264, 0.0
      %4356 = vadd.xlane.f32.xlu0 %v4355
      %v4357 = vpop.xlane.xlu0 %4356
      %v4358 = vsel %vm1850, %v4266, 0.0
      %4359 = vadd.xlane.f32.xlu0 %v4358
      %v4360 = vpop.xlane.xlu0 %4359
      %v4361 = vsel %vm1850, %v4268, 0.0
      %4362 = vadd.xlane.f32.xlu0 %v4361
      %v4363 = vpop.xlane.xlu0 %4362
      %v4364 = vsel %vm1850, %v4270, 0.0
      %4365 = vadd.xlane.f32.xlu0 %v4364
      %v4366 = vpop.xlane.xlu0 %4365
      %v4367 = vrcp.pop %v4273
      %v4368 = vrcp.pop %v4276
      %v4369 = vrcp.pop %v4279
      %v4370 = vrcp.pop %v4282
      %v4371 = vrcp.pop %v4285
      %v4372 = vrcp.pop %v4288
      %v4373 = vrcp.pop %v4291
      %v4374 = vrcp.pop %v4294
      %v4375 = vrcp.pop %v4297
      %v4376 = vrcp.pop %v4300
      %v4377 = vrcp.pop %v4303
      %v4378 = vrcp.pop %v4306
      %v4379 = vrcp.pop %v4309
      %v4380 = vrcp.pop %v4312
      %v4381 = vrcp.pop %v4315
      %v4382 = vrcp.pop %v4318
      %v4383 = vrcp.pop %v4321
      %v4384 = vrcp.pop %v4324
      %v4385 = vrcp.pop %v4327
      %v4386 = vrcp.pop %v4330
      %v4387 = vrcp.pop %v4333
      %v4388 = vrcp.pop %v4336
      %v4389 = vrcp.pop %v4339
      %v4390 = vrcp.pop %v4342
      %v4391 = vrcp.pop %v4345
      %v4392 = vrcp.pop %v4348
      %v4393 = vrcp.pop %v4351
      %v4394 = vrcp.pop %v4354
      %v4395 = vrcp.pop %v4357
      %v4396 = vrcp.pop %v4360
      %v4397 = vrcp.pop %v4363
      %v4398 = vrcp.pop %v4366
      %v4399 = vmul.f32 %v4208, %v4367
      %v4400 = vmul.f32 %v4210, %v4368
      %v4401 = vmul.f32 %v4212, %v4369
      %v4402 = vmul.f32 %v4214, %v4370
      %v4403 = vmul.f32 %v4216, %v4371
      %v4404 = vmul.f32 %v4218, %v4372
      %v4405 = vmul.f32 %v4220, %v4373
      %v4406 = vmul.f32 %v4222, %v4374
      %v4407 = vmul.f32 %v4224, %v4375
      %v4408 = vmul.f32 %v4226, %v4376
      %v4409 = vmul.f32 %v4228, %v4377
      %v4410 = vmul.f32 %v4230, %v4378
      %v4411 = vmul.f32 %v4232, %v4379
      %v4412 = vmul.f32 %v4234, %v4380
      %v4413 = vmul.f32 %v4236, %v4381
      %v4414 = vmul.f32 %v4238, %v4382
      %v4415 = vmul.f32 %v4240, %v4383
      %v4416 = vmul.f32 %v4242, %v4384
      %v4417 = vmul.f32 %v4244, %v4385
      %v4418 = vmul.f32 %v4246, %v4386
      %v4419 = vmul.f32 %v4248, %v4387
      %v4420 = vmul.f32 %v4250, %v4388
      %v4421 = vmul.f32 %v4252, %v4389
      %v4422 = vmul.f32 %v4254, %v4390
      %v4423 = vmul.f32 %v4256, %v4391
      %v4424 = vmul.f32 %v4258, %v4392
      %v4425 = vmul.f32 %v4260, %v4393
      %v4426 = vmul.f32 %v4262, %v4394
      %v4427 = vmul.f32 %v4264, %v4395
      %v4428 = vmul.f32 %v4266, %v4396
      %v4429 = vmul.f32 %v4268, %v4397
      %v4430 = vmul.f32 %v4270, %v4398
      %v4432 = vsel %vm1850, %v4399, 0
      %v4435 = vsel %vm1850, %v4400, 0
      %v4438 = vsel %vm1850, %v4401, 0
      %v4441 = vsel %vm1850, %v4402, 0
      %v4444 = vsel %vm1850, %v4403, 0
      %v4447 = vsel %vm1850, %v4404, 0
      %v4450 = vsel %vm1850, %v4405, 0
      %v4453 = vsel %vm1850, %v4406, 0
      %4455 = vmatprep.subr.mxu0 0.0
      %4456 = vmatpush1.msra.mxu0 0.0
      %4457 = vmatprep.subr.mxu0 0.0
      %4458 = vmatpush1.msra.mxu0 0.0
      %4459 = vmatprep.subr.mxu0 0.0
      %4460 = vmatpush1.msra.mxu0 0.0
      %4461 = vmatprep.subr.mxu0 0.0
      %4462 = vmatpush1.msra.mxu0 0.0
      %4463 = vmatprep.subr.mxu0 0.0
      %4464 = vmatpush1.msra.mxu0 0.0
      %4465 = vmatprep.subr.mxu0 0.0
      %4466 = vmatpush1.msra.mxu0 0.0
      %4467 = vmatprep.subr.mxu0 0.0
      %4468 = vmatpush1.msra.mxu0 0.0
      %4469 = vmatprep.subr.mxu0 0.0
      %4470 = vmatpush1.msra.mxu0 0.0
      %4471 = vmatprep.subr.mxu0 0.0
      %4472 = vmatpush1.msra.mxu0 %v3311
      %4473 = vmatprep.subr.mxu0 0.0
      %4474 = vmatpush1.msra.mxu0 %v3306
      %4475 = vmatprep.subr.mxu0 0.0
      %4476 = vmatpush1.msra.mxu0 %v3301
      %4477 = vmatprep.subr.mxu0 0.0
      %4478 = vmatpush1.msra.mxu0 %v3296
      %4479 = vmatprep.subr.mxu0 0.0
      %4480 = vmatpush1.msra.mxu0 %v3291
      %4481 = vmatprep.subr.mxu0 0.0
      %4482 = vmatpush1.msra.mxu0 %v3286
      %4483 = vmatprep.subr.mxu0 0.0
      %4484 = vmatpush1.msra.mxu0 %v3281
      %4485 = vmatprep.subr.mxu0 0.0
      %4486 = vmatpush1.msra.mxu0 %v3276
      %4487 = vmatprep.subr.mxu0 0.0
      %4488 = vmatpush2.msra.mxu0 0.0
      %4489 = vmatprep.subr.mxu0 0.0
      %4490 = vmatpush2.msra.mxu0 0.0
      %4491 = vmatprep.subr.mxu0 0.0
      %4492 = vmatpush2.msra.mxu0 0.0
      %4493 = vmatprep.subr.mxu0 0.0
      %4494 = vmatpush2.msra.mxu0 0.0
      %4495 = vmatprep.subr.mxu0 0.0
      %4496 = vmatpush2.msra.mxu0 0.0
      %4497 = vmatprep.subr.mxu0 0.0
      %4498 = vmatpush2.msra.mxu0 0.0
      %4499 = vmatprep.subr.mxu0 0.0
      %4500 = vmatpush2.msra.mxu0 0.0
      %4501 = vmatprep.subr.mxu0 0.0
      %4502 = vmatpush2.msra.mxu0 0.0
      %4503 = vmatprep.subr.mxu0 0.0
      %4504 = vmatpush2.msra.mxu0 0.0
      %4505 = vmatprep.subr.mxu0 0.0
      %4506 = vmatpush2.msra.mxu0 0.0
      %4507 = vmatprep.subr.mxu0 0.0
      %4508 = vmatpush2.msra.mxu0 0.0
      %4509 = vmatprep.subr.mxu0 0.0
      %4510 = vmatpush2.msra.mxu0 0.0
      %4511 = vmatprep.subr.mxu0 0.0
      %4512 = vmatpush2.msra.mxu0 0.0
      %4513 = vmatprep.subr.mxu0 0.0
      %4514 = vmatpush2.msra.mxu0 0.0
      %4515 = vmatprep.subr.mxu0 0.0
      %4516 = vmatpush2.msra.mxu0 0.0
      %4517 = vmatprep.subr.mxu0 0.0
      %4518 = vmatpush2.msra.mxu0 0.0
      %4519 = vmatprep.mubr.f32.mxu0 0.0
      %4520 = vmatmul.mubr.f32.gmra.mxu0 %v4432
      %v4521 = vpop.f32.mrf.mxu0
      %v4522 = vadd.f32 0.0, %v4521
      %v4523 = vpop.f32.mrf.mxu0
      %4524 = vmatprep.mubr.f32.mxu0 0.0
      %4525 = vmatmul.mubr.f32.gmra.mxu0 %v4435
      %v4526 = vpop.f32.mrf.mxu0
      %v4527 = vadd.f32 0.0, %v4526
      %v4528 = vpop.f32.mrf.mxu0
      %4529 = vmatprep.mubr.f32.mxu0 0.0
      %4530 = vmatmul.mubr.f32.gmra.mxu0 %v4438
      %v4531 = vpop.f32.mrf.mxu0
      %v4532 = vadd.f32 0.0, %v4531
      %v4533 = vpop.f32.mrf.mxu0
      %4534 = vmatprep.mubr.f32.mxu0 0.0
      %4535 = vmatmul.mubr.f32.gmra.mxu0 %v4441
      %v4536 = vpop.f32.mrf.mxu0
      %v4537 = vadd.f32 0.0, %v4536
      %v4538 = vpop.f32.mrf.mxu0
      %4539 = vmatprep.mubr.f32.mxu0 0.0
      %4540 = vmatmul.mubr.f32.gmra.mxu0 %v4444
      %v4541 = vpop.f32.mrf.mxu0
      %v4542 = vadd.f32 0.0, %v4541
      %v4543 = vpop.f32.mrf.mxu0
      %4544 = vmatprep.mubr.f32.mxu0 0.0
      %4545 = vmatmul.mubr.f32.gmra.mxu0 %v4447
      %v4546 = vpop.f32.mrf.mxu0
      %v4547 = vadd.f32 0.0, %v4546
      %v4548 = vpop.f32.mrf.mxu0
      %4549 = vmatprep.mubr.f32.mxu0 0.0
      %4550 = vmatmul.mubr.f32.gmra.mxu0 %v4450
      %v4551 = vpop.f32.mrf.mxu0
      %v4552 = vadd.f32 0.0, %v4551
      %v4553 = vpop.f32.mrf.mxu0
      %4554 = vmatprep.mubr.f32.mxu0 0.0
      %4555 = vmatmul.mubr.f32.gmra.mxu0 %v4453
      %v4556 = vpop.f32.mrf.mxu0
      %v4557 = vadd.f32 0.0, %v4556
      %v4558 = vpop.f32.mrf.mxu0
      %4559 = vdwg.mxu0
      %v4561 = vsel %vm1850, %v4407, 0
      %v4564 = vsel %vm1850, %v4408, 0
      %v4567 = vsel %vm1850, %v4409, 0
      %v4570 = vsel %vm1850, %v4410, 0
      %v4573 = vsel %vm1850, %v4411, 0
      %v4576 = vsel %vm1850, %v4412, 0
      %v4579 = vsel %vm1850, %v4413, 0
      %v4582 = vsel %vm1850, %v4414, 0
      %4584 = vmatprep.subr.mxu0 0.0
      %4585 = vmatpush1.msra.mxu0 0.0
      %4586 = vmatprep.subr.mxu0 0.0
      %4587 = vmatpush1.msra.mxu0 0.0
      %4588 = vmatprep.subr.mxu0 0.0
      %4589 = vmatpush1.msra.mxu0 0.0
      %4590 = vmatprep.subr.mxu0 0.0
      %4591 = vmatpush1.msra.mxu0 0.0
      %4592 = vmatprep.subr.mxu0 0.0
      %4593 = vmatpush1.msra.mxu0 0.0
      %4594 = vmatprep.subr.mxu0 0.0
      %4595 = vmatpush1.msra.mxu0 0.0
      %4596 = vmatprep.subr.mxu0 0.0
      %4597 = vmatpush1.msra.mxu0 0.0
      %4598 = vmatprep.subr.mxu0 0.0
      %4599 = vmatpush1.msra.mxu0 0.0
      %4600 = vmatprep.subr.mxu0 0.0
      %4601 = vmatpush1.msra.mxu0 %v3351
      %4602 = vmatprep.subr.mxu0 0.0
      %4603 = vmatpush1.msra.mxu0 %v3346
      %4604 = vmatprep.subr.mxu0 0.0
      %4605 = vmatpush1.msra.mxu0 %v3341
      %4606 = vmatprep.subr.mxu0 0.0
      %4607 = vmatpush1.msra.mxu0 %v3336
      %4608 = vmatprep.subr.mxu0 0.0
      %4609 = vmatpush1.msra.mxu0 %v3331
      %4610 = vmatprep.subr.mxu0 0.0
      %4611 = vmatpush1.msra.mxu0 %v3326
      %4612 = vmatprep.subr.mxu0 0.0
      %4613 = vmatpush1.msra.mxu0 %v3321
      %4614 = vmatprep.subr.mxu0 0.0
      %4615 = vmatpush1.msra.mxu0 %v3316
      %4616 = vmatprep.subr.mxu0 0.0
      %4617 = vmatpush2.msra.mxu0 0.0
      %4618 = vmatprep.subr.mxu0 0.0
      %4619 = vmatpush2.msra.mxu0 0.0
      %4620 = vmatprep.subr.mxu0 0.0
      %4621 = vmatpush2.msra.mxu0 0.0
      %4622 = vmatprep.subr.mxu0 0.0
      %4623 = vmatpush2.msra.mxu0 0.0
      %4624 = vmatprep.subr.mxu0 0.0
      %4625 = vmatpush2.msra.mxu0 0.0
      %4626 = vmatprep.subr.mxu0 0.0
      %4627 = vmatpush2.msra.mxu0 0.0
      %4628 = vmatprep.subr.mxu0 0.0
      %4629 = vmatpush2.msra.mxu0 0.0
      %4630 = vmatprep.subr.mxu0 0.0
      %4631 = vmatpush2.msra.mxu0 0.0
      %4632 = vmatprep.subr.mxu0 0.0
      %4633 = vmatpush2.msra.mxu0 0.0
      %4634 = vmatprep.subr.mxu0 0.0
      %4635 = vmatpush2.msra.mxu0 0.0
      %4636 = vmatprep.subr.mxu0 0.0
      %4637 = vmatpush2.msra.mxu0 0.0
      %4638 = vmatprep.subr.mxu0 0.0
      %4639 = vmatpush2.msra.mxu0 0.0
      %4640 = vmatprep.subr.mxu0 0.0
      %4641 = vmatpush2.msra.mxu0 0.0
      %4642 = vmatprep.subr.mxu0 0.0
      %4643 = vmatpush2.msra.mxu0 0.0
      %4644 = vmatprep.subr.mxu0 0.0
      %4645 = vmatpush2.msra.mxu0 0.0
      %4646 = vmatprep.subr.mxu0 0.0
      %4647 = vmatpush2.msra.mxu0 0.0
      %4648 = vmatprep.mubr.f32.mxu0 0.0
      %4649 = vmatmul.mubr.f32.gmra.mxu0 %v4561
      %v4650 = vpop.f32.mrf.mxu0
      %v4651 = vadd.f32 0.0, %v4650
      %v4652 = vpop.f32.mrf.mxu0
      %4653 = vmatprep.mubr.f32.mxu0 0.0
      %4654 = vmatmul.mubr.f32.gmra.mxu0 %v4564
      %v4655 = vpop.f32.mrf.mxu0
      %v4656 = vadd.f32 0.0, %v4655
      %v4657 = vpop.f32.mrf.mxu0
      %4658 = vmatprep.mubr.f32.mxu0 0.0
      %4659 = vmatmul.mubr.f32.gmra.mxu0 %v4567
      %v4660 = vpop.f32.mrf.mxu0
      %v4661 = vadd.f32 0.0, %v4660
      %v4662 = vpop.f32.mrf.mxu0
      %4663 = vmatprep.mubr.f32.mxu0 0.0
      %4664 = vmatmul.mubr.f32.gmra.mxu0 %v4570
      %v4665 = vpop.f32.mrf.mxu0
      %v4666 = vadd.f32 0.0, %v4665
      %v4667 = vpop.f32.mrf.mxu0
      %4668 = vmatprep.mubr.f32.mxu0 0.0
      %4669 = vmatmul.mubr.f32.gmra.mxu0 %v4573
      %v4670 = vpop.f32.mrf.mxu0
      %v4671 = vadd.f32 0.0, %v4670
      %v4672 = vpop.f32.mrf.mxu0
      %4673 = vmatprep.mubr.f32.mxu0 0.0
      %4674 = vmatmul.mubr.f32.gmra.mxu0 %v4576
      %v4675 = vpop.f32.mrf.mxu0
      %v4676 = vadd.f32 0.0, %v4675
      %v4677 = vpop.f32.mrf.mxu0
      %4678 = vmatprep.mubr.f32.mxu0 0.0
      %4679 = vmatmul.mubr.f32.gmra.mxu0 %v4579
      %v4680 = vpop.f32.mrf.mxu0
      %v4681 = vadd.f32 0.0, %v4680
      %v4682 = vpop.f32.mrf.mxu0
      %4683 = vmatprep.mubr.f32.mxu0 0.0
      %4684 = vmatmul.mubr.f32.gmra.mxu0 %v4582
      %v4685 = vpop.f32.mrf.mxu0
      %v4686 = vadd.f32 0.0, %v4685
      %v4687 = vpop.f32.mrf.mxu0
      %4688 = vdwg.mxu0
      %v4690 = vsel %vm1850, %v4415, 0
      %v4693 = vsel %vm1850, %v4416, 0
      %v4696 = vsel %vm1850, %v4417, 0
      %v4699 = vsel %vm1850, %v4418, 0
      %v4702 = vsel %vm1850, %v4419, 0
      %v4705 = vsel %vm1850, %v4420, 0
      %v4708 = vsel %vm1850, %v4421, 0
      %v4711 = vsel %vm1850, %v4422, 0
      %4713 = vmatprep.subr.mxu0 0.0
      %4714 = vmatpush1.msra.mxu0 0.0
      %4715 = vmatprep.subr.mxu0 0.0
      %4716 = vmatpush1.msra.mxu0 0.0
      %4717 = vmatprep.subr.mxu0 0.0
      %4718 = vmatpush1.msra.mxu0 0.0
      %4719 = vmatprep.subr.mxu0 0.0
      %4720 = vmatpush1.msra.mxu0 0.0
      %4721 = vmatprep.subr.mxu0 0.0
      %4722 = vmatpush1.msra.mxu0 0.0
      %4723 = vmatprep.subr.mxu0 0.0
      %4724 = vmatpush1.msra.mxu0 0.0
      %4725 = vmatprep.subr.mxu0 0.0
      %4726 = vmatpush1.msra.mxu0 0.0
      %4727 = vmatprep.subr.mxu0 0.0
      %4728 = vmatpush1.msra.mxu0 0.0
      %4729 = vmatprep.subr.mxu0 0.0
      %4730 = vmatpush1.msra.mxu0 %v3391
      %4731 = vmatprep.subr.mxu0 0.0
      %4732 = vmatpush1.msra.mxu0 %v3386
      %4733 = vmatprep.subr.mxu0 0.0
      %4734 = vmatpush1.msra.mxu0 %v3381
      %4735 = vmatprep.subr.mxu0 0.0
      %4736 = vmatpush1.msra.mxu0 %v3376
      %4737 = vmatprep.subr.mxu0 0.0
      %4738 = vmatpush1.msra.mxu0 %v3371
      %4739 = vmatprep.subr.mxu0 0.0
      %4740 = vmatpush1.msra.mxu0 %v3366
      %4741 = vmatprep.subr.mxu0 0.0
      %4742 = vmatpush1.msra.mxu0 %v3361
      %4743 = vmatprep.subr.mxu0 0.0
      %4744 = vmatpush1.msra.mxu0 %v3356
      %4745 = vmatprep.subr.mxu0 0.0
      %4746 = vmatpush2.msra.mxu0 0.0
      %4747 = vmatprep.subr.mxu0 0.0
      %4748 = vmatpush2.msra.mxu0 0.0
      %4749 = vmatprep.subr.mxu0 0.0
      %4750 = vmatpush2.msra.mxu0 0.0
      %4751 = vmatprep.subr.mxu0 0.0
      %4752 = vmatpush2.msra.mxu0 0.0
      %4753 = vmatprep.subr.mxu0 0.0
      %4754 = vmatpush2.msra.mxu0 0.0
      %4755 = vmatprep.subr.mxu0 0.0
      %4756 = vmatpush2.msra.mxu0 0.0
      %4757 = vmatprep.subr.mxu0 0.0
      %4758 = vmatpush2.msra.mxu0 0.0
      %4759 = vmatprep.subr.mxu0 0.0
      %4760 = vmatpush2.msra.mxu0 0.0
      %4761 = vmatprep.subr.mxu0 0.0
      %4762 = vmatpush2.msra.mxu0 0.0
      %4763 = vmatprep.subr.mxu0 0.0
      %4764 = vmatpush2.msra.mxu0 0.0
      %4765 = vmatprep.subr.mxu0 0.0
      %4766 = vmatpush2.msra.mxu0 0.0
      %4767 = vmatprep.subr.mxu0 0.0
      %4768 = vmatpush2.msra.mxu0 0.0
      %4769 = vmatprep.subr.mxu0 0.0
      %4770 = vmatpush2.msra.mxu0 0.0
      %4771 = vmatprep.subr.mxu0 0.0
      %4772 = vmatpush2.msra.mxu0 0.0
      %4773 = vmatprep.subr.mxu0 0.0
      %4774 = vmatpush2.msra.mxu0 0.0
      %4775 = vmatprep.subr.mxu0 0.0
      %4776 = vmatpush2.msra.mxu0 0.0
      %4777 = vmatprep.mubr.f32.mxu0 0.0
      %4778 = vmatmul.mubr.f32.gmra.mxu0 %v4690
      %v4779 = vpop.f32.mrf.mxu0
      %v4780 = vadd.f32 0.0, %v4779
      %v4781 = vpop.f32.mrf.mxu0
      %4782 = vmatprep.mubr.f32.mxu0 0.0
      %4783 = vmatmul.mubr.f32.gmra.mxu0 %v4693
      %v4784 = vpop.f32.mrf.mxu0
      %v4785 = vadd.f32 0.0, %v4784
      %v4786 = vpop.f32.mrf.mxu0
      %4787 = vmatprep.mubr.f32.mxu0 0.0
      %4788 = vmatmul.mubr.f32.gmra.mxu0 %v4696
      %v4789 = vpop.f32.mrf.mxu0
      %v4790 = vadd.f32 0.0, %v4789
      %v4791 = vpop.f32.mrf.mxu0
      %4792 = vmatprep.mubr.f32.mxu0 0.0
      %4793 = vmatmul.mubr.f32.gmra.mxu0 %v4699
      %v4794 = vpop.f32.mrf.mxu0
      %v4795 = vadd.f32 0.0, %v4794
      %v4796 = vpop.f32.mrf.mxu0
      %4797 = vmatprep.mubr.f32.mxu0 0.0
      %4798 = vmatmul.mubr.f32.gmra.mxu0 %v4702
      %v4799 = vpop.f32.mrf.mxu0
      %v4800 = vadd.f32 0.0, %v4799
      %v4801 = vpop.f32.mrf.mxu0
      %4802 = vmatprep.mubr.f32.mxu0 0.0
      %4803 = vmatmul.mubr.f32.gmra.mxu0 %v4705
      %v4804 = vpop.f32.mrf.mxu0
      %v4805 = vadd.f32 0.0, %v4804
      %v4806 = vpop.f32.mrf.mxu0
      %4807 = vmatprep.mubr.f32.mxu0 0.0
      %4808 = vmatmul.mubr.f32.gmra.mxu0 %v4708
      %v4809 = vpop.f32.mrf.mxu0
      %v4810 = vadd.f32 0.0, %v4809
      %v4811 = vpop.f32.mrf.mxu0
      %4812 = vmatprep.mubr.f32.mxu0 0.0
      %4813 = vmatmul.mubr.f32.gmra.mxu0 %v4711
      %v4814 = vpop.f32.mrf.mxu0
      %v4815 = vadd.f32 0.0, %v4814
      %v4816 = vpop.f32.mrf.mxu0
      %4817 = vdwg.mxu0
      %v4819 = vsel %vm1850, %v4423, 0
      %v4822 = vsel %vm1850, %v4424, 0
      %v4825 = vsel %vm1850, %v4425, 0
      %v4828 = vsel %vm1850, %v4426, 0
      %v4831 = vsel %vm1850, %v4427, 0
      %v4834 = vsel %vm1850, %v4428, 0
      %v4837 = vsel %vm1850, %v4429, 0
      %v4840 = vsel %vm1850, %v4430, 0
      %4842 = vmatprep.subr.mxu0 0.0
      %4843 = vmatpush1.msra.mxu0 0.0
      %4844 = vmatprep.subr.mxu0 0.0
      %4845 = vmatpush1.msra.mxu0 0.0
      %4846 = vmatprep.subr.mxu0 0.0
      %4847 = vmatpush1.msra.mxu0 0.0
      %4848 = vmatprep.subr.mxu0 0.0
      %4849 = vmatpush1.msra.mxu0 0.0
      %4850 = vmatprep.subr.mxu0 0.0
      %4851 = vmatpush1.msra.mxu0 0.0
      %4852 = vmatprep.subr.mxu0 0.0
      %4853 = vmatpush1.msra.mxu0 0.0
      %4854 = vmatprep.subr.mxu0 0.0
      %4855 = vmatpush1.msra.mxu0 0.0
      %4856 = vmatprep.subr.mxu0 0.0
      %4857 = vmatpush1.msra.mxu0 0.0
      %4858 = vmatprep.subr.mxu0 0.0
      %4859 = vmatpush1.msra.mxu0 %v3431
      %4860 = vmatprep.subr.mxu0 0.0
      %4861 = vmatpush1.msra.mxu0 %v3426
      %4862 = vmatprep.subr.mxu0 0.0
      %4863 = vmatpush1.msra.mxu0 %v3421
      %4864 = vmatprep.subr.mxu0 0.0
      %4865 = vmatpush1.msra.mxu0 %v3416
      %4866 = vmatprep.subr.mxu0 0.0
      %4867 = vmatpush1.msra.mxu0 %v3411
      %4868 = vmatprep.subr.mxu0 0.0
      %4869 = vmatpush1.msra.mxu0 %v3406
      %4870 = vmatprep.subr.mxu0 0.0
      %4871 = vmatpush1.msra.mxu0 %v3401
      %4872 = vmatprep.subr.mxu0 0.0
      %4873 = vmatpush1.msra.mxu0 %v3396
      %4874 = vmatprep.subr.mxu0 0.0
      %4875 = vmatpush2.msra.mxu0 0.0
      %4876 = vmatprep.subr.mxu0 0.0
      %4877 = vmatpush2.msra.mxu0 0.0
      %4878 = vmatprep.subr.mxu0 0.0
      %4879 = vmatpush2.msra.mxu0 0.0
      %4880 = vmatprep.subr.mxu0 0.0
      %4881 = vmatpush2.msra.mxu0 0.0
      %4882 = vmatprep.subr.mxu0 0.0
      %4883 = vmatpush2.msra.mxu0 0.0
      %4884 = vmatprep.subr.mxu0 0.0
      %4885 = vmatpush2.msra.mxu0 0.0
      %4886 = vmatprep.subr.mxu0 0.0
      %4887 = vmatpush2.msra.mxu0 0.0
      %4888 = vmatprep.subr.mxu0 0.0
      %4889 = vmatpush2.msra.mxu0 0.0
      %4890 = vmatprep.subr.mxu0 0.0
      %4891 = vmatpush2.msra.mxu0 0.0
      %4892 = vmatprep.subr.mxu0 0.0
      %4893 = vmatpush2.msra.mxu0 0.0
      %4894 = vmatprep.subr.mxu0 0.0
      %4895 = vmatpush2.msra.mxu0 0.0
      %4896 = vmatprep.subr.mxu0 0.0
      %4897 = vmatpush2.msra.mxu0 0.0
      %4898 = vmatprep.subr.mxu0 0.0
      %4899 = vmatpush2.msra.mxu0 0.0
      %4900 = vmatprep.subr.mxu0 0.0
      %4901 = vmatpush2.msra.mxu0 0.0
      %4902 = vmatprep.subr.mxu0 0.0
      %4903 = vmatpush2.msra.mxu0 0.0
      %4904 = vmatprep.subr.mxu0 0.0
      %4905 = vmatpush2.msra.mxu0 0.0
      %4906 = vmatprep.mubr.f32.mxu0 0.0
      %4907 = vmatmul.mubr.f32.gmra.mxu0 %v4819
      %v4908 = vpop.f32.mrf.mxu0
      %v4909 = vadd.f32 0.0, %v4908
      %v4910 = vpop.f32.mrf.mxu0
      %4911 = vmatprep.mubr.f32.mxu0 0.0
      %4912 = vmatmul.mubr.f32.gmra.mxu0 %v4822
      %v4913 = vpop.f32.mrf.mxu0
      %v4914 = vadd.f32 0.0, %v4913
      %v4915 = vpop.f32.mrf.mxu0
      %4916 = vmatprep.mubr.f32.mxu0 0.0
      %4917 = vmatmul.mubr.f32.gmra.mxu0 %v4825
      %v4918 = vpop.f32.mrf.mxu0
      %v4919 = vadd.f32 0.0, %v4918
      %v4920 = vpop.f32.mrf.mxu0
      %4921 = vmatprep.mubr.f32.mxu0 0.0
      %4922 = vmatmul.mubr.f32.gmra.mxu0 %v4828
      %v4923 = vpop.f32.mrf.mxu0
      %v4924 = vadd.f32 0.0, %v4923
      %v4925 = vpop.f32.mrf.mxu0
      %4926 = vmatprep.mubr.f32.mxu0 0.0
      %4927 = vmatmul.mubr.f32.gmra.mxu0 %v4831
      %v4928 = vpop.f32.mrf.mxu0
      %v4929 = vadd.f32 0.0, %v4928
      %v4930 = vpop.f32.mrf.mxu0
      %4931 = vmatprep.mubr.f32.mxu0 0.0
      %4932 = vmatmul.mubr.f32.gmra.mxu0 %v4834
      %v4933 = vpop.f32.mrf.mxu0
      %v4934 = vadd.f32 0.0, %v4933
      %v4935 = vpop.f32.mrf.mxu0
      %4936 = vmatprep.mubr.f32.mxu0 0.0
      %4937 = vmatmul.mubr.f32.gmra.mxu0 %v4837
      %v4938 = vpop.f32.mrf.mxu0
      %v4939 = vadd.f32 0.0, %v4938
      %v4940 = vpop.f32.mrf.mxu0
      %4941 = vmatprep.mubr.f32.mxu0 0.0
      %4942 = vmatmul.mubr.f32.gmra.mxu0 %v4840
      %v4943 = vpop.f32.mrf.mxu0
      %v4944 = vadd.f32 0.0, %v4943
      %v4945 = vpop.f32.mrf.mxu0
      %4946 = vdwg.mxu0
      %s4947 = scalar_lea.vmem %s8, 8
      %v4948 = vld [vmem:[%s4947] sm:$0xff]
      %v4950 = vsel %vm1237, %v4522, 0
      %v4953 = vsel %vm1237, %v4527, 0
      %v4956 = vsel %vm1237, %v4532, 0
      %v4959 = vsel %vm1237, %v4537, 0
      %v4962 = vsel %vm1237, %v4542, 0
      %v4965 = vsel %vm1237, %v4547, 0
      %v4968 = vsel %vm1237, %v4552, 0
      %v4971 = vsel %vm1237, %v4557, 0
      %v4974 = vsel %vm1237, %v4651, 0
      %v4977 = vsel %vm1237, %v4656, 0
      %v4980 = vsel %vm1237, %v4661, 0
      %v4983 = vsel %vm1237, %v4666, 0
      %v4986 = vsel %vm1237, %v4671, 0
      %v4989 = vsel %vm1237, %v4676, 0
      %v4992 = vsel %vm1237, %v4681, 0
      %v4995 = vsel %vm1237, %v4686, 0
      %v4998 = vsel %vm1237, %v4780, 0
      %v5001 = vsel %vm1237, %v4785, 0
      %v5004 = vsel %vm1237, %v4790, 0
      %v5007 = vsel %vm1237, %v4795, 0
      %v5010 = vsel %vm1237, %v4800, 0
      %v5013 = vsel %vm1237, %v4805, 0
      %v5016 = vsel %vm1237, %v4810, 0
      %v5019 = vsel %vm1237, %v4815, 0
      %v5022 = vsel %vm1237, %v4909, 0
      %v5025 = vsel %vm1237, %v4914, 0
      %v5028 = vsel %vm1237, %v4919, 0
      %v5031 = vsel %vm1237, %v4924, 0
      %v5034 = vsel %vm1237, %v4929, 0
      %v5037 = vsel %vm1237, %v4934, 0
      %v5040 = vsel %vm1237, %v4939, 0
      %v5043 = vsel %vm1237, %v4944, 0
      %5045 = vmatprep.subr.mxu0 0.0
      %5046 = vmatpush1.msra.mxu0 0.0
      %5047 = vmatprep.subr.mxu0 0.0
      %5048 = vmatpush1.msra.mxu0 0.0
      %5049 = vmatprep.subr.mxu0 0.0
      %5050 = vmatpush1.msra.mxu0 0.0
      %5051 = vmatprep.subr.mxu0 0.0
      %5052 = vmatpush1.msra.mxu0 0.0
      %5053 = vmatprep.subr.mxu0 0.0
      %5054 = vmatpush1.msra.mxu0 0.0
      %5055 = vmatprep.subr.mxu0 0.0
      %5056 = vmatpush1.msra.mxu0 0.0
      %5057 = vmatprep.subr.mxu0 0.0
      %5058 = vmatpush1.msra.mxu0 0.0
      %5059 = vmatprep.subr.mxu0 0.0
      %5060 = vmatpush1.msra.mxu0 0.0
      %5061 = vmatprep.subr.mxu0 0.0
      %5062 = vmatpush1.msra.mxu0 0.0
      %5063 = vmatprep.subr.mxu0 0.0
      %5064 = vmatpush1.msra.mxu0 0.0
      %5065 = vmatprep.subr.mxu0 0.0
      %5066 = vmatpush1.msra.mxu0 0.0
      %5067 = vmatprep.subr.mxu0 0.0
      %5068 = vmatpush1.msra.mxu0 0.0
      %5069 = vmatprep.subr.mxu0 0.0
      %5070 = vmatpush1.msra.mxu0 0.0
      %5071 = vmatprep.subr.mxu0 0.0
      %5072 = vmatpush1.msra.mxu0 0.0
      %5073 = vmatprep.subr.mxu0 0.0
      %5074 = vmatpush1.msra.mxu0 0.0
      %5075 = vmatprep.subr.mxu0 0.0
      %5076 = vmatpush1.msra.mxu0 %v4948
      %5077 = vmatprep.subr.mxu0 0.0
      %5078 = vmatpush2.msra.mxu0 0.0
      %5079 = vmatprep.subr.mxu0 0.0
      %5080 = vmatpush2.msra.mxu0 0.0
      %5081 = vmatprep.subr.mxu0 0.0
      %5082 = vmatpush2.msra.mxu0 0.0
      %5083 = vmatprep.subr.mxu0 0.0
      %5084 = vmatpush2.msra.mxu0 0.0
      %5085 = vmatprep.subr.mxu0 0.0
      %5086 = vmatpush2.msra.mxu0 0.0
      %5087 = vmatprep.subr.mxu0 0.0
      %5088 = vmatpush2.msra.mxu0 0.0
      %5089 = vmatprep.subr.mxu0 0.0
      %5090 = vmatpush2.msra.mxu0 0.0
      %5091 = vmatprep.subr.mxu0 0.0
      %5092 = vmatpush2.msra.mxu0 0.0
      %5093 = vmatprep.subr.mxu0 0.0
      %5094 = vmatpush2.msra.mxu0 0.0
      %5095 = vmatprep.subr.mxu0 0.0
      %5096 = vmatpush2.msra.mxu0 0.0
      %5097 = vmatprep.subr.mxu0 0.0
      %5098 = vmatpush2.msra.mxu0 0.0
      %5099 = vmatprep.subr.mxu0 0.0
      %5100 = vmatpush2.msra.mxu0 0.0
      %5101 = vmatprep.subr.mxu0 0.0
      %5102 = vmatpush2.msra.mxu0 0.0
      %5103 = vmatprep.subr.mxu0 0.0
      %5104 = vmatpush2.msra.mxu0 0.0
      %5105 = vmatprep.subr.mxu0 0.0
      %5106 = vmatpush2.msra.mxu0 0.0
      %5107 = vmatprep.subr.mxu0 0.0
      %5108 = vmatpush2.msra.mxu0 0.0
      %5109 = vmatprep.mubr.f32.mxu0 0.0
      %5110 = vmatmul.mubr.f32.gmra.mxu0 %v4950
      %v5111 = vpop.f32.mrf.mxu0
      %v5112 = vadd.f32 0.0, %v5111
      %v5113 = vpop.f32.mrf.mxu0
      %5114 = vmatprep.mubr.f32.mxu0 0.0
      %5115 = vmatmul.mubr.f32.gmra.mxu0 %v4953
      %v5116 = vpop.f32.mrf.mxu0
      %v5117 = vadd.f32 0.0, %v5116
      %v5118 = vpop.f32.mrf.mxu0
      %5119 = vmatprep.mubr.f32.mxu0 0.0
      %5120 = vmatmul.mubr.f32.gmra.mxu0 %v4956
      %v5121 = vpop.f32.mrf.mxu0
      %v5122 = vadd.f32 0.0, %v5121
      %v5123 = vpop.f32.mrf.mxu0
      %5124 = vmatprep.mubr.f32.mxu0 0.0
      %5125 = vmatmul.mubr.f32.gmra.mxu0 %v4959
      %v5126 = vpop.f32.mrf.mxu0
      %v5127 = vadd.f32 0.0, %v5126
      %v5128 = vpop.f32.mrf.mxu0
      %5129 = vmatprep.mubr.f32.mxu0 0.0
      %5130 = vmatmul.mubr.f32.gmra.mxu0 %v4962
      %v5131 = vpop.f32.mrf.mxu0
      %v5132 = vadd.f32 0.0, %v5131
      %v5133 = vpop.f32.mrf.mxu0
      %5134 = vmatprep.mubr.f32.mxu0 0.0
      %5135 = vmatmul.mubr.f32.gmra.mxu0 %v4965
      %v5136 = vpop.f32.mrf.mxu0
      %v5137 = vadd.f32 0.0, %v5136
      %v5138 = vpop.f32.mrf.mxu0
      %5139 = vmatprep.mubr.f32.mxu0 0.0
      %5140 = vmatmul.mubr.f32.gmra.mxu0 %v4968
      %v5141 = vpop.f32.mrf.mxu0
      %v5142 = vadd.f32 0.0, %v5141
      %v5143 = vpop.f32.mrf.mxu0
      %5144 = vmatprep.mubr.f32.mxu0 0.0
      %5145 = vmatmul.mubr.f32.gmra.mxu0 %v4971
      %v5146 = vpop.f32.mrf.mxu0
      %v5147 = vadd.f32 0.0, %v5146
      %v5148 = vpop.f32.mrf.mxu0
      %5149 = vmatprep.mubr.f32.mxu0 0.0
      %5150 = vmatmul.mubr.f32.gmra.mxu0 %v4974
      %v5151 = vpop.f32.mrf.mxu0
      %v5152 = vadd.f32 0.0, %v5151
      %v5153 = vpop.f32.mrf.mxu0
      %5154 = vmatprep.mubr.f32.mxu0 0.0
      %5155 = vmatmul.mubr.f32.gmra.mxu0 %v4977
      %v5156 = vpop.f32.mrf.mxu0
      %v5157 = vadd.f32 0.0, %v5156
      %v5158 = vpop.f32.mrf.mxu0
      %5159 = vmatprep.mubr.f32.mxu0 0.0
      %5160 = vmatmul.mubr.f32.gmra.mxu0 %v4980
      %v5161 = vpop.f32.mrf.mxu0
      %v5162 = vadd.f32 0.0, %v5161
      %v5163 = vpop.f32.mrf.mxu0
      %5164 = vmatprep.mubr.f32.mxu0 0.0
      %5165 = vmatmul.mubr.f32.gmra.mxu0 %v4983
      %v5166 = vpop.f32.mrf.mxu0
      %v5167 = vadd.f32 0.0, %v5166
      %v5168 = vpop.f32.mrf.mxu0
      %5169 = vmatprep.mubr.f32.mxu0 0.0
      %5170 = vmatmul.mubr.f32.gmra.mxu0 %v4986
      %v5171 = vpop.f32.mrf.mxu0
      %v5172 = vadd.f32 0.0, %v5171
      %v5173 = vpop.f32.mrf.mxu0
      %5174 = vmatprep.mubr.f32.mxu0 0.0
      %5175 = vmatmul.mubr.f32.gmra.mxu0 %v4989
      %v5176 = vpop.f32.mrf.mxu0
      %v5177 = vadd.f32 0.0, %v5176
      %v5178 = vpop.f32.mrf.mxu0
      %5179 = vmatprep.mubr.f32.mxu0 0.0
      %5180 = vmatmul.mubr.f32.gmra.mxu0 %v4992
      %v5181 = vpop.f32.mrf.mxu0
      %v5182 = vadd.f32 0.0, %v5181
      %v5183 = vpop.f32.mrf.mxu0
      %5184 = vmatprep.mubr.f32.mxu0 0.0
      %5185 = vmatmul.mubr.f32.gmra.mxu0 %v4995
      %v5186 = vpop.f32.mrf.mxu0
      %v5187 = vadd.f32 0.0, %v5186
      %v5188 = vpop.f32.mrf.mxu0
      %5189 = vmatprep.mubr.f32.mxu0 0.0
      %5190 = vmatmul.mubr.f32.gmra.mxu0 %v4998
      %v5191 = vpop.f32.mrf.mxu0
      %v5192 = vadd.f32 0.0, %v5191
      %v5193 = vpop.f32.mrf.mxu0
      %5194 = vmatprep.mubr.f32.mxu0 0.0
      %5195 = vmatmul.mubr.f32.gmra.mxu0 %v5001
      %v5196 = vpop.f32.mrf.mxu0
      %v5197 = vadd.f32 0.0, %v5196
      %v5198 = vpop.f32.mrf.mxu0
      %5199 = vmatprep.mubr.f32.mxu0 0.0
      %5200 = vmatmul.mubr.f32.gmra.mxu0 %v5004
      %v5201 = vpop.f32.mrf.mxu0
      %v5202 = vadd.f32 0.0, %v5201
      %v5203 = vpop.f32.mrf.mxu0
      %5204 = vmatprep.mubr.f32.mxu0 0.0
      %5205 = vmatmul.mubr.f32.gmra.mxu0 %v5007
      %v5206 = vpop.f32.mrf.mxu0
      %v5207 = vadd.f32 0.0, %v5206
      %v5208 = vpop.f32.mrf.mxu0
      %5209 = vmatprep.mubr.f32.mxu0 0.0
      %5210 = vmatmul.mubr.f32.gmra.mxu0 %v5010
      %v5211 = vpop.f32.mrf.mxu0
      %v5212 = vadd.f32 0.0, %v5211
      %v5213 = vpop.f32.mrf.mxu0
      %5214 = vmatprep.mubr.f32.mxu0 0.0
      %5215 = vmatmul.mubr.f32.gmra.mxu0 %v5013
      %v5216 = vpop.f32.mrf.mxu0
      %v5217 = vadd.f32 0.0, %v5216
      %v5218 = vpop.f32.mrf.mxu0
      %5219 = vmatprep.mubr.f32.mxu0 0.0
      %5220 = vmatmul.mubr.f32.gmra.mxu0 %v5016
      %v5221 = vpop.f32.mrf.mxu0
      %v5222 = vadd.f32 0.0, %v5221
      %v5223 = vpop.f32.mrf.mxu0
      %5224 = vmatprep.mubr.f32.mxu0 0.0
      %5225 = vmatmul.mubr.f32.gmra.mxu0 %v5019
      %v5226 = vpop.f32.mrf.mxu0
      %v5227 = vadd.f32 0.0, %v5226
      %v5228 = vpop.f32.mrf.mxu0
      %5229 = vmatprep.mubr.f32.mxu0 0.0
      %5230 = vmatmul.mubr.f32.gmra.mxu0 %v5022
      %v5231 = vpop.f32.mrf.mxu0
      %v5232 = vadd.f32 0.0, %v5231
      %v5233 = vpop.f32.mrf.mxu0
      %5234 = vmatprep.mubr.f32.mxu0 0.0
      %5235 = vmatmul.mubr.f32.gmra.mxu0 %v5025
      %v5236 = vpop.f32.mrf.mxu0
      %v5237 = vadd.f32 0.0, %v5236
      %v5238 = vpop.f32.mrf.mxu0
      %5239 = vmatprep.mubr.f32.mxu0 0.0
      %5240 = vmatmul.mubr.f32.gmra.mxu0 %v5028
      %v5241 = vpop.f32.mrf.mxu0
      %v5242 = vadd.f32 0.0, %v5241
      %v5243 = vpop.f32.mrf.mxu0
      %5244 = vmatprep.mubr.f32.mxu0 0.0
      %5245 = vmatmul.mubr.f32.gmra.mxu0 %v5031
      %v5246 = vpop.f32.mrf.mxu0
      %v5247 = vadd.f32 0.0, %v5246
      %v5248 = vpop.f32.mrf.mxu0
      %5249 = vmatprep.mubr.f32.mxu0 0.0
      %5250 = vmatmul.mubr.f32.gmra.mxu0 %v5034
      %v5251 = vpop.f32.mrf.mxu0
      %v5252 = vadd.f32 0.0, %v5251
      %v5253 = vpop.f32.mrf.mxu0
      %5254 = vmatprep.mubr.f32.mxu0 0.0
      %5255 = vmatmul.mubr.f32.gmra.mxu0 %v5037
      %v5256 = vpop.f32.mrf.mxu0
      %v5257 = vadd.f32 0.0, %v5256
      %v5258 = vpop.f32.mrf.mxu0
      %5259 = vmatprep.mubr.f32.mxu0 0.0
      %5260 = vmatmul.mubr.f32.gmra.mxu0 %v5040
      %v5261 = vpop.f32.mrf.mxu0
      %v5262 = vadd.f32 0.0, %v5261
      %v5263 = vpop.f32.mrf.mxu0
      %5264 = vmatprep.mubr.f32.mxu0 0.0
      %5265 = vmatmul.mubr.f32.gmra.mxu0 %v5043
      %v5266 = vpop.f32.mrf.mxu0
      %v5267 = vadd.f32 0.0, %v5266
      %v5268 = vpop.f32.mrf.mxu0
      %5269 = vdwg.mxu0
      %v5271 = vsel %vm1237, %v2294, 0
      %v5274 = vsel %vm1237, %v2299, 0
      %v5277 = vsel %vm1237, %v2304, 0
      %v5280 = vsel %vm1237, %v2309, 0
      %v5283 = vsel %vm1237, %v2314, 0
      %v5286 = vsel %vm1237, %v2319, 0
      %v5289 = vsel %vm1237, %v2324, 0
      %v5292 = vsel %vm1237, %v2329, 0
      %v5295 = vsel %vm1237, %v2423, 0
      %v5298 = vsel %vm1237, %v2428, 0
      %v5301 = vsel %vm1237, %v2433, 0
      %v5304 = vsel %vm1237, %v2438, 0
      %v5307 = vsel %vm1237, %v2443, 0
      %v5310 = vsel %vm1237, %v2448, 0
      %v5313 = vsel %vm1237, %v2453, 0
      %v5316 = vsel %vm1237, %v2458, 0
      %v5319 = vsel %vm1237, %v2552, 0
      %v5322 = vsel %vm1237, %v2557, 0
      %v5325 = vsel %vm1237, %v2562, 0
      %v5328 = vsel %vm1237, %v2567, 0
      %v5331 = vsel %vm1237, %v2572, 0
      %v5334 = vsel %vm1237, %v2577, 0
      %v5337 = vsel %vm1237, %v2582, 0
      %v5340 = vsel %vm1237, %v2587, 0
      %v5343 = vsel %vm1237, %v2681, 0
      %v5346 = vsel %vm1237, %v2686, 0
      %v5349 = vsel %vm1237, %v2691, 0
      %v5352 = vsel %vm1237, %v2696, 0
      %v5355 = vsel %vm1237, %v2701, 0
      %v5358 = vsel %vm1237, %v2706, 0
      %v5361 = vsel %vm1237, %v2711, 0
      %v5364 = vsel %vm1237, %v2716, 0
      %5366 = vmatprep.subr.mxu0 0.0
      %5367 = vmatpush1.msra.mxu0 0.0
      %5368 = vmatprep.subr.mxu0 0.0
      %5369 = vmatpush1.msra.mxu0 0.0
      %5370 = vmatprep.subr.mxu0 0.0
      %5371 = vmatpush1.msra.mxu0 0.0
      %5372 = vmatprep.subr.mxu0 0.0
      %5373 = vmatpush1.msra.mxu0 0.0
      %5374 = vmatprep.subr.mxu0 0.0
      %5375 = vmatpush1.msra.mxu0 0.0
      %5376 = vmatprep.subr.mxu0 0.0
      %5377 = vmatpush1.msra.mxu0 0.0
      %5378 = vmatprep.subr.mxu0 0.0
      %5379 = vmatpush1.msra.mxu0 0.0
      %5380 = vmatprep.subr.mxu0 0.0
      %5381 = vmatpush1.msra.mxu0 0.0
      %5382 = vmatprep.subr.mxu0 0.0
      %5383 = vmatpush1.msra.mxu0 0.0
      %5384 = vmatprep.subr.mxu0 0.0
      %5385 = vmatpush1.msra.mxu0 0.0
      %5386 = vmatprep.subr.mxu0 0.0
      %5387 = vmatpush1.msra.mxu0 0.0
      %5388 = vmatprep.subr.mxu0 0.0
      %5389 = vmatpush1.msra.mxu0 0.0
      %5390 = vmatprep.subr.mxu0 0.0
      %5391 = vmatpush1.msra.mxu0 0.0
      %5392 = vmatprep.subr.mxu0 0.0
      %5393 = vmatpush1.msra.mxu0 0.0
      %5394 = vmatprep.subr.mxu0 0.0
      %5395 = vmatpush1.msra.mxu0 0.0
      %5396 = vmatprep.subr.mxu0 0.0
      %5397 = vmatpush1.msra.mxu0 %v2719
      %5398 = vmatprep.subr.mxu0 0.0
      %5399 = vmatpush2.msra.mxu0 0.0
      %5400 = vmatprep.subr.mxu0 0.0
      %5401 = vmatpush2.msra.mxu0 0.0
      %5402 = vmatprep.subr.mxu0 0.0
      %5403 = vmatpush2.msra.mxu0 0.0
      %5404 = vmatprep.subr.mxu0 0.0
      %5405 = vmatpush2.msra.mxu0 0.0
      %5406 = vmatprep.subr.mxu0 0.0
      %5407 = vmatpush2.msra.mxu0 0.0
      %5408 = vmatprep.subr.mxu0 0.0
      %5409 = vmatpush2.msra.mxu0 0.0
      %5410 = vmatprep.subr.mxu0 0.0
      %5411 = vmatpush2.msra.mxu0 0.0
      %5412 = vmatprep.subr.mxu0 0.0
      %5413 = vmatpush2.msra.mxu0 0.0
      %5414 = vmatprep.subr.mxu0 0.0
      %5415 = vmatpush2.msra.mxu0 0.0
      %5416 = vmatprep.subr.mxu0 0.0
      %5417 = vmatpush2.msra.mxu0 0.0
      %5418 = vmatprep.subr.mxu0 0.0
      %5419 = vmatpush2.msra.mxu0 0.0
      %5420 = vmatprep.subr.mxu0 0.0
      %5421 = vmatpush2.msra.mxu0 0.0
      %5422 = vmatprep.subr.mxu0 0.0
      %5423 = vmatpush2.msra.mxu0 0.0
      %5424 = vmatprep.subr.mxu0 0.0
      %5425 = vmatpush2.msra.mxu0 0.0
      %5426 = vmatprep.subr.mxu0 0.0
      %5427 = vmatpush2.msra.mxu0 0.0
      %5428 = vmatprep.subr.mxu0 0.0
      %5429 = vmatpush2.msra.mxu0 0.0
      %5430 = vmatprep.mubr.f32.mxu0 0.0
      %5431 = vmatmul.mubr.f32.gmra.mxu0 %v5271
      %v5432 = vpop.f32.mrf.mxu0
      %v5433 = vadd.f32 %v5112, %v5432
      %v5434 = vpop.f32.mrf.mxu0
      %5435 = vmatprep.mubr.f32.mxu0 0.0
      %5436 = vmatmul.mubr.f32.gmra.mxu0 %v5274
      %v5437 = vpop.f32.mrf.mxu0
      %v5438 = vadd.f32 %v5117, %v5437
      %v5439 = vpop.f32.mrf.mxu0
      %5440 = vmatprep.mubr.f32.mxu0 0.0
      %5441 = vmatmul.mubr.f32.gmra.mxu0 %v5277
      %v5442 = vpop.f32.mrf.mxu0
      %v5443 = vadd.f32 %v5122, %v5442
      %v5444 = vpop.f32.mrf.mxu0
      %5445 = vmatprep.mubr.f32.mxu0 0.0
      %5446 = vmatmul.mubr.f32.gmra.mxu0 %v5280
      %v5447 = vpop.f32.mrf.mxu0
      %v5448 = vadd.f32 %v5127, %v5447
      %v5449 = vpop.f32.mrf.mxu0
      %5450 = vmatprep.mubr.f32.mxu0 0.0
      %5451 = vmatmul.mubr.f32.gmra.mxu0 %v5283
      %v5452 = vpop.f32.mrf.mxu0
      %v5453 = vadd.f32 %v5132, %v5452
      %v5454 = vpop.f32.mrf.mxu0
      %5455 = vmatprep.mubr.f32.mxu0 0.0
      %5456 = vmatmul.mubr.f32.gmra.mxu0 %v5286
      %v5457 = vpop.f32.mrf.mxu0
      %v5458 = vadd.f32 %v5137, %v5457
      %v5459 = vpop.f32.mrf.mxu0
      %5460 = vmatprep.mubr.f32.mxu0 0.0
      %5461 = vmatmul.mubr.f32.gmra.mxu0 %v5289
      %v5462 = vpop.f32.mrf.mxu0
      %v5463 = vadd.f32 %v5142, %v5462
      %v5464 = vpop.f32.mrf.mxu0
      %5465 = vmatprep.mubr.f32.mxu0 0.0
      %5466 = vmatmul.mubr.f32.gmra.mxu0 %v5292
      %v5467 = vpop.f32.mrf.mxu0
      %v5468 = vadd.f32 %v5147, %v5467
      %v5469 = vpop.f32.mrf.mxu0
      %5470 = vmatprep.mubr.f32.mxu0 0.0
      %5471 = vmatmul.mubr.f32.gmra.mxu0 %v5295
      %v5472 = vpop.f32.mrf.mxu0
      %v5473 = vadd.f32 %v5152, %v5472
      %v5474 = vpop.f32.mrf.mxu0
      %5475 = vmatprep.mubr.f32.mxu0 0.0
      %5476 = vmatmul.mubr.f32.gmra.mxu0 %v5298
      %v5477 = vpop.f32.mrf.mxu0
      %v5478 = vadd.f32 %v5157, %v5477
      %v5479 = vpop.f32.mrf.mxu0
      %5480 = vmatprep.mubr.f32.mxu0 0.0
      %5481 = vmatmul.mubr.f32.gmra.mxu0 %v5301
      %v5482 = vpop.f32.mrf.mxu0
      %v5483 = vadd.f32 %v5162, %v5482
      %v5484 = vpop.f32.mrf.mxu0
      %5485 = vmatprep.mubr.f32.mxu0 0.0
      %5486 = vmatmul.mubr.f32.gmra.mxu0 %v5304
      %v5487 = vpop.f32.mrf.mxu0
      %v5488 = vadd.f32 %v5167, %v5487
      %v5489 = vpop.f32.mrf.mxu0
      %5490 = vmatprep.mubr.f32.mxu0 0.0
      %5491 = vmatmul.mubr.f32.gmra.mxu0 %v5307
      %v5492 = vpop.f32.mrf.mxu0
      %v5493 = vadd.f32 %v5172, %v5492
      %v5494 = vpop.f32.mrf.mxu0
      %5495 = vmatprep.mubr.f32.mxu0 0.0
      %5496 = vmatmul.mubr.f32.gmra.mxu0 %v5310
      %v5497 = vpop.f32.mrf.mxu0
      %v5498 = vadd.f32 %v5177, %v5497
      %v5499 = vpop.f32.mrf.mxu0
      %5500 = vmatprep.mubr.f32.mxu0 0.0
      %5501 = vmatmul.mubr.f32.gmra.mxu0 %v5313
      %v5502 = vpop.f32.mrf.mxu0
      %v5503 = vadd.f32 %v5182, %v5502
      %v5504 = vpop.f32.mrf.mxu0
      %5505 = vmatprep.mubr.f32.mxu0 0.0
      %5506 = vmatmul.mubr.f32.gmra.mxu0 %v5316
      %v5507 = vpop.f32.mrf.mxu0
      %v5508 = vadd.f32 %v5187, %v5507
      %v5509 = vpop.f32.mrf.mxu0
      %5510 = vmatprep.mubr.f32.mxu0 0.0
      %5511 = vmatmul.mubr.f32.gmra.mxu0 %v5319
      %v5512 = vpop.f32.mrf.mxu0
      %v5513 = vadd.f32 %v5192, %v5512
      %v5514 = vpop.f32.mrf.mxu0
      %5515 = vmatprep.mubr.f32.mxu0 0.0
      %5516 = vmatmul.mubr.f32.gmra.mxu0 %v5322
      %v5517 = vpop.f32.mrf.mxu0
      %v5518 = vadd.f32 %v5197, %v5517
      %v5519 = vpop.f32.mrf.mxu0
      %5520 = vmatprep.mubr.f32.mxu0 0.0
      %5521 = vmatmul.mubr.f32.gmra.mxu0 %v5325
      %v5522 = vpop.f32.mrf.mxu0
      %v5523 = vadd.f32 %v5202, %v5522
      %v5524 = vpop.f32.mrf.mxu0
      %5525 = vmatprep.mubr.f32.mxu0 0.0
      %5526 = vmatmul.mubr.f32.gmra.mxu0 %v5328
      %v5527 = vpop.f32.mrf.mxu0
      %v5528 = vadd.f32 %v5207, %v5527
      %v5529 = vpop.f32.mrf.mxu0
      %5530 = vmatprep.mubr.f32.mxu0 0.0
      %5531 = vmatmul.mubr.f32.gmra.mxu0 %v5331
      %v5532 = vpop.f32.mrf.mxu0
      %v5533 = vadd.f32 %v5212, %v5532
      %v5534 = vpop.f32.mrf.mxu0
      %5535 = vmatprep.mubr.f32.mxu0 0.0
      %5536 = vmatmul.mubr.f32.gmra.mxu0 %v5334
      %v5537 = vpop.f32.mrf.mxu0
      %v5538 = vadd.f32 %v5217, %v5537
      %v5539 = vpop.f32.mrf.mxu0
      %5540 = vmatprep.mubr.f32.mxu0 0.0
      %5541 = vmatmul.mubr.f32.gmra.mxu0 %v5337
      %v5542 = vpop.f32.mrf.mxu0
      %v5543 = vadd.f32 %v5222, %v5542
      %v5544 = vpop.f32.mrf.mxu0
      %5545 = vmatprep.mubr.f32.mxu0 0.0
      %5546 = vmatmul.mubr.f32.gmra.mxu0 %v5340
      %v5547 = vpop.f32.mrf.mxu0
      %v5548 = vadd.f32 %v5227, %v5547
      %v5549 = vpop.f32.mrf.mxu0
      %5550 = vmatprep.mubr.f32.mxu0 0.0
      %5551 = vmatmul.mubr.f32.gmra.mxu0 %v5343
      %v5552 = vpop.f32.mrf.mxu0
      %v5553 = vadd.f32 %v5232, %v5552
      %v5554 = vpop.f32.mrf.mxu0
      %5555 = vmatprep.mubr.f32.mxu0 0.0
      %5556 = vmatmul.mubr.f32.gmra.mxu0 %v5346
      %v5557 = vpop.f32.mrf.mxu0
      %v5558 = vadd.f32 %v5237, %v5557
      %v5559 = vpop.f32.mrf.mxu0
      %5560 = vmatprep.mubr.f32.mxu0 0.0
      %5561 = vmatmul.mubr.f32.gmra.mxu0 %v5349
      %v5562 = vpop.f32.mrf.mxu0
      %v5563 = vadd.f32 %v5242, %v5562
      %v5564 = vpop.f32.mrf.mxu0
      %5565 = vmatprep.mubr.f32.mxu0 0.0
      %5566 = vmatmul.mubr.f32.gmra.mxu0 %v5352
      %v5567 = vpop.f32.mrf.mxu0
      %v5568 = vadd.f32 %v5247, %v5567
      %v5569 = vpop.f32.mrf.mxu0
      %5570 = vmatprep.mubr.f32.mxu0 0.0
      %5571 = vmatmul.mubr.f32.gmra.mxu0 %v5355
      %v5572 = vpop.f32.mrf.mxu0
      %v5573 = vadd.f32 %v5252, %v5572
      %v5574 = vpop.f32.mrf.mxu0
      %5575 = vmatprep.mubr.f32.mxu0 0.0
      %5576 = vmatmul.mubr.f32.gmra.mxu0 %v5358
      %v5577 = vpop.f32.mrf.mxu0
      %v5578 = vadd.f32 %v5257, %v5577
      %v5579 = vpop.f32.mrf.mxu0
      %5580 = vmatprep.mubr.f32.mxu0 0.0
      %5581 = vmatmul.mubr.f32.gmra.mxu0 %v5361
      %v5582 = vpop.f32.mrf.mxu0
      %v5583 = vadd.f32 %v5262, %v5582
      %v5584 = vpop.f32.mrf.mxu0
      %5585 = vmatprep.mubr.f32.mxu0 0.0
      %5586 = vmatmul.mubr.f32.gmra.mxu0 %v5364
      %v5587 = vpop.f32.mrf.mxu0
      %v5588 = vadd.f32 %v5267, %v5587
      %v5589 = vpop.f32.mrf.mxu0
      %5590 = vdwg.mxu0
      %s5591 = scalar_lea.vmem %s1, 64
      %v5592 = vld [vmem:[%s5591] sm:$0xff]
      %v5593 = vld [vmem:[%s5591 + $0x8] sm:$0xff]
      %v5594 = vld [vmem:[%s5591 + $0x10] sm:$0xff]
      %v5595 = vld [vmem:[%s5591 + $0x18] sm:$0xff]
      %s5596 = scalar_lea.vmem %s4, 2
      %v5597 = vld [vmem:[%s5596] sm:$0x1]
      %v5599 = vlaneseq
      %v5600 = vshrl.u32 %v5599, 7
      %v5601 = vsub.s32 0, %v5600
      %v5602 = vrot.slane %v5597, %v5601
      %5604 = vmatprep.subr.mxu0 0.0
      %5605 = vmatpush1.msra.mxu0 0.0
      %5606 = vmatprep.subr.mxu0 0.0
      %5607 = vmatpush1.msra.mxu0 0.0
      %5608 = vmatprep.subr.mxu0 0.0
      %5609 = vmatpush1.msra.mxu0 0.0
      %5610 = vmatprep.subr.mxu0 0.0
      %5611 = vmatpush1.msra.mxu0 0.0
      %5612 = vmatprep.subr.mxu0 0.0
      %5613 = vmatpush1.msra.mxu0 0.0
      %5614 = vmatprep.subr.mxu0 0.0
      %5615 = vmatpush1.msra.mxu0 0.0
      %5616 = vmatprep.subr.mxu0 0.0
      %5617 = vmatpush1.msra.mxu0 0.0
      %5618 = vmatprep.subr.mxu0 0.0
      %5619 = vmatpush1.msra.mxu0 0.0
      %5620 = vmatprep.subr.mxu0 0.0
      %5621 = vmatpush1.msra.mxu0 0.0
      %5622 = vmatprep.subr.mxu0 0.0
      %5623 = vmatpush1.msra.mxu0 0.0
      %5624 = vmatprep.subr.mxu0 0.0
      %5625 = vmatpush1.msra.mxu0 0.0
      %5626 = vmatprep.subr.mxu0 0.0
      %5627 = vmatpush1.msra.mxu0 0.0
      %5628 = vmatprep.subr.mxu0 0.0
      %5629 = vmatpush1.msra.mxu0 %v5595
      %5630 = vmatprep.subr.mxu0 0.0
      %5631 = vmatpush1.msra.mxu0 %v5594
      %5632 = vmatprep.subr.mxu0 0.0
      %5633 = vmatpush1.msra.mxu0 %v5593
      %5634 = vmatprep.subr.mxu0 0.0
      %5635 = vmatpush1.msra.mxu0 %v5592
      %5636 = vmatprep.subr.mxu0 0.0
      %5637 = vmatpush2.msra.mxu0 0.0
      %5638 = vmatprep.subr.mxu0 0.0
      %5639 = vmatpush2.msra.mxu0 0.0
      %5640 = vmatprep.subr.mxu0 0.0
      %5641 = vmatpush2.msra.mxu0 0.0
      %5642 = vmatprep.subr.mxu0 0.0
      %5643 = vmatpush2.msra.mxu0 0.0
      %5644 = vmatprep.subr.mxu0 0.0
      %5645 = vmatpush2.msra.mxu0 0.0
      %5646 = vmatprep.subr.mxu0 0.0
      %5647 = vmatpush2.msra.mxu0 0.0
      %5648 = vmatprep.subr.mxu0 0.0
      %5649 = vmatpush2.msra.mxu0 0.0
      %5650 = vmatprep.subr.mxu0 0.0
      %5651 = vmatpush2.msra.mxu0 0.0
      %5652 = vmatprep.subr.mxu0 0.0
      %5653 = vmatpush2.msra.mxu0 0.0
      %5654 = vmatprep.subr.mxu0 0.0
      %5655 = vmatpush2.msra.mxu0 0.0
      %5656 = vmatprep.subr.mxu0 0.0
      %5657 = vmatpush2.msra.mxu0 0.0
      %5658 = vmatprep.subr.mxu0 0.0
      %5659 = vmatpush2.msra.mxu0 0.0
      %5660 = vmatprep.subr.mxu0 0.0
      %5661 = vmatpush2.msra.mxu0 0.0
      %5662 = vmatprep.subr.mxu0 0.0
      %5663 = vmatpush2.msra.mxu0 0.0
      %5664 = vmatprep.subr.mxu0 0.0
      %5665 = vmatpush2.msra.mxu0 0.0
      %5666 = vmatprep.subr.mxu0 0.0
      %5667 = vmatpush2.msra.mxu0 0.0
      %5668 = vmatprep.mubr.f32.mxu0 0.0
      %5669 = vmatmul.mubr.f32.gmra.mxu0 %v413
      %v5670 = vpop.f32.mrf.mxu0
      %v5671 = vadd.f32 %v5602, %v5670
      %v5672 = vpop.f32.mrf.mxu0
      %5673 = vmatprep.mubr.f32.mxu0 0.0
      %5674 = vmatmul.mubr.f32.gmra.mxu0 %v416
      %v5675 = vpop.f32.mrf.mxu0
      %v5676 = vadd.f32 %v5602, %v5675
      %v5677 = vpop.f32.mrf.mxu0
      %5678 = vmatprep.mubr.f32.mxu0 0.0
      %5679 = vmatmul.mubr.f32.gmra.mxu0 %v419
      %v5680 = vpop.f32.mrf.mxu0
      %v5681 = vadd.f32 %v5602, %v5680
      %v5682 = vpop.f32.mrf.mxu0
      %5683 = vmatprep.mubr.f32.mxu0 0.0
      %5684 = vmatmul.mubr.f32.gmra.mxu0 %v422
      %v5685 = vpop.f32.mrf.mxu0
      %v5686 = vadd.f32 %v5602, %v5685
      %v5687 = vpop.f32.mrf.mxu0
      %5688 = vmatprep.mubr.f32.mxu0 0.0
      %5689 = vmatmul.mubr.f32.gmra.mxu0 %v425
      %v5690 = vpop.f32.mrf.mxu0
      %v5691 = vadd.f32 %v5602, %v5690
      %v5692 = vpop.f32.mrf.mxu0
      %5693 = vmatprep.mubr.f32.mxu0 0.0
      %5694 = vmatmul.mubr.f32.gmra.mxu0 %v428
      %v5695 = vpop.f32.mrf.mxu0
      %v5696 = vadd.f32 %v5602, %v5695
      %v5697 = vpop.f32.mrf.mxu0
      %5698 = vmatprep.mubr.f32.mxu0 0.0
      %5699 = vmatmul.mubr.f32.gmra.mxu0 %v431
      %v5700 = vpop.f32.mrf.mxu0
      %v5701 = vadd.f32 %v5602, %v5700
      %v5702 = vpop.f32.mrf.mxu0
      %5703 = vmatprep.mubr.f32.mxu0 0.0
      %5704 = vmatmul.mubr.f32.gmra.mxu0 %v434
      %v5705 = vpop.f32.mrf.mxu0
      %v5706 = vadd.f32 %v5602, %v5705
      %v5707 = vpop.f32.mrf.mxu0
      %5708 = vmatprep.mubr.f32.mxu0 0.0
      %5709 = vmatmul.mubr.f32.gmra.mxu0 %v437
      %v5710 = vpop.f32.mrf.mxu0
      %v5711 = vadd.f32 %v5602, %v5710
      %v5712 = vpop.f32.mrf.mxu0
      %5713 = vmatprep.mubr.f32.mxu0 0.0
      %5714 = vmatmul.mubr.f32.gmra.mxu0 %v440
      %v5715 = vpop.f32.mrf.mxu0
      %v5716 = vadd.f32 %v5602, %v5715
      %v5717 = vpop.f32.mrf.mxu0
      %5718 = vmatprep.mubr.f32.mxu0 0.0
      %5719 = vmatmul.mubr.f32.gmra.mxu0 %v443
      %v5720 = vpop.f32.mrf.mxu0
      %v5721 = vadd.f32 %v5602, %v5720
      %v5722 = vpop.f32.mrf.mxu0
      %5723 = vmatprep.mubr.f32.mxu0 0.0
      %5724 = vmatmul.mubr.f32.gmra.mxu0 %v446
      %v5725 = vpop.f32.mrf.mxu0
      %v5726 = vadd.f32 %v5602, %v5725
      %v5727 = vpop.f32.mrf.mxu0
      %5728 = vmatprep.mubr.f32.mxu0 0.0
      %5729 = vmatmul.mubr.f32.gmra.mxu0 %v449
      %v5730 = vpop.f32.mrf.mxu0
      %v5731 = vadd.f32 %v5602, %v5730
      %v5732 = vpop.f32.mrf.mxu0
      %5733 = vmatprep.mubr.f32.mxu0 0.0
      %5734 = vmatmul.mubr.f32.gmra.mxu0 %v452
      %v5735 = vpop.f32.mrf.mxu0
      %v5736 = vadd.f32 %v5602, %v5735
      %v5737 = vpop.f32.mrf.mxu0
      %5738 = vmatprep.mubr.f32.mxu0 0.0
      %5739 = vmatmul.mubr.f32.gmra.mxu0 %v455
      %v5740 = vpop.f32.mrf.mxu0
      %v5741 = vadd.f32 %v5602, %v5740
      %v5742 = vpop.f32.mrf.mxu0
      %5743 = vmatprep.mubr.f32.mxu0 0.0
      %5744 = vmatmul.mubr.f32.gmra.mxu0 %v458
      %v5745 = vpop.f32.mrf.mxu0
      %v5746 = vadd.f32 %v5602, %v5745
      %v5747 = vpop.f32.mrf.mxu0
      %5748 = vmatprep.mubr.f32.mxu0 0.0
      %5749 = vmatmul.mubr.f32.gmra.mxu0 %v461
      %v5750 = vpop.f32.mrf.mxu0
      %v5751 = vadd.f32 %v5602, %v5750
      %v5752 = vpop.f32.mrf.mxu0
      %5753 = vmatprep.mubr.f32.mxu0 0.0
      %5754 = vmatmul.mubr.f32.gmra.mxu0 %v464
      %v5755 = vpop.f32.mrf.mxu0
      %v5756 = vadd.f32 %v5602, %v5755
      %v5757 = vpop.f32.mrf.mxu0
      %5758 = vmatprep.mubr.f32.mxu0 0.0
      %5759 = vmatmul.mubr.f32.gmra.mxu0 %v467
      %v5760 = vpop.f32.mrf.mxu0
      %v5761 = vadd.f32 %v5602, %v5760
      %v5762 = vpop.f32.mrf.mxu0
      %5763 = vmatprep.mubr.f32.mxu0 0.0
      %5764 = vmatmul.mubr.f32.gmra.mxu0 %v470
      %v5765 = vpop.f32.mrf.mxu0
      %v5766 = vadd.f32 %v5602, %v5765
      %v5767 = vpop.f32.mrf.mxu0
      %5768 = vmatprep.mubr.f32.mxu0 0.0
      %5769 = vmatmul.mubr.f32.gmra.mxu0 %v473
      %v5770 = vpop.f32.mrf.mxu0
      %v5771 = vadd.f32 %v5602, %v5770
      %v5772 = vpop.f32.mrf.mxu0
      %5773 = vmatprep.mubr.f32.mxu0 0.0
      %5774 = vmatmul.mubr.f32.gmra.mxu0 %v476
      %v5775 = vpop.f32.mrf.mxu0
      %v5776 = vadd.f32 %v5602, %v5775
      %v5777 = vpop.f32.mrf.mxu0
      %5778 = vmatprep.mubr.f32.mxu0 0.0
      %5779 = vmatmul.mubr.f32.gmra.mxu0 %v479
      %v5780 = vpop.f32.mrf.mxu0
      %v5781 = vadd.f32 %v5602, %v5780
      %v5782 = vpop.f32.mrf.mxu0
      %5783 = vmatprep.mubr.f32.mxu0 0.0
      %5784 = vmatmul.mubr.f32.gmra.mxu0 %v482
      %v5785 = vpop.f32.mrf.mxu0
      %v5786 = vadd.f32 %v5602, %v5785
      %v5787 = vpop.f32.mrf.mxu0
      %5788 = vmatprep.mubr.f32.mxu0 0.0
      %5789 = vmatmul.mubr.f32.gmra.mxu0 %v485
      %v5790 = vpop.f32.mrf.mxu0
      %v5791 = vadd.f32 %v5602, %v5790
      %v5792 = vpop.f32.mrf.mxu0
      %5793 = vmatprep.mubr.f32.mxu0 0.0
      %5794 = vmatmul.mubr.f32.gmra.mxu0 %v488
      %v5795 = vpop.f32.mrf.mxu0
      %v5796 = vadd.f32 %v5602, %v5795
      %v5797 = vpop.f32.mrf.mxu0
      %5798 = vmatprep.mubr.f32.mxu0 0.0
      %5799 = vmatmul.mubr.f32.gmra.mxu0 %v491
      %v5800 = vpop.f32.mrf.mxu0
      %v5801 = vadd.f32 %v5602, %v5800
      %v5802 = vpop.f32.mrf.mxu0
      %5803 = vmatprep.mubr.f32.mxu0 0.0
      %5804 = vmatmul.mubr.f32.gmra.mxu0 %v494
      %v5805 = vpop.f32.mrf.mxu0
      %v5806 = vadd.f32 %v5602, %v5805
      %v5807 = vpop.f32.mrf.mxu0
      %5808 = vmatprep.mubr.f32.mxu0 0.0
      %5809 = vmatmul.mubr.f32.gmra.mxu0 %v497
      %v5810 = vpop.f32.mrf.mxu0
      %v5811 = vadd.f32 %v5602, %v5810
      %v5812 = vpop.f32.mrf.mxu0
      %5813 = vmatprep.mubr.f32.mxu0 0.0
      %5814 = vmatmul.mubr.f32.gmra.mxu0 %v500
      %v5815 = vpop.f32.mrf.mxu0
      %v5816 = vadd.f32 %v5602, %v5815
      %v5817 = vpop.f32.mrf.mxu0
      %5818 = vmatprep.mubr.f32.mxu0 0.0
      %5819 = vmatmul.mubr.f32.gmra.mxu0 %v503
      %v5820 = vpop.f32.mrf.mxu0
      %v5821 = vadd.f32 %v5602, %v5820
      %v5822 = vpop.f32.mrf.mxu0
      %5823 = vmatprep.mubr.f32.mxu0 0.0
      %5824 = vmatmul.mubr.f32.gmra.mxu0 %v506
      %v5825 = vpop.f32.mrf.mxu0
      %v5826 = vadd.f32 %v5602, %v5825
      %v5827 = vpop.f32.mrf.mxu0
      %5828 = vdwg.mxu0
      %s5829 = scalar_lea.vmem %s2, 64
      %v5830 = vld [vmem:[%s5829] sm:$0xff]
      %v5831 = vld [vmem:[%s5829 + $0x8] sm:$0xff]
      %v5832 = vld [vmem:[%s5829 + $0x10] sm:$0xff]
      %v5833 = vld [vmem:[%s5829 + $0x18] sm:$0xff]
      %s5834 = scalar_lea.vmem %s5, 2
      %v5835 = vld [vmem:[%s5834] sm:$0x1]
      %v5837 = vlaneseq
      %v5838 = vshrl.u32 %v5837, 7
      %v5839 = vsub.s32 0, %v5838
      %v5840 = vrot.slane %v5835, %v5839
      %5842 = vmatprep.subr.mxu0 0.0
      %5843 = vmatpush1.msra.mxu0 0.0
      %5844 = vmatprep.subr.mxu0 0.0
      %5845 = vmatpush1.msra.mxu0 0.0
      %5846 = vmatprep.subr.mxu0 0.0
      %5847 = vmatpush1.msra.mxu0 0.0
      %5848 = vmatprep.subr.mxu0 0.0
      %5849 = vmatpush1.msra.mxu0 0.0
      %5850 = vmatprep.subr.mxu0 0.0
      %5851 = vmatpush1.msra.mxu0 0.0
      %5852 = vmatprep.subr.mxu0 0.0
      %5853 = vmatpush1.msra.mxu0 0.0
      %5854 = vmatprep.subr.mxu0 0.0
      %5855 = vmatpush1.msra.mxu0 0.0
      %5856 = vmatprep.subr.mxu0 0.0
      %5857 = vmatpush1.msra.mxu0 0.0
      %5858 = vmatprep.subr.mxu0 0.0
      %5859 = vmatpush1.msra.mxu0 0.0
      %5860 = vmatprep.subr.mxu0 0.0
      %5861 = vmatpush1.msra.mxu0 0.0
      %5862 = vmatprep.subr.mxu0 0.0
      %5863 = vmatpush1.msra.mxu0 0.0
      %5864 = vmatprep.subr.mxu0 0.0
      %5865 = vmatpush1.msra.mxu0 0.0
      %5866 = vmatprep.subr.mxu0 0.0
      %5867 = vmatpush1.msra.mxu0 %v5833
      %5868 = vmatprep.subr.mxu0 0.0
      %5869 = vmatpush1.msra.mxu0 %v5832
      %5870 = vmatprep.subr.mxu0 0.0
      %5871 = vmatpush1.msra.mxu0 %v5831
      %5872 = vmatprep.subr.mxu0 0.0
      %5873 = vmatpush1.msra.mxu0 %v5830
      %5874 = vmatprep.subr.mxu0 0.0
      %5875 = vmatpush2.msra.mxu0 0.0
      %5876 = vmatprep.subr.mxu0 0.0
      %5877 = vmatpush2.msra.mxu0 0.0
      %5878 = vmatprep.subr.mxu0 0.0
      %5879 = vmatpush2.msra.mxu0 0.0
      %5880 = vmatprep.subr.mxu0 0.0
      %5881 = vmatpush2.msra.mxu0 0.0
      %5882 = vmatprep.subr.mxu0 0.0
      %5883 = vmatpush2.msra.mxu0 0.0
      %5884 = vmatprep.subr.mxu0 0.0
      %5885 = vmatpush2.msra.mxu0 0.0
      %5886 = vmatprep.subr.mxu0 0.0
      %5887 = vmatpush2.msra.mxu0 0.0
      %5888 = vmatprep.subr.mxu0 0.0
      %5889 = vmatpush2.msra.mxu0 0.0
      %5890 = vmatprep.subr.mxu0 0.0
      %5891 = vmatpush2.msra.mxu0 0.0
      %5892 = vmatprep.subr.mxu0 0.0
      %5893 = vmatpush2.msra.mxu0 0.0
      %5894 = vmatprep.subr.mxu0 0.0
      %5895 = vmatpush2.msra.mxu0 0.0
      %5896 = vmatprep.subr.mxu0 0.0
      %5897 = vmatpush2.msra.mxu0 0.0
      %5898 = vmatprep.subr.mxu0 0.0
      %5899 = vmatpush2.msra.mxu0 0.0
      %5900 = vmatprep.subr.mxu0 0.0
      %5901 = vmatpush2.msra.mxu0 0.0
      %5902 = vmatprep.subr.mxu0 0.0
      %5903 = vmatpush2.msra.mxu0 0.0
      %5904 = vmatprep.subr.mxu0 0.0
      %5905 = vmatpush2.msra.mxu0 0.0
      %5906 = vmatprep.mubr.f32.mxu0 0.0
      %5907 = vmatmul.mubr.f32.gmra.mxu0 %v413
      %v5908 = vpop.f32.mrf.mxu0
      %v5909 = vadd.f32 %v5840, %v5908
      %v5910 = vpop.f32.mrf.mxu0
      %5911 = vmatprep.mubr.f32.mxu0 0.0
      %5912 = vmatmul.mubr.f32.gmra.mxu0 %v416
      %v5913 = vpop.f32.mrf.mxu0
      %v5914 = vadd.f32 %v5840, %v5913
      %v5915 = vpop.f32.mrf.mxu0
      %5916 = vmatprep.mubr.f32.mxu0 0.0
      %5917 = vmatmul.mubr.f32.gmra.mxu0 %v419
      %v5918 = vpop.f32.mrf.mxu0
      %v5919 = vadd.f32 %v5840, %v5918
      %v5920 = vpop.f32.mrf.mxu0
      %5921 = vmatprep.mubr.f32.mxu0 0.0
      %5922 = vmatmul.mubr.f32.gmra.mxu0 %v422
      %v5923 = vpop.f32.mrf.mxu0
      %v5924 = vadd.f32 %v5840, %v5923
      %v5925 = vpop.f32.mrf.mxu0
      %5926 = vmatprep.mubr.f32.mxu0 0.0
      %5927 = vmatmul.mubr.f32.gmra.mxu0 %v425
      %v5928 = vpop.f32.mrf.mxu0
      %v5929 = vadd.f32 %v5840, %v5928
      %v5930 = vpop.f32.mrf.mxu0
      %5931 = vmatprep.mubr.f32.mxu0 0.0
      %5932 = vmatmul.mubr.f32.gmra.mxu0 %v428
      %v5933 = vpop.f32.mrf.mxu0
      %v5934 = vadd.f32 %v5840, %v5933
      %v5935 = vpop.f32.mrf.mxu0
      %5936 = vmatprep.mubr.f32.mxu0 0.0
      %5937 = vmatmul.mubr.f32.gmra.mxu0 %v431
      %v5938 = vpop.f32.mrf.mxu0
      %v5939 = vadd.f32 %v5840, %v5938
      %v5940 = vpop.f32.mrf.mxu0
      %5941 = vmatprep.mubr.f32.mxu0 0.0
      %5942 = vmatmul.mubr.f32.gmra.mxu0 %v434
      %v5943 = vpop.f32.mrf.mxu0
      %v5944 = vadd.f32 %v5840, %v5943
      %v5945 = vpop.f32.mrf.mxu0
      %5946 = vmatprep.mubr.f32.mxu0 0.0
      %5947 = vmatmul.mubr.f32.gmra.mxu0 %v437
      %v5948 = vpop.f32.mrf.mxu0
      %v5949 = vadd.f32 %v5840, %v5948
      %v5950 = vpop.f32.mrf.mxu0
      %5951 = vmatprep.mubr.f32.mxu0 0.0
      %5952 = vmatmul.mubr.f32.gmra.mxu0 %v440
      %v5953 = vpop.f32.mrf.mxu0
      %v5954 = vadd.f32 %v5840, %v5953
      %v5955 = vpop.f32.mrf.mxu0
      %5956 = vmatprep.mubr.f32.mxu0 0.0
      %5957 = vmatmul.mubr.f32.gmra.mxu0 %v443
      %v5958 = vpop.f32.mrf.mxu0
      %v5959 = vadd.f32 %v5840, %v5958
      %v5960 = vpop.f32.mrf.mxu0
      %5961 = vmatprep.mubr.f32.mxu0 0.0
      %5962 = vmatmul.mubr.f32.gmra.mxu0 %v446
      %v5963 = vpop.f32.mrf.mxu0
      %v5964 = vadd.f32 %v5840, %v5963
      %v5965 = vpop.f32.mrf.mxu0
      %5966 = vmatprep.mubr.f32.mxu0 0.0
      %5967 = vmatmul.mubr.f32.gmra.mxu0 %v449
      %v5968 = vpop.f32.mrf.mxu0
      %v5969 = vadd.f32 %v5840, %v5968
      %v5970 = vpop.f32.mrf.mxu0
      %5971 = vmatprep.mubr.f32.mxu0 0.0
      %5972 = vmatmul.mubr.f32.gmra.mxu0 %v452
      %v5973 = vpop.f32.mrf.mxu0
      %v5974 = vadd.f32 %v5840, %v5973
      %v5975 = vpop.f32.mrf.mxu0
      %5976 = vmatprep.mubr.f32.mxu0 0.0
      %5977 = vmatmul.mubr.f32.gmra.mxu0 %v455
      %v5978 = vpop.f32.mrf.mxu0
      %v5979 = vadd.f32 %v5840, %v5978
      %v5980 = vpop.f32.mrf.mxu0
      %5981 = vmatprep.mubr.f32.mxu0 0.0
      %5982 = vmatmul.mubr.f32.gmra.mxu0 %v458
      %v5983 = vpop.f32.mrf.mxu0
      %v5984 = vadd.f32 %v5840, %v5983
      %v5985 = vpop.f32.mrf.mxu0
      %5986 = vmatprep.mubr.f32.mxu0 0.0
      %5987 = vmatmul.mubr.f32.gmra.mxu0 %v461
      %v5988 = vpop.f32.mrf.mxu0
      %v5989 = vadd.f32 %v5840, %v5988
      %v5990 = vpop.f32.mrf.mxu0
      %5991 = vmatprep.mubr.f32.mxu0 0.0
      %5992 = vmatmul.mubr.f32.gmra.mxu0 %v464
      %v5993 = vpop.f32.mrf.mxu0
      %v5994 = vadd.f32 %v5840, %v5993
      %v5995 = vpop.f32.mrf.mxu0
      %5996 = vmatprep.mubr.f32.mxu0 0.0
      %5997 = vmatmul.mubr.f32.gmra.mxu0 %v467
      %v5998 = vpop.f32.mrf.mxu0
      %v5999 = vadd.f32 %v5840, %v5998
      %v6000 = vpop.f32.mrf.mxu0
      %6001 = vmatprep.mubr.f32.mxu0 0.0
      %6002 = vmatmul.mubr.f32.gmra.mxu0 %v470
      %v6003 = vpop.f32.mrf.mxu0
      %v6004 = vadd.f32 %v5840, %v6003
      %v6005 = vpop.f32.mrf.mxu0
      %6006 = vmatprep.mubr.f32.mxu0 0.0
      %6007 = vmatmul.mubr.f32.gmra.mxu0 %v473
      %v6008 = vpop.f32.mrf.mxu0
      %v6009 = vadd.f32 %v5840, %v6008
      %v6010 = vpop.f32.mrf.mxu0
      %6011 = vmatprep.mubr.f32.mxu0 0.0
      %6012 = vmatmul.mubr.f32.gmra.mxu0 %v476
      %v6013 = vpop.f32.mrf.mxu0
      %v6014 = vadd.f32 %v5840, %v6013
      %v6015 = vpop.f32.mrf.mxu0
      %6016 = vmatprep.mubr.f32.mxu0 0.0
      %6017 = vmatmul.mubr.f32.gmra.mxu0 %v479
      %v6018 = vpop.f32.mrf.mxu0
      %v6019 = vadd.f32 %v5840, %v6018
      %v6020 = vpop.f32.mrf.mxu0
      %6021 = vmatprep.mubr.f32.mxu0 0.0
      %6022 = vmatmul.mubr.f32.gmra.mxu0 %v482
      %v6023 = vpop.f32.mrf.mxu0
      %v6024 = vadd.f32 %v5840, %v6023
      %v6025 = vpop.f32.mrf.mxu0
      %6026 = vmatprep.mubr.f32.mxu0 0.0
      %6027 = vmatmul.mubr.f32.gmra.mxu0 %v485
      %v6028 = vpop.f32.mrf.mxu0
      %v6029 = vadd.f32 %v5840, %v6028
      %v6030 = vpop.f32.mrf.mxu0
      %6031 = vmatprep.mubr.f32.mxu0 0.0
      %6032 = vmatmul.mubr.f32.gmra.mxu0 %v488
      %v6033 = vpop.f32.mrf.mxu0
      %v6034 = vadd.f32 %v5840, %v6033
      %v6035 = vpop.f32.mrf.mxu0
      %6036 = vmatprep.mubr.f32.mxu0 0.0
      %6037 = vmatmul.mubr.f32.gmra.mxu0 %v491
      %v6038 = vpop.f32.mrf.mxu0
      %v6039 = vadd.f32 %v5840, %v6038
      %v6040 = vpop.f32.mrf.mxu0
      %6041 = vmatprep.mubr.f32.mxu0 0.0
      %6042 = vmatmul.mubr.f32.gmra.mxu0 %v494
      %v6043 = vpop.f32.mrf.mxu0
      %v6044 = vadd.f32 %v5840, %v6043
      %v6045 = vpop.f32.mrf.mxu0
      %6046 = vmatprep.mubr.f32.mxu0 0.0
      %6047 = vmatmul.mubr.f32.gmra.mxu0 %v497
      %v6048 = vpop.f32.mrf.mxu0
      %v6049 = vadd.f32 %v5840, %v6048
      %v6050 = vpop.f32.mrf.mxu0
      %6051 = vmatprep.mubr.f32.mxu0 0.0
      %6052 = vmatmul.mubr.f32.gmra.mxu0 %v500
      %v6053 = vpop.f32.mrf.mxu0
      %v6054 = vadd.f32 %v5840, %v6053
      %v6055 = vpop.f32.mrf.mxu0
      %6056 = vmatprep.mubr.f32.mxu0 0.0
      %6057 = vmatmul.mubr.f32.gmra.mxu0 %v503
      %v6058 = vpop.f32.mrf.mxu0
      %v6059 = vadd.f32 %v5840, %v6058
      %v6060 = vpop.f32.mrf.mxu0
      %6061 = vmatprep.mubr.f32.mxu0 0.0
      %6062 = vmatmul.mubr.f32.gmra.mxu0 %v506
      %v6063 = vpop.f32.mrf.mxu0
      %v6064 = vadd.f32 %v5840, %v6063
      %v6065 = vpop.f32.mrf.mxu0
      %6066 = vdwg.mxu0
      %s6067 = scalar_lea.vmem %s3, 64
      %v6068 = vld [vmem:[%s6067] sm:$0xff]
      %v6069 = vld [vmem:[%s6067 + $0x8] sm:$0xff]
      %v6070 = vld [vmem:[%s6067 + $0x10] sm:$0xff]
      %v6071 = vld [vmem:[%s6067 + $0x18] sm:$0xff]
      %s6072 = scalar_lea.vmem %s6, 2
      %v6073 = vld [vmem:[%s6072] sm:$0x1]
      %v6075 = vlaneseq
      %v6076 = vshrl.u32 %v6075, 7
      %v6077 = vsub.s32 0, %v6076
      %v6078 = vrot.slane %v6073, %v6077
      %6080 = vmatprep.subr.mxu0 0.0
      %6081 = vmatpush1.msra.mxu0 0.0
      %6082 = vmatprep.subr.mxu0 0.0
      %6083 = vmatpush1.msra.mxu0 0.0
      %6084 = vmatprep.subr.mxu0 0.0
      %6085 = vmatpush1.msra.mxu0 0.0
      %6086 = vmatprep.subr.mxu0 0.0
      %6087 = vmatpush1.msra.mxu0 0.0
      %6088 = vmatprep.subr.mxu0 0.0
      %6089 = vmatpush1.msra.mxu0 0.0
      %6090 = vmatprep.subr.mxu0 0.0
      %6091 = vmatpush1.msra.mxu0 0.0
      %6092 = vmatprep.subr.mxu0 0.0
      %6093 = vmatpush1.msra.mxu0 0.0
      %6094 = vmatprep.subr.mxu0 0.0
      %6095 = vmatpush1.msra.mxu0 0.0
      %6096 = vmatprep.subr.mxu0 0.0
      %6097 = vmatpush1.msra.mxu0 0.0
      %6098 = vmatprep.subr.mxu0 0.0
      %6099 = vmatpush1.msra.mxu0 0.0
      %6100 = vmatprep.subr.mxu0 0.0
      %6101 = vmatpush1.msra.mxu0 0.0
      %6102 = vmatprep.subr.mxu0 0.0
      %6103 = vmatpush1.msra.mxu0 0.0
      %6104 = vmatprep.subr.mxu0 0.0
      %6105 = vmatpush1.msra.mxu0 %v6071
      %6106 = vmatprep.subr.mxu0 0.0
      %6107 = vmatpush1.msra.mxu0 %v6070
      %6108 = vmatprep.subr.mxu0 0.0
      %6109 = vmatpush1.msra.mxu0 %v6069
      %6110 = vmatprep.subr.mxu0 0.0
      %6111 = vmatpush1.msra.mxu0 %v6068
      %6112 = vmatprep.subr.mxu0 0.0
      %6113 = vmatpush2.msra.mxu0 0.0
      %6114 = vmatprep.subr.mxu0 0.0
      %6115 = vmatpush2.msra.mxu0 0.0
      %6116 = vmatprep.subr.mxu0 0.0
      %6117 = vmatpush2.msra.mxu0 0.0
      %6118 = vmatprep.subr.mxu0 0.0
      %6119 = vmatpush2.msra.mxu0 0.0
      %6120 = vmatprep.subr.mxu0 0.0
      %6121 = vmatpush2.msra.mxu0 0.0
      %6122 = vmatprep.subr.mxu0 0.0
      %6123 = vmatpush2.msra.mxu0 0.0
      %6124 = vmatprep.subr.mxu0 0.0
      %6125 = vmatpush2.msra.mxu0 0.0
      %6126 = vmatprep.subr.mxu0 0.0
      %6127 = vmatpush2.msra.mxu0 0.0
      %6128 = vmatprep.subr.mxu0 0.0
      %6129 = vmatpush2.msra.mxu0 0.0
      %6130 = vmatprep.subr.mxu0 0.0
      %6131 = vmatpush2.msra.mxu0 0.0
      %6132 = vmatprep.subr.mxu0 0.0
      %6133 = vmatpush2.msra.mxu0 0.0
      %6134 = vmatprep.subr.mxu0 0.0
      %6135 = vmatpush2.msra.mxu0 0.0
      %6136 = vmatprep.subr.mxu0 0.0
      %6137 = vmatpush2.msra.mxu0 0.0
      %6138 = vmatprep.subr.mxu0 0.0
      %6139 = vmatpush2.msra.mxu0 0.0
      %6140 = vmatprep.subr.mxu0 0.0
      %6141 = vmatpush2.msra.mxu0 0.0
      %6142 = vmatprep.subr.mxu0 0.0
      %6143 = vmatpush2.msra.mxu0 0.0
      %6144 = vmatprep.mubr.f32.mxu0 0.0
      %6145 = vmatmul.mubr.f32.gmra.mxu0 %v413
      %v6146 = vpop.f32.mrf.mxu0
      %v6147 = vadd.f32 %v6078, %v6146
      %v6148 = vpop.f32.mrf.mxu0
      %6149 = vmatprep.mubr.f32.mxu0 0.0
      %6150 = vmatmul.mubr.f32.gmra.mxu0 %v416
      %v6151 = vpop.f32.mrf.mxu0
      %v6152 = vadd.f32 %v6078, %v6151
      %v6153 = vpop.f32.mrf.mxu0
      %6154 = vmatprep.mubr.f32.mxu0 0.0
      %6155 = vmatmul.mubr.f32.gmra.mxu0 %v419
      %v6156 = vpop.f32.mrf.mxu0
      %v6157 = vadd.f32 %v6078, %v6156
      %v6158 = vpop.f32.mrf.mxu0
      %6159 = vmatprep.mubr.f32.mxu0 0.0
      %6160 = vmatmul.mubr.f32.gmra.mxu0 %v422
      %v6161 = vpop.f32.mrf.mxu0
      %v6162 = vadd.f32 %v6078, %v6161
      %v6163 = vpop.f32.mrf.mxu0
      %6164 = vmatprep.mubr.f32.mxu0 0.0
      %6165 = vmatmul.mubr.f32.gmra.mxu0 %v425
      %v6166 = vpop.f32.mrf.mxu0
      %v6167 = vadd.f32 %v6078, %v6166
      %v6168 = vpop.f32.mrf.mxu0
      %6169 = vmatprep.mubr.f32.mxu0 0.0
      %6170 = vmatmul.mubr.f32.gmra.mxu0 %v428
      %v6171 = vpop.f32.mrf.mxu0
      %v6172 = vadd.f32 %v6078, %v6171
      %v6173 = vpop.f32.mrf.mxu0
      %6174 = vmatprep.mubr.f32.mxu0 0.0
      %6175 = vmatmul.mubr.f32.gmra.mxu0 %v431
      %v6176 = vpop.f32.mrf.mxu0
      %v6177 = vadd.f32 %v6078, %v6176
      %v6178 = vpop.f32.mrf.mxu0
      %6179 = vmatprep.mubr.f32.mxu0 0.0
      %6180 = vmatmul.mubr.f32.gmra.mxu0 %v434
      %v6181 = vpop.f32.mrf.mxu0
      %v6182 = vadd.f32 %v6078, %v6181
      %v6183 = vpop.f32.mrf.mxu0
      %6184 = vmatprep.mubr.f32.mxu0 0.0
      %6185 = vmatmul.mubr.f32.gmra.mxu0 %v437
      %v6186 = vpop.f32.mrf.mxu0
      %v6187 = vadd.f32 %v6078, %v6186
      %v6188 = vpop.f32.mrf.mxu0
      %6189 = vmatprep.mubr.f32.mxu0 0.0
      %6190 = vmatmul.mubr.f32.gmra.mxu0 %v440
      %v6191 = vpop.f32.mrf.mxu0
      %v6192 = vadd.f32 %v6078, %v6191
      %v6193 = vpop.f32.mrf.mxu0
      %6194 = vmatprep.mubr.f32.mxu0 0.0
      %6195 = vmatmul.mubr.f32.gmra.mxu0 %v443
      %v6196 = vpop.f32.mrf.mxu0
      %v6197 = vadd.f32 %v6078, %v6196
      %v6198 = vpop.f32.mrf.mxu0
      %6199 = vmatprep.mubr.f32.mxu0 0.0
      %6200 = vmatmul.mubr.f32.gmra.mxu0 %v446
      %v6201 = vpop.f32.mrf.mxu0
      %v6202 = vadd.f32 %v6078, %v6201
      %v6203 = vpop.f32.mrf.mxu0
      %6204 = vmatprep.mubr.f32.mxu0 0.0
      %6205 = vmatmul.mubr.f32.gmra.mxu0 %v449
      %v6206 = vpop.f32.mrf.mxu0
      %v6207 = vadd.f32 %v6078, %v6206
      %v6208 = vpop.f32.mrf.mxu0
      %6209 = vmatprep.mubr.f32.mxu0 0.0
      %6210 = vmatmul.mubr.f32.gmra.mxu0 %v452
      %v6211 = vpop.f32.mrf.mxu0
      %v6212 = vadd.f32 %v6078, %v6211
      %v6213 = vpop.f32.mrf.mxu0
      %6214 = vmatprep.mubr.f32.mxu0 0.0
      %6215 = vmatmul.mubr.f32.gmra.mxu0 %v455
      %v6216 = vpop.f32.mrf.mxu0
      %v6217 = vadd.f32 %v6078, %v6216
      %v6218 = vpop.f32.mrf.mxu0
      %6219 = vmatprep.mubr.f32.mxu0 0.0
      %6220 = vmatmul.mubr.f32.gmra.mxu0 %v458
      %v6221 = vpop.f32.mrf.mxu0
      %v6222 = vadd.f32 %v6078, %v6221
      %v6223 = vpop.f32.mrf.mxu0
      %6224 = vmatprep.mubr.f32.mxu0 0.0
      %6225 = vmatmul.mubr.f32.gmra.mxu0 %v461
      %v6226 = vpop.f32.mrf.mxu0
      %v6227 = vadd.f32 %v6078, %v6226
      %v6228 = vpop.f32.mrf.mxu0
      %6229 = vmatprep.mubr.f32.mxu0 0.0
      %6230 = vmatmul.mubr.f32.gmra.mxu0 %v464
      %v6231 = vpop.f32.mrf.mxu0
      %v6232 = vadd.f32 %v6078, %v6231
      %v6233 = vpop.f32.mrf.mxu0
      %6234 = vmatprep.mubr.f32.mxu0 0.0
      %6235 = vmatmul.mubr.f32.gmra.mxu0 %v467
      %v6236 = vpop.f32.mrf.mxu0
      %v6237 = vadd.f32 %v6078, %v6236
      %v6238 = vpop.f32.mrf.mxu0
      %6239 = vmatprep.mubr.f32.mxu0 0.0
      %6240 = vmatmul.mubr.f32.gmra.mxu0 %v470
      %v6241 = vpop.f32.mrf.mxu0
      %v6242 = vadd.f32 %v6078, %v6241
      %v6243 = vpop.f32.mrf.mxu0
      %6244 = vmatprep.mubr.f32.mxu0 0.0
      %6245 = vmatmul.mubr.f32.gmra.mxu0 %v473
      %v6246 = vpop.f32.mrf.mxu0
      %v6247 = vadd.f32 %v6078, %v6246
      %v6248 = vpop.f32.mrf.mxu0
      %6249 = vmatprep.mubr.f32.mxu0 0.0
      %6250 = vmatmul.mubr.f32.gmra.mxu0 %v476
      %v6251 = vpop.f32.mrf.mxu0
      %v6252 = vadd.f32 %v6078, %v6251
      %v6253 = vpop.f32.mrf.mxu0
      %6254 = vmatprep.mubr.f32.mxu0 0.0
      %6255 = vmatmul.mubr.f32.gmra.mxu0 %v479
      %v6256 = vpop.f32.mrf.mxu0
      %v6257 = vadd.f32 %v6078, %v6256
      %v6258 = vpop.f32.mrf.mxu0
      %6259 = vmatprep.mubr.f32.mxu0 0.0
      %6260 = vmatmul.mubr.f32.gmra.mxu0 %v482
      %v6261 = vpop.f32.mrf.mxu0
      %v6262 = vadd.f32 %v6078, %v6261
      %v6263 = vpop.f32.mrf.mxu0
      %6264 = vmatprep.mubr.f32.mxu0 0.0
      %6265 = vmatmul.mubr.f32.gmra.mxu0 %v485
      %v6266 = vpop.f32.mrf.mxu0
      %v6267 = vadd.f32 %v6078, %v6266
      %v6268 = vpop.f32.mrf.mxu0
      %6269 = vmatprep.mubr.f32.mxu0 0.0
      %6270 = vmatmul.mubr.f32.gmra.mxu0 %v488
      %v6271 = vpop.f32.mrf.mxu0
      %v6272 = vadd.f32 %v6078, %v6271
      %v6273 = vpop.f32.mrf.mxu0
      %6274 = vmatprep.mubr.f32.mxu0 0.0
      %6275 = vmatmul.mubr.f32.gmra.mxu0 %v491
      %v6276 = vpop.f32.mrf.mxu0
      %v6277 = vadd.f32 %v6078, %v6276
      %v6278 = vpop.f32.mrf.mxu0
      %6279 = vmatprep.mubr.f32.mxu0 0.0
      %6280 = vmatmul.mubr.f32.gmra.mxu0 %v494
      %v6281 = vpop.f32.mrf.mxu0
      %v6282 = vadd.f32 %v6078, %v6281
      %v6283 = vpop.f32.mrf.mxu0
      %6284 = vmatprep.mubr.f32.mxu0 0.0
      %6285 = vmatmul.mubr.f32.gmra.mxu0 %v497
      %v6286 = vpop.f32.mrf.mxu0
      %v6287 = vadd.f32 %v6078, %v6286
      %v6288 = vpop.f32.mrf.mxu0
      %6289 = vmatprep.mubr.f32.mxu0 0.0
      %6290 = vmatmul.mubr.f32.gmra.mxu0 %v500
      %v6291 = vpop.f32.mrf.mxu0
      %v6292 = vadd.f32 %v6078, %v6291
      %v6293 = vpop.f32.mrf.mxu0
      %6294 = vmatprep.mubr.f32.mxu0 0.0
      %6295 = vmatmul.mubr.f32.gmra.mxu0 %v503
      %v6296 = vpop.f32.mrf.mxu0
      %v6297 = vadd.f32 %v6078, %v6296
      %v6298 = vpop.f32.mrf.mxu0
      %6299 = vmatprep.mubr.f32.mxu0 0.0
      %6300 = vmatmul.mubr.f32.gmra.mxu0 %v506
      %v6301 = vpop.f32.mrf.mxu0
      %v6302 = vadd.f32 %v6078, %v6301
      %v6303 = vpop.f32.mrf.mxu0
      %6304 = vdwg.mxu0
      %s6305 = scalar_lea.vmem %s7, 512
      %v6306 = vld [vmem:[%s6305] sm:$0xff]
      %v6307 = vld [vmem:[%s6305 + $0x8] sm:$0xff]
      %v6308 = vld [vmem:[%s6305 + $0x10] sm:$0xff]
      %v6309 = vld [vmem:[%s6305 + $0x18] sm:$0xff]
      %v6310 = vld [vmem:[%s6305 + $0x20] sm:$0xff]
      %v6311 = vld [vmem:[%s6305 + $0x28] sm:$0xff]
      %v6312 = vld [vmem:[%s6305 + $0x30] sm:$0xff]
      %v6313 = vld [vmem:[%s6305 + $0x38] sm:$0xff]
      %v6314 = vld [vmem:[%s6305 + $0x40] sm:$0xff]
      %v6315 = vld [vmem:[%s6305 + $0x48] sm:$0xff]
      %v6316 = vld [vmem:[%s6305 + $0x50] sm:$0xff]
      %v6317 = vld [vmem:[%s6305 + $0x58] sm:$0xff]
      %v6318 = vld [vmem:[%s6305 + $0x60] sm:$0xff]
      %v6319 = vld [vmem:[%s6305 + $0x68] sm:$0xff]
      %v6320 = vld [vmem:[%s6305 + $0x70] sm:$0xff]
      %v6321 = vld [vmem:[%s6305 + $0x78] sm:$0xff]
      %v6322 = vld [vmem:[%s6305 + $0x80] sm:$0xff]
      %v6323 = vld [vmem:[%s6305 + $0x88] sm:$0xff]
      %v6324 = vld [vmem:[%s6305 + $0x90] sm:$0xff]
      %v6325 = vld [vmem:[%s6305 + $0x98] sm:$0xff]
      %v6326 = vld [vmem:[%s6305 + $0xa0] sm:$0xff]
      %v6327 = vld [vmem:[%s6305 + $0xa8] sm:$0xff]
      %v6328 = vld [vmem:[%s6305 + $0xb0] sm:$0xff]
      %v6329 = vld [vmem:[%s6305 + $0xb8] sm:$0xff]
      %v6330 = vld [vmem:[%s6305 + $0xc0] sm:$0xff]
      %v6331 = vld [vmem:[%s6305 + $0xc8] sm:$0xff]
      %v6332 = vld [vmem:[%s6305 + $0xd0] sm:$0xff]
      %v6333 = vld [vmem:[%s6305 + $0xd8] sm:$0xff]
      %v6334 = vld [vmem:[%s6305 + $0xe0] sm:$0xff]
      %v6335 = vld [vmem:[%s6305 + $0xe8] sm:$0xff]
      %v6336 = vld [vmem:[%s6305 + $0xf0] sm:$0xff]
      %v6337 = vld [vmem:[%s6305 + $0xf8] sm:$0xff]
      %v6339 = vsel %vm1237, %v5671, 0
      %v6342 = vsel %vm1237, %v5676, 0
      %v6345 = vsel %vm1237, %v5681, 0
      %v6348 = vsel %vm1237, %v5686, 0
      %v6351 = vsel %vm1237, %v5691, 0
      %v6354 = vsel %vm1237, %v5696, 0
      %v6357 = vsel %vm1237, %v5701, 0
      %v6360 = vsel %vm1237, %v5706, 0
      %v6363 = vsel %vm1237, %v5909, 0
      %v6366 = vsel %vm1237, %v5914, 0
      %v6369 = vsel %vm1237, %v5919, 0
      %v6372 = vsel %vm1237, %v5924, 0
      %v6375 = vsel %vm1237, %v5929, 0
      %v6378 = vsel %vm1237, %v5934, 0
      %v6381 = vsel %vm1237, %v5939, 0
      %v6384 = vsel %vm1237, %v5944, 0
      %6386 = vmatprep.subr.mxu0 0.0
      %6387 = vmatpush1.xpose.msra.mxu0 0.0
      %6388 = vmatprep.subr.mxu0 0.0
      %6389 = vmatpush1.xpose.msra.mxu0 0.0
      %6390 = vmatprep.subr.mxu0 0.0
      %6391 = vmatpush1.xpose.msra.mxu0 0.0
      %6392 = vmatprep.subr.mxu0 0.0
      %6393 = vmatpush1.xpose.msra.mxu0 0.0
      %6394 = vmatprep.subr.mxu0 0.0
      %6395 = vmatpush1.xpose.msra.mxu0 0.0
      %6396 = vmatprep.subr.mxu0 0.0
      %6397 = vmatpush1.xpose.msra.mxu0 0.0
      %6398 = vmatprep.subr.mxu0 0.0
      %6399 = vmatpush1.xpose.msra.mxu0 0.0
      %6400 = vmatprep.subr.mxu0 0.0
      %6401 = vmatpush1.xpose.msra.mxu0 0.0
      %6402 = vmatprep.subr.mxu0 0.0
      %6403 = vmatpush1.xpose.msra.mxu0 %v6384
      %6404 = vmatprep.subr.mxu0 0.0
      %6405 = vmatpush1.xpose.msra.mxu0 %v6381
      %6406 = vmatprep.subr.mxu0 0.0
      %6407 = vmatpush1.xpose.msra.mxu0 %v6378
      %6408 = vmatprep.subr.mxu0 0.0
      %6409 = vmatpush1.xpose.msra.mxu0 %v6375
      %6410 = vmatprep.subr.mxu0 0.0
      %6411 = vmatpush1.xpose.msra.mxu0 %v6372
      %6412 = vmatprep.subr.mxu0 0.0
      %6413 = vmatpush1.xpose.msra.mxu0 %v6369
      %6414 = vmatprep.subr.mxu0 0.0
      %6415 = vmatpush1.xpose.msra.mxu0 %v6366
      %6416 = vmatprep.subr.mxu0 0.0
      %6417 = vmatpush1.xpose.msra.mxu0 %v6363
      %6418 = vmatprep.subr.mxu0 0.0
      %6419 = vmatpush2.xpose.msra.mxu0 0.0
      %6420 = vmatprep.subr.mxu0 0.0
      %6421 = vmatpush2.xpose.msra.mxu0 0.0
      %6422 = vmatprep.subr.mxu0 0.0
      %6423 = vmatpush2.xpose.msra.mxu0 0.0
      %6424 = vmatprep.subr.mxu0 0.0
      %6425 = vmatpush2.xpose.msra.mxu0 0.0
      %6426 = vmatprep.subr.mxu0 0.0
      %6427 = vmatpush2.xpose.msra.mxu0 0.0
      %6428 = vmatprep.subr.mxu0 0.0
      %6429 = vmatpush2.xpose.msra.mxu0 0.0
      %6430 = vmatprep.subr.mxu0 0.0
      %6431 = vmatpush2.xpose.msra.mxu0 0.0
      %6432 = vmatprep.subr.mxu0 0.0
      %6433 = vmatpush2.xpose.msra.mxu0 0.0
      %6434 = vmatprep.subr.mxu0 0.0
      %6435 = vmatpush2.xpose.msra.mxu0 0.0
      %6436 = vmatprep.subr.mxu0 0.0
      %6437 = vmatpush2.xpose.msra.mxu0 0.0
      %6438 = vmatprep.subr.mxu0 0.0
      %6439 = vmatpush2.xpose.msra.mxu0 0.0
      %6440 = vmatprep.subr.mxu0 0.0
      %6441 = vmatpush2.xpose.msra.mxu0 0.0
      %6442 = vmatprep.subr.mxu0 0.0
      %6443 = vmatpush2.xpose.msra.mxu0 0.0
      %6444 = vmatprep.subr.mxu0 0.0
      %6445 = vmatpush2.xpose.msra.mxu0 0.0
      %6446 = vmatprep.subr.mxu0 0.0
      %6447 = vmatpush2.xpose.msra.mxu0 0.0
      %6448 = vmatprep.subr.mxu0 0.0
      %6449 = vmatpush2.xpose.msra.mxu0 0.0
      %6450 = vmatprep.mubr.f32.mxu0 0.0
      %6451 = vmatmul.mubr.f32.gmra.mxu0 %v6339
      %v6452 = vpop.f32.mrf.mxu0
      %v6453 = vadd.f32 %v6306, %v6452
      %v6454 = vpop.f32.mrf.mxu0
      %6455 = vmatprep.mubr.f32.mxu0 0.0
      %6456 = vmatmul.mubr.f32.gmra.mxu0 %v6342
      %v6457 = vpop.f32.mrf.mxu0
      %v6458 = vadd.f32 %v6307, %v6457
      %v6459 = vpop.f32.mrf.mxu0
      %6460 = vmatprep.mubr.f32.mxu0 0.0
      %6461 = vmatmul.mubr.f32.gmra.mxu0 %v6345
      %v6462 = vpop.f32.mrf.mxu0
      %v6463 = vadd.f32 %v6308, %v6462
      %v6464 = vpop.f32.mrf.mxu0
      %6465 = vmatprep.mubr.f32.mxu0 0.0
      %6466 = vmatmul.mubr.f32.gmra.mxu0 %v6348
      %v6467 = vpop.f32.mrf.mxu0
      %v6468 = vadd.f32 %v6309, %v6467
      %v6469 = vpop.f32.mrf.mxu0
      %6470 = vmatprep.mubr.f32.mxu0 0.0
      %6471 = vmatmul.mubr.f32.gmra.mxu0 %v6351
      %v6472 = vpop.f32.mrf.mxu0
      %v6473 = vadd.f32 %v6310, %v6472
      %v6474 = vpop.f32.mrf.mxu0
      %6475 = vmatprep.mubr.f32.mxu0 0.0
      %6476 = vmatmul.mubr.f32.gmra.mxu0 %v6354
      %v6477 = vpop.f32.mrf.mxu0
      %v6478 = vadd.f32 %v6311, %v6477
      %v6479 = vpop.f32.mrf.mxu0
      %6480 = vmatprep.mubr.f32.mxu0 0.0
      %6481 = vmatmul.mubr.f32.gmra.mxu0 %v6357
      %v6482 = vpop.f32.mrf.mxu0
      %v6483 = vadd.f32 %v6312, %v6482
      %v6484 = vpop.f32.mrf.mxu0
      %6485 = vmatprep.mubr.f32.mxu0 0.0
      %6486 = vmatmul.mubr.f32.gmra.mxu0 %v6360
      %v6487 = vpop.f32.mrf.mxu0
      %v6488 = vadd.f32 %v6313, %v6487
      %v6489 = vpop.f32.mrf.mxu0
      %6490 = vdwg.mxu0
      %v6492 = vsel %vm1237, %v5711, 0
      %v6495 = vsel %vm1237, %v5716, 0
      %v6498 = vsel %vm1237, %v5721, 0
      %v6501 = vsel %vm1237, %v5726, 0
      %v6504 = vsel %vm1237, %v5731, 0
      %v6507 = vsel %vm1237, %v5736, 0
      %v6510 = vsel %vm1237, %v5741, 0
      %v6513 = vsel %vm1237, %v5746, 0
      %v6516 = vsel %vm1237, %v5949, 0
      %v6519 = vsel %vm1237, %v5954, 0
      %v6522 = vsel %vm1237, %v5959, 0
      %v6525 = vsel %vm1237, %v5964, 0
      %v6528 = vsel %vm1237, %v5969, 0
      %v6531 = vsel %vm1237, %v5974, 0
      %v6534 = vsel %vm1237, %v5979, 0
      %v6537 = vsel %vm1237, %v5984, 0
      %6539 = vmatprep.subr.mxu0 0.0
      %6540 = vmatpush1.xpose.msra.mxu0 0.0
      %6541 = vmatprep.subr.mxu0 0.0
      %6542 = vmatpush1.xpose.msra.mxu0 0.0
      %6543 = vmatprep.subr.mxu0 0.0
      %6544 = vmatpush1.xpose.msra.mxu0 0.0
      %6545 = vmatprep.subr.mxu0 0.0
      %6546 = vmatpush1.xpose.msra.mxu0 0.0
      %6547 = vmatprep.subr.mxu0 0.0
      %6548 = vmatpush1.xpose.msra.mxu0 0.0
      %6549 = vmatprep.subr.mxu0 0.0
      %6550 = vmatpush1.xpose.msra.mxu0 0.0
      %6551 = vmatprep.subr.mxu0 0.0
      %6552 = vmatpush1.xpose.msra.mxu0 0.0
      %6553 = vmatprep.subr.mxu0 0.0
      %6554 = vmatpush1.xpose.msra.mxu0 0.0
      %6555 = vmatprep.subr.mxu0 0.0
      %6556 = vmatpush1.xpose.msra.mxu0 %v6537
      %6557 = vmatprep.subr.mxu0 0.0
      %6558 = vmatpush1.xpose.msra.mxu0 %v6534
      %6559 = vmatprep.subr.mxu0 0.0
      %6560 = vmatpush1.xpose.msra.mxu0 %v6531
      %6561 = vmatprep.subr.mxu0 0.0
      %6562 = vmatpush1.xpose.msra.mxu0 %v6528
      %6563 = vmatprep.subr.mxu0 0.0
      %6564 = vmatpush1.xpose.msra.mxu0 %v6525
      %6565 = vmatprep.subr.mxu0 0.0
      %6566 = vmatpush1.xpose.msra.mxu0 %v6522
      %6567 = vmatprep.subr.mxu0 0.0
      %6568 = vmatpush1.xpose.msra.mxu0 %v6519
      %6569 = vmatprep.subr.mxu0 0.0
      %6570 = vmatpush1.xpose.msra.mxu0 %v6516
      %6571 = vmatprep.subr.mxu0 0.0
      %6572 = vmatpush2.xpose.msra.mxu0 0.0
      %6573 = vmatprep.subr.mxu0 0.0
      %6574 = vmatpush2.xpose.msra.mxu0 0.0
      %6575 = vmatprep.subr.mxu0 0.0
      %6576 = vmatpush2.xpose.msra.mxu0 0.0
      %6577 = vmatprep.subr.mxu0 0.0
      %6578 = vmatpush2.xpose.msra.mxu0 0.0
      %6579 = vmatprep.subr.mxu0 0.0
      %6580 = vmatpush2.xpose.msra.mxu0 0.0
      %6581 = vmatprep.subr.mxu0 0.0
      %6582 = vmatpush2.xpose.msra.mxu0 0.0
      %6583 = vmatprep.subr.mxu0 0.0
      %6584 = vmatpush2.xpose.msra.mxu0 0.0
      %6585 = vmatprep.subr.mxu0 0.0
      %6586 = vmatpush2.xpose.msra.mxu0 0.0
      %6587 = vmatprep.subr.mxu0 0.0
      %6588 = vmatpush2.xpose.msra.mxu0 0.0
      %6589 = vmatprep.subr.mxu0 0.0
      %6590 = vmatpush2.xpose.msra.mxu0 0.0
      %6591 = vmatprep.subr.mxu0 0.0
      %6592 = vmatpush2.xpose.msra.mxu0 0.0
      %6593 = vmatprep.subr.mxu0 0.0
      %6594 = vmatpush2.xpose.msra.mxu0 0.0
      %6595 = vmatprep.subr.mxu0 0.0
      %6596 = vmatpush2.xpose.msra.mxu0 0.0
      %6597 = vmatprep.subr.mxu0 0.0
      %6598 = vmatpush2.xpose.msra.mxu0 0.0
      %6599 = vmatprep.subr.mxu0 0.0
      %6600 = vmatpush2.xpose.msra.mxu0 0.0
      %6601 = vmatprep.subr.mxu0 0.0
      %6602 = vmatpush2.xpose.msra.mxu0 0.0
      %6603 = vmatprep.mubr.f32.mxu0 0.0
      %6604 = vmatmul.mubr.f32.gmra.mxu0 %v6492
      %v6605 = vpop.f32.mrf.mxu0
      %v6606 = vadd.f32 %v6314, %v6605
      %v6607 = vpop.f32.mrf.mxu0
      %6608 = vmatprep.mubr.f32.mxu0 0.0
      %6609 = vmatmul.mubr.f32.gmra.mxu0 %v6495
      %v6610 = vpop.f32.mrf.mxu0
      %v6611 = vadd.f32 %v6315, %v6610
      %v6612 = vpop.f32.mrf.mxu0
      %6613 = vmatprep.mubr.f32.mxu0 0.0
      %6614 = vmatmul.mubr.f32.gmra.mxu0 %v6498
      %v6615 = vpop.f32.mrf.mxu0
      %v6616 = vadd.f32 %v6316, %v6615
      %v6617 = vpop.f32.mrf.mxu0
      %6618 = vmatprep.mubr.f32.mxu0 0.0
      %6619 = vmatmul.mubr.f32.gmra.mxu0 %v6501
      %v6620 = vpop.f32.mrf.mxu0
      %v6621 = vadd.f32 %v6317, %v6620
      %v6622 = vpop.f32.mrf.mxu0
      %6623 = vmatprep.mubr.f32.mxu0 0.0
      %6624 = vmatmul.mubr.f32.gmra.mxu0 %v6504
      %v6625 = vpop.f32.mrf.mxu0
      %v6626 = vadd.f32 %v6318, %v6625
      %v6627 = vpop.f32.mrf.mxu0
      %6628 = vmatprep.mubr.f32.mxu0 0.0
      %6629 = vmatmul.mubr.f32.gmra.mxu0 %v6507
      %v6630 = vpop.f32.mrf.mxu0
      %v6631 = vadd.f32 %v6319, %v6630
      %v6632 = vpop.f32.mrf.mxu0
      %6633 = vmatprep.mubr.f32.mxu0 0.0
      %6634 = vmatmul.mubr.f32.gmra.mxu0 %v6510
      %v6635 = vpop.f32.mrf.mxu0
      %v6636 = vadd.f32 %v6320, %v6635
      %v6637 = vpop.f32.mrf.mxu0
      %6638 = vmatprep.mubr.f32.mxu0 0.0
      %6639 = vmatmul.mubr.f32.gmra.mxu0 %v6513
      %v6640 = vpop.f32.mrf.mxu0
      %v6641 = vadd.f32 %v6321, %v6640
      %v6642 = vpop.f32.mrf.mxu0
      %6643 = vdwg.mxu0
      %v6645 = vsel %vm1237, %v5751, 0
      %v6648 = vsel %vm1237, %v5756, 0
      %v6651 = vsel %vm1237, %v5761, 0
      %v6654 = vsel %vm1237, %v5766, 0
      %v6657 = vsel %vm1237, %v5771, 0
      %v6660 = vsel %vm1237, %v5776, 0
      %v6663 = vsel %vm1237, %v5781, 0
      %v6666 = vsel %vm1237, %v5786, 0
      %v6669 = vsel %vm1237, %v5989, 0
      %v6672 = vsel %vm1237, %v5994, 0
      %v6675 = vsel %vm1237, %v5999, 0
      %v6678 = vsel %vm1237, %v6004, 0
      %v6681 = vsel %vm1237, %v6009, 0
      %v6684 = vsel %vm1237, %v6014, 0
      %v6687 = vsel %vm1237, %v6019, 0
      %v6690 = vsel %vm1237, %v6024, 0
      %6692 = vmatprep.subr.mxu0 0.0
      %6693 = vmatpush1.xpose.msra.mxu0 0.0
      %6694 = vmatprep.subr.mxu0 0.0
      %6695 = vmatpush1.xpose.msra.mxu0 0.0
      %6696 = vmatprep.subr.mxu0 0.0
      %6697 = vmatpush1.xpose.msra.mxu0 0.0
      %6698 = vmatprep.subr.mxu0 0.0
      %6699 = vmatpush1.xpose.msra.mxu0 0.0
      %6700 = vmatprep.subr.mxu0 0.0
      %6701 = vmatpush1.xpose.msra.mxu0 0.0
      %6702 = vmatprep.subr.mxu0 0.0
      %6703 = vmatpush1.xpose.msra.mxu0 0.0
      %6704 = vmatprep.subr.mxu0 0.0
      %6705 = vmatpush1.xpose.msra.mxu0 0.0
      %6706 = vmatprep.subr.mxu0 0.0
      %6707 = vmatpush1.xpose.msra.mxu0 0.0
      %6708 = vmatprep.subr.mxu0 0.0
      %6709 = vmatpush1.xpose.msra.mxu0 %v6690
      %6710 = vmatprep.subr.mxu0 0.0
      %6711 = vmatpush1.xpose.msra.mxu0 %v6687
      %6712 = vmatprep.subr.mxu0 0.0
      %6713 = vmatpush1.xpose.msra.mxu0 %v6684
      %6714 = vmatprep.subr.mxu0 0.0
      %6715 = vmatpush1.xpose.msra.mxu0 %v6681
      %6716 = vmatprep.subr.mxu0 0.0
      %6717 = vmatpush1.xpose.msra.mxu0 %v6678
      %6718 = vmatprep.subr.mxu0 0.0
      %6719 = vmatpush1.xpose.msra.mxu0 %v6675
      %6720 = vmatprep.subr.mxu0 0.0
      %6721 = vmatpush1.xpose.msra.mxu0 %v6672
      %6722 = vmatprep.subr.mxu0 0.0
      %6723 = vmatpush1.xpose.msra.mxu0 %v6669
      %6724 = vmatprep.subr.mxu0 0.0
      %6725 = vmatpush2.xpose.msra.mxu0 0.0
      %6726 = vmatprep.subr.mxu0 0.0
      %6727 = vmatpush2.xpose.msra.mxu0 0.0
      %6728 = vmatprep.subr.mxu0 0.0
      %6729 = vmatpush2.xpose.msra.mxu0 0.0
      %6730 = vmatprep.subr.mxu0 0.0
      %6731 = vmatpush2.xpose.msra.mxu0 0.0
      %6732 = vmatprep.subr.mxu0 0.0
      %6733 = vmatpush2.xpose.msra.mxu0 0.0
      %6734 = vmatprep.subr.mxu0 0.0
      %6735 = vmatpush2.xpose.msra.mxu0 0.0
      %6736 = vmatprep.subr.mxu0 0.0
      %6737 = vmatpush2.xpose.msra.mxu0 0.0
      %6738 = vmatprep.subr.mxu0 0.0
      %6739 = vmatpush2.xpose.msra.mxu0 0.0
      %6740 = vmatprep.subr.mxu0 0.0
      %6741 = vmatpush2.xpose.msra.mxu0 0.0
      %6742 = vmatprep.subr.mxu0 0.0
      %6743 = vmatpush2.xpose.msra.mxu0 0.0
      %6744 = vmatprep.subr.mxu0 0.0
      %6745 = vmatpush2.xpose.msra.mxu0 0.0
      %6746 = vmatprep.subr.mxu0 0.0
      %6747 = vmatpush2.xpose.msra.mxu0 0.0
      %6748 = vmatprep.subr.mxu0 0.0
      %6749 = vmatpush2.xpose.msra.mxu0 0.0
      %6750 = vmatprep.subr.mxu0 0.0
      %6751 = vmatpush2.xpose.msra.mxu0 0.0
      %6752 = vmatprep.subr.mxu0 0.0
      %6753 = vmatpush2.xpose.msra.mxu0 0.0
      %6754 = vmatprep.subr.mxu0 0.0
      %6755 = vmatpush2.xpose.msra.mxu0 0.0
      %6756 = vmatprep.mubr.f32.mxu0 0.0
      %6757 = vmatmul.mubr.f32.gmra.mxu0 %v6645
      %v6758 = vpop.f32.mrf.mxu0
      %v6759 = vadd.f32 %v6322, %v6758
      %v6760 = vpop.f32.mrf.mxu0
      %6761 = vmatprep.mubr.f32.mxu0 0.0
      %6762 = vmatmul.mubr.f32.gmra.mxu0 %v6648
      %v6763 = vpop.f32.mrf.mxu0
      %v6764 = vadd.f32 %v6323, %v6763
      %v6765 = vpop.f32.mrf.mxu0
      %6766 = vmatprep.mubr.f32.mxu0 0.0
      %6767 = vmatmul.mubr.f32.gmra.mxu0 %v6651
      %v6768 = vpop.f32.mrf.mxu0
      %v6769 = vadd.f32 %v6324, %v6768
      %v6770 = vpop.f32.mrf.mxu0
      %6771 = vmatprep.mubr.f32.mxu0 0.0
      %6772 = vmatmul.mubr.f32.gmra.mxu0 %v6654
      %v6773 = vpop.f32.mrf.mxu0
      %v6774 = vadd.f32 %v6325, %v6773
      %v6775 = vpop.f32.mrf.mxu0
      %6776 = vmatprep.mubr.f32.mxu0 0.0
      %6777 = vmatmul.mubr.f32.gmra.mxu0 %v6657
      %v6778 = vpop.f32.mrf.mxu0
      %v6779 = vadd.f32 %v6326, %v6778
      %v6780 = vpop.f32.mrf.mxu0
      %6781 = vmatprep.mubr.f32.mxu0 0.0
      %6782 = vmatmul.mubr.f32.gmra.mxu0 %v6660
      %v6783 = vpop.f32.mrf.mxu0
      %v6784 = vadd.f32 %v6327, %v6783
      %v6785 = vpop.f32.mrf.mxu0
      %6786 = vmatprep.mubr.f32.mxu0 0.0
      %6787 = vmatmul.mubr.f32.gmra.mxu0 %v6663
      %v6788 = vpop.f32.mrf.mxu0
      %v6789 = vadd.f32 %v6328, %v6788
      %v6790 = vpop.f32.mrf.mxu0
      %6791 = vmatprep.mubr.f32.mxu0 0.0
      %6792 = vmatmul.mubr.f32.gmra.mxu0 %v6666
      %v6793 = vpop.f32.mrf.mxu0
      %v6794 = vadd.f32 %v6329, %v6793
      %v6795 = vpop.f32.mrf.mxu0
      %6796 = vdwg.mxu0
      %v6798 = vsel %vm1237, %v5791, 0
      %v6801 = vsel %vm1237, %v5796, 0
      %v6804 = vsel %vm1237, %v5801, 0
      %v6807 = vsel %vm1237, %v5806, 0
      %v6810 = vsel %vm1237, %v5811, 0
      %v6813 = vsel %vm1237, %v5816, 0
      %v6816 = vsel %vm1237, %v5821, 0
      %v6819 = vsel %vm1237, %v5826, 0
      %v6822 = vsel %vm1237, %v6029, 0
      %v6825 = vsel %vm1237, %v6034, 0
      %v6828 = vsel %vm1237, %v6039, 0
      %v6831 = vsel %vm1237, %v6044, 0
      %v6834 = vsel %vm1237, %v6049, 0
      %v6837 = vsel %vm1237, %v6054, 0
      %v6840 = vsel %vm1237, %v6059, 0
      %v6843 = vsel %vm1237, %v6064, 0
      %6845 = vmatprep.subr.mxu0 0.0
      %6846 = vmatpush1.xpose.msra.mxu0 0.0
      %6847 = vmatprep.subr.mxu0 0.0
      %6848 = vmatpush1.xpose.msra.mxu0 0.0
      %6849 = vmatprep.subr.mxu0 0.0
      %6850 = vmatpush1.xpose.msra.mxu0 0.0
      %6851 = vmatprep.subr.mxu0 0.0
      %6852 = vmatpush1.xpose.msra.mxu0 0.0
      %6853 = vmatprep.subr.mxu0 0.0
      %6854 = vmatpush1.xpose.msra.mxu0 0.0
      %6855 = vmatprep.subr.mxu0 0.0
      %6856 = vmatpush1.xpose.msra.mxu0 0.0
      %6857 = vmatprep.subr.mxu0 0.0
      %6858 = vmatpush1.xpose.msra.mxu0 0.0
      %6859 = vmatprep.subr.mxu0 0.0
      %6860 = vmatpush1.xpose.msra.mxu0 0.0
      %6861 = vmatprep.subr.mxu0 0.0
      %6862 = vmatpush1.xpose.msra.mxu0 %v6843
      %6863 = vmatprep.subr.mxu0 0.0
      %6864 = vmatpush1.xpose.msra.mxu0 %v6840
      %6865 = vmatprep.subr.mxu0 0.0
      %6866 = vmatpush1.xpose.msra.mxu0 %v6837
      %6867 = vmatprep.subr.mxu0 0.0
      %6868 = vmatpush1.xpose.msra.mxu0 %v6834
      %6869 = vmatprep.subr.mxu0 0.0
      %6870 = vmatpush1.xpose.msra.mxu0 %v6831
      %6871 = vmatprep.subr.mxu0 0.0
      %6872 = vmatpush1.xpose.msra.mxu0 %v6828
      %6873 = vmatprep.subr.mxu0 0.0
      %6874 = vmatpush1.xpose.msra.mxu0 %v6825
      %6875 = vmatprep.subr.mxu0 0.0
      %6876 = vmatpush1.xpose.msra.mxu0 %v6822
      %6877 = vmatprep.subr.mxu0 0.0
      %6878 = vmatpush2.xpose.msra.mxu0 0.0
      %6879 = vmatprep.subr.mxu0 0.0
      %6880 = vmatpush2.xpose.msra.mxu0 0.0
      %6881 = vmatprep.subr.mxu0 0.0
      %6882 = vmatpush2.xpose.msra.mxu0 0.0
      %6883 = vmatprep.subr.mxu0 0.0
      %6884 = vmatpush2.xpose.msra.mxu0 0.0
      %6885 = vmatprep.subr.mxu0 0.0
      %6886 = vmatpush2.xpose.msra.mxu0 0.0
      %6887 = vmatprep.subr.mxu0 0.0
      %6888 = vmatpush2.xpose.msra.mxu0 0.0
      %6889 = vmatprep.subr.mxu0 0.0
      %6890 = vmatpush2.xpose.msra.mxu0 0.0
      %6891 = vmatprep.subr.mxu0 0.0
      %6892 = vmatpush2.xpose.msra.mxu0 0.0
      %6893 = vmatprep.subr.mxu0 0.0
      %6894 = vmatpush2.xpose.msra.mxu0 0.0
      %6895 = vmatprep.subr.mxu0 0.0
      %6896 = vmatpush2.xpose.msra.mxu0 0.0
      %6897 = vmatprep.subr.mxu0 0.0
      %6898 = vmatpush2.xpose.msra.mxu0 0.0
      %6899 = vmatprep.subr.mxu0 0.0
      %6900 = vmatpush2.xpose.msra.mxu0 0.0
      %6901 = vmatprep.subr.mxu0 0.0
      %6902 = vmatpush2.xpose.msra.mxu0 0.0
      %6903 = vmatprep.subr.mxu0 0.0
      %6904 = vmatpush2.xpose.msra.mxu0 0.0
      %6905 = vmatprep.subr.mxu0 0.0
      %6906 = vmatpush2.xpose.msra.mxu0 0.0
      %6907 = vmatprep.subr.mxu0 0.0
      %6908 = vmatpush2.xpose.msra.mxu0 0.0
      %6909 = vmatprep.mubr.f32.mxu0 0.0
      %6910 = vmatmul.mubr.f32.gmra.mxu0 %v6798
      %v6911 = vpop.f32.mrf.mxu0
      %v6912 = vadd.f32 %v6330, %v6911
      %v6913 = vpop.f32.mrf.mxu0
      %6914 = vmatprep.mubr.f32.mxu0 0.0
      %6915 = vmatmul.mubr.f32.gmra.mxu0 %v6801
      %v6916 = vpop.f32.mrf.mxu0
      %v6917 = vadd.f32 %v6331, %v6916
      %v6918 = vpop.f32.mrf.mxu0
      %6919 = vmatprep.mubr.f32.mxu0 0.0
      %6920 = vmatmul.mubr.f32.gmra.mxu0 %v6804
      %v6921 = vpop.f32.mrf.mxu0
      %v6922 = vadd.f32 %v6332, %v6921
      %v6923 = vpop.f32.mrf.mxu0
      %6924 = vmatprep.mubr.f32.mxu0 0.0
      %6925 = vmatmul.mubr.f32.gmra.mxu0 %v6807
      %v6926 = vpop.f32.mrf.mxu0
      %v6927 = vadd.f32 %v6333, %v6926
      %v6928 = vpop.f32.mrf.mxu0
      %6929 = vmatprep.mubr.f32.mxu0 0.0
      %6930 = vmatmul.mubr.f32.gmra.mxu0 %v6810
      %v6931 = vpop.f32.mrf.mxu0
      %v6932 = vadd.f32 %v6334, %v6931
      %v6933 = vpop.f32.mrf.mxu0
      %6934 = vmatprep.mubr.f32.mxu0 0.0
      %6935 = vmatmul.mubr.f32.gmra.mxu0 %v6813
      %v6936 = vpop.f32.mrf.mxu0
      %v6937 = vadd.f32 %v6335, %v6936
      %v6938 = vpop.f32.mrf.mxu0
      %6939 = vmatprep.mubr.f32.mxu0 0.0
      %6940 = vmatmul.mubr.f32.gmra.mxu0 %v6816
      %v6941 = vpop.f32.mrf.mxu0
      %v6942 = vadd.f32 %v6336, %v6941
      %v6943 = vpop.f32.mrf.mxu0
      %6944 = vmatprep.mubr.f32.mxu0 0.0
      %6945 = vmatmul.mubr.f32.gmra.mxu0 %v6819
      %v6946 = vpop.f32.mrf.mxu0
      %v6947 = vadd.f32 %v6337, %v6946
      %v6948 = vpop.f32.mrf.mxu0
      %6949 = vdwg.mxu0
      %v6950 = vsel %vm1850, %v6453, -inf
      %6951 = vmax.xlane.f32.xlu0 %v6950
      %v6952 = vpop.xlane.xlu0 %6951
      %v6953 = vsel %vm1850, %v6458, -inf
      %6954 = vmax.xlane.f32.xlu0 %v6953
      %v6955 = vpop.xlane.xlu0 %6954
      %v6956 = vsel %vm1850, %v6463, -inf
      %6957 = vmax.xlane.f32.xlu0 %v6956
      %v6958 = vpop.xlane.xlu0 %6957
      %v6959 = vsel %vm1850, %v6468, -inf
      %6960 = vmax.xlane.f32.xlu0 %v6959
      %v6961 = vpop.xlane.xlu0 %6960
      %v6962 = vsel %vm1850, %v6473, -inf
      %6963 = vmax.xlane.f32.xlu0 %v6962
      %v6964 = vpop.xlane.xlu0 %6963
      %v6965 = vsel %vm1850, %v6478, -inf
      %6966 = vmax.xlane.f32.xlu0 %v6965
      %v6967 = vpop.xlane.xlu0 %6966
      %v6968 = vsel %vm1850, %v6483, -inf
      %6969 = vmax.xlane.f32.xlu0 %v6968
      %v6970 = vpop.xlane.xlu0 %6969
      %v6971 = vsel %vm1850, %v6488, -inf
      %6972 = vmax.xlane.f32.xlu0 %v6971
      %v6973 = vpop.xlane.xlu0 %6972
      %v6974 = vsel %vm1850, %v6606, -inf
      %6975 = vmax.xlane.f32.xlu0 %v6974
      %v6976 = vpop.xlane.xlu0 %6975
      %v6977 = vsel %vm1850, %v6611, -inf
      %6978 = vmax.xlane.f32.xlu0 %v6977
      %v6979 = vpop.xlane.xlu0 %6978
      %v6980 = vsel %vm1850, %v6616, -inf
      %6981 = vmax.xlane.f32.xlu0 %v6980
      %v6982 = vpop.xlane.xlu0 %6981
      %v6983 = vsel %vm1850, %v6621, -inf
      %6984 = vmax.xlane.f32.xlu0 %v6983
      %v6985 = vpop.xlane.xlu0 %6984
      %v6986 = vsel %vm1850, %v6626, -inf
      %6987 = vmax.xlane.f32.xlu0 %v6986
      %v6988 = vpop.xlane.xlu0 %6987
      %v6989 = vsel %vm1850, %v6631, -inf
      %6990 = vmax.xlane.f32.xlu0 %v6989
      %v6991 = vpop.xlane.xlu0 %6990
      %v6992 = vsel %vm1850, %v6636, -inf
      %6993 = vmax.xlane.f32.xlu0 %v6992
      %v6994 = vpop.xlane.xlu0 %6993
      %v6995 = vsel %vm1850, %v6641, -inf
      %6996 = vmax.xlane.f32.xlu0 %v6995
      %v6997 = vpop.xlane.xlu0 %6996
      %v6998 = vsel %vm1850, %v6759, -inf
      %6999 = vmax.xlane.f32.xlu0 %v6998
      %v7000 = vpop.xlane.xlu0 %6999
      %v7001 = vsel %vm1850, %v6764, -inf
      %7002 = vmax.xlane.f32.xlu0 %v7001
      %v7003 = vpop.xlane.xlu0 %7002
      %v7004 = vsel %vm1850, %v6769, -inf
      %7005 = vmax.xlane.f32.xlu0 %v7004
      %v7006 = vpop.xlane.xlu0 %7005
      %v7007 = vsel %vm1850, %v6774, -inf
      %7008 = vmax.xlane.f32.xlu0 %v7007
      %v7009 = vpop.xlane.xlu0 %7008
      %v7010 = vsel %vm1850, %v6779, -inf
      %7011 = vmax.xlane.f32.xlu0 %v7010
      %v7012 = vpop.xlane.xlu0 %7011
      %v7013 = vsel %vm1850, %v6784, -inf
      %7014 = vmax.xlane.f32.xlu0 %v7013
      %v7015 = vpop.xlane.xlu0 %7014
      %v7016 = vsel %vm1850, %v6789, -inf
      %7017 = vmax.xlane.f32.xlu0 %v7016
      %v7018 = vpop.xlane.xlu0 %7017
      %v7019 = vsel %vm1850, %v6794, -inf
      %7020 = vmax.xlane.f32.xlu0 %v7019
      %v7021 = vpop.xlane.xlu0 %7020
      %v7022 = vsel %vm1850, %v6912, -inf
      %7023 = vmax.xlane.f32.xlu0 %v7022
      %v7024 = vpop.xlane.xlu0 %7023
      %v7025 = vsel %vm1850, %v6917, -inf
      %7026 = vmax.xlane.f32.xlu0 %v7025
      %v7027 = vpop.xlane.xlu0 %7026
      %v7028 = vsel %vm1850, %v6922, -inf
      %7029 = vmax.xlane.f32.xlu0 %v7028
      %v7030 = vpop.xlane.xlu0 %7029
      %v7031 = vsel %vm1850, %v6927, -inf
      %7032 = vmax.xlane.f32.xlu0 %v7031
      %v7033 = vpop.xlane.xlu0 %7032
      %v7034 = vsel %vm1850, %v6932, -inf
      %7035 = vmax.xlane.f32.xlu0 %v7034
      %v7036 = vpop.xlane.xlu0 %7035
      %v7037 = vsel %vm1850, %v6937, -inf
      %7038 = vmax.xlane.f32.xlu0 %v7037
      %v7039 = vpop.xlane.xlu0 %7038
      %v7040 = vsel %vm1850, %v6942, -inf
      %7041 = vmax.xlane.f32.xlu0 %v7040
      %v7042 = vpop.xlane.xlu0 %7041
      %v7043 = vsel %vm1850, %v6947, -inf
      %7044 = vmax.xlane.f32.xlu0 %v7043
      %v7045 = vpop.xlane.xlu0 %7044
      %v7046 = vsub.f32 %v6453, %v6952
      %v7047 = vsub.f32 %v6458, %v6955
      %v7048 = vsub.f32 %v6463, %v6958
      %v7049 = vsub.f32 %v6468, %v6961
      %v7050 = vsub.f32 %v6473, %v6964
      %v7051 = vsub.f32 %v6478, %v6967
      %v7052 = vsub.f32 %v6483, %v6970
      %v7053 = vsub.f32 %v6488, %v6973
      %v7054 = vsub.f32 %v6606, %v6976
      %v7055 = vsub.f32 %v6611, %v6979
      %v7056 = vsub.f32 %v6616, %v6982
      %v7057 = vsub.f32 %v6621, %v6985
      %v7058 = vsub.f32 %v6626, %v6988
      %v7059 = vsub.f32 %v6631, %v6991
      %v7060 = vsub.f32 %v6636, %v6994
      %v7061 = vsub.f32 %v6641, %v6997
      %v7062 = vsub.f32 %v6759, %v7000
      %v7063 = vsub.f32 %v6764, %v7003
      %v7064 = vsub.f32 %v6769, %v7006
      %v7065 = vsub.f32 %v6774, %v7009
      %v7066 = vsub.f32 %v6779, %v7012
      %v7067 = vsub.f32 %v6784, %v7015
      %v7068 = vsub.f32 %v6789, %v7018
      %v7069 = vsub.f32 %v6794, %v7021
      %v7070 = vsub.f32 %v6912, %v7024
      %v7071 = vsub.f32 %v6917, %v7027
      %v7072 = vsub.f32 %v6922, %v7030
      %v7073 = vsub.f32 %v6927, %v7033
      %v7074 = vsub.f32 %v6932, %v7036
      %v7075 = vsub.f32 %v6937, %v7039
      %v7076 = vsub.f32 %v6942, %v7042
      %v7077 = vsub.f32 %v6947, %v7045
      %v7078 = vmul.f32 %v7046, 1.442695
      %v7079 = vpow.pop %v7078
      %v7080 = vmul.f32 %v7047, 1.442695
      %v7081 = vpow.pop %v7080
      %v7082 = vmul.f32 %v7048, 1.442695
      %v7083 = vpow.pop %v7082
      %v7084 = vmul.f32 %v7049, 1.442695
      %v7085 = vpow.pop %v7084
      %v7086 = vmul.f32 %v7050, 1.442695
      %v7087 = vpow.pop %v7086
      %v7088 = vmul.f32 %v7051, 1.442695
      %v7089 = vpow.pop %v7088
      %v7090 = vmul.f32 %v7052, 1.442695
      %v7091 = vpow.pop %v7090
      %v7092 = vmul.f32 %v7053, 1.442695
      %v7093 = vpow.pop %v7092
      %v7094 = vmul.f32 %v7054, 1.442695
      %v7095 = vpow.pop %v7094
      %v7096 = vmul.f32 %v7055, 1.442695
      %v7097 = vpow.pop %v7096
      %v7098 = vmul.f32 %v7056, 1.442695
      %v7099 = vpow.pop %v7098
      %v7100 = vmul.f32 %v7057, 1.442695
      %v7101 = vpow.pop %v7100
      %v7102 = vmul.f32 %v7058, 1.442695
      %v7103 = vpow.pop %v7102
      %v7104 = vmul.f32 %v7059, 1.442695
      %v7105 = vpow.pop %v7104
      %v7106 = vmul.f32 %v7060, 1.442695
      %v7107 = vpow.pop %v7106
      %v7108 = vmul.f32 %v7061, 1.442695
      %v7109 = vpow.pop %v7108
      %v7110 = vmul.f32 %v7062, 1.442695
      %v7111 = vpow.pop %v7110
      %v7112 = vmul.f32 %v7063, 1.442695
      %v7113 = vpow.pop %v7112
      %v7114 = vmul.f32 %v7064, 1.442695
      %v7115 = vpow.pop %v7114
      %v7116 = vmul.f32 %v7065, 1.442695
      %v7117 = vpow.pop %v7116
      %v7118 = vmul.f32 %v7066, 1.442695
      %v7119 = vpow.pop %v7118
      %v7120 = vmul.f32 %v7067, 1.442695
      %v7121 = vpow.pop %v7120
      %v7122 = vmul.f32 %v7068, 1.442695
      %v7123 = vpow.pop %v7122
      %v7124 = vmul.f32 %v7069, 1.442695
      %v7125 = vpow.pop %v7124
      %v7126 = vmul.f32 %v7070, 1.442695
      %v7127 = vpow.pop %v7126
      %v7128 = vmul.f32 %v7071, 1.442695
      %v7129 = vpow.pop %v7128
      %v7130 = vmul.f32 %v7072, 1.442695
      %v7131 = vpow.pop %v7130
      %v7132 = vmul.f32 %v7073, 1.442695
      %v7133 = vpow.pop %v7132
      %v7134 = vmul.f32 %v7074, 1.442695
      %v7135 = vpow.pop %v7134
      %v7136 = vmul.f32 %v7075, 1.442695
      %v7137 = vpow.pop %v7136
      %v7138 = vmul.f32 %v7076, 1.442695
      %v7139 = vpow.pop %v7138
      %v7140 = vmul.f32 %v7077, 1.442695
      %v7141 = vpow.pop %v7140
      %v7142 = vsel %vm1850, %v7079, 0.0
      %7143 = vadd.xlane.f32.xlu0 %v7142
      %v7144 = vpop.xlane.xlu0 %7143
      %v7145 = vsel %vm1850, %v7081, 0.0
      %7146 = vadd.xlane.f32.xlu0 %v7145
      %v7147 = vpop.xlane.xlu0 %7146
      %v7148 = vsel %vm1850, %v7083, 0.0
      %7149 = vadd.xlane.f32.xlu0 %v7148
      %v7150 = vpop.xlane.xlu0 %7149
      %v7151 = vsel %vm1850, %v7085, 0.0
      %7152 = vadd.xlane.f32.xlu0 %v7151
      %v7153 = vpop.xlane.xlu0 %7152
      %v7154 = vsel %vm1850, %v7087, 0.0
      %7155 = vadd.xlane.f32.xlu0 %v7154
      %v7156 = vpop.xlane.xlu0 %7155
      %v7157 = vsel %vm1850, %v7089, 0.0
      %7158 = vadd.xlane.f32.xlu0 %v7157
      %v7159 = vpop.xlane.xlu0 %7158
      %v7160 = vsel %vm1850, %v7091, 0.0
      %7161 = vadd.xlane.f32.xlu0 %v7160
      %v7162 = vpop.xlane.xlu0 %7161
      %v7163 = vsel %vm1850, %v7093, 0.0
      %7164 = vadd.xlane.f32.xlu0 %v7163
      %v7165 = vpop.xlane.xlu0 %7164
      %v7166 = vsel %vm1850, %v7095, 0.0
      %7167 = vadd.xlane.f32.xlu0 %v7166
      %v7168 = vpop.xlane.xlu0 %7167
      %v7169 = vsel %vm1850, %v7097, 0.0
      %7170 = vadd.xlane.f32.xlu0 %v7169
      %v7171 = vpop.xlane.xlu0 %7170
      %v7172 = vsel %vm1850, %v7099, 0.0
      %7173 = vadd.xlane.f32.xlu0 %v7172
      %v7174 = vpop.xlane.xlu0 %7173
      %v7175 = vsel %vm1850, %v7101, 0.0
      %7176 = vadd.xlane.f32.xlu0 %v7175
      %v7177 = vpop.xlane.xlu0 %7176
      %v7178 = vsel %vm1850, %v7103, 0.0
      %7179 = vadd.xlane.f32.xlu0 %v7178
      %v7180 = vpop.xlane.xlu0 %7179
      %v7181 = vsel %vm1850, %v7105, 0.0
      %7182 = vadd.xlane.f32.xlu0 %v7181
      %v7183 = vpop.xlane.xlu0 %7182
      %v7184 = vsel %vm1850, %v7107, 0.0
      %7185 = vadd.xlane.f32.xlu0 %v7184
      %v7186 = vpop.xlane.xlu0 %7185
      %v7187 = vsel %vm1850, %v7109, 0.0
      %7188 = vadd.xlane.f32.xlu0 %v7187
      %v7189 = vpop.xlane.xlu0 %7188
      %v7190 = vsel %vm1850, %v7111, 0.0
      %7191 = vadd.xlane.f32.xlu0 %v7190
      %v7192 = vpop.xlane.xlu0 %7191
      %v7193 = vsel %vm1850, %v7113, 0.0
      %7194 = vadd.xlane.f32.xlu0 %v7193
      %v7195 = vpop.xlane.xlu0 %7194
      %v7196 = vsel %vm1850, %v7115, 0.0
      %7197 = vadd.xlane.f32.xlu0 %v7196
      %v7198 = vpop.xlane.xlu0 %7197
      %v7199 = vsel %vm1850, %v7117, 0.0
      %7200 = vadd.xlane.f32.xlu0 %v7199
      %v7201 = vpop.xlane.xlu0 %7200
      %v7202 = vsel %vm1850, %v7119, 0.0
      %7203 = vadd.xlane.f32.xlu0 %v7202
      %v7204 = vpop.xlane.xlu0 %7203
      %v7205 = vsel %vm1850, %v7121, 0.0
      %7206 = vadd.xlane.f32.xlu0 %v7205
      %v7207 = vpop.xlane.xlu0 %7206
      %v7208 = vsel %vm1850, %v7123, 0.0
      %7209 = vadd.xlane.f32.xlu0 %v7208
      %v7210 = vpop.xlane.xlu0 %7209
      %v7211 = vsel %vm1850, %v7125, 0.0
      %7212 = vadd.xlane.f32.xlu0 %v7211
      %v7213 = vpop.xlane.xlu0 %7212
      %v7214 = vsel %vm1850, %v7127, 0.0
      %7215 = vadd.xlane.f32.xlu0 %v7214
      %v7216 = vpop.xlane.xlu0 %7215
      %v7217 = vsel %vm1850, %v7129, 0.0
      %7218 = vadd.xlane.f32.xlu0 %v7217
      %v7219 = vpop.xlane.xlu0 %7218
      %v7220 = vsel %vm1850, %v7131, 0.0
      %7221 = vadd.xlane.f32.xlu0 %v7220
      %v7222 = vpop.xlane.xlu0 %7221
      %v7223 = vsel %vm1850, %v7133, 0.0
      %7224 = vadd.xlane.f32.xlu0 %v7223
      %v7225 = vpop.xlane.xlu0 %7224
      %v7226 = vsel %vm1850, %v7135, 0.0
      %7227 = vadd.xlane.f32.xlu0 %v7226
      %v7228 = vpop.xlane.xlu0 %7227
      %v7229 = vsel %vm1850, %v7137, 0.0
      %7230 = vadd.xlane.f32.xlu0 %v7229
      %v7231 = vpop.xlane.xlu0 %7230
      %v7232 = vsel %vm1850, %v7139, 0.0
      %7233 = vadd.xlane.f32.xlu0 %v7232
      %v7234 = vpop.xlane.xlu0 %7233
      %v7235 = vsel %vm1850, %v7141, 0.0
      %7236 = vadd.xlane.f32.xlu0 %v7235
      %v7237 = vpop.xlane.xlu0 %7236
      %v7238 = vrcp.pop %v7144
      %v7239 = vrcp.pop %v7147
      %v7240 = vrcp.pop %v7150
      %v7241 = vrcp.pop %v7153
      %v7242 = vrcp.pop %v7156
      %v7243 = vrcp.pop %v7159
      %v7244 = vrcp.pop %v7162
      %v7245 = vrcp.pop %v7165
      %v7246 = vrcp.pop %v7168
      %v7247 = vrcp.pop %v7171
      %v7248 = vrcp.pop %v7174
      %v7249 = vrcp.pop %v7177
      %v7250 = vrcp.pop %v7180
      %v7251 = vrcp.pop %v7183
      %v7252 = vrcp.pop %v7186
      %v7253 = vrcp.pop %v7189
      %v7254 = vrcp.pop %v7192
      %v7255 = vrcp.pop %v7195
      %v7256 = vrcp.pop %v7198
      %v7257 = vrcp.pop %v7201
      %v7258 = vrcp.pop %v7204
      %v7259 = vrcp.pop %v7207
      %v7260 = vrcp.pop %v7210
      %v7261 = vrcp.pop %v7213
      %v7262 = vrcp.pop %v7216
      %v7263 = vrcp.pop %v7219
      %v7264 = vrcp.pop %v7222
      %v7265 = vrcp.pop %v7225
      %v7266 = vrcp.pop %v7228
      %v7267 = vrcp.pop %v7231
      %v7268 = vrcp.pop %v7234
      %v7269 = vrcp.pop %v7237
      %v7270 = vmul.f32 %v7079, %v7238
      %v7271 = vmul.f32 %v7081, %v7239
      %v7272 = vmul.f32 %v7083, %v7240
      %v7273 = vmul.f32 %v7085, %v7241
      %v7274 = vmul.f32 %v7087, %v7242
      %v7275 = vmul.f32 %v7089, %v7243
      %v7276 = vmul.f32 %v7091, %v7244
      %v7277 = vmul.f32 %v7093, %v7245
      %v7278 = vmul.f32 %v7095, %v7246
      %v7279 = vmul.f32 %v7097, %v7247
      %v7280 = vmul.f32 %v7099, %v7248
      %v7281 = vmul.f32 %v7101, %v7249
      %v7282 = vmul.f32 %v7103, %v7250
      %v7283 = vmul.f32 %v7105, %v7251
      %v7284 = vmul.f32 %v7107, %v7252
      %v7285 = vmul.f32 %v7109, %v7253
      %v7286 = vmul.f32 %v7111, %v7254
      %v7287 = vmul.f32 %v7113, %v7255
      %v7288 = vmul.f32 %v7115, %v7256
      %v7289 = vmul.f32 %v7117, %v7257
      %v7290 = vmul.f32 %v7119, %v7258
      %v7291 = vmul.f32 %v7121, %v7259
      %v7292 = vmul.f32 %v7123, %v7260
      %v7293 = vmul.f32 %v7125, %v7261
      %v7294 = vmul.f32 %v7127, %v7262
      %v7295 = vmul.f32 %v7129, %v7263
      %v7296 = vmul.f32 %v7131, %v7264
      %v7297 = vmul.f32 %v7133, %v7265
      %v7298 = vmul.f32 %v7135, %v7266
      %v7299 = vmul.f32 %v7137, %v7267
      %v7300 = vmul.f32 %v7139, %v7268
      %v7301 = vmul.f32 %v7141, %v7269
      %v7303 = vsel %vm1850, %v7270, 0
      %v7306 = vsel %vm1850, %v7271, 0
      %v7309 = vsel %vm1850, %v7272, 0
      %v7312 = vsel %vm1850, %v7273, 0
      %v7315 = vsel %vm1850, %v7274, 0
      %v7318 = vsel %vm1850, %v7275, 0
      %v7321 = vsel %vm1850, %v7276, 0
      %v7324 = vsel %vm1850, %v7277, 0
      %7326 = vmatprep.subr.mxu0 0.0
      %7327 = vmatpush1.msra.mxu0 0.0
      %7328 = vmatprep.subr.mxu0 0.0
      %7329 = vmatpush1.msra.mxu0 0.0
      %7330 = vmatprep.subr.mxu0 0.0
      %7331 = vmatpush1.msra.mxu0 0.0
      %7332 = vmatprep.subr.mxu0 0.0
      %7333 = vmatpush1.msra.mxu0 0.0
      %7334 = vmatprep.subr.mxu0 0.0
      %7335 = vmatpush1.msra.mxu0 0.0
      %7336 = vmatprep.subr.mxu0 0.0
      %7337 = vmatpush1.msra.mxu0 0.0
      %7338 = vmatprep.subr.mxu0 0.0
      %7339 = vmatpush1.msra.mxu0 0.0
      %7340 = vmatprep.subr.mxu0 0.0
      %7341 = vmatpush1.msra.mxu0 0.0
      %7342 = vmatprep.subr.mxu0 0.0
      %7343 = vmatpush1.msra.mxu0 %v6182
      %7344 = vmatprep.subr.mxu0 0.0
      %7345 = vmatpush1.msra.mxu0 %v6177
      %7346 = vmatprep.subr.mxu0 0.0
      %7347 = vmatpush1.msra.mxu0 %v6172
      %7348 = vmatprep.subr.mxu0 0.0
      %7349 = vmatpush1.msra.mxu0 %v6167
      %7350 = vmatprep.subr.mxu0 0.0
      %7351 = vmatpush1.msra.mxu0 %v6162
      %7352 = vmatprep.subr.mxu0 0.0
      %7353 = vmatpush1.msra.mxu0 %v6157
      %7354 = vmatprep.subr.mxu0 0.0
      %7355 = vmatpush1.msra.mxu0 %v6152
      %7356 = vmatprep.subr.mxu0 0.0
      %7357 = vmatpush1.msra.mxu0 %v6147
      %7358 = vmatprep.subr.mxu0 0.0
      %7359 = vmatpush2.msra.mxu0 0.0
      %7360 = vmatprep.subr.mxu0 0.0
      %7361 = vmatpush2.msra.mxu0 0.0
      %7362 = vmatprep.subr.mxu0 0.0
      %7363 = vmatpush2.msra.mxu0 0.0
      %7364 = vmatprep.subr.mxu0 0.0
      %7365 = vmatpush2.msra.mxu0 0.0
      %7366 = vmatprep.subr.mxu0 0.0
      %7367 = vmatpush2.msra.mxu0 0.0
      %7368 = vmatprep.subr.mxu0 0.0
      %7369 = vmatpush2.msra.mxu0 0.0
      %7370 = vmatprep.subr.mxu0 0.0
      %7371 = vmatpush2.msra.mxu0 0.0
      %7372 = vmatprep.subr.mxu0 0.0
      %7373 = vmatpush2.msra.mxu0 0.0
      %7374 = vmatprep.subr.mxu0 0.0
      %7375 = vmatpush2.msra.mxu0 0.0
      %7376 = vmatprep.subr.mxu0 0.0
      %7377 = vmatpush2.msra.mxu0 0.0
      %7378 = vmatprep.subr.mxu0 0.0
      %7379 = vmatpush2.msra.mxu0 0.0
      %7380 = vmatprep.subr.mxu0 0.0
      %7381 = vmatpush2.msra.mxu0 0.0
      %7382 = vmatprep.subr.mxu0 0.0
      %7383 = vmatpush2.msra.mxu0 0.0
      %7384 = vmatprep.subr.mxu0 0.0
      %7385 = vmatpush2.msra.mxu0 0.0
      %7386 = vmatprep.subr.mxu0 0.0
      %7387 = vmatpush2.msra.mxu0 0.0
      %7388 = vmatprep.subr.mxu0 0.0
      %7389 = vmatpush2.msra.mxu0 0.0
      %7390 = vmatprep.mubr.f32.mxu0 0.0
      %7391 = vmatmul.mubr.f32.gmra.mxu0 %v7303
      %v7392 = vpop.f32.mrf.mxu0
      %v7393 = vadd.f32 0.0, %v7392
      %v7394 = vpop.f32.mrf.mxu0
      %7395 = vmatprep.mubr.f32.mxu0 0.0
      %7396 = vmatmul.mubr.f32.gmra.mxu0 %v7306
      %v7397 = vpop.f32.mrf.mxu0
      %v7398 = vadd.f32 0.0, %v7397
      %v7399 = vpop.f32.mrf.mxu0
      %7400 = vmatprep.mubr.f32.mxu0 0.0
      %7401 = vmatmul.mubr.f32.gmra.mxu0 %v7309
      %v7402 = vpop.f32.mrf.mxu0
      %v7403 = vadd.f32 0.0, %v7402
      %v7404 = vpop.f32.mrf.mxu0
      %7405 = vmatprep.mubr.f32.mxu0 0.0
      %7406 = vmatmul.mubr.f32.gmra.mxu0 %v7312
      %v7407 = vpop.f32.mrf.mxu0
      %v7408 = vadd.f32 0.0, %v7407
      %v7409 = vpop.f32.mrf.mxu0
      %7410 = vmatprep.mubr.f32.mxu0 0.0
      %7411 = vmatmul.mubr.f32.gmra.mxu0 %v7315
      %v7412 = vpop.f32.mrf.mxu0
      %v7413 = vadd.f32 0.0, %v7412
      %v7414 = vpop.f32.mrf.mxu0
      %7415 = vmatprep.mubr.f32.mxu0 0.0
      %7416 = vmatmul.mubr.f32.gmra.mxu0 %v7318
      %v7417 = vpop.f32.mrf.mxu0
      %v7418 = vadd.f32 0.0, %v7417
      %v7419 = vpop.f32.mrf.mxu0
      %7420 = vmatprep.mubr.f32.mxu0 0.0
      %7421 = vmatmul.mubr.f32.gmra.mxu0 %v7321
      %v7422 = vpop.f32.mrf.mxu0
      %v7423 = vadd.f32 0.0, %v7422
      %v7424 = vpop.f32.mrf.mxu0
      %7425 = vmatprep.mubr.f32.mxu0 0.0
      %7426 = vmatmul.mubr.f32.gmra.mxu0 %v7324
      %v7427 = vpop.f32.mrf.mxu0
      %v7428 = vadd.f32 0.0, %v7427
      %v7429 = vpop.f32.mrf.mxu0
      %7430 = vdwg.mxu0
      %v7432 = vsel %vm1850, %v7278, 0
      %v7435 = vsel %vm1850, %v7279, 0
      %v7438 = vsel %vm1850, %v7280, 0
      %v7441 = vsel %vm1850, %v7281, 0
      %v7444 = vsel %vm1850, %v7282, 0
      %v7447 = vsel %vm1850, %v7283, 0
      %v7450 = vsel %vm1850, %v7284, 0
      %v7453 = vsel %vm1850, %v7285, 0
      %7455 = vmatprep.subr.mxu0 0.0
      %7456 = vmatpush1.msra.mxu0 0.0
      %7457 = vmatprep.subr.mxu0 0.0
      %7458 = vmatpush1.msra.mxu0 0.0
      %7459 = vmatprep.subr.mxu0 0.0
      %7460 = vmatpush1.msra.mxu0 0.0
      %7461 = vmatprep.subr.mxu0 0.0
      %7462 = vmatpush1.msra.mxu0 0.0
      %7463 = vmatprep.subr.mxu0 0.0
      %7464 = vmatpush1.msra.mxu0 0.0
      %7465 = vmatprep.subr.mxu0 0.0
      %7466 = vmatpush1.msra.mxu0 0.0
      %7467 = vmatprep.subr.mxu0 0.0
      %7468 = vmatpush1.msra.mxu0 0.0
      %7469 = vmatprep.subr.mxu0 0.0
      %7470 = vmatpush1.msra.mxu0 0.0
      %7471 = vmatprep.subr.mxu0 0.0
      %7472 = vmatpush1.msra.mxu0 %v6222
      %7473 = vmatprep.subr.mxu0 0.0
      %7474 = vmatpush1.msra.mxu0 %v6217
      %7475 = vmatprep.subr.mxu0 0.0
      %7476 = vmatpush1.msra.mxu0 %v6212
      %7477 = vmatprep.subr.mxu0 0.0
      %7478 = vmatpush1.msra.mxu0 %v6207
      %7479 = vmatprep.subr.mxu0 0.0
      %7480 = vmatpush1.msra.mxu0 %v6202
      %7481 = vmatprep.subr.mxu0 0.0
      %7482 = vmatpush1.msra.mxu0 %v6197
      %7483 = vmatprep.subr.mxu0 0.0
      %7484 = vmatpush1.msra.mxu0 %v6192
      %7485 = vmatprep.subr.mxu0 0.0
      %7486 = vmatpush1.msra.mxu0 %v6187
      %7487 = vmatprep.subr.mxu0 0.0
      %7488 = vmatpush2.msra.mxu0 0.0
      %7489 = vmatprep.subr.mxu0 0.0
      %7490 = vmatpush2.msra.mxu0 0.0
      %7491 = vmatprep.subr.mxu0 0.0
      %7492 = vmatpush2.msra.mxu0 0.0
      %7493 = vmatprep.subr.mxu0 0.0
      %7494 = vmatpush2.msra.mxu0 0.0
      %7495 = vmatprep.subr.mxu0 0.0
      %7496 = vmatpush2.msra.mxu0 0.0
      %7497 = vmatprep.subr.mxu0 0.0
      %7498 = vmatpush2.msra.mxu0 0.0
      %7499 = vmatprep.subr.mxu0 0.0
      %7500 = vmatpush2.msra.mxu0 0.0
      %7501 = vmatprep.subr.mxu0 0.0
      %7502 = vmatpush2.msra.mxu0 0.0
      %7503 = vmatprep.subr.mxu0 0.0
      %7504 = vmatpush2.msra.mxu0 0.0
      %7505 = vmatprep.subr.mxu0 0.0
      %7506 = vmatpush2.msra.mxu0 0.0
      %7507 = vmatprep.subr.mxu0 0.0
      %7508 = vmatpush2.msra.mxu0 0.0
      %7509 = vmatprep.subr.mxu0 0.0
      %7510 = vmatpush2.msra.mxu0 0.0
      %7511 = vmatprep.subr.mxu0 0.0
      %7512 = vmatpush2.msra.mxu0 0.0
      %7513 = vmatprep.subr.mxu0 0.0
      %7514 = vmatpush2.msra.mxu0 0.0
      %7515 = vmatprep.subr.mxu0 0.0
      %7516 = vmatpush2.msra.mxu0 0.0
      %7517 = vmatprep.subr.mxu0 0.0
      %7518 = vmatpush2.msra.mxu0 0.0
      %7519 = vmatprep.mubr.f32.mxu0 0.0
      %7520 = vmatmul.mubr.f32.gmra.mxu0 %v7432
      %v7521 = vpop.f32.mrf.mxu0
      %v7522 = vadd.f32 0.0, %v7521
      %v7523 = vpop.f32.mrf.mxu0
      %7524 = vmatprep.mubr.f32.mxu0 0.0
      %7525 = vmatmul.mubr.f32.gmra.mxu0 %v7435
      %v7526 = vpop.f32.mrf.mxu0
      %v7527 = vadd.f32 0.0, %v7526
      %v7528 = vpop.f32.mrf.mxu0
      %7529 = vmatprep.mubr.f32.mxu0 0.0
      %7530 = vmatmul.mubr.f32.gmra.mxu0 %v7438
      %v7531 = vpop.f32.mrf.mxu0
      %v7532 = vadd.f32 0.0, %v7531
      %v7533 = vpop.f32.mrf.mxu0
      %7534 = vmatprep.mubr.f32.mxu0 0.0
      %7535 = vmatmul.mubr.f32.gmra.mxu0 %v7441
      %v7536 = vpop.f32.mrf.mxu0
      %v7537 = vadd.f32 0.0, %v7536
      %v7538 = vpop.f32.mrf.mxu0
      %7539 = vmatprep.mubr.f32.mxu0 0.0
      %7540 = vmatmul.mubr.f32.gmra.mxu0 %v7444
      %v7541 = vpop.f32.mrf.mxu0
      %v7542 = vadd.f32 0.0, %v7541
      %v7543 = vpop.f32.mrf.mxu0
      %7544 = vmatprep.mubr.f32.mxu0 0.0
      %7545 = vmatmul.mubr.f32.gmra.mxu0 %v7447
      %v7546 = vpop.f32.mrf.mxu0
      %v7547 = vadd.f32 0.0, %v7546
      %v7548 = vpop.f32.mrf.mxu0
      %7549 = vmatprep.mubr.f32.mxu0 0.0
      %7550 = vmatmul.mubr.f32.gmra.mxu0 %v7450
      %v7551 = vpop.f32.mrf.mxu0
      %v7552 = vadd.f32 0.0, %v7551
      %v7553 = vpop.f32.mrf.mxu0
      %7554 = vmatprep.mubr.f32.mxu0 0.0
      %7555 = vmatmul.mubr.f32.gmra.mxu0 %v7453
      %v7556 = vpop.f32.mrf.mxu0
      %v7557 = vadd.f32 0.0, %v7556
      %v7558 = vpop.f32.mrf.mxu0
      %7559 = vdwg.mxu0
      %v7561 = vsel %vm1850, %v7286, 0
      %v7564 = vsel %vm1850, %v7287, 0
      %v7567 = vsel %vm1850, %v7288, 0
      %v7570 = vsel %vm1850, %v7289, 0
      %v7573 = vsel %vm1850, %v7290, 0
      %v7576 = vsel %vm1850, %v7291, 0
      %v7579 = vsel %vm1850, %v7292, 0
      %v7582 = vsel %vm1850, %v7293, 0
      %7584 = vmatprep.subr.mxu0 0.0
      %7585 = vmatpush1.msra.mxu0 0.0
      %7586 = vmatprep.subr.mxu0 0.0
      %7587 = vmatpush1.msra.mxu0 0.0
      %7588 = vmatprep.subr.mxu0 0.0
      %7589 = vmatpush1.msra.mxu0 0.0
      %7590 = vmatprep.subr.mxu0 0.0
      %7591 = vmatpush1.msra.mxu0 0.0
      %7592 = vmatprep.subr.mxu0 0.0
      %7593 = vmatpush1.msra.mxu0 0.0
      %7594 = vmatprep.subr.mxu0 0.0
      %7595 = vmatpush1.msra.mxu0 0.0
      %7596 = vmatprep.subr.mxu0 0.0
      %7597 = vmatpush1.msra.mxu0 0.0
      %7598 = vmatprep.subr.mxu0 0.0
      %7599 = vmatpush1.msra.mxu0 0.0
      %7600 = vmatprep.subr.mxu0 0.0
      %7601 = vmatpush1.msra.mxu0 %v6262
      %7602 = vmatprep.subr.mxu0 0.0
      %7603 = vmatpush1.msra.mxu0 %v6257
      %7604 = vmatprep.subr.mxu0 0.0
      %7605 = vmatpush1.msra.mxu0 %v6252
      %7606 = vmatprep.subr.mxu0 0.0
      %7607 = vmatpush1.msra.mxu0 %v6247
      %7608 = vmatprep.subr.mxu0 0.0
      %7609 = vmatpush1.msra.mxu0 %v6242
      %7610 = vmatprep.subr.mxu0 0.0
      %7611 = vmatpush1.msra.mxu0 %v6237
      %7612 = vmatprep.subr.mxu0 0.0
      %7613 = vmatpush1.msra.mxu0 %v6232
      %7614 = vmatprep.subr.mxu0 0.0
      %7615 = vmatpush1.msra.mxu0 %v6227
      %7616 = vmatprep.subr.mxu0 0.0
      %7617 = vmatpush2.msra.mxu0 0.0
      %7618 = vmatprep.subr.mxu0 0.0
      %7619 = vmatpush2.msra.mxu0 0.0
      %7620 = vmatprep.subr.mxu0 0.0
      %7621 = vmatpush2.msra.mxu0 0.0
      %7622 = vmatprep.subr.mxu0 0.0
      %7623 = vmatpush2.msra.mxu0 0.0
      %7624 = vmatprep.subr.mxu0 0.0
      %7625 = vmatpush2.msra.mxu0 0.0
      %7626 = vmatprep.subr.mxu0 0.0
      %7627 = vmatpush2.msra.mxu0 0.0
      %7628 = vmatprep.subr.mxu0 0.0
      %7629 = vmatpush2.msra.mxu0 0.0
      %7630 = vmatprep.subr.mxu0 0.0
      %7631 = vmatpush2.msra.mxu0 0.0
      %7632 = vmatprep.subr.mxu0 0.0
      %7633 = vmatpush2.msra.mxu0 0.0
      %7634 = vmatprep.subr.mxu0 0.0
      %7635 = vmatpush2.msra.mxu0 0.0
      %7636 = vmatprep.subr.mxu0 0.0
      %7637 = vmatpush2.msra.mxu0 0.0
      %7638 = vmatprep.subr.mxu0 0.0
      %7639 = vmatpush2.msra.mxu0 0.0
      %7640 = vmatprep.subr.mxu0 0.0
      %7641 = vmatpush2.msra.mxu0 0.0
      %7642 = vmatprep.subr.mxu0 0.0
      %7643 = vmatpush2.msra.mxu0 0.0
      %7644 = vmatprep.subr.mxu0 0.0
      %7645 = vmatpush2.msra.mxu0 0.0
      %7646 = vmatprep.subr.mxu0 0.0
      %7647 = vmatpush2.msra.mxu0 0.0
      %7648 = vmatprep.mubr.f32.mxu0 0.0
      %7649 = vmatmul.mubr.f32.gmra.mxu0 %v7561
      %v7650 = vpop.f32.mrf.mxu0
      %v7651 = vadd.f32 0.0, %v7650
      %v7652 = vpop.f32.mrf.mxu0
      %7653 = vmatprep.mubr.f32.mxu0 0.0
      %7654 = vmatmul.mubr.f32.gmra.mxu0 %v7564
      %v7655 = vpop.f32.mrf.mxu0
      %v7656 = vadd.f32 0.0, %v7655
      %v7657 = vpop.f32.mrf.mxu0
      %7658 = vmatprep.mubr.f32.mxu0 0.0
      %7659 = vmatmul.mubr.f32.gmra.mxu0 %v7567
      %v7660 = vpop.f32.mrf.mxu0
      %v7661 = vadd.f32 0.0, %v7660
      %v7662 = vpop.f32.mrf.mxu0
      %7663 = vmatprep.mubr.f32.mxu0 0.0
      %7664 = vmatmul.mubr.f32.gmra.mxu0 %v7570
      %v7665 = vpop.f32.mrf.mxu0
      %v7666 = vadd.f32 0.0, %v7665
      %v7667 = vpop.f32.mrf.mxu0
      %7668 = vmatprep.mubr.f32.mxu0 0.0
      %7669 = vmatmul.mubr.f32.gmra.mxu0 %v7573
      %v7670 = vpop.f32.mrf.mxu0
      %v7671 = vadd.f32 0.0, %v7670
      %v7672 = vpop.f32.mrf.mxu0
      %7673 = vmatprep.mubr.f32.mxu0 0.0
      %7674 = vmatmul.mubr.f32.gmra.mxu0 %v7576
      %v7675 = vpop.f32.mrf.mxu0
      %v7676 = vadd.f32 0.0, %v7675
      %v7677 = vpop.f32.mrf.mxu0
      %7678 = vmatprep.mubr.f32.mxu0 0.0
      %7679 = vmatmul.mubr.f32.gmra.mxu0 %v7579
      %v7680 = vpop.f32.mrf.mxu0
      %v7681 = vadd.f32 0.0, %v7680
      %v7682 = vpop.f32.mrf.mxu0
      %7683 = vmatprep.mubr.f32.mxu0 0.0
      %7684 = vmatmul.mubr.f32.gmra.mxu0 %v7582
      %v7685 = vpop.f32.mrf.mxu0
      %v7686 = vadd.f32 0.0, %v7685
      %v7687 = vpop.f32.mrf.mxu0
      %7688 = vdwg.mxu0
      %v7690 = vsel %vm1850, %v7294, 0
      %v7693 = vsel %vm1850, %v7295, 0
      %v7696 = vsel %vm1850, %v7296, 0
      %v7699 = vsel %vm1850, %v7297, 0
      %v7702 = vsel %vm1850, %v7298, 0
      %v7705 = vsel %vm1850, %v7299, 0
      %v7708 = vsel %vm1850, %v7300, 0
      %v7711 = vsel %vm1850, %v7301, 0
      %7713 = vmatprep.subr.mxu0 0.0
      %7714 = vmatpush1.msra.mxu0 0.0
      %7715 = vmatprep.subr.mxu0 0.0
      %7716 = vmatpush1.msra.mxu0 0.0
      %7717 = vmatprep.subr.mxu0 0.0
      %7718 = vmatpush1.msra.mxu0 0.0
      %7719 = vmatprep.subr.mxu0 0.0
      %7720 = vmatpush1.msra.mxu0 0.0
      %7721 = vmatprep.subr.mxu0 0.0
      %7722 = vmatpush1.msra.mxu0 0.0
      %7723 = vmatprep.subr.mxu0 0.0
      %7724 = vmatpush1.msra.mxu0 0.0
      %7725 = vmatprep.subr.mxu0 0.0
      %7726 = vmatpush1.msra.mxu0 0.0
      %7727 = vmatprep.subr.mxu0 0.0
      %7728 = vmatpush1.msra.mxu0 0.0
      %7729 = vmatprep.subr.mxu0 0.0
      %7730 = vmatpush1.msra.mxu0 %v6302
      %7731 = vmatprep.subr.mxu0 0.0
      %7732 = vmatpush1.msra.mxu0 %v6297
      %7733 = vmatprep.subr.mxu0 0.0
      %7734 = vmatpush1.msra.mxu0 %v6292
      %7735 = vmatprep.subr.mxu0 0.0
      %7736 = vmatpush1.msra.mxu0 %v6287
      %7737 = vmatprep.subr.mxu0 0.0
      %7738 = vmatpush1.msra.mxu0 %v6282
      %7739 = vmatprep.subr.mxu0 0.0
      %7740 = vmatpush1.msra.mxu0 %v6277
      %7741 = vmatprep.subr.mxu0 0.0
      %7742 = vmatpush1.msra.mxu0 %v6272
      %7743 = vmatprep.subr.mxu0 0.0
      %7744 = vmatpush1.msra.mxu0 %v6267
      %7745 = vmatprep.subr.mxu0 0.0
      %7746 = vmatpush2.msra.mxu0 0.0
      %7747 = vmatprep.subr.mxu0 0.0
      %7748 = vmatpush2.msra.mxu0 0.0
      %7749 = vmatprep.subr.mxu0 0.0
      %7750 = vmatpush2.msra.mxu0 0.0
      %7751 = vmatprep.subr.mxu0 0.0
      %7752 = vmatpush2.msra.mxu0 0.0
      %7753 = vmatprep.subr.mxu0 0.0
      %7754 = vmatpush2.msra.mxu0 0.0
      %7755 = vmatprep.subr.mxu0 0.0
      %7756 = vmatpush2.msra.mxu0 0.0
      %7757 = vmatprep.subr.mxu0 0.0
      %7758 = vmatpush2.msra.mxu0 0.0
      %7759 = vmatprep.subr.mxu0 0.0
      %7760 = vmatpush2.msra.mxu0 0.0
      %7761 = vmatprep.subr.mxu0 0.0
      %7762 = vmatpush2.msra.mxu0 0.0
      %7763 = vmatprep.subr.mxu0 0.0
      %7764 = vmatpush2.msra.mxu0 0.0
      %7765 = vmatprep.subr.mxu0 0.0
      %7766 = vmatpush2.msra.mxu0 0.0
      %7767 = vmatprep.subr.mxu0 0.0
      %7768 = vmatpush2.msra.mxu0 0.0
      %7769 = vmatprep.subr.mxu0 0.0
      %7770 = vmatpush2.msra.mxu0 0.0
      %7771 = vmatprep.subr.mxu0 0.0
      %7772 = vmatpush2.msra.mxu0 0.0
      %7773 = vmatprep.subr.mxu0 0.0
      %7774 = vmatpush2.msra.mxu0 0.0
      %7775 = vmatprep.subr.mxu0 0.0
      %7776 = vmatpush2.msra.mxu0 0.0
      %7777 = vmatprep.mubr.f32.mxu0 0.0
      %7778 = vmatmul.mubr.f32.gmra.mxu0 %v7690
      %v7779 = vpop.f32.mrf.mxu0
      %v7780 = vadd.f32 0.0, %v7779
      %v7781 = vpop.f32.mrf.mxu0
      %7782 = vmatprep.mubr.f32.mxu0 0.0
      %7783 = vmatmul.mubr.f32.gmra.mxu0 %v7693
      %v7784 = vpop.f32.mrf.mxu0
      %v7785 = vadd.f32 0.0, %v7784
      %v7786 = vpop.f32.mrf.mxu0
      %7787 = vmatprep.mubr.f32.mxu0 0.0
      %7788 = vmatmul.mubr.f32.gmra.mxu0 %v7696
      %v7789 = vpop.f32.mrf.mxu0
      %v7790 = vadd.f32 0.0, %v7789
      %v7791 = vpop.f32.mrf.mxu0
      %7792 = vmatprep.mubr.f32.mxu0 0.0
      %7793 = vmatmul.mubr.f32.gmra.mxu0 %v7699
      %v7794 = vpop.f32.mrf.mxu0
      %v7795 = vadd.f32 0.0, %v7794
      %v7796 = vpop.f32.mrf.mxu0
      %7797 = vmatprep.mubr.f32.mxu0 0.0
      %7798 = vmatmul.mubr.f32.gmra.mxu0 %v7702
      %v7799 = vpop.f32.mrf.mxu0
      %v7800 = vadd.f32 0.0, %v7799
      %v7801 = vpop.f32.mrf.mxu0
      %7802 = vmatprep.mubr.f32.mxu0 0.0
      %7803 = vmatmul.mubr.f32.gmra.mxu0 %v7705
      %v7804 = vpop.f32.mrf.mxu0
      %v7805 = vadd.f32 0.0, %v7804
      %v7806 = vpop.f32.mrf.mxu0
      %7807 = vmatprep.mubr.f32.mxu0 0.0
      %7808 = vmatmul.mubr.f32.gmra.mxu0 %v7708
      %v7809 = vpop.f32.mrf.mxu0
      %v7810 = vadd.f32 0.0, %v7809
      %v7811 = vpop.f32.mrf.mxu0
      %7812 = vmatprep.mubr.f32.mxu0 0.0
      %7813 = vmatmul.mubr.f32.gmra.mxu0 %v7711
      %v7814 = vpop.f32.mrf.mxu0
      %v7815 = vadd.f32 0.0, %v7814
      %v7816 = vpop.f32.mrf.mxu0
      %7817 = vdwg.mxu0
      %s7818 = scalar_lea.vmem %s8, 16
      %v7819 = vld [vmem:[%s7818] sm:$0xff]
      %v7821 = vsel %vm1237, %v7393, 0
      %v7824 = vsel %vm1237, %v7398, 0
      %v7827 = vsel %vm1237, %v7403, 0
      %v7830 = vsel %vm1237, %v7408, 0
      %v7833 = vsel %vm1237, %v7413, 0
      %v7836 = vsel %vm1237, %v7418, 0
      %v7839 = vsel %vm1237, %v7423, 0
      %v7842 = vsel %vm1237, %v7428, 0
      %v7845 = vsel %vm1237, %v7522, 0
      %v7848 = vsel %vm1237, %v7527, 0
      %v7851 = vsel %vm1237, %v7532, 0
      %v7854 = vsel %vm1237, %v7537, 0
      %v7857 = vsel %vm1237, %v7542, 0
      %v7860 = vsel %vm1237, %v7547, 0
      %v7863 = vsel %vm1237, %v7552, 0
      %v7866 = vsel %vm1237, %v7557, 0
      %v7869 = vsel %vm1237, %v7651, 0
      %v7872 = vsel %vm1237, %v7656, 0
      %v7875 = vsel %vm1237, %v7661, 0
      %v7878 = vsel %vm1237, %v7666, 0
      %v7881 = vsel %vm1237, %v7671, 0
      %v7884 = vsel %vm1237, %v7676, 0
      %v7887 = vsel %vm1237, %v7681, 0
      %v7890 = vsel %vm1237, %v7686, 0
      %v7893 = vsel %vm1237, %v7780, 0
      %v7896 = vsel %vm1237, %v7785, 0
      %v7899 = vsel %vm1237, %v7790, 0
      %v7902 = vsel %vm1237, %v7795, 0
      %v7905 = vsel %vm1237, %v7800, 0
      %v7908 = vsel %vm1237, %v7805, 0
      %v7911 = vsel %vm1237, %v7810, 0
      %v7914 = vsel %vm1237, %v7815, 0
      %7916 = vmatprep.subr.mxu0 0.0
      %7917 = vmatpush1.msra.mxu0 0.0
      %7918 = vmatprep.subr.mxu0 0.0
      %7919 = vmatpush1.msra.mxu0 0.0
      %7920 = vmatprep.subr.mxu0 0.0
      %7921 = vmatpush1.msra.mxu0 0.0
      %7922 = vmatprep.subr.mxu0 0.0
      %7923 = vmatpush1.msra.mxu0 0.0
      %7924 = vmatprep.subr.mxu0 0.0
      %7925 = vmatpush1.msra.mxu0 0.0
      %7926 = vmatprep.subr.mxu0 0.0
      %7927 = vmatpush1.msra.mxu0 0.0
      %7928 = vmatprep.subr.mxu0 0.0
      %7929 = vmatpush1.msra.mxu0 0.0
      %7930 = vmatprep.subr.mxu0 0.0
      %7931 = vmatpush1.msra.mxu0 0.0
      %7932 = vmatprep.subr.mxu0 0.0
      %7933 = vmatpush1.msra.mxu0 0.0
      %7934 = vmatprep.subr.mxu0 0.0
      %7935 = vmatpush1.msra.mxu0 0.0
      %7936 = vmatprep.subr.mxu0 0.0
      %7937 = vmatpush1.msra.mxu0 0.0
      %7938 = vmatprep.subr.mxu0 0.0
      %7939 = vmatpush1.msra.mxu0 0.0
      %7940 = vmatprep.subr.mxu0 0.0
      %7941 = vmatpush1.msra.mxu0 0.0
      %7942 = vmatprep.subr.mxu0 0.0
      %7943 = vmatpush1.msra.mxu0 0.0
      %7944 = vmatprep.subr.mxu0 0.0
      %7945 = vmatpush1.msra.mxu0 0.0
      %7946 = vmatprep.subr.mxu0 0.0
      %7947 = vmatpush1.msra.mxu0 %v7819
      %7948 = vmatprep.subr.mxu0 0.0
      %7949 = vmatpush2.msra.mxu0 0.0
      %7950 = vmatprep.subr.mxu0 0.0
      %7951 = vmatpush2.msra.mxu0 0.0
      %7952 = vmatprep.subr.mxu0 0.0
      %7953 = vmatpush2.msra.mxu0 0.0
      %7954 = vmatprep.subr.mxu0 0.0
      %7955 = vmatpush2.msra.mxu0 0.0
      %7956 = vmatprep.subr.mxu0 0.0
      %7957 = vmatpush2.msra.mxu0 0.0
      %7958 = vmatprep.subr.mxu0 0.0
      %7959 = vmatpush2.msra.mxu0 0.0
      %7960 = vmatprep.subr.mxu0 0.0
      %7961 = vmatpush2.msra.mxu0 0.0
      %7962 = vmatprep.subr.mxu0 0.0
      %7963 = vmatpush2.msra.mxu0 0.0
      %7964 = vmatprep.subr.mxu0 0.0
      %7965 = vmatpush2.msra.mxu0 0.0
      %7966 = vmatprep.subr.mxu0 0.0
      %7967 = vmatpush2.msra.mxu0 0.0
      %7968 = vmatprep.subr.mxu0 0.0
      %7969 = vmatpush2.msra.mxu0 0.0
      %7970 = vmatprep.subr.mxu0 0.0
      %7971 = vmatpush2.msra.mxu0 0.0
      %7972 = vmatprep.subr.mxu0 0.0
      %7973 = vmatpush2.msra.mxu0 0.0
      %7974 = vmatprep.subr.mxu0 0.0
      %7975 = vmatpush2.msra.mxu0 0.0
      %7976 = vmatprep.subr.mxu0 0.0
      %7977 = vmatpush2.msra.mxu0 0.0
      %7978 = vmatprep.subr.mxu0 0.0
      %7979 = vmatpush2.msra.mxu0 0.0
      %7980 = vmatprep.mubr.f32.mxu0 0.0
      %7981 = vmatmul.mubr.f32.gmra.mxu0 %v7821
      %v7982 = vpop.f32.mrf.mxu0
      %v7983 = vadd.f32 0.0, %v7982
      %v7984 = vpop.f32.mrf.mxu0
      %7985 = vmatprep.mubr.f32.mxu0 0.0
      %7986 = vmatmul.mubr.f32.gmra.mxu0 %v7824
      %v7987 = vpop.f32.mrf.mxu0
      %v7988 = vadd.f32 0.0, %v7987
      %v7989 = vpop.f32.mrf.mxu0
      %7990 = vmatprep.mubr.f32.mxu0 0.0
      %7991 = vmatmul.mubr.f32.gmra.mxu0 %v7827
      %v7992 = vpop.f32.mrf.mxu0
      %v7993 = vadd.f32 0.0, %v7992
      %v7994 = vpop.f32.mrf.mxu0
      %7995 = vmatprep.mubr.f32.mxu0 0.0
      %7996 = vmatmul.mubr.f32.gmra.mxu0 %v7830
      %v7997 = vpop.f32.mrf.mxu0
      %v7998 = vadd.f32 0.0, %v7997
      %v7999 = vpop.f32.mrf.mxu0
      %8000 = vmatprep.mubr.f32.mxu0 0.0
      %8001 = vmatmul.mubr.f32.gmra.mxu0 %v7833
      %v8002 = vpop.f32.mrf.mxu0
      %v8003 = vadd.f32 0.0, %v8002
      %v8004 = vpop.f32.mrf.mxu0
      %8005 = vmatprep.mubr.f32.mxu0 0.0
      %8006 = vmatmul.mubr.f32.gmra.mxu0 %v7836
      %v8007 = vpop.f32.mrf.mxu0
      %v8008 = vadd.f32 0.0, %v8007
      %v8009 = vpop.f32.mrf.mxu0
      %8010 = vmatprep.mubr.f32.mxu0 0.0
      %8011 = vmatmul.mubr.f32.gmra.mxu0 %v7839
      %v8012 = vpop.f32.mrf.mxu0
      %v8013 = vadd.f32 0.0, %v8012
      %v8014 = vpop.f32.mrf.mxu0
      %8015 = vmatprep.mubr.f32.mxu0 0.0
      %8016 = vmatmul.mubr.f32.gmra.mxu0 %v7842
      %v8017 = vpop.f32.mrf.mxu0
      %v8018 = vadd.f32 0.0, %v8017
      %v8019 = vpop.f32.mrf.mxu0
      %8020 = vmatprep.mubr.f32.mxu0 0.0
      %8021 = vmatmul.mubr.f32.gmra.mxu0 %v7845
      %v8022 = vpop.f32.mrf.mxu0
      %v8023 = vadd.f32 0.0, %v8022
      %v8024 = vpop.f32.mrf.mxu0
      %8025 = vmatprep.mubr.f32.mxu0 0.0
      %8026 = vmatmul.mubr.f32.gmra.mxu0 %v7848
      %v8027 = vpop.f32.mrf.mxu0
      %v8028 = vadd.f32 0.0, %v8027
      %v8029 = vpop.f32.mrf.mxu0
      %8030 = vmatprep.mubr.f32.mxu0 0.0
      %8031 = vmatmul.mubr.f32.gmra.mxu0 %v7851
      %v8032 = vpop.f32.mrf.mxu0
      %v8033 = vadd.f32 0.0, %v8032
      %v8034 = vpop.f32.mrf.mxu0
      %8035 = vmatprep.mubr.f32.mxu0 0.0
      %8036 = vmatmul.mubr.f32.gmra.mxu0 %v7854
      %v8037 = vpop.f32.mrf.mxu0
      %v8038 = vadd.f32 0.0, %v8037
      %v8039 = vpop.f32.mrf.mxu0
      %8040 = vmatprep.mubr.f32.mxu0 0.0
      %8041 = vmatmul.mubr.f32.gmra.mxu0 %v7857
      %v8042 = vpop.f32.mrf.mxu0
      %v8043 = vadd.f32 0.0, %v8042
      %v8044 = vpop.f32.mrf.mxu0
      %8045 = vmatprep.mubr.f32.mxu0 0.0
      %8046 = vmatmul.mubr.f32.gmra.mxu0 %v7860
      %v8047 = vpop.f32.mrf.mxu0
      %v8048 = vadd.f32 0.0, %v8047
      %v8049 = vpop.f32.mrf.mxu0
      %8050 = vmatprep.mubr.f32.mxu0 0.0
      %8051 = vmatmul.mubr.f32.gmra.mxu0 %v7863
      %v8052 = vpop.f32.mrf.mxu0
      %v8053 = vadd.f32 0.0, %v8052
      %v8054 = vpop.f32.mrf.mxu0
      %8055 = vmatprep.mubr.f32.mxu0 0.0
      %8056 = vmatmul.mubr.f32.gmra.mxu0 %v7866
      %v8057 = vpop.f32.mrf.mxu0
      %v8058 = vadd.f32 0.0, %v8057
      %v8059 = vpop.f32.mrf.mxu0
      %8060 = vmatprep.mubr.f32.mxu0 0.0
      %8061 = vmatmul.mubr.f32.gmra.mxu0 %v7869
      %v8062 = vpop.f32.mrf.mxu0
      %v8063 = vadd.f32 0.0, %v8062
      %v8064 = vpop.f32.mrf.mxu0
      %8065 = vmatprep.mubr.f32.mxu0 0.0
      %8066 = vmatmul.mubr.f32.gmra.mxu0 %v7872
      %v8067 = vpop.f32.mrf.mxu0
      %v8068 = vadd.f32 0.0, %v8067
      %v8069 = vpop.f32.mrf.mxu0
      %8070 = vmatprep.mubr.f32.mxu0 0.0
      %8071 = vmatmul.mubr.f32.gmra.mxu0 %v7875
      %v8072 = vpop.f32.mrf.mxu0
      %v8073 = vadd.f32 0.0, %v8072
      %v8074 = vpop.f32.mrf.mxu0
      %8075 = vmatprep.mubr.f32.mxu0 0.0
      %8076 = vmatmul.mubr.f32.gmra.mxu0 %v7878
      %v8077 = vpop.f32.mrf.mxu0
      %v8078 = vadd.f32 0.0, %v8077
      %v8079 = vpop.f32.mrf.mxu0
      %8080 = vmatprep.mubr.f32.mxu0 0.0
      %8081 = vmatmul.mubr.f32.gmra.mxu0 %v7881
      %v8082 = vpop.f32.mrf.mxu0
      %v8083 = vadd.f32 0.0, %v8082
      %v8084 = vpop.f32.mrf.mxu0
      %8085 = vmatprep.mubr.f32.mxu0 0.0
      %8086 = vmatmul.mubr.f32.gmra.mxu0 %v7884
      %v8087 = vpop.f32.mrf.mxu0
      %v8088 = vadd.f32 0.0, %v8087
      %v8089 = vpop.f32.mrf.mxu0
      %8090 = vmatprep.mubr.f32.mxu0 0.0
      %8091 = vmatmul.mubr.f32.gmra.mxu0 %v7887
      %v8092 = vpop.f32.mrf.mxu0
      %v8093 = vadd.f32 0.0, %v8092
      %v8094 = vpop.f32.mrf.mxu0
      %8095 = vmatprep.mubr.f32.mxu0 0.0
      %8096 = vmatmul.mubr.f32.gmra.mxu0 %v7890
      %v8097 = vpop.f32.mrf.mxu0
      %v8098 = vadd.f32 0.0, %v8097
      %v8099 = vpop.f32.mrf.mxu0
      %8100 = vmatprep.mubr.f32.mxu0 0.0
      %8101 = vmatmul.mubr.f32.gmra.mxu0 %v7893
      %v8102 = vpop.f32.mrf.mxu0
      %v8103 = vadd.f32 0.0, %v8102
      %v8104 = vpop.f32.mrf.mxu0
      %8105 = vmatprep.mubr.f32.mxu0 0.0
      %8106 = vmatmul.mubr.f32.gmra.mxu0 %v7896
      %v8107 = vpop.f32.mrf.mxu0
      %v8108 = vadd.f32 0.0, %v8107
      %v8109 = vpop.f32.mrf.mxu0
      %8110 = vmatprep.mubr.f32.mxu0 0.0
      %8111 = vmatmul.mubr.f32.gmra.mxu0 %v7899
      %v8112 = vpop.f32.mrf.mxu0
      %v8113 = vadd.f32 0.0, %v8112
      %v8114 = vpop.f32.mrf.mxu0
      %8115 = vmatprep.mubr.f32.mxu0 0.0
      %8116 = vmatmul.mubr.f32.gmra.mxu0 %v7902
      %v8117 = vpop.f32.mrf.mxu0
      %v8118 = vadd.f32 0.0, %v8117
      %v8119 = vpop.f32.mrf.mxu0
      %8120 = vmatprep.mubr.f32.mxu0 0.0
      %8121 = vmatmul.mubr.f32.gmra.mxu0 %v7905
      %v8122 = vpop.f32.mrf.mxu0
      %v8123 = vadd.f32 0.0, %v8122
      %v8124 = vpop.f32.mrf.mxu0
      %8125 = vmatprep.mubr.f32.mxu0 0.0
      %8126 = vmatmul.mubr.f32.gmra.mxu0 %v7908
      %v8127 = vpop.f32.mrf.mxu0
      %v8128 = vadd.f32 0.0, %v8127
      %v8129 = vpop.f32.mrf.mxu0
      %8130 = vmatprep.mubr.f32.mxu0 0.0
      %8131 = vmatmul.mubr.f32.gmra.mxu0 %v7911
      %v8132 = vpop.f32.mrf.mxu0
      %v8133 = vadd.f32 0.0, %v8132
      %v8134 = vpop.f32.mrf.mxu0
      %8135 = vmatprep.mubr.f32.mxu0 0.0
      %8136 = vmatmul.mubr.f32.gmra.mxu0 %v7914
      %v8137 = vpop.f32.mrf.mxu0
      %v8138 = vadd.f32 0.0, %v8137
      %v8139 = vpop.f32.mrf.mxu0
      %8140 = vdwg.mxu0
      %v8141 = vadd.f32 %v5433, %v7983
      %v8142 = vadd.f32 %v5438, %v7988
      %v8143 = vadd.f32 %v5443, %v7993
      %v8144 = vadd.f32 %v5448, %v7998
      %v8145 = vadd.f32 %v5453, %v8003
      %v8146 = vadd.f32 %v5458, %v8008
      %v8147 = vadd.f32 %v5463, %v8013
      %v8148 = vadd.f32 %v5468, %v8018
      %v8149 = vadd.f32 %v5473, %v8023
      %v8150 = vadd.f32 %v5478, %v8028
      %v8151 = vadd.f32 %v5483, %v8033
      %v8152 = vadd.f32 %v5488, %v8038
      %v8153 = vadd.f32 %v5493, %v8043
      %v8154 = vadd.f32 %v5498, %v8048
      %v8155 = vadd.f32 %v5503, %v8053
      %v8156 = vadd.f32 %v5508, %v8058
      %v8157 = vadd.f32 %v5513, %v8063
      %v8158 = vadd.f32 %v5518, %v8068
      %v8159 = vadd.f32 %v5523, %v8073
      %v8160 = vadd.f32 %v5528, %v8078
      %v8161 = vadd.f32 %v5533, %v8083
      %v8162 = vadd.f32 %v5538, %v8088
      %v8163 = vadd.f32 %v5543, %v8093
      %v8164 = vadd.f32 %v5548, %v8098
      %v8165 = vadd.f32 %v5553, %v8103
      %v8166 = vadd.f32 %v5558, %v8108
      %v8167 = vadd.f32 %v5563, %v8113
      %v8168 = vadd.f32 %v5568, %v8118
      %v8169 = vadd.f32 %v5573, %v8123
      %v8170 = vadd.f32 %v5578, %v8128
      %v8171 = vadd.f32 %v5583, %v8133
      %v8172 = vadd.f32 %v5588, %v8138
      %s8173 = scalar_lea.vmem %s1, 96
      %v8174 = vld [vmem:[%s8173] sm:$0xff]
      %v8175 = vld [vmem:[%s8173 + $0x8] sm:$0xff]
      %v8176 = vld [vmem:[%s8173 + $0x10] sm:$0xff]
      %v8177 = vld [vmem:[%s8173 + $0x18] sm:$0xff]
      %s8178 = scalar_lea.vmem %s4, 3
      %v8179 = vld [vmem:[%s8178] sm:$0x1]
      %v8181 = vlaneseq
      %v8182 = vshrl.u32 %v8181, 7
      %v8183 = vsub.s32 0, %v8182
      %v8184 = vrot.slane %v8179, %v8183
      %8186 = vmatprep.subr.mxu0 0.0
      %8187 = vmatpush1.msra.mxu0 0.0
      %8188 = vmatprep.subr.mxu0 0.0
      %8189 = vmatpush1.msra.mxu0 0.0
      %8190 = vmatprep.subr.mxu0 0.0
      %8191 = vmatpush1.msra.mxu0 0.0
      %8192 = vmatprep.subr.mxu0 0.0
      %8193 = vmatpush1.msra.mxu0 0.0
      %8194 = vmatprep.subr.mxu0 0.0
      %8195 = vmatpush1.msra.mxu0 0.0
      %8196 = vmatprep.subr.mxu0 0.0
      %8197 = vmatpush1.msra.mxu0 0.0
      %8198 = vmatprep.subr.mxu0 0.0
      %8199 = vmatpush1.msra.mxu0 0.0
      %8200 = vmatprep.subr.mxu0 0.0
      %8201 = vmatpush1.msra.mxu0 0.0
      %8202 = vmatprep.subr.mxu0 0.0
      %8203 = vmatpush1.msra.mxu0 0.0
      %8204 = vmatprep.subr.mxu0 0.0
      %8205 = vmatpush1.msra.mxu0 0.0
      %8206 = vmatprep.subr.mxu0 0.0
      %8207 = vmatpush1.msra.mxu0 0.0
      %8208 = vmatprep.subr.mxu0 0.0
      %8209 = vmatpush1.msra.mxu0 0.0
      %8210 = vmatprep.subr.mxu0 0.0
      %8211 = vmatpush1.msra.mxu0 %v8177
      %8212 = vmatprep.subr.mxu0 0.0
      %8213 = vmatpush1.msra.mxu0 %v8176
      %8214 = vmatprep.subr.mxu0 0.0
      %8215 = vmatpush1.msra.mxu0 %v8175
      %8216 = vmatprep.subr.mxu0 0.0
      %8217 = vmatpush1.msra.mxu0 %v8174
      %8218 = vmatprep.subr.mxu0 0.0
      %8219 = vmatpush2.msra.mxu0 0.0
      %8220 = vmatprep.subr.mxu0 0.0
      %8221 = vmatpush2.msra.mxu0 0.0
      %8222 = vmatprep.subr.mxu0 0.0
      %8223 = vmatpush2.msra.mxu0 0.0
      %8224 = vmatprep.subr.mxu0 0.0
      %8225 = vmatpush2.msra.mxu0 0.0
      %8226 = vmatprep.subr.mxu0 0.0
      %8227 = vmatpush2.msra.mxu0 0.0
      %8228 = vmatprep.subr.mxu0 0.0
      %8229 = vmatpush2.msra.mxu0 0.0
      %8230 = vmatprep.subr.mxu0 0.0
      %8231 = vmatpush2.msra.mxu0 0.0
      %8232 = vmatprep.subr.mxu0 0.0
      %8233 = vmatpush2.msra.mxu0 0.0
      %8234 = vmatprep.subr.mxu0 0.0
      %8235 = vmatpush2.msra.mxu0 0.0
      %8236 = vmatprep.subr.mxu0 0.0
      %8237 = vmatpush2.msra.mxu0 0.0
      %8238 = vmatprep.subr.mxu0 0.0
      %8239 = vmatpush2.msra.mxu0 0.0
      %8240 = vmatprep.subr.mxu0 0.0
      %8241 = vmatpush2.msra.mxu0 0.0
      %8242 = vmatprep.subr.mxu0 0.0
      %8243 = vmatpush2.msra.mxu0 0.0
      %8244 = vmatprep.subr.mxu0 0.0
      %8245 = vmatpush2.msra.mxu0 0.0
      %8246 = vmatprep.subr.mxu0 0.0
      %8247 = vmatpush2.msra.mxu0 0.0
      %8248 = vmatprep.subr.mxu0 0.0
      %8249 = vmatpush2.msra.mxu0 0.0
      %8250 = vmatprep.mubr.f32.mxu0 0.0
      %8251 = vmatmul.mubr.f32.gmra.mxu0 %v413
      %v8252 = vpop.f32.mrf.mxu0
      %v8253 = vadd.f32 %v8184, %v8252
      %v8254 = vpop.f32.mrf.mxu0
      %8255 = vmatprep.mubr.f32.mxu0 0.0
      %8256 = vmatmul.mubr.f32.gmra.mxu0 %v416
      %v8257 = vpop.f32.mrf.mxu0
      %v8258 = vadd.f32 %v8184, %v8257
      %v8259 = vpop.f32.mrf.mxu0
      %8260 = vmatprep.mubr.f32.mxu0 0.0
      %8261 = vmatmul.mubr.f32.gmra.mxu0 %v419
      %v8262 = vpop.f32.mrf.mxu0
      %v8263 = vadd.f32 %v8184, %v8262
      %v8264 = vpop.f32.mrf.mxu0
      %8265 = vmatprep.mubr.f32.mxu0 0.0
      %8266 = vmatmul.mubr.f32.gmra.mxu0 %v422
      %v8267 = vpop.f32.mrf.mxu0
      %v8268 = vadd.f32 %v8184, %v8267
      %v8269 = vpop.f32.mrf.mxu0
      %8270 = vmatprep.mubr.f32.mxu0 0.0
      %8271 = vmatmul.mubr.f32.gmra.mxu0 %v425
      %v8272 = vpop.f32.mrf.mxu0
      %v8273 = vadd.f32 %v8184, %v8272
      %v8274 = vpop.f32.mrf.mxu0
      %8275 = vmatprep.mubr.f32.mxu0 0.0
      %8276 = vmatmul.mubr.f32.gmra.mxu0 %v428
      %v8277 = vpop.f32.mrf.mxu0
      %v8278 = vadd.f32 %v8184, %v8277
      %v8279 = vpop.f32.mrf.mxu0
      %8280 = vmatprep.mubr.f32.mxu0 0.0
      %8281 = vmatmul.mubr.f32.gmra.mxu0 %v431
      %v8282 = vpop.f32.mrf.mxu0
      %v8283 = vadd.f32 %v8184, %v8282
      %v8284 = vpop.f32.mrf.mxu0
      %8285 = vmatprep.mubr.f32.mxu0 0.0
      %8286 = vmatmul.mubr.f32.gmra.mxu0 %v434
      %v8287 = vpop.f32.mrf.mxu0
      %v8288 = vadd.f32 %v8184, %v8287
      %v8289 = vpop.f32.mrf.mxu0
      %8290 = vmatprep.mubr.f32.mxu0 0.0
      %8291 = vmatmul.mubr.f32.gmra.mxu0 %v437
      %v8292 = vpop.f32.mrf.mxu0
      %v8293 = vadd.f32 %v8184, %v8292
      %v8294 = vpop.f32.mrf.mxu0
      %8295 = vmatprep.mubr.f32.mxu0 0.0
      %8296 = vmatmul.mubr.f32.gmra.mxu0 %v440
      %v8297 = vpop.f32.mrf.mxu0
      %v8298 = vadd.f32 %v8184, %v8297
      %v8299 = vpop.f32.mrf.mxu0
      %8300 = vmatprep.mubr.f32.mxu0 0.0
      %8301 = vmatmul.mubr.f32.gmra.mxu0 %v443
      %v8302 = vpop.f32.mrf.mxu0
      %v8303 = vadd.f32 %v8184, %v8302
      %v8304 = vpop.f32.mrf.mxu0
      %8305 = vmatprep.mubr.f32.mxu0 0.0
      %8306 = vmatmul.mubr.f32.gmra.mxu0 %v446
      %v8307 = vpop.f32.mrf.mxu0
      %v8308 = vadd.f32 %v8184, %v8307
      %v8309 = vpop.f32.mrf.mxu0
      %8310 = vmatprep.mubr.f32.mxu0 0.0
      %8311 = vmatmul.mubr.f32.gmra.mxu0 %v449
      %v8312 = vpop.f32.mrf.mxu0
      %v8313 = vadd.f32 %v8184, %v8312
      %v8314 = vpop.f32.mrf.mxu0
      %8315 = vmatprep.mubr.f32.mxu0 0.0
      %8316 = vmatmul.mubr.f32.gmra.mxu0 %v452
      %v8317 = vpop.f32.mrf.mxu0
      %v8318 = vadd.f32 %v8184, %v8317
      %v8319 = vpop.f32.mrf.mxu0
      %8320 = vmatprep.mubr.f32.mxu0 0.0
      %8321 = vmatmul.mubr.f32.gmra.mxu0 %v455
      %v8322 = vpop.f32.mrf.mxu0
      %v8323 = vadd.f32 %v8184, %v8322
      %v8324 = vpop.f32.mrf.mxu0
      %8325 = vmatprep.mubr.f32.mxu0 0.0
      %8326 = vmatmul.mubr.f32.gmra.mxu0 %v458
      %v8327 = vpop.f32.mrf.mxu0
      %v8328 = vadd.f32 %v8184, %v8327
      %v8329 = vpop.f32.mrf.mxu0
      %8330 = vmatprep.mubr.f32.mxu0 0.0
      %8331 = vmatmul.mubr.f32.gmra.mxu0 %v461
      %v8332 = vpop.f32.mrf.mxu0
      %v8333 = vadd.f32 %v8184, %v8332
      %v8334 = vpop.f32.mrf.mxu0
      %8335 = vmatprep.mubr.f32.mxu0 0.0
      %8336 = vmatmul.mubr.f32.gmra.mxu0 %v464
      %v8337 = vpop.f32.mrf.mxu0
      %v8338 = vadd.f32 %v8184, %v8337
      %v8339 = vpop.f32.mrf.mxu0
      %8340 = vmatprep.mubr.f32.mxu0 0.0
      %8341 = vmatmul.mubr.f32.gmra.mxu0 %v467
      %v8342 = vpop.f32.mrf.mxu0
      %v8343 = vadd.f32 %v8184, %v8342
      %v8344 = vpop.f32.mrf.mxu0
      %8345 = vmatprep.mubr.f32.mxu0 0.0
      %8346 = vmatmul.mubr.f32.gmra.mxu0 %v470
      %v8347 = vpop.f32.mrf.mxu0
      %v8348 = vadd.f32 %v8184, %v8347
      %v8349 = vpop.f32.mrf.mxu0
      %8350 = vmatprep.mubr.f32.mxu0 0.0
      %8351 = vmatmul.mubr.f32.gmra.mxu0 %v473
      %v8352 = vpop.f32.mrf.mxu0
      %v8353 = vadd.f32 %v8184, %v8352
      %v8354 = vpop.f32.mrf.mxu0
      %8355 = vmatprep.mubr.f32.mxu0 0.0
      %8356 = vmatmul.mubr.f32.gmra.mxu0 %v476
      %v8357 = vpop.f32.mrf.mxu0
      %v8358 = vadd.f32 %v8184, %v8357
      %v8359 = vpop.f32.mrf.mxu0
      %8360 = vmatprep.mubr.f32.mxu0 0.0
      %8361 = vmatmul.mubr.f32.gmra.mxu0 %v479
      %v8362 = vpop.f32.mrf.mxu0
      %v8363 = vadd.f32 %v8184, %v8362
      %v8364 = vpop.f32.mrf.mxu0
      %8365 = vmatprep.mubr.f32.mxu0 0.0
      %8366 = vmatmul.mubr.f32.gmra.mxu0 %v482
      %v8367 = vpop.f32.mrf.mxu0
      %v8368 = vadd.f32 %v8184, %v8367
      %v8369 = vpop.f32.mrf.mxu0
      %8370 = vmatprep.mubr.f32.mxu0 0.0
      %8371 = vmatmul.mubr.f32.gmra.mxu0 %v485
      %v8372 = vpop.f32.mrf.mxu0
      %v8373 = vadd.f32 %v8184, %v8372
      %v8374 = vpop.f32.mrf.mxu0
      %8375 = vmatprep.mubr.f32.mxu0 0.0
      %8376 = vmatmul.mubr.f32.gmra.mxu0 %v488
      %v8377 = vpop.f32.mrf.mxu0
      %v8378 = vadd.f32 %v8184, %v8377
      %v8379 = vpop.f32.mrf.mxu0
      %8380 = vmatprep.mubr.f32.mxu0 0.0
      %8381 = vmatmul.mubr.f32.gmra.mxu0 %v491
      %v8382 = vpop.f32.mrf.mxu0
      %v8383 = vadd.f32 %v8184, %v8382
      %v8384 = vpop.f32.mrf.mxu0
      %8385 = vmatprep.mubr.f32.mxu0 0.0
      %8386 = vmatmul.mubr.f32.gmra.mxu0 %v494
      %v8387 = vpop.f32.mrf.mxu0
      %v8388 = vadd.f32 %v8184, %v8387
      %v8389 = vpop.f32.mrf.mxu0
      %8390 = vmatprep.mubr.f32.mxu0 0.0
      %8391 = vmatmul.mubr.f32.gmra.mxu0 %v497
      %v8392 = vpop.f32.mrf.mxu0
      %v8393 = vadd.f32 %v8184, %v8392
      %v8394 = vpop.f32.mrf.mxu0
      %8395 = vmatprep.mubr.f32.mxu0 0.0
      %8396 = vmatmul.mubr.f32.gmra.mxu0 %v500
      %v8397 = vpop.f32.mrf.mxu0
      %v8398 = vadd.f32 %v8184, %v8397
      %v8399 = vpop.f32.mrf.mxu0
      %8400 = vmatprep.mubr.f32.mxu0 0.0
      %8401 = vmatmul.mubr.f32.gmra.mxu0 %v503
      %v8402 = vpop.f32.mrf.mxu0
      %v8403 = vadd.f32 %v8184, %v8402
      %v8404 = vpop.f32.mrf.mxu0
      %8405 = vmatprep.mubr.f32.mxu0 0.0
      %8406 = vmatmul.mubr.f32.gmra.mxu0 %v506
      %v8407 = vpop.f32.mrf.mxu0
      %v8408 = vadd.f32 %v8184, %v8407
      %v8409 = vpop.f32.mrf.mxu0
      %8410 = vdwg.mxu0
      %s8411 = scalar_lea.vmem %s2, 96
      %v8412 = vld [vmem:[%s8411] sm:$0xff]
      %v8413 = vld [vmem:[%s8411 + $0x8] sm:$0xff]
      %v8414 = vld [vmem:[%s8411 + $0x10] sm:$0xff]
      %v8415 = vld [vmem:[%s8411 + $0x18] sm:$0xff]
      %s8416 = scalar_lea.vmem %s5, 3
      %v8417 = vld [vmem:[%s8416] sm:$0x1]
      %v8419 = vlaneseq
      %v8420 = vshrl.u32 %v8419, 7
      %v8421 = vsub.s32 0, %v8420
      %v8422 = vrot.slane %v8417, %v8421
      %8424 = vmatprep.subr.mxu0 0.0
      %8425 = vmatpush1.msra.mxu0 0.0
      %8426 = vmatprep.subr.mxu0 0.0
      %8427 = vmatpush1.msra.mxu0 0.0
      %8428 = vmatprep.subr.mxu0 0.0
      %8429 = vmatpush1.msra.mxu0 0.0
      %8430 = vmatprep.subr.mxu0 0.0
      %8431 = vmatpush1.msra.mxu0 0.0
      %8432 = vmatprep.subr.mxu0 0.0
      %8433 = vmatpush1.msra.mxu0 0.0
      %8434 = vmatprep.subr.mxu0 0.0
      %8435 = vmatpush1.msra.mxu0 0.0
      %8436 = vmatprep.subr.mxu0 0.0
      %8437 = vmatpush1.msra.mxu0 0.0
      %8438 = vmatprep.subr.mxu0 0.0
      %8439 = vmatpush1.msra.mxu0 0.0
      %8440 = vmatprep.subr.mxu0 0.0
      %8441 = vmatpush1.msra.mxu0 0.0
      %8442 = vmatprep.subr.mxu0 0.0
      %8443 = vmatpush1.msra.mxu0 0.0
      %8444 = vmatprep.subr.mxu0 0.0
      %8445 = vmatpush1.msra.mxu0 0.0
      %8446 = vmatprep.subr.mxu0 0.0
      %8447 = vmatpush1.msra.mxu0 0.0
      %8448 = vmatprep.subr.mxu0 0.0
      %8449 = vmatpush1.msra.mxu0 %v8415
      %8450 = vmatprep.subr.mxu0 0.0
      %8451 = vmatpush1.msra.mxu0 %v8414
      %8452 = vmatprep.subr.mxu0 0.0
      %8453 = vmatpush1.msra.mxu0 %v8413
      %8454 = vmatprep.subr.mxu0 0.0
      %8455 = vmatpush1.msra.mxu0 %v8412
      %8456 = vmatprep.subr.mxu0 0.0
      %8457 = vmatpush2.msra.mxu0 0.0
      %8458 = vmatprep.subr.mxu0 0.0
      %8459 = vmatpush2.msra.mxu0 0.0
      %8460 = vmatprep.subr.mxu0 0.0
      %8461 = vmatpush2.msra.mxu0 0.0
      %8462 = vmatprep.subr.mxu0 0.0
      %8463 = vmatpush2.msra.mxu0 0.0
      %8464 = vmatprep.subr.mxu0 0.0
      %8465 = vmatpush2.msra.mxu0 0.0
      %8466 = vmatprep.subr.mxu0 0.0
      %8467 = vmatpush2.msra.mxu0 0.0
      %8468 = vmatprep.subr.mxu0 0.0
      %8469 = vmatpush2.msra.mxu0 0.0
      %8470 = vmatprep.subr.mxu0 0.0
      %8471 = vmatpush2.msra.mxu0 0.0
      %8472 = vmatprep.subr.mxu0 0.0
      %8473 = vmatpush2.msra.mxu0 0.0
      %8474 = vmatprep.subr.mxu0 0.0
      %8475 = vmatpush2.msra.mxu0 0.0
      %8476 = vmatprep.subr.mxu0 0.0
      %8477 = vmatpush2.msra.mxu0 0.0
      %8478 = vmatprep.subr.mxu0 0.0
      %8479 = vmatpush2.msra.mxu0 0.0
      %8480 = vmatprep.subr.mxu0 0.0
      %8481 = vmatpush2.msra.mxu0 0.0
      %8482 = vmatprep.subr.mxu0 0.0
      %8483 = vmatpush2.msra.mxu0 0.0
      %8484 = vmatprep.subr.mxu0 0.0
      %8485 = vmatpush2.msra.mxu0 0.0
      %8486 = vmatprep.subr.mxu0 0.0
      %8487 = vmatpush2.msra.mxu0 0.0
      %8488 = vmatprep.mubr.f32.mxu0 0.0
      %8489 = vmatmul.mubr.f32.gmra.mxu0 %v413
      %v8490 = vpop.f32.mrf.mxu0
      %v8491 = vadd.f32 %v8422, %v8490
      %v8492 = vpop.f32.mrf.mxu0
      %8493 = vmatprep.mubr.f32.mxu0 0.0
      %8494 = vmatmul.mubr.f32.gmra.mxu0 %v416
      %v8495 = vpop.f32.mrf.mxu0
      %v8496 = vadd.f32 %v8422, %v8495
      %v8497 = vpop.f32.mrf.mxu0
      %8498 = vmatprep.mubr.f32.mxu0 0.0
      %8499 = vmatmul.mubr.f32.gmra.mxu0 %v419
      %v8500 = vpop.f32.mrf.mxu0
      %v8501 = vadd.f32 %v8422, %v8500
      %v8502 = vpop.f32.mrf.mxu0
      %8503 = vmatprep.mubr.f32.mxu0 0.0
      %8504 = vmatmul.mubr.f32.gmra.mxu0 %v422
      %v8505 = vpop.f32.mrf.mxu0
      %v8506 = vadd.f32 %v8422, %v8505
      %v8507 = vpop.f32.mrf.mxu0
      %8508 = vmatprep.mubr.f32.mxu0 0.0
      %8509 = vmatmul.mubr.f32.gmra.mxu0 %v425
      %v8510 = vpop.f32.mrf.mxu0
      %v8511 = vadd.f32 %v8422, %v8510
      %v8512 = vpop.f32.mrf.mxu0
      %8513 = vmatprep.mubr.f32.mxu0 0.0
      %8514 = vmatmul.mubr.f32.gmra.mxu0 %v428
      %v8515 = vpop.f32.mrf.mxu0
      %v8516 = vadd.f32 %v8422, %v8515
      %v8517 = vpop.f32.mrf.mxu0
      %8518 = vmatprep.mubr.f32.mxu0 0.0
      %8519 = vmatmul.mubr.f32.gmra.mxu0 %v431
      %v8520 = vpop.f32.mrf.mxu0
      %v8521 = vadd.f32 %v8422, %v8520
      %v8522 = vpop.f32.mrf.mxu0
      %8523 = vmatprep.mubr.f32.mxu0 0.0
      %8524 = vmatmul.mubr.f32.gmra.mxu0 %v434
      %v8525 = vpop.f32.mrf.mxu0
      %v8526 = vadd.f32 %v8422, %v8525
      %v8527 = vpop.f32.mrf.mxu0
      %8528 = vmatprep.mubr.f32.mxu0 0.0
      %8529 = vmatmul.mubr.f32.gmra.mxu0 %v437
      %v8530 = vpop.f32.mrf.mxu0
      %v8531 = vadd.f32 %v8422, %v8530
      %v8532 = vpop.f32.mrf.mxu0
      %8533 = vmatprep.mubr.f32.mxu0 0.0
      %8534 = vmatmul.mubr.f32.gmra.mxu0 %v440
      %v8535 = vpop.f32.mrf.mxu0
      %v8536 = vadd.f32 %v8422, %v8535
      %v8537 = vpop.f32.mrf.mxu0
      %8538 = vmatprep.mubr.f32.mxu0 0.0
      %8539 = vmatmul.mubr.f32.gmra.mxu0 %v443
      %v8540 = vpop.f32.mrf.mxu0
      %v8541 = vadd.f32 %v8422, %v8540
      %v8542 = vpop.f32.mrf.mxu0
      %8543 = vmatprep.mubr.f32.mxu0 0.0
      %8544 = vmatmul.mubr.f32.gmra.mxu0 %v446
      %v8545 = vpop.f32.mrf.mxu0
      %v8546 = vadd.f32 %v8422, %v8545
      %v8547 = vpop.f32.mrf.mxu0
      %8548 = vmatprep.mubr.f32.mxu0 0.0
      %8549 = vmatmul.mubr.f32.gmra.mxu0 %v449
      %v8550 = vpop.f32.mrf.mxu0
      %v8551 = vadd.f32 %v8422, %v8550
      %v8552 = vpop.f32.mrf.mxu0
      %8553 = vmatprep.mubr.f32.mxu0 0.0
      %8554 = vmatmul.mubr.f32.gmra.mxu0 %v452
      %v8555 = vpop.f32.mrf.mxu0
      %v8556 = vadd.f32 %v8422, %v8555
      %v8557 = vpop.f32.mrf.mxu0
      %8558 = vmatprep.mubr.f32.mxu0 0.0
      %8559 = vmatmul.mubr.f32.gmra.mxu0 %v455
      %v8560 = vpop.f32.mrf.mxu0
      %v8561 = vadd.f32 %v8422, %v8560
      %v8562 = vpop.f32.mrf.mxu0
      %8563 = vmatprep.mubr.f32.mxu0 0.0
      %8564 = vmatmul.mubr.f32.gmra.mxu0 %v458
      %v8565 = vpop.f32.mrf.mxu0
      %v8566 = vadd.f32 %v8422, %v8565
      %v8567 = vpop.f32.mrf.mxu0
      %8568 = vmatprep.mubr.f32.mxu0 0.0
      %8569 = vmatmul.mubr.f32.gmra.mxu0 %v461
      %v8570 = vpop.f32.mrf.mxu0
      %v8571 = vadd.f32 %v8422, %v8570
      %v8572 = vpop.f32.mrf.mxu0
      %8573 = vmatprep.mubr.f32.mxu0 0.0
      %8574 = vmatmul.mubr.f32.gmra.mxu0 %v464
      %v8575 = vpop.f32.mrf.mxu0
      %v8576 = vadd.f32 %v8422, %v8575
      %v8577 = vpop.f32.mrf.mxu0
      %8578 = vmatprep.mubr.f32.mxu0 0.0
      %8579 = vmatmul.mubr.f32.gmra.mxu0 %v467
      %v8580 = vpop.f32.mrf.mxu0
      %v8581 = vadd.f32 %v8422, %v8580
      %v8582 = vpop.f32.mrf.mxu0
      %8583 = vmatprep.mubr.f32.mxu0 0.0
      %8584 = vmatmul.mubr.f32.gmra.mxu0 %v470
      %v8585 = vpop.f32.mrf.mxu0
      %v8586 = vadd.f32 %v8422, %v8585
      %v8587 = vpop.f32.mrf.mxu0
      %8588 = vmatprep.mubr.f32.mxu0 0.0
      %8589 = vmatmul.mubr.f32.gmra.mxu0 %v473
      %v8590 = vpop.f32.mrf.mxu0
      %v8591 = vadd.f32 %v8422, %v8590
      %v8592 = vpop.f32.mrf.mxu0
      %8593 = vmatprep.mubr.f32.mxu0 0.0
      %8594 = vmatmul.mubr.f32.gmra.mxu0 %v476
      %v8595 = vpop.f32.mrf.mxu0
      %v8596 = vadd.f32 %v8422, %v8595
      %v8597 = vpop.f32.mrf.mxu0
      %8598 = vmatprep.mubr.f32.mxu0 0.0
      %8599 = vmatmul.mubr.f32.gmra.mxu0 %v479
      %v8600 = vpop.f32.mrf.mxu0
      %v8601 = vadd.f32 %v8422, %v8600
      %v8602 = vpop.f32.mrf.mxu0
      %8603 = vmatprep.mubr.f32.mxu0 0.0
      %8604 = vmatmul.mubr.f32.gmra.mxu0 %v482
      %v8605 = vpop.f32.mrf.mxu0
      %v8606 = vadd.f32 %v8422, %v8605
      %v8607 = vpop.f32.mrf.mxu0
      %8608 = vmatprep.mubr.f32.mxu0 0.0
      %8609 = vmatmul.mubr.f32.gmra.mxu0 %v485
      %v8610 = vpop.f32.mrf.mxu0
      %v8611 = vadd.f32 %v8422, %v8610
      %v8612 = vpop.f32.mrf.mxu0
      %8613 = vmatprep.mubr.f32.mxu0 0.0
      %8614 = vmatmul.mubr.f32.gmra.mxu0 %v488
      %v8615 = vpop.f32.mrf.mxu0
      %v8616 = vadd.f32 %v8422, %v8615
      %v8617 = vpop.f32.mrf.mxu0
      %8618 = vmatprep.mubr.f32.mxu0 0.0
      %8619 = vmatmul.mubr.f32.gmra.mxu0 %v491
      %v8620 = vpop.f32.mrf.mxu0
      %v8621 = vadd.f32 %v8422, %v8620
      %v8622 = vpop.f32.mrf.mxu0
      %8623 = vmatprep.mubr.f32.mxu0 0.0
      %8624 = vmatmul.mubr.f32.gmra.mxu0 %v494
      %v8625 = vpop.f32.mrf.mxu0
      %v8626 = vadd.f32 %v8422, %v8625
      %v8627 = vpop.f32.mrf.mxu0
      %8628 = vmatprep.mubr.f32.mxu0 0.0
      %8629 = vmatmul.mubr.f32.gmra.mxu0 %v497
      %v8630 = vpop.f32.mrf.mxu0
      %v8631 = vadd.f32 %v8422, %v8630
      %v8632 = vpop.f32.mrf.mxu0
      %8633 = vmatprep.mubr.f32.mxu0 0.0
      %8634 = vmatmul.mubr.f32.gmra.mxu0 %v500
      %v8635 = vpop.f32.mrf.mxu0
      %v8636 = vadd.f32 %v8422, %v8635
      %v8637 = vpop.f32.mrf.mxu0
      %8638 = vmatprep.mubr.f32.mxu0 0.0
      %8639 = vmatmul.mubr.f32.gmra.mxu0 %v503
      %v8640 = vpop.f32.mrf.mxu0
      %v8641 = vadd.f32 %v8422, %v8640
      %v8642 = vpop.f32.mrf.mxu0
      %8643 = vmatprep.mubr.f32.mxu0 0.0
      %8644 = vmatmul.mubr.f32.gmra.mxu0 %v506
      %v8645 = vpop.f32.mrf.mxu0
      %v8646 = vadd.f32 %v8422, %v8645
      %v8647 = vpop.f32.mrf.mxu0
      %8648 = vdwg.mxu0
      %s8649 = scalar_lea.vmem %s3, 96
      %v8650 = vld [vmem:[%s8649] sm:$0xff]
      %v8651 = vld [vmem:[%s8649 + $0x8] sm:$0xff]
      %v8652 = vld [vmem:[%s8649 + $0x10] sm:$0xff]
      %v8653 = vld [vmem:[%s8649 + $0x18] sm:$0xff]
      %s8654 = scalar_lea.vmem %s6, 3
      %v8655 = vld [vmem:[%s8654] sm:$0x1]
      %v8657 = vlaneseq
      %v8658 = vshrl.u32 %v8657, 7
      %v8659 = vsub.s32 0, %v8658
      %v8660 = vrot.slane %v8655, %v8659
      %8662 = vmatprep.subr.mxu0 0.0
      %8663 = vmatpush1.msra.mxu0 0.0
      %8664 = vmatprep.subr.mxu0 0.0
      %8665 = vmatpush1.msra.mxu0 0.0
      %8666 = vmatprep.subr.mxu0 0.0
      %8667 = vmatpush1.msra.mxu0 0.0
      %8668 = vmatprep.subr.mxu0 0.0
      %8669 = vmatpush1.msra.mxu0 0.0
      %8670 = vmatprep.subr.mxu0 0.0
      %8671 = vmatpush1.msra.mxu0 0.0
      %8672 = vmatprep.subr.mxu0 0.0
      %8673 = vmatpush1.msra.mxu0 0.0
      %8674 = vmatprep.subr.mxu0 0.0
      %8675 = vmatpush1.msra.mxu0 0.0
      %8676 = vmatprep.subr.mxu0 0.0
      %8677 = vmatpush1.msra.mxu0 0.0
      %8678 = vmatprep.subr.mxu0 0.0
      %8679 = vmatpush1.msra.mxu0 0.0
      %8680 = vmatprep.subr.mxu0 0.0
      %8681 = vmatpush1.msra.mxu0 0.0
      %8682 = vmatprep.subr.mxu0 0.0
      %8683 = vmatpush1.msra.mxu0 0.0
      %8684 = vmatprep.subr.mxu0 0.0
      %8685 = vmatpush1.msra.mxu0 0.0
      %8686 = vmatprep.subr.mxu0 0.0
      %8687 = vmatpush1.msra.mxu0 %v8653
      %8688 = vmatprep.subr.mxu0 0.0
      %8689 = vmatpush1.msra.mxu0 %v8652
      %8690 = vmatprep.subr.mxu0 0.0
      %8691 = vmatpush1.msra.mxu0 %v8651
      %8692 = vmatprep.subr.mxu0 0.0
      %8693 = vmatpush1.msra.mxu0 %v8650
      %8694 = vmatprep.subr.mxu0 0.0
      %8695 = vmatpush2.msra.mxu0 0.0
      %8696 = vmatprep.subr.mxu0 0.0
      %8697 = vmatpush2.msra.mxu0 0.0
      %8698 = vmatprep.subr.mxu0 0.0
      %8699 = vmatpush2.msra.mxu0 0.0
      %8700 = vmatprep.subr.mxu0 0.0
      %8701 = vmatpush2.msra.mxu0 0.0
      %8702 = vmatprep.subr.mxu0 0.0
      %8703 = vmatpush2.msra.mxu0 0.0
      %8704 = vmatprep.subr.mxu0 0.0
      %8705 = vmatpush2.msra.mxu0 0.0
      %8706 = vmatprep.subr.mxu0 0.0
      %8707 = vmatpush2.msra.mxu0 0.0
      %8708 = vmatprep.subr.mxu0 0.0
      %8709 = vmatpush2.msra.mxu0 0.0
      %8710 = vmatprep.subr.mxu0 0.0
      %8711 = vmatpush2.msra.mxu0 0.0
      %8712 = vmatprep.subr.mxu0 0.0
      %8713 = vmatpush2.msra.mxu0 0.0
      %8714 = vmatprep.subr.mxu0 0.0
      %8715 = vmatpush2.msra.mxu0 0.0
      %8716 = vmatprep.subr.mxu0 0.0
      %8717 = vmatpush2.msra.mxu0 0.0
      %8718 = vmatprep.subr.mxu0 0.0
      %8719 = vmatpush2.msra.mxu0 0.0
      %8720 = vmatprep.subr.mxu0 0.0
      %8721 = vmatpush2.msra.mxu0 0.0
      %8722 = vmatprep.subr.mxu0 0.0
      %8723 = vmatpush2.msra.mxu0 0.0
      %8724 = vmatprep.subr.mxu0 0.0
      %8725 = vmatpush2.msra.mxu0 0.0
      %8726 = vmatprep.mubr.f32.mxu0 0.0
      %8727 = vmatmul.mubr.f32.gmra.mxu0 %v413
      %v8728 = vpop.f32.mrf.mxu0
      %v8729 = vadd.f32 %v8660, %v8728
      %v8730 = vpop.f32.mrf.mxu0
      %8731 = vmatprep.mubr.f32.mxu0 0.0
      %8732 = vmatmul.mubr.f32.gmra.mxu0 %v416
      %v8733 = vpop.f32.mrf.mxu0
      %v8734 = vadd.f32 %v8660, %v8733
      %v8735 = vpop.f32.mrf.mxu0
      %8736 = vmatprep.mubr.f32.mxu0 0.0
      %8737 = vmatmul.mubr.f32.gmra.mxu0 %v419
      %v8738 = vpop.f32.mrf.mxu0
      %v8739 = vadd.f32 %v8660, %v8738
      %v8740 = vpop.f32.mrf.mxu0
      %8741 = vmatprep.mubr.f32.mxu0 0.0
      %8742 = vmatmul.mubr.f32.gmra.mxu0 %v422
      %v8743 = vpop.f32.mrf.mxu0
      %v8744 = vadd.f32 %v8660, %v8743
      %v8745 = vpop.f32.mrf.mxu0
      %8746 = vmatprep.mubr.f32.mxu0 0.0
      %8747 = vmatmul.mubr.f32.gmra.mxu0 %v425
      %v8748 = vpop.f32.mrf.mxu0
      %v8749 = vadd.f32 %v8660, %v8748
      %v8750 = vpop.f32.mrf.mxu0
      %8751 = vmatprep.mubr.f32.mxu0 0.0
      %8752 = vmatmul.mubr.f32.gmra.mxu0 %v428
      %v8753 = vpop.f32.mrf.mxu0
      %v8754 = vadd.f32 %v8660, %v8753
      %v8755 = vpop.f32.mrf.mxu0
      %8756 = vmatprep.mubr.f32.mxu0 0.0
      %8757 = vmatmul.mubr.f32.gmra.mxu0 %v431
      %v8758 = vpop.f32.mrf.mxu0
      %v8759 = vadd.f32 %v8660, %v8758
      %v8760 = vpop.f32.mrf.mxu0
      %8761 = vmatprep.mubr.f32.mxu0 0.0
      %8762 = vmatmul.mubr.f32.gmra.mxu0 %v434
      %v8763 = vpop.f32.mrf.mxu0
      %v8764 = vadd.f32 %v8660, %v8763
      %v8765 = vpop.f32.mrf.mxu0
      %8766 = vmatprep.mubr.f32.mxu0 0.0
      %8767 = vmatmul.mubr.f32.gmra.mxu0 %v437
      %v8768 = vpop.f32.mrf.mxu0
      %v8769 = vadd.f32 %v8660, %v8768
      %v8770 = vpop.f32.mrf.mxu0
      %8771 = vmatprep.mubr.f32.mxu0 0.0
      %8772 = vmatmul.mubr.f32.gmra.mxu0 %v440
      %v8773 = vpop.f32.mrf.mxu0
      %v8774 = vadd.f32 %v8660, %v8773
      %v8775 = vpop.f32.mrf.mxu0
      %8776 = vmatprep.mubr.f32.mxu0 0.0
      %8777 = vmatmul.mubr.f32.gmra.mxu0 %v443
      %v8778 = vpop.f32.mrf.mxu0
      %v8779 = vadd.f32 %v8660, %v8778
      %v8780 = vpop.f32.mrf.mxu0
      %8781 = vmatprep.mubr.f32.mxu0 0.0
      %8782 = vmatmul.mubr.f32.gmra.mxu0 %v446
      %v8783 = vpop.f32.mrf.mxu0
      %v8784 = vadd.f32 %v8660, %v8783
      %v8785 = vpop.f32.mrf.mxu0
      %8786 = vmatprep.mubr.f32.mxu0 0.0
      %8787 = vmatmul.mubr.f32.gmra.mxu0 %v449
      %v8788 = vpop.f32.mrf.mxu0
      %v8789 = vadd.f32 %v8660, %v8788
      %v8790 = vpop.f32.mrf.mxu0
      %8791 = vmatprep.mubr.f32.mxu0 0.0
      %8792 = vmatmul.mubr.f32.gmra.mxu0 %v452
      %v8793 = vpop.f32.mrf.mxu0
      %v8794 = vadd.f32 %v8660, %v8793
      %v8795 = vpop.f32.mrf.mxu0
      %8796 = vmatprep.mubr.f32.mxu0 0.0
      %8797 = vmatmul.mubr.f32.gmra.mxu0 %v455
      %v8798 = vpop.f32.mrf.mxu0
      %v8799 = vadd.f32 %v8660, %v8798
      %v8800 = vpop.f32.mrf.mxu0
      %8801 = vmatprep.mubr.f32.mxu0 0.0
      %8802 = vmatmul.mubr.f32.gmra.mxu0 %v458
      %v8803 = vpop.f32.mrf.mxu0
      %v8804 = vadd.f32 %v8660, %v8803
      %v8805 = vpop.f32.mrf.mxu0
      %8806 = vmatprep.mubr.f32.mxu0 0.0
      %8807 = vmatmul.mubr.f32.gmra.mxu0 %v461
      %v8808 = vpop.f32.mrf.mxu0
      %v8809 = vadd.f32 %v8660, %v8808
      %v8810 = vpop.f32.mrf.mxu0
      %8811 = vmatprep.mubr.f32.mxu0 0.0
      %8812 = vmatmul.mubr.f32.gmra.mxu0 %v464
      %v8813 = vpop.f32.mrf.mxu0
      %v8814 = vadd.f32 %v8660, %v8813
      %v8815 = vpop.f32.mrf.mxu0
      %8816 = vmatprep.mubr.f32.mxu0 0.0
      %8817 = vmatmul.mubr.f32.gmra.mxu0 %v467
      %v8818 = vpop.f32.mrf.mxu0
      %v8819 = vadd.f32 %v8660, %v8818
      %v8820 = vpop.f32.mrf.mxu0
      %8821 = vmatprep.mubr.f32.mxu0 0.0
      %8822 = vmatmul.mubr.f32.gmra.mxu0 %v470
      %v8823 = vpop.f32.mrf.mxu0
      %v8824 = vadd.f32 %v8660, %v8823
      %v8825 = vpop.f32.mrf.mxu0
      %8826 = vmatprep.mubr.f32.mxu0 0.0
      %8827 = vmatmul.mubr.f32.gmra.mxu0 %v473
      %v8828 = vpop.f32.mrf.mxu0
      %v8829 = vadd.f32 %v8660, %v8828
      %v8830 = vpop.f32.mrf.mxu0
      %8831 = vmatprep.mubr.f32.mxu0 0.0
      %8832 = vmatmul.mubr.f32.gmra.mxu0 %v476
      %v8833 = vpop.f32.mrf.mxu0
      %v8834 = vadd.f32 %v8660, %v8833
      %v8835 = vpop.f32.mrf.mxu0
      %8836 = vmatprep.mubr.f32.mxu0 0.0
      %8837 = vmatmul.mubr.f32.gmra.mxu0 %v479
      %v8838 = vpop.f32.mrf.mxu0
      %v8839 = vadd.f32 %v8660, %v8838
      %v8840 = vpop.f32.mrf.mxu0
      %8841 = vmatprep.mubr.f32.mxu0 0.0
      %8842 = vmatmul.mubr.f32.gmra.mxu0 %v482
      %v8843 = vpop.f32.mrf.mxu0
      %v8844 = vadd.f32 %v8660, %v8843
      %v8845 = vpop.f32.mrf.mxu0
      %8846 = vmatprep.mubr.f32.mxu0 0.0
      %8847 = vmatmul.mubr.f32.gmra.mxu0 %v485
      %v8848 = vpop.f32.mrf.mxu0
      %v8849 = vadd.f32 %v8660, %v8848
      %v8850 = vpop.f32.mrf.mxu0
      %8851 = vmatprep.mubr.f32.mxu0 0.0
      %8852 = vmatmul.mubr.f32.gmra.mxu0 %v488
      %v8853 = vpop.f32.mrf.mxu0
      %v8854 = vadd.f32 %v8660, %v8853
      %v8855 = vpop.f32.mrf.mxu0
      %8856 = vmatprep.mubr.f32.mxu0 0.0
      %8857 = vmatmul.mubr.f32.gmra.mxu0 %v491
      %v8858 = vpop.f32.mrf.mxu0
      %v8859 = vadd.f32 %v8660, %v8858
      %v8860 = vpop.f32.mrf.mxu0
      %8861 = vmatprep.mubr.f32.mxu0 0.0
      %8862 = vmatmul.mubr.f32.gmra.mxu0 %v494
      %v8863 = vpop.f32.mrf.mxu0
      %v8864 = vadd.f32 %v8660, %v8863
      %v8865 = vpop.f32.mrf.mxu0
      %8866 = vmatprep.mubr.f32.mxu0 0.0
      %8867 = vmatmul.mubr.f32.gmra.mxu0 %v497
      %v8868 = vpop.f32.mrf.mxu0
      %v8869 = vadd.f32 %v8660, %v8868
      %v8870 = vpop.f32.mrf.mxu0
      %8871 = vmatprep.mubr.f32.mxu0 0.0
      %8872 = vmatmul.mubr.f32.gmra.mxu0 %v500
      %v8873 = vpop.f32.mrf.mxu0
      %v8874 = vadd.f32 %v8660, %v8873
      %v8875 = vpop.f32.mrf.mxu0
      %8876 = vmatprep.mubr.f32.mxu0 0.0
      %8877 = vmatmul.mubr.f32.gmra.mxu0 %v503
      %v8878 = vpop.f32.mrf.mxu0
      %v8879 = vadd.f32 %v8660, %v8878
      %v8880 = vpop.f32.mrf.mxu0
      %8881 = vmatprep.mubr.f32.mxu0 0.0
      %8882 = vmatmul.mubr.f32.gmra.mxu0 %v506
      %v8883 = vpop.f32.mrf.mxu0
      %v8884 = vadd.f32 %v8660, %v8883
      %v8885 = vpop.f32.mrf.mxu0
      %8886 = vdwg.mxu0
      %s8887 = scalar_lea.vmem %s7, 768
      %v8888 = vld [vmem:[%s8887] sm:$0xff]
      %v8889 = vld [vmem:[%s8887 + $0x8] sm:$0xff]
      %v8890 = vld [vmem:[%s8887 + $0x10] sm:$0xff]
      %v8891 = vld [vmem:[%s8887 + $0x18] sm:$0xff]
      %v8892 = vld [vmem:[%s8887 + $0x20] sm:$0xff]
      %v8893 = vld [vmem:[%s8887 + $0x28] sm:$0xff]
      %v8894 = vld [vmem:[%s8887 + $0x30] sm:$0xff]
      %v8895 = vld [vmem:[%s8887 + $0x38] sm:$0xff]
      %v8896 = vld [vmem:[%s8887 + $0x40] sm:$0xff]
      %v8897 = vld [vmem:[%s8887 + $0x48] sm:$0xff]
      %v8898 = vld [vmem:[%s8887 + $0x50] sm:$0xff]
      %v8899 = vld [vmem:[%s8887 + $0x58] sm:$0xff]
      %v8900 = vld [vmem:[%s8887 + $0x60] sm:$0xff]
      %v8901 = vld [vmem:[%s8887 + $0x68] sm:$0xff]
      %v8902 = vld [vmem:[%s8887 + $0x70] sm:$0xff]
      %v8903 = vld [vmem:[%s8887 + $0x78] sm:$0xff]
      %v8904 = vld [vmem:[%s8887 + $0x80] sm:$0xff]
      %v8905 = vld [vmem:[%s8887 + $0x88] sm:$0xff]
      %v8906 = vld [vmem:[%s8887 + $0x90] sm:$0xff]
      %v8907 = vld [vmem:[%s8887 + $0x98] sm:$0xff]
      %v8908 = vld [vmem:[%s8887 + $0xa0] sm:$0xff]
      %v8909 = vld [vmem:[%s8887 + $0xa8] sm:$0xff]
      %v8910 = vld [vmem:[%s8887 + $0xb0] sm:$0xff]
      %v8911 = vld [vmem:[%s8887 + $0xb8] sm:$0xff]
      %v8912 = vld [vmem:[%s8887 + $0xc0] sm:$0xff]
      %v8913 = vld [vmem:[%s8887 + $0xc8] sm:$0xff]
      %v8914 = vld [vmem:[%s8887 + $0xd0] sm:$0xff]
      %v8915 = vld [vmem:[%s8887 + $0xd8] sm:$0xff]
      %v8916 = vld [vmem:[%s8887 + $0xe0] sm:$0xff]
      %v8917 = vld [vmem:[%s8887 + $0xe8] sm:$0xff]
      %v8918 = vld [vmem:[%s8887 + $0xf0] sm:$0xff]
      %v8919 = vld [vmem:[%s8887 + $0xf8] sm:$0xff]
      %v8921 = vsel %vm1237, %v8253, 0
      %v8924 = vsel %vm1237, %v8258, 0
      %v8927 = vsel %vm1237, %v8263, 0
      %v8930 = vsel %vm1237, %v8268, 0
      %v8933 = vsel %vm1237, %v8273, 0
      %v8936 = vsel %vm1237, %v8278, 0
      %v8939 = vsel %vm1237, %v8283, 0
      %v8942 = vsel %vm1237, %v8288, 0
      %v8945 = vsel %vm1237, %v8491, 0
      %v8948 = vsel %vm1237, %v8496, 0
      %v8951 = vsel %vm1237, %v8501, 0
      %v8954 = vsel %vm1237, %v8506, 0
      %v8957 = vsel %vm1237, %v8511, 0
      %v8960 = vsel %vm1237, %v8516, 0
      %v8963 = vsel %vm1237, %v8521, 0
      %v8966 = vsel %vm1237, %v8526, 0
      %8968 = vmatprep.subr.mxu0 0.0
      %8969 = vmatpush1.xpose.msra.mxu0 0.0
      %8970 = vmatprep.subr.mxu0 0.0
      %8971 = vmatpush1.xpose.msra.mxu0 0.0
      %8972 = vmatprep.subr.mxu0 0.0
      %8973 = vmatpush1.xpose.msra.mxu0 0.0
      %8974 = vmatprep.subr.mxu0 0.0
      %8975 = vmatpush1.xpose.msra.mxu0 0.0
      %8976 = vmatprep.subr.mxu0 0.0
      %8977 = vmatpush1.xpose.msra.mxu0 0.0
      %8978 = vmatprep.subr.mxu0 0.0
      %8979 = vmatpush1.xpose.msra.mxu0 0.0
      %8980 = vmatprep.subr.mxu0 0.0
      %8981 = vmatpush1.xpose.msra.mxu0 0.0
      %8982 = vmatprep.subr.mxu0 0.0
      %8983 = vmatpush1.xpose.msra.mxu0 0.0
      %8984 = vmatprep.subr.mxu0 0.0
      %8985 = vmatpush1.xpose.msra.mxu0 %v8966
      %8986 = vmatprep.subr.mxu0 0.0
      %8987 = vmatpush1.xpose.msra.mxu0 %v8963
      %8988 = vmatprep.subr.mxu0 0.0
      %8989 = vmatpush1.xpose.msra.mxu0 %v8960
      %8990 = vmatprep.subr.mxu0 0.0
      %8991 = vmatpush1.xpose.msra.mxu0 %v8957
      %8992 = vmatprep.subr.mxu0 0.0
      %8993 = vmatpush1.xpose.msra.mxu0 %v8954
      %8994 = vmatprep.subr.mxu0 0.0
      %8995 = vmatpush1.xpose.msra.mxu0 %v8951
      %8996 = vmatprep.subr.mxu0 0.0
      %8997 = vmatpush1.xpose.msra.mxu0 %v8948
      %8998 = vmatprep.subr.mxu0 0.0
      %8999 = vmatpush1.xpose.msra.mxu0 %v8945
      %9000 = vmatprep.subr.mxu0 0.0
      %9001 = vmatpush2.xpose.msra.mxu0 0.0
      %9002 = vmatprep.subr.mxu0 0.0
      %9003 = vmatpush2.xpose.msra.mxu0 0.0
      %9004 = vmatprep.subr.mxu0 0.0
      %9005 = vmatpush2.xpose.msra.mxu0 0.0
      %9006 = vmatprep.subr.mxu0 0.0
      %9007 = vmatpush2.xpose.msra.mxu0 0.0
      %9008 = vmatprep.subr.mxu0 0.0
      %9009 = vmatpush2.xpose.msra.mxu0 0.0
      %9010 = vmatprep.subr.mxu0 0.0
      %9011 = vmatpush2.xpose.msra.mxu0 0.0
      %9012 = vmatprep.subr.mxu0 0.0
      %9013 = vmatpush2.xpose.msra.mxu0 0.0
      %9014 = vmatprep.subr.mxu0 0.0
      %9015 = vmatpush2.xpose.msra.mxu0 0.0
      %9016 = vmatprep.subr.mxu0 0.0
      %9017 = vmatpush2.xpose.msra.mxu0 0.0
      %9018 = vmatprep.subr.mxu0 0.0
      %9019 = vmatpush2.xpose.msra.mxu0 0.0
      %9020 = vmatprep.subr.mxu0 0.0
      %9021 = vmatpush2.xpose.msra.mxu0 0.0
      %9022 = vmatprep.subr.mxu0 0.0
      %9023 = vmatpush2.xpose.msra.mxu0 0.0
      %9024 = vmatprep.subr.mxu0 0.0
      %9025 = vmatpush2.xpose.msra.mxu0 0.0
      %9026 = vmatprep.subr.mxu0 0.0
      %9027 = vmatpush2.xpose.msra.mxu0 0.0
      %9028 = vmatprep.subr.mxu0 0.0
      %9029 = vmatpush2.xpose.msra.mxu0 0.0
      %9030 = vmatprep.subr.mxu0 0.0
      %9031 = vmatpush2.xpose.msra.mxu0 0.0
      %9032 = vmatprep.mubr.f32.mxu0 0.0
      %9033 = vmatmul.mubr.f32.gmra.mxu0 %v8921
      %v9034 = vpop.f32.mrf.mxu0
      %v9035 = vadd.f32 %v8888, %v9034
      %v9036 = vpop.f32.mrf.mxu0
      %9037 = vmatprep.mubr.f32.mxu0 0.0
      %9038 = vmatmul.mubr.f32.gmra.mxu0 %v8924
      %v9039 = vpop.f32.mrf.mxu0
      %v9040 = vadd.f32 %v8889, %v9039
      %v9041 = vpop.f32.mrf.mxu0
      %9042 = vmatprep.mubr.f32.mxu0 0.0
      %9043 = vmatmul.mubr.f32.gmra.mxu0 %v8927
      %v9044 = vpop.f32.mrf.mxu0
      %v9045 = vadd.f32 %v8890, %v9044
      %v9046 = vpop.f32.mrf.mxu0
      %9047 = vmatprep.mubr.f32.mxu0 0.0
      %9048 = vmatmul.mubr.f32.gmra.mxu0 %v8930
      %v9049 = vpop.f32.mrf.mxu0
      %v9050 = vadd.f32 %v8891, %v9049
      %v9051 = vpop.f32.mrf.mxu0
      %9052 = vmatprep.mubr.f32.mxu0 0.0
      %9053 = vmatmul.mubr.f32.gmra.mxu0 %v8933
      %v9054 = vpop.f32.mrf.mxu0
      %v9055 = vadd.f32 %v8892, %v9054
      %v9056 = vpop.f32.mrf.mxu0
      %9057 = vmatprep.mubr.f32.mxu0 0.0
      %9058 = vmatmul.mubr.f32.gmra.mxu0 %v8936
      %v9059 = vpop.f32.mrf.mxu0
      %v9060 = vadd.f32 %v8893, %v9059
      %v9061 = vpop.f32.mrf.mxu0
      %9062 = vmatprep.mubr.f32.mxu0 0.0
      %9063 = vmatmul.mubr.f32.gmra.mxu0 %v8939
      %v9064 = vpop.f32.mrf.mxu0
      %v9065 = vadd.f32 %v8894, %v9064
      %v9066 = vpop.f32.mrf.mxu0
      %9067 = vmatprep.mubr.f32.mxu0 0.0
      %9068 = vmatmul.mubr.f32.gmra.mxu0 %v8942
      %v9069 = vpop.f32.mrf.mxu0
      %v9070 = vadd.f32 %v8895, %v9069
      %v9071 = vpop.f32.mrf.mxu0
      %9072 = vdwg.mxu0
      %v9074 = vsel %vm1237, %v8293, 0
      %v9077 = vsel %vm1237, %v8298, 0
      %v9080 = vsel %vm1237, %v8303, 0
      %v9083 = vsel %vm1237, %v8308, 0
      %v9086 = vsel %vm1237, %v8313, 0
      %v9089 = vsel %vm1237, %v8318, 0
      %v9092 = vsel %vm1237, %v8323, 0
      %v9095 = vsel %vm1237, %v8328, 0
      %v9098 = vsel %vm1237, %v8531, 0
      %v9101 = vsel %vm1237, %v8536, 0
      %v9104 = vsel %vm1237, %v8541, 0
      %v9107 = vsel %vm1237, %v8546, 0
      %v9110 = vsel %vm1237, %v8551, 0
      %v9113 = vsel %vm1237, %v8556, 0
      %v9116 = vsel %vm1237, %v8561, 0
      %v9119 = vsel %vm1237, %v8566, 0
      %9121 = vmatprep.subr.mxu0 0.0
      %9122 = vmatpush1.xpose.msra.mxu0 0.0
      %9123 = vmatprep.subr.mxu0 0.0
      %9124 = vmatpush1.xpose.msra.mxu0 0.0
      %9125 = vmatprep.subr.mxu0 0.0
      %9126 = vmatpush1.xpose.msra.mxu0 0.0
      %9127 = vmatprep.subr.mxu0 0.0
      %9128 = vmatpush1.xpose.msra.mxu0 0.0
      %9129 = vmatprep.subr.mxu0 0.0
      %9130 = vmatpush1.xpose.msra.mxu0 0.0
      %9131 = vmatprep.subr.mxu0 0.0
      %9132 = vmatpush1.xpose.msra.mxu0 0.0
      %9133 = vmatprep.subr.mxu0 0.0
      %9134 = vmatpush1.xpose.msra.mxu0 0.0
      %9135 = vmatprep.subr.mxu0 0.0
      %9136 = vmatpush1.xpose.msra.mxu0 0.0
      %9137 = vmatprep.subr.mxu0 0.0
      %9138 = vmatpush1.xpose.msra.mxu0 %v9119
      %9139 = vmatprep.subr.mxu0 0.0
      %9140 = vmatpush1.xpose.msra.mxu0 %v9116
      %9141 = vmatprep.subr.mxu0 0.0
      %9142 = vmatpush1.xpose.msra.mxu0 %v9113
      %9143 = vmatprep.subr.mxu0 0.0
      %9144 = vmatpush1.xpose.msra.mxu0 %v9110
      %9145 = vmatprep.subr.mxu0 0.0
      %9146 = vmatpush1.xpose.msra.mxu0 %v9107
      %9147 = vmatprep.subr.mxu0 0.0
      %9148 = vmatpush1.xpose.msra.mxu0 %v9104
      %9149 = vmatprep.subr.mxu0 0.0
      %9150 = vmatpush1.xpose.msra.mxu0 %v9101
      %9151 = vmatprep.subr.mxu0 0.0
      %9152 = vmatpush1.xpose.msra.mxu0 %v9098
      %9153 = vmatprep.subr.mxu0 0.0
      %9154 = vmatpush2.xpose.msra.mxu0 0.0
      %9155 = vmatprep.subr.mxu0 0.0
      %9156 = vmatpush2.xpose.msra.mxu0 0.0
      %9157 = vmatprep.subr.mxu0 0.0
      %9158 = vmatpush2.xpose.msra.mxu0 0.0
      %9159 = vmatprep.subr.mxu0 0.0
      %9160 = vmatpush2.xpose.msra.mxu0 0.0
      %9161 = vmatprep.subr.mxu0 0.0
      %9162 = vmatpush2.xpose.msra.mxu0 0.0
      %9163 = vmatprep.subr.mxu0 0.0
      %9164 = vmatpush2.xpose.msra.mxu0 0.0
      %9165 = vmatprep.subr.mxu0 0.0
      %9166 = vmatpush2.xpose.msra.mxu0 0.0
      %9167 = vmatprep.subr.mxu0 0.0
      %9168 = vmatpush2.xpose.msra.mxu0 0.0
      %9169 = vmatprep.subr.mxu0 0.0
      %9170 = vmatpush2.xpose.msra.mxu0 0.0
      %9171 = vmatprep.subr.mxu0 0.0
      %9172 = vmatpush2.xpose.msra.mxu0 0.0
      %9173 = vmatprep.subr.mxu0 0.0
      %9174 = vmatpush2.xpose.msra.mxu0 0.0
      %9175 = vmatprep.subr.mxu0 0.0
      %9176 = vmatpush2.xpose.msra.mxu0 0.0
      %9177 = vmatprep.subr.mxu0 0.0
      %9178 = vmatpush2.xpose.msra.mxu0 0.0
      %9179 = vmatprep.subr.mxu0 0.0
      %9180 = vmatpush2.xpose.msra.mxu0 0.0
      %9181 = vmatprep.subr.mxu0 0.0
      %9182 = vmatpush2.xpose.msra.mxu0 0.0
      %9183 = vmatprep.subr.mxu0 0.0
      %9184 = vmatpush2.xpose.msra.mxu0 0.0
      %9185 = vmatprep.mubr.f32.mxu0 0.0
      %9186 = vmatmul.mubr.f32.gmra.mxu0 %v9074
      %v9187 = vpop.f32.mrf.mxu0
      %v9188 = vadd.f32 %v8896, %v9187
      %v9189 = vpop.f32.mrf.mxu0
      %9190 = vmatprep.mubr.f32.mxu0 0.0
      %9191 = vmatmul.mubr.f32.gmra.mxu0 %v9077
      %v9192 = vpop.f32.mrf.mxu0
      %v9193 = vadd.f32 %v8897, %v9192
      %v9194 = vpop.f32.mrf.mxu0
      %9195 = vmatprep.mubr.f32.mxu0 0.0
      %9196 = vmatmul.mubr.f32.gmra.mxu0 %v9080
      %v9197 = vpop.f32.mrf.mxu0
      %v9198 = vadd.f32 %v8898, %v9197
      %v9199 = vpop.f32.mrf.mxu0
      %9200 = vmatprep.mubr.f32.mxu0 0.0
      %9201 = vmatmul.mubr.f32.gmra.mxu0 %v9083
      %v9202 = vpop.f32.mrf.mxu0
      %v9203 = vadd.f32 %v8899, %v9202
      %v9204 = vpop.f32.mrf.mxu0
      %9205 = vmatprep.mubr.f32.mxu0 0.0
      %9206 = vmatmul.mubr.f32.gmra.mxu0 %v9086
      %v9207 = vpop.f32.mrf.mxu0
      %v9208 = vadd.f32 %v8900, %v9207
      %v9209 = vpop.f32.mrf.mxu0
      %9210 = vmatprep.mubr.f32.mxu0 0.0
      %9211 = vmatmul.mubr.f32.gmra.mxu0 %v9089
      %v9212 = vpop.f32.mrf.mxu0
      %v9213 = vadd.f32 %v8901, %v9212
      %v9214 = vpop.f32.mrf.mxu0
      %9215 = vmatprep.mubr.f32.mxu0 0.0
      %9216 = vmatmul.mubr.f32.gmra.mxu0 %v9092
      %v9217 = vpop.f32.mrf.mxu0
      %v9218 = vadd.f32 %v8902, %v9217
      %v9219 = vpop.f32.mrf.mxu0
      %9220 = vmatprep.mubr.f32.mxu0 0.0
      %9221 = vmatmul.mubr.f32.gmra.mxu0 %v9095
      %v9222 = vpop.f32.mrf.mxu0
      %v9223 = vadd.f32 %v8903, %v9222
      %v9224 = vpop.f32.mrf.mxu0
      %9225 = vdwg.mxu0
      %v9227 = vsel %vm1237, %v8333, 0
      %v9230 = vsel %vm1237, %v8338, 0
      %v9233 = vsel %vm1237, %v8343, 0
      %v9236 = vsel %vm1237, %v8348, 0
      %v9239 = vsel %vm1237, %v8353, 0
      %v9242 = vsel %vm1237, %v8358, 0
      %v9245 = vsel %vm1237, %v8363, 0
      %v9248 = vsel %vm1237, %v8368, 0
      %v9251 = vsel %vm1237, %v8571, 0
      %v9254 = vsel %vm1237, %v8576, 0
      %v9257 = vsel %vm1237, %v8581, 0
      %v9260 = vsel %vm1237, %v8586, 0
      %v9263 = vsel %vm1237, %v8591, 0
      %v9266 = vsel %vm1237, %v8596, 0
      %v9269 = vsel %vm1237, %v8601, 0
      %v9272 = vsel %vm1237, %v8606, 0
      %9274 = vmatprep.subr.mxu0 0.0
      %9275 = vmatpush1.xpose.msra.mxu0 0.0
      %9276 = vmatprep.subr.mxu0 0.0
      %9277 = vmatpush1.xpose.msra.mxu0 0.0
      %9278 = vmatprep.subr.mxu0 0.0
      %9279 = vmatpush1.xpose.msra.mxu0 0.0
      %9280 = vmatprep.subr.mxu0 0.0
      %9281 = vmatpush1.xpose.msra.mxu0 0.0
      %9282 = vmatprep.subr.mxu0 0.0
      %9283 = vmatpush1.xpose.msra.mxu0 0.0
      %9284 = vmatprep.subr.mxu0 0.0
      %9285 = vmatpush1.xpose.msra.mxu0 0.0
      %9286 = vmatprep.subr.mxu0 0.0
      %9287 = vmatpush1.xpose.msra.mxu0 0.0
      %9288 = vmatprep.subr.mxu0 0.0
      %9289 = vmatpush1.xpose.msra.mxu0 0.0
      %9290 = vmatprep.subr.mxu0 0.0
      %9291 = vmatpush1.xpose.msra.mxu0 %v9272
      %9292 = vmatprep.subr.mxu0 0.0
      %9293 = vmatpush1.xpose.msra.mxu0 %v9269
      %9294 = vmatprep.subr.mxu0 0.0
      %9295 = vmatpush1.xpose.msra.mxu0 %v9266
      %9296 = vmatprep.subr.mxu0 0.0
      %9297 = vmatpush1.xpose.msra.mxu0 %v9263
      %9298 = vmatprep.subr.mxu0 0.0
      %9299 = vmatpush1.xpose.msra.mxu0 %v9260
      %9300 = vmatprep.subr.mxu0 0.0
      %9301 = vmatpush1.xpose.msra.mxu0 %v9257
      %9302 = vmatprep.subr.mxu0 0.0
      %9303 = vmatpush1.xpose.msra.mxu0 %v9254
      %9304 = vmatprep.subr.mxu0 0.0
      %9305 = vmatpush1.xpose.msra.mxu0 %v9251
      %9306 = vmatprep.subr.mxu0 0.0
      %9307 = vmatpush2.xpose.msra.mxu0 0.0
      %9308 = vmatprep.subr.mxu0 0.0
      %9309 = vmatpush2.xpose.msra.mxu0 0.0
      %9310 = vmatprep.subr.mxu0 0.0
      %9311 = vmatpush2.xpose.msra.mxu0 0.0
      %9312 = vmatprep.subr.mxu0 0.0
      %9313 = vmatpush2.xpose.msra.mxu0 0.0
      %9314 = vmatprep.subr.mxu0 0.0
      %9315 = vmatpush2.xpose.msra.mxu0 0.0
      %9316 = vmatprep.subr.mxu0 0.0
      %9317 = vmatpush2.xpose.msra.mxu0 0.0
      %9318 = vmatprep.subr.mxu0 0.0
      %9319 = vmatpush2.xpose.msra.mxu0 0.0
      %9320 = vmatprep.subr.mxu0 0.0
      %9321 = vmatpush2.xpose.msra.mxu0 0.0
      %9322 = vmatprep.subr.mxu0 0.0
      %9323 = vmatpush2.xpose.msra.mxu0 0.0
      %9324 = vmatprep.subr.mxu0 0.0
      %9325 = vmatpush2.xpose.msra.mxu0 0.0
      %9326 = vmatprep.subr.mxu0 0.0
      %9327 = vmatpush2.xpose.msra.mxu0 0.0
      %9328 = vmatprep.subr.mxu0 0.0
      %9329 = vmatpush2.xpose.msra.mxu0 0.0
      %9330 = vmatprep.subr.mxu0 0.0
      %9331 = vmatpush2.xpose.msra.mxu0 0.0
      %9332 = vmatprep.subr.mxu0 0.0
      %9333 = vmatpush2.xpose.msra.mxu0 0.0
      %9334 = vmatprep.subr.mxu0 0.0
      %9335 = vmatpush2.xpose.msra.mxu0 0.0
      %9336 = vmatprep.subr.mxu0 0.0
      %9337 = vmatpush2.xpose.msra.mxu0 0.0
      %9338 = vmatprep.mubr.f32.mxu0 0.0
      %9339 = vmatmul.mubr.f32.gmra.mxu0 %v9227
      %v9340 = vpop.f32.mrf.mxu0
      %v9341 = vadd.f32 %v8904, %v9340
      %v9342 = vpop.f32.mrf.mxu0
      %9343 = vmatprep.mubr.f32.mxu0 0.0
      %9344 = vmatmul.mubr.f32.gmra.mxu0 %v9230
      %v9345 = vpop.f32.mrf.mxu0
      %v9346 = vadd.f32 %v8905, %v9345
      %v9347 = vpop.f32.mrf.mxu0
      %9348 = vmatprep.mubr.f32.mxu0 0.0
      %9349 = vmatmul.mubr.f32.gmra.mxu0 %v9233
      %v9350 = vpop.f32.mrf.mxu0
      %v9351 = vadd.f32 %v8906, %v9350
      %v9352 = vpop.f32.mrf.mxu0
      %9353 = vmatprep.mubr.f32.mxu0 0.0
      %9354 = vmatmul.mubr.f32.gmra.mxu0 %v9236
      %v9355 = vpop.f32.mrf.mxu0
      %v9356 = vadd.f32 %v8907, %v9355
      %v9357 = vpop.f32.mrf.mxu0
      %9358 = vmatprep.mubr.f32.mxu0 0.0
      %9359 = vmatmul.mubr.f32.gmra.mxu0 %v9239
      %v9360 = vpop.f32.mrf.mxu0
      %v9361 = vadd.f32 %v8908, %v9360
      %v9362 = vpop.f32.mrf.mxu0
      %9363 = vmatprep.mubr.f32.mxu0 0.0
      %9364 = vmatmul.mubr.f32.gmra.mxu0 %v9242
      %v9365 = vpop.f32.mrf.mxu0
      %v9366 = vadd.f32 %v8909, %v9365
      %v9367 = vpop.f32.mrf.mxu0
      %9368 = vmatprep.mubr.f32.mxu0 0.0
      %9369 = vmatmul.mubr.f32.gmra.mxu0 %v9245
      %v9370 = vpop.f32.mrf.mxu0
      %v9371 = vadd.f32 %v8910, %v9370
      %v9372 = vpop.f32.mrf.mxu0
      %9373 = vmatprep.mubr.f32.mxu0 0.0
      %9374 = vmatmul.mubr.f32.gmra.mxu0 %v9248
      %v9375 = vpop.f32.mrf.mxu0
      %v9376 = vadd.f32 %v8911, %v9375
      %v9377 = vpop.f32.mrf.mxu0
      %9378 = vdwg.mxu0
      %v9380 = vsel %vm1237, %v8373, 0
      %v9383 = vsel %vm1237, %v8378, 0
      %v9386 = vsel %vm1237, %v8383, 0
      %v9389 = vsel %vm1237, %v8388, 0
      %v9392 = vsel %vm1237, %v8393, 0
      %v9395 = vsel %vm1237, %v8398, 0
      %v9398 = vsel %vm1237, %v8403, 0
      %v9401 = vsel %vm1237, %v8408, 0
      %v9404 = vsel %vm1237, %v8611, 0
      %v9407 = vsel %vm1237, %v8616, 0
      %v9410 = vsel %vm1237, %v8621, 0
      %v9413 = vsel %vm1237, %v8626, 0
      %v9416 = vsel %vm1237, %v8631, 0
      %v9419 = vsel %vm1237, %v8636, 0
      %v9422 = vsel %vm1237, %v8641, 0
      %v9425 = vsel %vm1237, %v8646, 0
      %9427 = vmatprep.subr.mxu0 0.0
      %9428 = vmatpush1.xpose.msra.mxu0 0.0
      %9429 = vmatprep.subr.mxu0 0.0
      %9430 = vmatpush1.xpose.msra.mxu0 0.0
      %9431 = vmatprep.subr.mxu0 0.0
      %9432 = vmatpush1.xpose.msra.mxu0 0.0
      %9433 = vmatprep.subr.mxu0 0.0
      %9434 = vmatpush1.xpose.msra.mxu0 0.0
      %9435 = vmatprep.subr.mxu0 0.0
      %9436 = vmatpush1.xpose.msra.mxu0 0.0
      %9437 = vmatprep.subr.mxu0 0.0
      %9438 = vmatpush1.xpose.msra.mxu0 0.0
      %9439 = vmatprep.subr.mxu0 0.0
      %9440 = vmatpush1.xpose.msra.mxu0 0.0
      %9441 = vmatprep.subr.mxu0 0.0
      %9442 = vmatpush1.xpose.msra.mxu0 0.0
      %9443 = vmatprep.subr.mxu0 0.0
      %9444 = vmatpush1.xpose.msra.mxu0 %v9425
      %9445 = vmatprep.subr.mxu0 0.0
      %9446 = vmatpush1.xpose.msra.mxu0 %v9422
      %9447 = vmatprep.subr.mxu0 0.0
      %9448 = vmatpush1.xpose.msra.mxu0 %v9419
      %9449 = vmatprep.subr.mxu0 0.0
      %9450 = vmatpush1.xpose.msra.mxu0 %v9416
      %9451 = vmatprep.subr.mxu0 0.0
      %9452 = vmatpush1.xpose.msra.mxu0 %v9413
      %9453 = vmatprep.subr.mxu0 0.0
      %9454 = vmatpush1.xpose.msra.mxu0 %v9410
      %9455 = vmatprep.subr.mxu0 0.0
      %9456 = vmatpush1.xpose.msra.mxu0 %v9407
      %9457 = vmatprep.subr.mxu0 0.0
      %9458 = vmatpush1.xpose.msra.mxu0 %v9404
      %9459 = vmatprep.subr.mxu0 0.0
      %9460 = vmatpush2.xpose.msra.mxu0 0.0
      %9461 = vmatprep.subr.mxu0 0.0
      %9462 = vmatpush2.xpose.msra.mxu0 0.0
      %9463 = vmatprep.subr.mxu0 0.0
      %9464 = vmatpush2.xpose.msra.mxu0 0.0
      %9465 = vmatprep.subr.mxu0 0.0
      %9466 = vmatpush2.xpose.msra.mxu0 0.0
      %9467 = vmatprep.subr.mxu0 0.0
      %9468 = vmatpush2.xpose.msra.mxu0 0.0
      %9469 = vmatprep.subr.mxu0 0.0
      %9470 = vmatpush2.xpose.msra.mxu0 0.0
      %9471 = vmatprep.subr.mxu0 0.0
      %9472 = vmatpush2.xpose.msra.mxu0 0.0
      %9473 = vmatprep.subr.mxu0 0.0
      %9474 = vmatpush2.xpose.msra.mxu0 0.0
      %9475 = vmatprep.subr.mxu0 0.0
      %9476 = vmatpush2.xpose.msra.mxu0 0.0
      %9477 = vmatprep.subr.mxu0 0.0
      %9478 = vmatpush2.xpose.msra.mxu0 0.0
      %9479 = vmatprep.subr.mxu0 0.0
      %9480 = vmatpush2.xpose.msra.mxu0 0.0
      %9481 = vmatprep.subr.mxu0 0.0
      %9482 = vmatpush2.xpose.msra.mxu0 0.0
      %9483 = vmatprep.subr.mxu0 0.0
      %9484 = vmatpush2.xpose.msra.mxu0 0.0
      %9485 = vmatprep.subr.mxu0 0.0
      %9486 = vmatpush2.xpose.msra.mxu0 0.0
      %9487 = vmatprep.subr.mxu0 0.0
      %9488 = vmatpush2.xpose.msra.mxu0 0.0
      %9489 = vmatprep.subr.mxu0 0.0
      %9490 = vmatpush2.xpose.msra.mxu0 0.0
      %9491 = vmatprep.mubr.f32.mxu0 0.0
      %9492 = vmatmul.mubr.f32.gmra.mxu0 %v9380
      %v9493 = vpop.f32.mrf.mxu0
      %v9494 = vadd.f32 %v8912, %v9493
      %v9495 = vpop.f32.mrf.mxu0
      %9496 = vmatprep.mubr.f32.mxu0 0.0
      %9497 = vmatmul.mubr.f32.gmra.mxu0 %v9383
      %v9498 = vpop.f32.mrf.mxu0
      %v9499 = vadd.f32 %v8913, %v9498
      %v9500 = vpop.f32.mrf.mxu0
      %9501 = vmatprep.mubr.f32.mxu0 0.0
      %9502 = vmatmul.mubr.f32.gmra.mxu0 %v9386
      %v9503 = vpop.f32.mrf.mxu0
      %v9504 = vadd.f32 %v8914, %v9503
      %v9505 = vpop.f32.mrf.mxu0
      %9506 = vmatprep.mubr.f32.mxu0 0.0
      %9507 = vmatmul.mubr.f32.gmra.mxu0 %v9389
      %v9508 = vpop.f32.mrf.mxu0
      %v9509 = vadd.f32 %v8915, %v9508
      %v9510 = vpop.f32.mrf.mxu0
      %9511 = vmatprep.mubr.f32.mxu0 0.0
      %9512 = vmatmul.mubr.f32.gmra.mxu0 %v9392
      %v9513 = vpop.f32.mrf.mxu0
      %v9514 = vadd.f32 %v8916, %v9513
      %v9515 = vpop.f32.mrf.mxu0
      %9516 = vmatprep.mubr.f32.mxu0 0.0
      %9517 = vmatmul.mubr.f32.gmra.mxu0 %v9395
      %v9518 = vpop.f32.mrf.mxu0
      %v9519 = vadd.f32 %v8917, %v9518
      %v9520 = vpop.f32.mrf.mxu0
      %9521 = vmatprep.mubr.f32.mxu0 0.0
      %9522 = vmatmul.mubr.f32.gmra.mxu0 %v9398
      %v9523 = vpop.f32.mrf.mxu0
      %v9524 = vadd.f32 %v8918, %v9523
      %v9525 = vpop.f32.mrf.mxu0
      %9526 = vmatprep.mubr.f32.mxu0 0.0
      %9527 = vmatmul.mubr.f32.gmra.mxu0 %v9401
      %v9528 = vpop.f32.mrf.mxu0
      %v9529 = vadd.f32 %v8919, %v9528
      %v9530 = vpop.f32.mrf.mxu0
      %9531 = vdwg.mxu0
      %v9532 = vsel %vm1850, %v9035, -inf
      %9533 = vmax.xlane.f32.xlu0 %v9532
      %v9534 = vpop.xlane.xlu0 %9533
      %v9535 = vsel %vm1850, %v9040, -inf
      %9536 = vmax.xlane.f32.xlu0 %v9535
      %v9537 = vpop.xlane.xlu0 %9536
      %v9538 = vsel %vm1850, %v9045, -inf
      %9539 = vmax.xlane.f32.xlu0 %v9538
      %v9540 = vpop.xlane.xlu0 %9539
      %v9541 = vsel %vm1850, %v9050, -inf
      %9542 = vmax.xlane.f32.xlu0 %v9541
      %v9543 = vpop.xlane.xlu0 %9542
      %v9544 = vsel %vm1850, %v9055, -inf
      %9545 = vmax.xlane.f32.xlu0 %v9544
      %v9546 = vpop.xlane.xlu0 %9545
      %v9547 = vsel %vm1850, %v9060, -inf
      %9548 = vmax.xlane.f32.xlu0 %v9547
      %v9549 = vpop.xlane.xlu0 %9548
      %v9550 = vsel %vm1850, %v9065, -inf
      %9551 = vmax.xlane.f32.xlu0 %v9550
      %v9552 = vpop.xlane.xlu0 %9551
      %v9553 = vsel %vm1850, %v9070, -inf
      %9554 = vmax.xlane.f32.xlu0 %v9553
      %v9555 = vpop.xlane.xlu0 %9554
      %v9556 = vsel %vm1850, %v9188, -inf
      %9557 = vmax.xlane.f32.xlu0 %v9556
      %v9558 = vpop.xlane.xlu0 %9557
      %v9559 = vsel %vm1850, %v9193, -inf
      %9560 = vmax.xlane.f32.xlu0 %v9559
      %v9561 = vpop.xlane.xlu0 %9560
      %v9562 = vsel %vm1850, %v9198, -inf
      %9563 = vmax.xlane.f32.xlu0 %v9562
      %v9564 = vpop.xlane.xlu0 %9563
      %v9565 = vsel %vm1850, %v9203, -inf
      %9566 = vmax.xlane.f32.xlu0 %v9565
      %v9567 = vpop.xlane.xlu0 %9566
      %v9568 = vsel %vm1850, %v9208, -inf
      %9569 = vmax.xlane.f32.xlu0 %v9568
      %v9570 = vpop.xlane.xlu0 %9569
      %v9571 = vsel %vm1850, %v9213, -inf
      %9572 = vmax.xlane.f32.xlu0 %v9571
      %v9573 = vpop.xlane.xlu0 %9572
      %v9574 = vsel %vm1850, %v9218, -inf
      %9575 = vmax.xlane.f32.xlu0 %v9574
      %v9576 = vpop.xlane.xlu0 %9575
      %v9577 = vsel %vm1850, %v9223, -inf
      %9578 = vmax.xlane.f32.xlu0 %v9577
      %v9579 = vpop.xlane.xlu0 %9578
      %v9580 = vsel %vm1850, %v9341, -inf
      %9581 = vmax.xlane.f32.xlu0 %v9580
      %v9582 = vpop.xlane.xlu0 %9581
      %v9583 = vsel %vm1850, %v9346, -inf
      %9584 = vmax.xlane.f32.xlu0 %v9583
      %v9585 = vpop.xlane.xlu0 %9584
      %v9586 = vsel %vm1850, %v9351, -inf
      %9587 = vmax.xlane.f32.xlu0 %v9586
      %v9588 = vpop.xlane.xlu0 %9587
      %v9589 = vsel %vm1850, %v9356, -inf
      %9590 = vmax.xlane.f32.xlu0 %v9589
      %v9591 = vpop.xlane.xlu0 %9590
      %v9592 = vsel %vm1850, %v9361, -inf
      %9593 = vmax.xlane.f32.xlu0 %v9592
      %v9594 = vpop.xlane.xlu0 %9593
      %v9595 = vsel %vm1850, %v9366, -inf
      %9596 = vmax.xlane.f32.xlu0 %v9595
      %v9597 = vpop.xlane.xlu0 %9596
      %v9598 = vsel %vm1850, %v9371, -inf
      %9599 = vmax.xlane.f32.xlu0 %v9598
      %v9600 = vpop.xlane.xlu0 %9599
      %v9601 = vsel %vm1850, %v9376, -inf
      %9602 = vmax.xlane.f32.xlu0 %v9601
      %v9603 = vpop.xlane.xlu0 %9602
      %v9604 = vsel %vm1850, %v9494, -inf
      %9605 = vmax.xlane.f32.xlu0 %v9604
      %v9606 = vpop.xlane.xlu0 %9605
      %v9607 = vsel %vm1850, %v9499, -inf
      %9608 = vmax.xlane.f32.xlu0 %v9607
      %v9609 = vpop.xlane.xlu0 %9608
      %v9610 = vsel %vm1850, %v9504, -inf
      %9611 = vmax.xlane.f32.xlu0 %v9610
      %v9612 = vpop.xlane.xlu0 %9611
      %v9613 = vsel %vm1850, %v9509, -inf
      %9614 = vmax.xlane.f32.xlu0 %v9613
      %v9615 = vpop.xlane.xlu0 %9614
      %v9616 = vsel %vm1850, %v9514, -inf
      %9617 = vmax.xlane.f32.xlu0 %v9616
      %v9618 = vpop.xlane.xlu0 %9617
      %v9619 = vsel %vm1850, %v9519, -inf
      %9620 = vmax.xlane.f32.xlu0 %v9619
      %v9621 = vpop.xlane.xlu0 %9620
      %v9622 = vsel %vm1850, %v9524, -inf
      %9623 = vmax.xlane.f32.xlu0 %v9622
      %v9624 = vpop.xlane.xlu0 %9623
      %v9625 = vsel %vm1850, %v9529, -inf
      %9626 = vmax.xlane.f32.xlu0 %v9625
      %v9627 = vpop.xlane.xlu0 %9626
      %v9628 = vsub.f32 %v9035, %v9534
      %v9629 = vsub.f32 %v9040, %v9537
      %v9630 = vsub.f32 %v9045, %v9540
      %v9631 = vsub.f32 %v9050, %v9543
      %v9632 = vsub.f32 %v9055, %v9546
      %v9633 = vsub.f32 %v9060, %v9549
      %v9634 = vsub.f32 %v9065, %v9552
      %v9635 = vsub.f32 %v9070, %v9555
      %v9636 = vsub.f32 %v9188, %v9558
      %v9637 = vsub.f32 %v9193, %v9561
      %v9638 = vsub.f32 %v9198, %v9564
      %v9639 = vsub.f32 %v9203, %v9567
      %v9640 = vsub.f32 %v9208, %v9570
      %v9641 = vsub.f32 %v9213, %v9573
      %v9642 = vsub.f32 %v9218, %v9576
      %v9643 = vsub.f32 %v9223, %v9579
      %v9644 = vsub.f32 %v9341, %v9582
      %v9645 = vsub.f32 %v9346, %v9585
      %v9646 = vsub.f32 %v9351, %v9588
      %v9647 = vsub.f32 %v9356, %v9591
      %v9648 = vsub.f32 %v9361, %v9594
      %v9649 = vsub.f32 %v9366, %v9597
      %v9650 = vsub.f32 %v9371, %v9600
      %v9651 = vsub.f32 %v9376, %v9603
      %v9652 = vsub.f32 %v9494, %v9606
      %v9653 = vsub.f32 %v9499, %v9609
      %v9654 = vsub.f32 %v9504, %v9612
      %v9655 = vsub.f32 %v9509, %v9615
      %v9656 = vsub.f32 %v9514, %v9618
      %v9657 = vsub.f32 %v9519, %v9621
      %v9658 = vsub.f32 %v9524, %v9624
      %v9659 = vsub.f32 %v9529, %v9627
      %v9660 = vmul.f32 %v9628, 1.442695
      %v9661 = vpow.pop %v9660
      %v9662 = vmul.f32 %v9629, 1.442695
      %v9663 = vpow.pop %v9662
      %v9664 = vmul.f32 %v9630, 1.442695
      %v9665 = vpow.pop %v9664
      %v9666 = vmul.f32 %v9631, 1.442695
      %v9667 = vpow.pop %v9666
      %v9668 = vmul.f32 %v9632, 1.442695
      %v9669 = vpow.pop %v9668
      %v9670 = vmul.f32 %v9633, 1.442695
      %v9671 = vpow.pop %v9670
      %v9672 = vmul.f32 %v9634, 1.442695
      %v9673 = vpow.pop %v9672
      %v9674 = vmul.f32 %v9635, 1.442695
      %v9675 = vpow.pop %v9674
      %v9676 = vmul.f32 %v9636, 1.442695
      %v9677 = vpow.pop %v9676
      %v9678 = vmul.f32 %v9637, 1.442695
      %v9679 = vpow.pop %v9678
      %v9680 = vmul.f32 %v9638, 1.442695
      %v9681 = vpow.pop %v9680
      %v9682 = vmul.f32 %v9639, 1.442695
      %v9683 = vpow.pop %v9682
      %v9684 = vmul.f32 %v9640, 1.442695
      %v9685 = vpow.pop %v9684
      %v9686 = vmul.f32 %v9641, 1.442695
      %v9687 = vpow.pop %v9686
      %v9688 = vmul.f32 %v9642, 1.442695
      %v9689 = vpow.pop %v9688
      %v9690 = vmul.f32 %v9643, 1.442695
      %v9691 = vpow.pop %v9690
      %v9692 = vmul.f32 %v9644, 1.442695
      %v9693 = vpow.pop %v9692
      %v9694 = vmul.f32 %v9645, 1.442695
      %v9695 = vpow.pop %v9694
      %v9696 = vmul.f32 %v9646, 1.442695
      %v9697 = vpow.pop %v9696
      %v9698 = vmul.f32 %v9647, 1.442695
      %v9699 = vpow.pop %v9698
      %v9700 = vmul.f32 %v9648, 1.442695
      %v9701 = vpow.pop %v9700
      %v9702 = vmul.f32 %v9649, 1.442695
      %v9703 = vpow.pop %v9702
      %v9704 = vmul.f32 %v9650, 1.442695
      %v9705 = vpow.pop %v9704
      %v9706 = vmul.f32 %v9651, 1.442695
      %v9707 = vpow.pop %v9706
      %v9708 = vmul.f32 %v9652, 1.442695
      %v9709 = vpow.pop %v9708
      %v9710 = vmul.f32 %v9653, 1.442695
      %v9711 = vpow.pop %v9710
      %v9712 = vmul.f32 %v9654, 1.442695
      %v9713 = vpow.pop %v9712
      %v9714 = vmul.f32 %v9655, 1.442695
      %v9715 = vpow.pop %v9714
      %v9716 = vmul.f32 %v9656, 1.442695
      %v9717 = vpow.pop %v9716
      %v9718 = vmul.f32 %v9657, 1.442695
      %v9719 = vpow.pop %v9718
      %v9720 = vmul.f32 %v9658, 1.442695
      %v9721 = vpow.pop %v9720
      %v9722 = vmul.f32 %v9659, 1.442695
      %v9723 = vpow.pop %v9722
      %v9724 = vsel %vm1850, %v9661, 0.0
      %9725 = vadd.xlane.f32.xlu0 %v9724
      %v9726 = vpop.xlane.xlu0 %9725
      %v9727 = vsel %vm1850, %v9663, 0.0
      %9728 = vadd.xlane.f32.xlu0 %v9727
      %v9729 = vpop.xlane.xlu0 %9728
      %v9730 = vsel %vm1850, %v9665, 0.0
      %9731 = vadd.xlane.f32.xlu0 %v9730
      %v9732 = vpop.xlane.xlu0 %9731
      %v9733 = vsel %vm1850, %v9667, 0.0
      %9734 = vadd.xlane.f32.xlu0 %v9733
      %v9735 = vpop.xlane.xlu0 %9734
      %v9736 = vsel %vm1850, %v9669, 0.0
      %9737 = vadd.xlane.f32.xlu0 %v9736
      %v9738 = vpop.xlane.xlu0 %9737
      %v9739 = vsel %vm1850, %v9671, 0.0
      %9740 = vadd.xlane.f32.xlu0 %v9739
      %v9741 = vpop.xlane.xlu0 %9740
      %v9742 = vsel %vm1850, %v9673, 0.0
      %9743 = vadd.xlane.f32.xlu0 %v9742
      %v9744 = vpop.xlane.xlu0 %9743
      %v9745 = vsel %vm1850, %v9675, 0.0
      %9746 = vadd.xlane.f32.xlu0 %v9745
      %v9747 = vpop.xlane.xlu0 %9746
      %v9748 = vsel %vm1850, %v9677, 0.0
      %9749 = vadd.xlane.f32.xlu0 %v9748
      %v9750 = vpop.xlane.xlu0 %9749
      %v9751 = vsel %vm1850, %v9679, 0.0
      %9752 = vadd.xlane.f32.xlu0 %v9751
      %v9753 = vpop.xlane.xlu0 %9752
      %v9754 = vsel %vm1850, %v9681, 0.0
      %9755 = vadd.xlane.f32.xlu0 %v9754
      %v9756 = vpop.xlane.xlu0 %9755
      %v9757 = vsel %vm1850, %v9683, 0.0
      %9758 = vadd.xlane.f32.xlu0 %v9757
      %v9759 = vpop.xlane.xlu0 %9758
      %v9760 = vsel %vm1850, %v9685, 0.0
      %9761 = vadd.xlane.f32.xlu0 %v9760
      %v9762 = vpop.xlane.xlu0 %9761
      %v9763 = vsel %vm1850, %v9687, 0.0
      %9764 = vadd.xlane.f32.xlu0 %v9763
      %v9765 = vpop.xlane.xlu0 %9764
      %v9766 = vsel %vm1850, %v9689, 0.0
      %9767 = vadd.xlane.f32.xlu0 %v9766
      %v9768 = vpop.xlane.xlu0 %9767
      %v9769 = vsel %vm1850, %v9691, 0.0
      %9770 = vadd.xlane.f32.xlu0 %v9769
      %v9771 = vpop.xlane.xlu0 %9770
      %v9772 = vsel %vm1850, %v9693, 0.0
      %9773 = vadd.xlane.f32.xlu0 %v9772
      %v9774 = vpop.xlane.xlu0 %9773
      %v9775 = vsel %vm1850, %v9695, 0.0
      %9776 = vadd.xlane.f32.xlu0 %v9775
      %v9777 = vpop.xlane.xlu0 %9776
      %v9778 = vsel %vm1850, %v9697, 0.0
      %9779 = vadd.xlane.f32.xlu0 %v9778
      %v9780 = vpop.xlane.xlu0 %9779
      %v9781 = vsel %vm1850, %v9699, 0.0
      %9782 = vadd.xlane.f32.xlu0 %v9781
      %v9783 = vpop.xlane.xlu0 %9782
      %v9784 = vsel %vm1850, %v9701, 0.0
      %9785 = vadd.xlane.f32.xlu0 %v9784
      %v9786 = vpop.xlane.xlu0 %9785
      %v9787 = vsel %vm1850, %v9703, 0.0
      %9788 = vadd.xlane.f32.xlu0 %v9787
      %v9789 = vpop.xlane.xlu0 %9788
      %v9790 = vsel %vm1850, %v9705, 0.0
      %9791 = vadd.xlane.f32.xlu0 %v9790
      %v9792 = vpop.xlane.xlu0 %9791
      %v9793 = vsel %vm1850, %v9707, 0.0
      %9794 = vadd.xlane.f32.xlu0 %v9793
      %v9795 = vpop.xlane.xlu0 %9794
      %v9796 = vsel %vm1850, %v9709, 0.0
      %9797 = vadd.xlane.f32.xlu0 %v9796
      %v9798 = vpop.xlane.xlu0 %9797
      %v9799 = vsel %vm1850, %v9711, 0.0
      %9800 = vadd.xlane.f32.xlu0 %v9799
      %v9801 = vpop.xlane.xlu0 %9800
      %v9802 = vsel %vm1850, %v9713, 0.0
      %9803 = vadd.xlane.f32.xlu0 %v9802
      %v9804 = vpop.xlane.xlu0 %9803
      %v9805 = vsel %vm1850, %v9715, 0.0
      %9806 = vadd.xlane.f32.xlu0 %v9805
      %v9807 = vpop.xlane.xlu0 %9806
      %v9808 = vsel %vm1850, %v9717, 0.0
      %9809 = vadd.xlane.f32.xlu0 %v9808
      %v9810 = vpop.xlane.xlu0 %9809
      %v9811 = vsel %vm1850, %v9719, 0.0
      %9812 = vadd.xlane.f32.xlu0 %v9811
      %v9813 = vpop.xlane.xlu0 %9812
      %v9814 = vsel %vm1850, %v9721, 0.0
      %9815 = vadd.xlane.f32.xlu0 %v9814
      %v9816 = vpop.xlane.xlu0 %9815
      %v9817 = vsel %vm1850, %v9723, 0.0
      %9818 = vadd.xlane.f32.xlu0 %v9817
      %v9819 = vpop.xlane.xlu0 %9818
      %v9820 = vrcp.pop %v9726
      %v9821 = vrcp.pop %v9729
      %v9822 = vrcp.pop %v9732
      %v9823 = vrcp.pop %v9735
      %v9824 = vrcp.pop %v9738
      %v9825 = vrcp.pop %v9741
      %v9826 = vrcp.pop %v9744
      %v9827 = vrcp.pop %v9747
      %v9828 = vrcp.pop %v9750
      %v9829 = vrcp.pop %v9753
      %v9830 = vrcp.pop %v9756
      %v9831 = vrcp.pop %v9759
      %v9832 = vrcp.pop %v9762
      %v9833 = vrcp.pop %v9765
      %v9834 = vrcp.pop %v9768
      %v9835 = vrcp.pop %v9771
      %v9836 = vrcp.pop %v9774
      %v9837 = vrcp.pop %v9777
      %v9838 = vrcp.pop %v9780
      %v9839 = vrcp.pop %v9783
      %v9840 = vrcp.pop %v9786
      %v9841 = vrcp.pop %v9789
      %v9842 = vrcp.pop %v9792
      %v9843 = vrcp.pop %v9795
      %v9844 = vrcp.pop %v9798
      %v9845 = vrcp.pop %v9801
      %v9846 = vrcp.pop %v9804
      %v9847 = vrcp.pop %v9807
      %v9848 = vrcp.pop %v9810
      %v9849 = vrcp.pop %v9813
      %v9850 = vrcp.pop %v9816
      %v9851 = vrcp.pop %v9819
      %v9852 = vmul.f32 %v9661, %v9820
      %v9853 = vmul.f32 %v9663, %v9821
      %v9854 = vmul.f32 %v9665, %v9822
      %v9855 = vmul.f32 %v9667, %v9823
      %v9856 = vmul.f32 %v9669, %v9824
      %v9857 = vmul.f32 %v9671, %v9825
      %v9858 = vmul.f32 %v9673, %v9826
      %v9859 = vmul.f32 %v9675, %v9827
      %v9860 = vmul.f32 %v9677, %v9828
      %v9861 = vmul.f32 %v9679, %v9829
      %v9862 = vmul.f32 %v9681, %v9830
      %v9863 = vmul.f32 %v9683, %v9831
      %v9864 = vmul.f32 %v9685, %v9832
      %v9865 = vmul.f32 %v9687, %v9833
      %v9866 = vmul.f32 %v9689, %v9834
      %v9867 = vmul.f32 %v9691, %v9835
      %v9868 = vmul.f32 %v9693, %v9836
      %v9869 = vmul.f32 %v9695, %v9837
      %v9870 = vmul.f32 %v9697, %v9838
      %v9871 = vmul.f32 %v9699, %v9839
      %v9872 = vmul.f32 %v9701, %v9840
      %v9873 = vmul.f32 %v9703, %v9841
      %v9874 = vmul.f32 %v9705, %v9842
      %v9875 = vmul.f32 %v9707, %v9843
      %v9876 = vmul.f32 %v9709, %v9844
      %v9877 = vmul.f32 %v9711, %v9845
      %v9878 = vmul.f32 %v9713, %v9846
      %v9879 = vmul.f32 %v9715, %v9847
      %v9880 = vmul.f32 %v9717, %v9848
      %v9881 = vmul.f32 %v9719, %v9849
      %v9882 = vmul.f32 %v9721, %v9850
      %v9883 = vmul.f32 %v9723, %v9851
      %v9885 = vsel %vm1850, %v9852, 0
      %v9888 = vsel %vm1850, %v9853, 0
      %v9891 = vsel %vm1850, %v9854, 0
      %v9894 = vsel %vm1850, %v9855, 0
      %v9897 = vsel %vm1850, %v9856, 0
      %v9900 = vsel %vm1850, %v9857, 0
      %v9903 = vsel %vm1850, %v9858, 0
      %v9906 = vsel %vm1850, %v9859, 0
      %9908 = vmatprep.subr.mxu0 0.0
      %9909 = vmatpush1.msra.mxu0 0.0
      %9910 = vmatprep.subr.mxu0 0.0
      %9911 = vmatpush1.msra.mxu0 0.0
      %9912 = vmatprep.subr.mxu0 0.0
      %9913 = vmatpush1.msra.mxu0 0.0
      %9914 = vmatprep.subr.mxu0 0.0
      %9915 = vmatpush1.msra.mxu0 0.0
      %9916 = vmatprep.subr.mxu0 0.0
      %9917 = vmatpush1.msra.mxu0 0.0
      %9918 = vmatprep.subr.mxu0 0.0
      %9919 = vmatpush1.msra.mxu0 0.0
      %9920 = vmatprep.subr.mxu0 0.0
      %9921 = vmatpush1.msra.mxu0 0.0
      %9922 = vmatprep.subr.mxu0 0.0
      %9923 = vmatpush1.msra.mxu0 0.0
      %9924 = vmatprep.subr.mxu0 0.0
      %9925 = vmatpush1.msra.mxu0 %v8764
      %9926 = vmatprep.subr.mxu0 0.0
      %9927 = vmatpush1.msra.mxu0 %v8759
      %9928 = vmatprep.subr.mxu0 0.0
      %9929 = vmatpush1.msra.mxu0 %v8754
      %9930 = vmatprep.subr.mxu0 0.0
      %9931 = vmatpush1.msra.mxu0 %v8749
      %9932 = vmatprep.subr.mxu0 0.0
      %9933 = vmatpush1.msra.mxu0 %v8744
      %9934 = vmatprep.subr.mxu0 0.0
      %9935 = vmatpush1.msra.mxu0 %v8739
      %9936 = vmatprep.subr.mxu0 0.0
      %9937 = vmatpush1.msra.mxu0 %v8734
      %9938 = vmatprep.subr.mxu0 0.0
      %9939 = vmatpush1.msra.mxu0 %v8729
      %9940 = vmatprep.subr.mxu0 0.0
      %9941 = vmatpush2.msra.mxu0 0.0
      %9942 = vmatprep.subr.mxu0 0.0
      %9943 = vmatpush2.msra.mxu0 0.0
      %9944 = vmatprep.subr.mxu0 0.0
      %9945 = vmatpush2.msra.mxu0 0.0
      %9946 = vmatprep.subr.mxu0 0.0
      %9947 = vmatpush2.msra.mxu0 0.0
      %9948 = vmatprep.subr.mxu0 0.0
      %9949 = vmatpush2.msra.mxu0 0.0
      %9950 = vmatprep.subr.mxu0 0.0
      %9951 = vmatpush2.msra.mxu0 0.0
      %9952 = vmatprep.subr.mxu0 0.0
      %9953 = vmatpush2.msra.mxu0 0.0
      %9954 = vmatprep.subr.mxu0 0.0
      %9955 = vmatpush2.msra.mxu0 0.0
      %9956 = vmatprep.subr.mxu0 0.0
      %9957 = vmatpush2.msra.mxu0 0.0
      %9958 = vmatprep.subr.mxu0 0.0
      %9959 = vmatpush2.msra.mxu0 0.0
      %9960 = vmatprep.subr.mxu0 0.0
      %9961 = vmatpush2.msra.mxu0 0.0
      %9962 = vmatprep.subr.mxu0 0.0
      %9963 = vmatpush2.msra.mxu0 0.0
      %9964 = vmatprep.subr.mxu0 0.0
      %9965 = vmatpush2.msra.mxu0 0.0
      %9966 = vmatprep.subr.mxu0 0.0
      %9967 = vmatpush2.msra.mxu0 0.0
      %9968 = vmatprep.subr.mxu0 0.0
      %9969 = vmatpush2.msra.mxu0 0.0
      %9970 = vmatprep.subr.mxu0 0.0
      %9971 = vmatpush2.msra.mxu0 0.0
      %9972 = vmatprep.mubr.f32.mxu0 0.0
      %9973 = vmatmul.mubr.f32.gmra.mxu0 %v9885
      %v9974 = vpop.f32.mrf.mxu0
      %v9975 = vadd.f32 0.0, %v9974
      %v9976 = vpop.f32.mrf.mxu0
      %9977 = vmatprep.mubr.f32.mxu0 0.0
      %9978 = vmatmul.mubr.f32.gmra.mxu0 %v9888
      %v9979 = vpop.f32.mrf.mxu0
      %v9980 = vadd.f32 0.0, %v9979
      %v9981 = vpop.f32.mrf.mxu0
      %9982 = vmatprep.mubr.f32.mxu0 0.0
      %9983 = vmatmul.mubr.f32.gmra.mxu0 %v9891
      %v9984 = vpop.f32.mrf.mxu0
      %v9985 = vadd.f32 0.0, %v9984
      %v9986 = vpop.f32.mrf.mxu0
      %9987 = vmatprep.mubr.f32.mxu0 0.0
      %9988 = vmatmul.mubr.f32.gmra.mxu0 %v9894
      %v9989 = vpop.f32.mrf.mxu0
      %v9990 = vadd.f32 0.0, %v9989
      %v9991 = vpop.f32.mrf.mxu0
      %9992 = vmatprep.mubr.f32.mxu0 0.0
      %9993 = vmatmul.mubr.f32.gmra.mxu0 %v9897
      %v9994 = vpop.f32.mrf.mxu0
      %v9995 = vadd.f32 0.0, %v9994
      %v9996 = vpop.f32.mrf.mxu0
      %9997 = vmatprep.mubr.f32.mxu0 0.0
      %9998 = vmatmul.mubr.f32.gmra.mxu0 %v9900
      %v9999 = vpop.f32.mrf.mxu0
      %v10000 = vadd.f32 0.0, %v9999
      %v10001 = vpop.f32.mrf.mxu0
      %10002 = vmatprep.mubr.f32.mxu0 0.0
      %10003 = vmatmul.mubr.f32.gmra.mxu0 %v9903
      %v10004 = vpop.f32.mrf.mxu0
      %v10005 = vadd.f32 0.0, %v10004
      %v10006 = vpop.f32.mrf.mxu0
      %10007 = vmatprep.mubr.f32.mxu0 0.0
      %10008 = vmatmul.mubr.f32.gmra.mxu0 %v9906
      %v10009 = vpop.f32.mrf.mxu0
      %v10010 = vadd.f32 0.0, %v10009
      %v10011 = vpop.f32.mrf.mxu0
      %10012 = vdwg.mxu0
      %v10014 = vsel %vm1850, %v9860, 0
      %v10017 = vsel %vm1850, %v9861, 0
      %v10020 = vsel %vm1850, %v9862, 0
      %v10023 = vsel %vm1850, %v9863, 0
      %v10026 = vsel %vm1850, %v9864, 0
      %v10029 = vsel %vm1850, %v9865, 0
      %v10032 = vsel %vm1850, %v9866, 0
      %v10035 = vsel %vm1850, %v9867, 0
      %10037 = vmatprep.subr.mxu0 0.0
      %10038 = vmatpush1.msra.mxu0 0.0
      %10039 = vmatprep.subr.mxu0 0.0
      %10040 = vmatpush1.msra.mxu0 0.0
      %10041 = vmatprep.subr.mxu0 0.0
      %10042 = vmatpush1.msra.mxu0 0.0
      %10043 = vmatprep.subr.mxu0 0.0
      %10044 = vmatpush1.msra.mxu0 0.0
      %10045 = vmatprep.subr.mxu0 0.0
      %10046 = vmatpush1.msra.mxu0 0.0
      %10047 = vmatprep.subr.mxu0 0.0
      %10048 = vmatpush1.msra.mxu0 0.0
      %10049 = vmatprep.subr.mxu0 0.0
      %10050 = vmatpush1.msra.mxu0 0.0
      %10051 = vmatprep.subr.mxu0 0.0
      %10052 = vmatpush1.msra.mxu0 0.0
      %10053 = vmatprep.subr.mxu0 0.0
      %10054 = vmatpush1.msra.mxu0 %v8804
      %10055 = vmatprep.subr.mxu0 0.0
      %10056 = vmatpush1.msra.mxu0 %v8799
      %10057 = vmatprep.subr.mxu0 0.0
      %10058 = vmatpush1.msra.mxu0 %v8794
      %10059 = vmatprep.subr.mxu0 0.0
      %10060 = vmatpush1.msra.mxu0 %v8789
      %10061 = vmatprep.subr.mxu0 0.0
      %10062 = vmatpush1.msra.mxu0 %v8784
      %10063 = vmatprep.subr.mxu0 0.0
      %10064 = vmatpush1.msra.mxu0 %v8779
      %10065 = vmatprep.subr.mxu0 0.0
      %10066 = vmatpush1.msra.mxu0 %v8774
      %10067 = vmatprep.subr.mxu0 0.0
      %10068 = vmatpush1.msra.mxu0 %v8769
      %10069 = vmatprep.subr.mxu0 0.0
      %10070 = vmatpush2.msra.mxu0 0.0
      %10071 = vmatprep.subr.mxu0 0.0
      %10072 = vmatpush2.msra.mxu0 0.0
      %10073 = vmatprep.subr.mxu0 0.0
      %10074 = vmatpush2.msra.mxu0 0.0
      %10075 = vmatprep.subr.mxu0 0.0
      %10076 = vmatpush2.msra.mxu0 0.0
      %10077 = vmatprep.subr.mxu0 0.0
      %10078 = vmatpush2.msra.mxu0 0.0
      %10079 = vmatprep.subr.mxu0 0.0
      %10080 = vmatpush2.msra.mxu0 0.0
      %10081 = vmatprep.subr.mxu0 0.0
      %10082 = vmatpush2.msra.mxu0 0.0
      %10083 = vmatprep.subr.mxu0 0.0
      %10084 = vmatpush2.msra.mxu0 0.0
      %10085 = vmatprep.subr.mxu0 0.0
      %10086 = vmatpush2.msra.mxu0 0.0
      %10087 = vmatprep.subr.mxu0 0.0
      %10088 = vmatpush2.msra.mxu0 0.0
      %10089 = vmatprep.subr.mxu0 0.0
      %10090 = vmatpush2.msra.mxu0 0.0
      %10091 = vmatprep.subr.mxu0 0.0
      %10092 = vmatpush2.msra.mxu0 0.0
      %10093 = vmatprep.subr.mxu0 0.0
      %10094 = vmatpush2.msra.mxu0 0.0
      %10095 = vmatprep.subr.mxu0 0.0
      %10096 = vmatpush2.msra.mxu0 0.0
      %10097 = vmatprep.subr.mxu0 0.0
      %10098 = vmatpush2.msra.mxu0 0.0
      %10099 = vmatprep.subr.mxu0 0.0
      %10100 = vmatpush2.msra.mxu0 0.0
      %10101 = vmatprep.mubr.f32.mxu0 0.0
      %10102 = vmatmul.mubr.f32.gmra.mxu0 %v10014
      %v10103 = vpop.f32.mrf.mxu0
      %v10104 = vadd.f32 0.0, %v10103
      %v10105 = vpop.f32.mrf.mxu0
      %10106 = vmatprep.mubr.f32.mxu0 0.0
      %10107 = vmatmul.mubr.f32.gmra.mxu0 %v10017
      %v10108 = vpop.f32.mrf.mxu0
      %v10109 = vadd.f32 0.0, %v10108
      %v10110 = vpop.f32.mrf.mxu0
      %10111 = vmatprep.mubr.f32.mxu0 0.0
      %10112 = vmatmul.mubr.f32.gmra.mxu0 %v10020
      %v10113 = vpop.f32.mrf.mxu0
      %v10114 = vadd.f32 0.0, %v10113
      %v10115 = vpop.f32.mrf.mxu0
      %10116 = vmatprep.mubr.f32.mxu0 0.0
      %10117 = vmatmul.mubr.f32.gmra.mxu0 %v10023
      %v10118 = vpop.f32.mrf.mxu0
      %v10119 = vadd.f32 0.0, %v10118
      %v10120 = vpop.f32.mrf.mxu0
      %10121 = vmatprep.mubr.f32.mxu0 0.0
      %10122 = vmatmul.mubr.f32.gmra.mxu0 %v10026
      %v10123 = vpop.f32.mrf.mxu0
      %v10124 = vadd.f32 0.0, %v10123
      %v10125 = vpop.f32.mrf.mxu0
      %10126 = vmatprep.mubr.f32.mxu0 0.0
      %10127 = vmatmul.mubr.f32.gmra.mxu0 %v10029
      %v10128 = vpop.f32.mrf.mxu0
      %v10129 = vadd.f32 0.0, %v10128
      %v10130 = vpop.f32.mrf.mxu0
      %10131 = vmatprep.mubr.f32.mxu0 0.0
      %10132 = vmatmul.mubr.f32.gmra.mxu0 %v10032
      %v10133 = vpop.f32.mrf.mxu0
      %v10134 = vadd.f32 0.0, %v10133
      %v10135 = vpop.f32.mrf.mxu0
      %10136 = vmatprep.mubr.f32.mxu0 0.0
      %10137 = vmatmul.mubr.f32.gmra.mxu0 %v10035
      %v10138 = vpop.f32.mrf.mxu0
      %v10139 = vadd.f32 0.0, %v10138
      %v10140 = vpop.f32.mrf.mxu0
      %10141 = vdwg.mxu0
      %v10143 = vsel %vm1850, %v9868, 0
      %v10146 = vsel %vm1850, %v9869, 0
      %v10149 = vsel %vm1850, %v9870, 0
      %v10152 = vsel %vm1850, %v9871, 0
      %v10155 = vsel %vm1850, %v9872, 0
      %v10158 = vsel %vm1850, %v9873, 0
      %v10161 = vsel %vm1850, %v9874, 0
      %v10164 = vsel %vm1850, %v9875, 0
      %10166 = vmatprep.subr.mxu0 0.0
      %10167 = vmatpush1.msra.mxu0 0.0
      %10168 = vmatprep.subr.mxu0 0.0
      %10169 = vmatpush1.msra.mxu0 0.0
      %10170 = vmatprep.subr.mxu0 0.0
      %10171 = vmatpush1.msra.mxu0 0.0
      %10172 = vmatprep.subr.mxu0 0.0
      %10173 = vmatpush1.msra.mxu0 0.0
      %10174 = vmatprep.subr.mxu0 0.0
      %10175 = vmatpush1.msra.mxu0 0.0
      %10176 = vmatprep.subr.mxu0 0.0
      %10177 = vmatpush1.msra.mxu0 0.0
      %10178 = vmatprep.subr.mxu0 0.0
      %10179 = vmatpush1.msra.mxu0 0.0
      %10180 = vmatprep.subr.mxu0 0.0
      %10181 = vmatpush1.msra.mxu0 0.0
      %10182 = vmatprep.subr.mxu0 0.0
      %10183 = vmatpush1.msra.mxu0 %v8844
      %10184 = vmatprep.subr.mxu0 0.0
      %10185 = vmatpush1.msra.mxu0 %v8839
      %10186 = vmatprep.subr.mxu0 0.0
      %10187 = vmatpush1.msra.mxu0 %v8834
      %10188 = vmatprep.subr.mxu0 0.0
      %10189 = vmatpush1.msra.mxu0 %v8829
      %10190 = vmatprep.subr.mxu0 0.0
      %10191 = vmatpush1.msra.mxu0 %v8824
      %10192 = vmatprep.subr.mxu0 0.0
      %10193 = vmatpush1.msra.mxu0 %v8819
      %10194 = vmatprep.subr.mxu0 0.0
      %10195 = vmatpush1.msra.mxu0 %v8814
      %10196 = vmatprep.subr.mxu0 0.0
      %10197 = vmatpush1.msra.mxu0 %v8809
      %10198 = vmatprep.subr.mxu0 0.0
      %10199 = vmatpush2.msra.mxu0 0.0
      %10200 = vmatprep.subr.mxu0 0.0
      %10201 = vmatpush2.msra.mxu0 0.0
      %10202 = vmatprep.subr.mxu0 0.0
      %10203 = vmatpush2.msra.mxu0 0.0
      %10204 = vmatprep.subr.mxu0 0.0
      %10205 = vmatpush2.msra.mxu0 0.0
      %10206 = vmatprep.subr.mxu0 0.0
      %10207 = vmatpush2.msra.mxu0 0.0
      %10208 = vmatprep.subr.mxu0 0.0
      %10209 = vmatpush2.msra.mxu0 0.0
      %10210 = vmatprep.subr.mxu0 0.0
      %10211 = vmatpush2.msra.mxu0 0.0
      %10212 = vmatprep.subr.mxu0 0.0
      %10213 = vmatpush2.msra.mxu0 0.0
      %10214 = vmatprep.subr.mxu0 0.0
      %10215 = vmatpush2.msra.mxu0 0.0
      %10216 = vmatprep.subr.mxu0 0.0
      %10217 = vmatpush2.msra.mxu0 0.0
      %10218 = vmatprep.subr.mxu0 0.0
      %10219 = vmatpush2.msra.mxu0 0.0
      %10220 = vmatprep.subr.mxu0 0.0
      %10221 = vmatpush2.msra.mxu0 0.0
      %10222 = vmatprep.subr.mxu0 0.0
      %10223 = vmatpush2.msra.mxu0 0.0
      %10224 = vmatprep.subr.mxu0 0.0
      %10225 = vmatpush2.msra.mxu0 0.0
      %10226 = vmatprep.subr.mxu0 0.0
      %10227 = vmatpush2.msra.mxu0 0.0
      %10228 = vmatprep.subr.mxu0 0.0
      %10229 = vmatpush2.msra.mxu0 0.0
      %10230 = vmatprep.mubr.f32.mxu0 0.0
      %10231 = vmatmul.mubr.f32.gmra.mxu0 %v10143
      %v10232 = vpop.f32.mrf.mxu0
      %v10233 = vadd.f32 0.0, %v10232
      %v10234 = vpop.f32.mrf.mxu0
      %10235 = vmatprep.mubr.f32.mxu0 0.0
      %10236 = vmatmul.mubr.f32.gmra.mxu0 %v10146
      %v10237 = vpop.f32.mrf.mxu0
      %v10238 = vadd.f32 0.0, %v10237
      %v10239 = vpop.f32.mrf.mxu0
      %10240 = vmatprep.mubr.f32.mxu0 0.0
      %10241 = vmatmul.mubr.f32.gmra.mxu0 %v10149
      %v10242 = vpop.f32.mrf.mxu0
      %v10243 = vadd.f32 0.0, %v10242
      %v10244 = vpop.f32.mrf.mxu0
      %10245 = vmatprep.mubr.f32.mxu0 0.0
      %10246 = vmatmul.mubr.f32.gmra.mxu0 %v10152
      %v10247 = vpop.f32.mrf.mxu0
      %v10248 = vadd.f32 0.0, %v10247
      %v10249 = vpop.f32.mrf.mxu0
      %10250 = vmatprep.mubr.f32.mxu0 0.0
      %10251 = vmatmul.mubr.f32.gmra.mxu0 %v10155
      %v10252 = vpop.f32.mrf.mxu0
      %v10253 = vadd.f32 0.0, %v10252
      %v10254 = vpop.f32.mrf.mxu0
      %10255 = vmatprep.mubr.f32.mxu0 0.0
      %10256 = vmatmul.mubr.f32.gmra.mxu0 %v10158
      %v10257 = vpop.f32.mrf.mxu0
      %v10258 = vadd.f32 0.0, %v10257
      %v10259 = vpop.f32.mrf.mxu0
      %10260 = vmatprep.mubr.f32.mxu0 0.0
      %10261 = vmatmul.mubr.f32.gmra.mxu0 %v10161
      %v10262 = vpop.f32.mrf.mxu0
      %v10263 = vadd.f32 0.0, %v10262
      %v10264 = vpop.f32.mrf.mxu0
      %10265 = vmatprep.mubr.f32.mxu0 0.0
      %10266 = vmatmul.mubr.f32.gmra.mxu0 %v10164
      %v10267 = vpop.f32.mrf.mxu0
      %v10268 = vadd.f32 0.0, %v10267
      %v10269 = vpop.f32.mrf.mxu0
      %10270 = vdwg.mxu0
      %v10272 = vsel %vm1850, %v9876, 0
      %v10275 = vsel %vm1850, %v9877, 0
      %v10278 = vsel %vm1850, %v9878, 0
      %v10281 = vsel %vm1850, %v9879, 0
      %v10284 = vsel %vm1850, %v9880, 0
      %v10287 = vsel %vm1850, %v9881, 0
      %v10290 = vsel %vm1850, %v9882, 0
      %v10293 = vsel %vm1850, %v9883, 0
      %10295 = vmatprep.subr.mxu0 0.0
      %10296 = vmatpush1.msra.mxu0 0.0
      %10297 = vmatprep.subr.mxu0 0.0
      %10298 = vmatpush1.msra.mxu0 0.0
      %10299 = vmatprep.subr.mxu0 0.0
      %10300 = vmatpush1.msra.mxu0 0.0
      %10301 = vmatprep.subr.mxu0 0.0
      %10302 = vmatpush1.msra.mxu0 0.0
      %10303 = vmatprep.subr.mxu0 0.0
      %10304 = vmatpush1.msra.mxu0 0.0
      %10305 = vmatprep.subr.mxu0 0.0
      %10306 = vmatpush1.msra.mxu0 0.0
      %10307 = vmatprep.subr.mxu0 0.0
      %10308 = vmatpush1.msra.mxu0 0.0
      %10309 = vmatprep.subr.mxu0 0.0
      %10310 = vmatpush1.msra.mxu0 0.0
      %10311 = vmatprep.subr.mxu0 0.0
      %10312 = vmatpush1.msra.mxu0 %v8884
      %10313 = vmatprep.subr.mxu0 0.0
      %10314 = vmatpush1.msra.mxu0 %v8879
      %10315 = vmatprep.subr.mxu0 0.0
      %10316 = vmatpush1.msra.mxu0 %v8874
      %10317 = vmatprep.subr.mxu0 0.0
      %10318 = vmatpush1.msra.mxu0 %v8869
      %10319 = vmatprep.subr.mxu0 0.0
      %10320 = vmatpush1.msra.mxu0 %v8864
      %10321 = vmatprep.subr.mxu0 0.0
      %10322 = vmatpush1.msra.mxu0 %v8859
      %10323 = vmatprep.subr.mxu0 0.0
      %10324 = vmatpush1.msra.mxu0 %v8854
      %10325 = vmatprep.subr.mxu0 0.0
      %10326 = vmatpush1.msra.mxu0 %v8849
      %10327 = vmatprep.subr.mxu0 0.0
      %10328 = vmatpush2.msra.mxu0 0.0
      %10329 = vmatprep.subr.mxu0 0.0
      %10330 = vmatpush2.msra.mxu0 0.0
      %10331 = vmatprep.subr.mxu0 0.0
      %10332 = vmatpush2.msra.mxu0 0.0
      %10333 = vmatprep.subr.mxu0 0.0
      %10334 = vmatpush2.msra.mxu0 0.0
      %10335 = vmatprep.subr.mxu0 0.0
      %10336 = vmatpush2.msra.mxu0 0.0
      %10337 = vmatprep.subr.mxu0 0.0
      %10338 = vmatpush2.msra.mxu0 0.0
      %10339 = vmatprep.subr.mxu0 0.0
      %10340 = vmatpush2.msra.mxu0 0.0
      %10341 = vmatprep.subr.mxu0 0.0
      %10342 = vmatpush2.msra.mxu0 0.0
      %10343 = vmatprep.subr.mxu0 0.0
      %10344 = vmatpush2.msra.mxu0 0.0
      %10345 = vmatprep.subr.mxu0 0.0
      %10346 = vmatpush2.msra.mxu0 0.0
      %10347 = vmatprep.subr.mxu0 0.0
      %10348 = vmatpush2.msra.mxu0 0.0
      %10349 = vmatprep.subr.mxu0 0.0
      %10350 = vmatpush2.msra.mxu0 0.0
      %10351 = vmatprep.subr.mxu0 0.0
      %10352 = vmatpush2.msra.mxu0 0.0
      %10353 = vmatprep.subr.mxu0 0.0
      %10354 = vmatpush2.msra.mxu0 0.0
      %10355 = vmatprep.subr.mxu0 0.0
      %10356 = vmatpush2.msra.mxu0 0.0
      %10357 = vmatprep.subr.mxu0 0.0
      %10358 = vmatpush2.msra.mxu0 0.0
      %10359 = vmatprep.mubr.f32.mxu0 0.0
      %10360 = vmatmul.mubr.f32.gmra.mxu0 %v10272
      %v10361 = vpop.f32.mrf.mxu0
      %v10362 = vadd.f32 0.0, %v10361
      %v10363 = vpop.f32.mrf.mxu0
      %10364 = vmatprep.mubr.f32.mxu0 0.0
      %10365 = vmatmul.mubr.f32.gmra.mxu0 %v10275
      %v10366 = vpop.f32.mrf.mxu0
      %v10367 = vadd.f32 0.0, %v10366
      %v10368 = vpop.f32.mrf.mxu0
      %10369 = vmatprep.mubr.f32.mxu0 0.0
      %10370 = vmatmul.mubr.f32.gmra.mxu0 %v10278
      %v10371 = vpop.f32.mrf.mxu0
      %v10372 = vadd.f32 0.0, %v10371
      %v10373 = vpop.f32.mrf.mxu0
      %10374 = vmatprep.mubr.f32.mxu0 0.0
      %10375 = vmatmul.mubr.f32.gmra.mxu0 %v10281
      %v10376 = vpop.f32.mrf.mxu0
      %v10377 = vadd.f32 0.0, %v10376
      %v10378 = vpop.f32.mrf.mxu0
      %10379 = vmatprep.mubr.f32.mxu0 0.0
      %10380 = vmatmul.mubr.f32.gmra.mxu0 %v10284
      %v10381 = vpop.f32.mrf.mxu0
      %v10382 = vadd.f32 0.0, %v10381
      %v10383 = vpop.f32.mrf.mxu0
      %10384 = vmatprep.mubr.f32.mxu0 0.0
      %10385 = vmatmul.mubr.f32.gmra.mxu0 %v10287
      %v10386 = vpop.f32.mrf.mxu0
      %v10387 = vadd.f32 0.0, %v10386
      %v10388 = vpop.f32.mrf.mxu0
      %10389 = vmatprep.mubr.f32.mxu0 0.0
      %10390 = vmatmul.mubr.f32.gmra.mxu0 %v10290
      %v10391 = vpop.f32.mrf.mxu0
      %v10392 = vadd.f32 0.0, %v10391
      %v10393 = vpop.f32.mrf.mxu0
      %10394 = vmatprep.mubr.f32.mxu0 0.0
      %10395 = vmatmul.mubr.f32.gmra.mxu0 %v10293
      %v10396 = vpop.f32.mrf.mxu0
      %v10397 = vadd.f32 0.0, %v10396
      %v10398 = vpop.f32.mrf.mxu0
      %10399 = vdwg.mxu0
      %s10400 = scalar_lea.vmem %s8, 24
      %v10401 = vld [vmem:[%s10400] sm:$0xff]
      %v10403 = vsel %vm1237, %v9975, 0
      %v10406 = vsel %vm1237, %v9980, 0
      %v10409 = vsel %vm1237, %v9985, 0
      %v10412 = vsel %vm1237, %v9990, 0
      %v10415 = vsel %vm1237, %v9995, 0
      %v10418 = vsel %vm1237, %v10000, 0
      %v10421 = vsel %vm1237, %v10005, 0
      %v10424 = vsel %vm1237, %v10010, 0
      %v10427 = vsel %vm1237, %v10104, 0
      %v10430 = vsel %vm1237, %v10109, 0
      %v10433 = vsel %vm1237, %v10114, 0
      %v10436 = vsel %vm1237, %v10119, 0
      %v10439 = vsel %vm1237, %v10124, 0
      %v10442 = vsel %vm1237, %v10129, 0
      %v10445 = vsel %vm1237, %v10134, 0
      %v10448 = vsel %vm1237, %v10139, 0
      %v10451 = vsel %vm1237, %v10233, 0
      %v10454 = vsel %vm1237, %v10238, 0
      %v10457 = vsel %vm1237, %v10243, 0
      %v10460 = vsel %vm1237, %v10248, 0
      %v10463 = vsel %vm1237, %v10253, 0
      %v10466 = vsel %vm1237, %v10258, 0
      %v10469 = vsel %vm1237, %v10263, 0
      %v10472 = vsel %vm1237, %v10268, 0
      %v10475 = vsel %vm1237, %v10362, 0
      %v10478 = vsel %vm1237, %v10367, 0
      %v10481 = vsel %vm1237, %v10372, 0
      %v10484 = vsel %vm1237, %v10377, 0
      %v10487 = vsel %vm1237, %v10382, 0
      %v10490 = vsel %vm1237, %v10387, 0
      %v10493 = vsel %vm1237, %v10392, 0
      %v10496 = vsel %vm1237, %v10397, 0
      %10498 = vmatprep.subr.mxu0 0.0
      %10499 = vmatpush1.msra.mxu0 0.0
      %10500 = vmatprep.subr.mxu0 0.0
      %10501 = vmatpush1.msra.mxu0 0.0
      %10502 = vmatprep.subr.mxu0 0.0
      %10503 = vmatpush1.msra.mxu0 0.0
      %10504 = vmatprep.subr.mxu0 0.0
      %10505 = vmatpush1.msra.mxu0 0.0
      %10506 = vmatprep.subr.mxu0 0.0
      %10507 = vmatpush1.msra.mxu0 0.0
      %10508 = vmatprep.subr.mxu0 0.0
      %10509 = vmatpush1.msra.mxu0 0.0
      %10510 = vmatprep.subr.mxu0 0.0
      %10511 = vmatpush1.msra.mxu0 0.0
      %10512 = vmatprep.subr.mxu0 0.0
      %10513 = vmatpush1.msra.mxu0 0.0
      %10514 = vmatprep.subr.mxu0 0.0
      %10515 = vmatpush1.msra.mxu0 0.0
      %10516 = vmatprep.subr.mxu0 0.0
      %10517 = vmatpush1.msra.mxu0 0.0
      %10518 = vmatprep.subr.mxu0 0.0
      %10519 = vmatpush1.msra.mxu0 0.0
      %10520 = vmatprep.subr.mxu0 0.0
      %10521 = vmatpush1.msra.mxu0 0.0
      %10522 = vmatprep.subr.mxu0 0.0
      %10523 = vmatpush1.msra.mxu0 0.0
      %10524 = vmatprep.subr.mxu0 0.0
      %10525 = vmatpush1.msra.mxu0 0.0
      %10526 = vmatprep.subr.mxu0 0.0
      %10527 = vmatpush1.msra.mxu0 0.0
      %10528 = vmatprep.subr.mxu0 0.0
      %10529 = vmatpush1.msra.mxu0 %v10401
      %10530 = vmatprep.subr.mxu0 0.0
      %10531 = vmatpush2.msra.mxu0 0.0
      %10532 = vmatprep.subr.mxu0 0.0
      %10533 = vmatpush2.msra.mxu0 0.0
      %10534 = vmatprep.subr.mxu0 0.0
      %10535 = vmatpush2.msra.mxu0 0.0
      %10536 = vmatprep.subr.mxu0 0.0
      %10537 = vmatpush2.msra.mxu0 0.0
      %10538 = vmatprep.subr.mxu0 0.0
      %10539 = vmatpush2.msra.mxu0 0.0
      %10540 = vmatprep.subr.mxu0 0.0
      %10541 = vmatpush2.msra.mxu0 0.0
      %10542 = vmatprep.subr.mxu0 0.0
      %10543 = vmatpush2.msra.mxu0 0.0
      %10544 = vmatprep.subr.mxu0 0.0
      %10545 = vmatpush2.msra.mxu0 0.0
      %10546 = vmatprep.subr.mxu0 0.0
      %10547 = vmatpush2.msra.mxu0 0.0
      %10548 = vmatprep.subr.mxu0 0.0
      %10549 = vmatpush2.msra.mxu0 0.0
      %10550 = vmatprep.subr.mxu0 0.0
      %10551 = vmatpush2.msra.mxu0 0.0
      %10552 = vmatprep.subr.mxu0 0.0
      %10553 = vmatpush2.msra.mxu0 0.0
      %10554 = vmatprep.subr.mxu0 0.0
      %10555 = vmatpush2.msra.mxu0 0.0
      %10556 = vmatprep.subr.mxu0 0.0
      %10557 = vmatpush2.msra.mxu0 0.0
      %10558 = vmatprep.subr.mxu0 0.0
      %10559 = vmatpush2.msra.mxu0 0.0
      %10560 = vmatprep.subr.mxu0 0.0
      %10561 = vmatpush2.msra.mxu0 0.0
      %10562 = vmatprep.mubr.f32.mxu0 0.0
      %10563 = vmatmul.mubr.f32.gmra.mxu0 %v10403
      %v10564 = vpop.f32.mrf.mxu0
      %v10565 = vadd.f32 0.0, %v10564
      %v10566 = vpop.f32.mrf.mxu0
      %10567 = vmatprep.mubr.f32.mxu0 0.0
      %10568 = vmatmul.mubr.f32.gmra.mxu0 %v10406
      %v10569 = vpop.f32.mrf.mxu0
      %v10570 = vadd.f32 0.0, %v10569
      %v10571 = vpop.f32.mrf.mxu0
      %10572 = vmatprep.mubr.f32.mxu0 0.0
      %10573 = vmatmul.mubr.f32.gmra.mxu0 %v10409
      %v10574 = vpop.f32.mrf.mxu0
      %v10575 = vadd.f32 0.0, %v10574
      %v10576 = vpop.f32.mrf.mxu0
      %10577 = vmatprep.mubr.f32.mxu0 0.0
      %10578 = vmatmul.mubr.f32.gmra.mxu0 %v10412
      %v10579 = vpop.f32.mrf.mxu0
      %v10580 = vadd.f32 0.0, %v10579
      %v10581 = vpop.f32.mrf.mxu0
      %10582 = vmatprep.mubr.f32.mxu0 0.0
      %10583 = vmatmul.mubr.f32.gmra.mxu0 %v10415
      %v10584 = vpop.f32.mrf.mxu0
      %v10585 = vadd.f32 0.0, %v10584
      %v10586 = vpop.f32.mrf.mxu0
      %10587 = vmatprep.mubr.f32.mxu0 0.0
      %10588 = vmatmul.mubr.f32.gmra.mxu0 %v10418
      %v10589 = vpop.f32.mrf.mxu0
      %v10590 = vadd.f32 0.0, %v10589
      %v10591 = vpop.f32.mrf.mxu0
      %10592 = vmatprep.mubr.f32.mxu0 0.0
      %10593 = vmatmul.mubr.f32.gmra.mxu0 %v10421
      %v10594 = vpop.f32.mrf.mxu0
      %v10595 = vadd.f32 0.0, %v10594
      %v10596 = vpop.f32.mrf.mxu0
      %10597 = vmatprep.mubr.f32.mxu0 0.0
      %10598 = vmatmul.mubr.f32.gmra.mxu0 %v10424
      %v10599 = vpop.f32.mrf.mxu0
      %v10600 = vadd.f32 0.0, %v10599
      %v10601 = vpop.f32.mrf.mxu0
      %10602 = vmatprep.mubr.f32.mxu0 0.0
      %10603 = vmatmul.mubr.f32.gmra.mxu0 %v10427
      %v10604 = vpop.f32.mrf.mxu0
      %v10605 = vadd.f32 0.0, %v10604
      %v10606 = vpop.f32.mrf.mxu0
      %10607 = vmatprep.mubr.f32.mxu0 0.0
      %10608 = vmatmul.mubr.f32.gmra.mxu0 %v10430
      %v10609 = vpop.f32.mrf.mxu0
      %v10610 = vadd.f32 0.0, %v10609
      %v10611 = vpop.f32.mrf.mxu0
      %10612 = vmatprep.mubr.f32.mxu0 0.0
      %10613 = vmatmul.mubr.f32.gmra.mxu0 %v10433
      %v10614 = vpop.f32.mrf.mxu0
      %v10615 = vadd.f32 0.0, %v10614
      %v10616 = vpop.f32.mrf.mxu0
      %10617 = vmatprep.mubr.f32.mxu0 0.0
      %10618 = vmatmul.mubr.f32.gmra.mxu0 %v10436
      %v10619 = vpop.f32.mrf.mxu0
      %v10620 = vadd.f32 0.0, %v10619
      %v10621 = vpop.f32.mrf.mxu0
      %10622 = vmatprep.mubr.f32.mxu0 0.0
      %10623 = vmatmul.mubr.f32.gmra.mxu0 %v10439
      %v10624 = vpop.f32.mrf.mxu0
      %v10625 = vadd.f32 0.0, %v10624
      %v10626 = vpop.f32.mrf.mxu0
      %10627 = vmatprep.mubr.f32.mxu0 0.0
      %10628 = vmatmul.mubr.f32.gmra.mxu0 %v10442
      %v10629 = vpop.f32.mrf.mxu0
      %v10630 = vadd.f32 0.0, %v10629
      %v10631 = vpop.f32.mrf.mxu0
      %10632 = vmatprep.mubr.f32.mxu0 0.0
      %10633 = vmatmul.mubr.f32.gmra.mxu0 %v10445
      %v10634 = vpop.f32.mrf.mxu0
      %v10635 = vadd.f32 0.0, %v10634
      %v10636 = vpop.f32.mrf.mxu0
      %10637 = vmatprep.mubr.f32.mxu0 0.0
      %10638 = vmatmul.mubr.f32.gmra.mxu0 %v10448
      %v10639 = vpop.f32.mrf.mxu0
      %v10640 = vadd.f32 0.0, %v10639
      %v10641 = vpop.f32.mrf.mxu0
      %10642 = vmatprep.mubr.f32.mxu0 0.0
      %10643 = vmatmul.mubr.f32.gmra.mxu0 %v10451
      %v10644 = vpop.f32.mrf.mxu0
      %v10645 = vadd.f32 0.0, %v10644
      %v10646 = vpop.f32.mrf.mxu0
      %10647 = vmatprep.mubr.f32.mxu0 0.0
      %10648 = vmatmul.mubr.f32.gmra.mxu0 %v10454
      %v10649 = vpop.f32.mrf.mxu0
      %v10650 = vadd.f32 0.0, %v10649
      %v10651 = vpop.f32.mrf.mxu0
      %10652 = vmatprep.mubr.f32.mxu0 0.0
      %10653 = vmatmul.mubr.f32.gmra.mxu0 %v10457
      %v10654 = vpop.f32.mrf.mxu0
      %v10655 = vadd.f32 0.0, %v10654
      %v10656 = vpop.f32.mrf.mxu0
      %10657 = vmatprep.mubr.f32.mxu0 0.0
      %10658 = vmatmul.mubr.f32.gmra.mxu0 %v10460
      %v10659 = vpop.f32.mrf.mxu0
      %v10660 = vadd.f32 0.0, %v10659
      %v10661 = vpop.f32.mrf.mxu0
      %10662 = vmatprep.mubr.f32.mxu0 0.0
      %10663 = vmatmul.mubr.f32.gmra.mxu0 %v10463
      %v10664 = vpop.f32.mrf.mxu0
      %v10665 = vadd.f32 0.0, %v10664
      %v10666 = vpop.f32.mrf.mxu0
      %10667 = vmatprep.mubr.f32.mxu0 0.0
      %10668 = vmatmul.mubr.f32.gmra.mxu0 %v10466
      %v10669 = vpop.f32.mrf.mxu0
      %v10670 = vadd.f32 0.0, %v10669
      %v10671 = vpop.f32.mrf.mxu0
      %10672 = vmatprep.mubr.f32.mxu0 0.0
      %10673 = vmatmul.mubr.f32.gmra.mxu0 %v10469
      %v10674 = vpop.f32.mrf.mxu0
      %v10675 = vadd.f32 0.0, %v10674
      %v10676 = vpop.f32.mrf.mxu0
      %10677 = vmatprep.mubr.f32.mxu0 0.0
      %10678 = vmatmul.mubr.f32.gmra.mxu0 %v10472
      %v10679 = vpop.f32.mrf.mxu0
      %v10680 = vadd.f32 0.0, %v10679
      %v10681 = vpop.f32.mrf.mxu0
      %10682 = vmatprep.mubr.f32.mxu0 0.0
      %10683 = vmatmul.mubr.f32.gmra.mxu0 %v10475
      %v10684 = vpop.f32.mrf.mxu0
      %v10685 = vadd.f32 0.0, %v10684
      %v10686 = vpop.f32.mrf.mxu0
      %10687 = vmatprep.mubr.f32.mxu0 0.0
      %10688 = vmatmul.mubr.f32.gmra.mxu0 %v10478
      %v10689 = vpop.f32.mrf.mxu0
      %v10690 = vadd.f32 0.0, %v10689
      %v10691 = vpop.f32.mrf.mxu0
      %10692 = vmatprep.mubr.f32.mxu0 0.0
      %10693 = vmatmul.mubr.f32.gmra.mxu0 %v10481
      %v10694 = vpop.f32.mrf.mxu0
      %v10695 = vadd.f32 0.0, %v10694
      %v10696 = vpop.f32.mrf.mxu0
      %10697 = vmatprep.mubr.f32.mxu0 0.0
      %10698 = vmatmul.mubr.f32.gmra.mxu0 %v10484
      %v10699 = vpop.f32.mrf.mxu0
      %v10700 = vadd.f32 0.0, %v10699
      %v10701 = vpop.f32.mrf.mxu0
      %10702 = vmatprep.mubr.f32.mxu0 0.0
      %10703 = vmatmul.mubr.f32.gmra.mxu0 %v10487
      %v10704 = vpop.f32.mrf.mxu0
      %v10705 = vadd.f32 0.0, %v10704
      %v10706 = vpop.f32.mrf.mxu0
      %10707 = vmatprep.mubr.f32.mxu0 0.0
      %10708 = vmatmul.mubr.f32.gmra.mxu0 %v10490
      %v10709 = vpop.f32.mrf.mxu0
      %v10710 = vadd.f32 0.0, %v10709
      %v10711 = vpop.f32.mrf.mxu0
      %10712 = vmatprep.mubr.f32.mxu0 0.0
      %10713 = vmatmul.mubr.f32.gmra.mxu0 %v10493
      %v10714 = vpop.f32.mrf.mxu0
      %v10715 = vadd.f32 0.0, %v10714
      %v10716 = vpop.f32.mrf.mxu0
      %10717 = vmatprep.mubr.f32.mxu0 0.0
      %10718 = vmatmul.mubr.f32.gmra.mxu0 %v10496
      %v10719 = vpop.f32.mrf.mxu0
      %v10720 = vadd.f32 0.0, %v10719
      %v10721 = vpop.f32.mrf.mxu0
      %10722 = vdwg.mxu0
      %v10723 = vadd.f32 %v8141, %v10565
      %v10724 = vadd.f32 %v8142, %v10570
      %v10725 = vadd.f32 %v8143, %v10575
      %v10726 = vadd.f32 %v8144, %v10580
      %v10727 = vadd.f32 %v8145, %v10585
      %v10728 = vadd.f32 %v8146, %v10590
      %v10729 = vadd.f32 %v8147, %v10595
      %v10730 = vadd.f32 %v8148, %v10600
      %v10731 = vadd.f32 %v8149, %v10605
      %v10732 = vadd.f32 %v8150, %v10610
      %v10733 = vadd.f32 %v8151, %v10615
      %v10734 = vadd.f32 %v8152, %v10620
      %v10735 = vadd.f32 %v8153, %v10625
      %v10736 = vadd.f32 %v8154, %v10630
      %v10737 = vadd.f32 %v8155, %v10635
      %v10738 = vadd.f32 %v8156, %v10640
      %v10739 = vadd.f32 %v8157, %v10645
      %v10740 = vadd.f32 %v8158, %v10650
      %v10741 = vadd.f32 %v8159, %v10655
      %v10742 = vadd.f32 %v8160, %v10660
      %v10743 = vadd.f32 %v8161, %v10665
      %v10744 = vadd.f32 %v8162, %v10670
      %v10745 = vadd.f32 %v8163, %v10675
      %v10746 = vadd.f32 %v8164, %v10680
      %v10747 = vadd.f32 %v8165, %v10685
      %v10748 = vadd.f32 %v8166, %v10690
      %v10749 = vadd.f32 %v8167, %v10695
      %v10750 = vadd.f32 %v8168, %v10700
      %v10751 = vadd.f32 %v8169, %v10705
      %v10752 = vadd.f32 %v8170, %v10710
      %v10753 = vadd.f32 %v8171, %v10715
      %v10754 = vadd.f32 %v8172, %v10720
      %v10755 = vld [vmem:[%s9] sm:$0x1]
      %v10757 = vlaneseq
      %v10758 = vshrl.u32 %v10757, 7
      %v10759 = vsub.s32 0, %v10758
      %v10760 = vrot.slane %v10755, %v10759
      %v10762 = vadd.f32 %v10723, %v10760
      %v10763 = vadd.f32 %v10724, %v10760
      %v10764 = vadd.f32 %v10725, %v10760
      %v10765 = vadd.f32 %v10726, %v10760
      %v10766 = vadd.f32 %v10727, %v10760
      %v10767 = vadd.f32 %v10728, %v10760
      %v10768 = vadd.f32 %v10729, %v10760
      %v10769 = vadd.f32 %v10730, %v10760
      %v10770 = vadd.f32 %v10731, %v10760
      %v10771 = vadd.f32 %v10732, %v10760
      %v10772 = vadd.f32 %v10733, %v10760
      %v10773 = vadd.f32 %v10734, %v10760
      %v10774 = vadd.f32 %v10735, %v10760
      %v10775 = vadd.f32 %v10736, %v10760
      %v10776 = vadd.f32 %v10737, %v10760
      %v10777 = vadd.f32 %v10738, %v10760
      %v10778 = vadd.f32 %v10739, %v10760
      %v10779 = vadd.f32 %v10740, %v10760
      %v10780 = vadd.f32 %v10741, %v10760
      %v10781 = vadd.f32 %v10742, %v10760
      %v10782 = vadd.f32 %v10743, %v10760
      %v10783 = vadd.f32 %v10744, %v10760
      %v10784 = vadd.f32 %v10745, %v10760
      %v10785 = vadd.f32 %v10746, %v10760
      %v10786 = vadd.f32 %v10747, %v10760
      %v10787 = vadd.f32 %v10748, %v10760
      %v10788 = vadd.f32 %v10749, %v10760
      %v10789 = vadd.f32 %v10750, %v10760
      %v10790 = vadd.f32 %v10751, %v10760
      %v10791 = vadd.f32 %v10752, %v10760
      %v10792 = vadd.f32 %v10753, %v10760
      %v10793 = vadd.f32 %v10754, %v10760
      %10794 = vst.msk [vmem:[%s366] sm:$0xff] %vm411, %v10762
      %10795 = vst.msk [vmem:[%s366 + $0x8] sm:$0xff] %vm411, %v10763
      %10796 = vst.msk [vmem:[%s366 + $0x10] sm:$0xff] %vm411, %v10764
      %10797 = vst.msk [vmem:[%s366 + $0x18] sm:$0xff] %vm411, %v10765
      %10798 = vst.msk [vmem:[%s366 + $0x20] sm:$0xff] %vm411, %v10766
      %10799 = vst.msk [vmem:[%s366 + $0x28] sm:$0xff] %vm411, %v10767
      %10800 = vst.msk [vmem:[%s366 + $0x30] sm:$0xff] %vm411, %v10768
      %10801 = vst.msk [vmem:[%s366 + $0x38] sm:$0xff] %vm411, %v10769
      %10802 = vst.msk [vmem:[%s366 + $0x40] sm:$0xff] %vm411, %v10770
      %10803 = vst.msk [vmem:[%s366 + $0x48] sm:$0xff] %vm411, %v10771
      %10804 = vst.msk [vmem:[%s366 + $0x50] sm:$0xff] %vm411, %v10772
      %10805 = vst.msk [vmem:[%s366 + $0x58] sm:$0xff] %vm411, %v10773
      %10806 = vst.msk [vmem:[%s366 + $0x60] sm:$0xff] %vm411, %v10774
      %10807 = vst.msk [vmem:[%s366 + $0x68] sm:$0xff] %vm411, %v10775
      %10808 = vst.msk [vmem:[%s366 + $0x70] sm:$0xff] %vm411, %v10776
      %10809 = vst.msk [vmem:[%s366 + $0x78] sm:$0xff] %vm411, %v10777
      %10810 = vst.msk [vmem:[%s366 + $0x80] sm:$0xff] %vm411, %v10778
      %10811 = vst.msk [vmem:[%s366 + $0x88] sm:$0xff] %vm411, %v10779
      %10812 = vst.msk [vmem:[%s366 + $0x90] sm:$0xff] %vm411, %v10780
      %10813 = vst.msk [vmem:[%s366 + $0x98] sm:$0xff] %vm411, %v10781
      %10814 = vst.msk [vmem:[%s366 + $0xa0] sm:$0xff] %vm411, %v10782
      %10815 = vst.msk [vmem:[%s366 + $0xa8] sm:$0xff] %vm411, %v10783
      %10816 = vst.msk [vmem:[%s366 + $0xb0] sm:$0xff] %vm411, %v10784
      %10817 = vst.msk [vmem:[%s366 + $0xb8] sm:$0xff] %vm411, %v10785
      %10818 = vst.msk [vmem:[%s366 + $0xc0] sm:$0xff] %vm411, %v10786
      %10819 = vst.msk [vmem:[%s366 + $0xc8] sm:$0xff] %vm411, %v10787
      %10820 = vst.msk [vmem:[%s366 + $0xd0] sm:$0xff] %vm411, %v10788
      %10821 = vst.msk [vmem:[%s366 + $0xd8] sm:$0xff] %vm411, %v10789
      %10822 = vst.msk [vmem:[%s366 + $0xe0] sm:$0xff] %vm411, %v10790
      %10823 = vst.msk [vmem:[%s366 + $0xe8] sm:$0xff] %vm411, %v10791
      %10824 = vst.msk [vmem:[%s366 + $0xf0] sm:$0xff] %vm411, %v10792
      %10825 = vst.msk [vmem:[%s366 + $0xf8] sm:$0xff] %vm411, %v10793
      %s10826 = smul.u32 4, %s21
      %p10827 = scmp.lt.s32.totalorder %s10826, 7
      %s10828 = scalar_select %p10827, %s10826, 7
      %s10829 = smul.addr %s10828, 8
      %s10830 = smul.addr %s10829, 8
      %s10831 = scalar_lea.vmem %s10, %s10830
      // Predicated region
      $region61: #{tpu_custom_call.1} parent=59 // pred_check
        %p10832 = pneg %p254
      $region62: #{tpu_custom_call.1} parent=59 // pred_check_branch
        %10834 = sbr.rel (%p10832) target = $region64
      $region63: #{tpu_custom_call.1} parent=59 // pred_region
        %s10835 = smul.u32 4, %s21
      $region64: #{tpu_custom_call.1} parent=59 // pred_fallthru
        _
    $region60: #{tpu_custom_call.1} parent=5 // pred_fallthru
      _
    %p10836 = scmp.le.s32.totalorder 2, %s16
    // Predicated region
    $region65: #{tpu_custom_call.1} parent=5 // pred_check
      %p10837 = pneg %p10836
    $region66: #{tpu_custom_call.1} parent=5 // pred_check_branch
      %10839 = sbr.rel (%p10837) target = $region68
    $region67: #{tpu_custom_call.1} parent=5 // pred_region
      %s10840 = ssub.s32 %s16, 2
      // Predicated region
      $region69: #{tpu_custom_call.1} parent=67 // pred_check
        %p10841 = pneg %p260
      $region70: #{tpu_custom_call.1} parent=67 // pred_check_branch
        %10843 = sbr.rel (%p10841) target = $region72
      $region71: #{tpu_custom_call.1} parent=67 // pred_region
        %s10844 = smul.u32 4, %s22
        %p10845 = scmp.lt.s32.totalorder %s10844, 7
        %s10846 = scalar_select %p10845, %s10844, 7
        %s10847 = smul.addr %s10846, 8
        %s10848 = smul.addr %s10847, 8
        %s10849 = scalar_lea.vmem %s10, %s10848
      $region72: #{tpu_custom_call.1} parent=67 // pred_fallthru
        _
    $region68: #{tpu_custom_call.1} parent=5 // pred_fallthru
      _
  $region6: #{tpu_custom_call.1} parent=0 // loop_footer
    %s20 = sadd.s32 1, %s16
  $region7: #{tpu_custom_call.1} parent=0 // loop_footer_branch
    %15 = sbr.rel target = $region3
  $region8: #{tpu_custom_call.1} parent=0 // loop_exit
    _

</llo_original>
